<compile_context>
chip_gen: v7x
topology: tpu7x:2x2x1
jax: 0.10.0
libtpu: 0.0.40
codegen_flags: <defaults>
</compile_context>

<pallas_src>
import jax
import jax.numpy as jnp
from jax.experimental import pallas as pl
from jax.experimental.pallas import tpu as pltpu


def _round_up(n, m):
    return ((n + m - 1) // m) * m


def _vmem_capacity_bytes():
    try:
        return int(pltpu.get_tpu_info().vmem_capacity_bytes)
    except Exception:
        return 64 * 1024 * 1024  # conservative fallback (v7x-sized VMEM)


# ---------------------------------------------------------------------------
# Kernel: one (o_tile, b_tile, i_block) grid step.
def _dnm_m4_kernel(x_ref, wt_ref, qt_ref, dw_ref, db_ref, kq_ref, out_ref, s_acc):
    """
    x_ref:   [Bt, Ib]      VMEM f32   (i on lanes -> lane-dense DMA)
    wt_ref:  [M, Ib, Ot]   VMEM       Synapse_W^T (i on sublanes, o on lanes)
    qt_ref:  [M, Ib, Ot]   VMEM       Synapse_q^T
    dw_ref:  [Ip]          SMEM f32   Dendritic_W
    db_ref:  [Ip]          SMEM f32   Dendritic_B
    kq_ref:  [2]           SMEM f32   [k, qs]
    out_ref: [Bt, Ot]      VMEM f32
    s_acc:   [M, Bt, Ot]   VMEM f32 scratch (accumulates sum_i d over the i grid axis)
    """
    i_idx = pl.program_id(2)
    n_i = pl.num_programs(2)
    n_branches, i_blk, _ = wt_ref.shape
    bt, ot = out_ref.shape

    @pl.when(i_idx == 0)
    def _init():
        s_acc[...] = jnp.zeros_like(s_acc)

    x_blk = x_ref[...].astype(jnp.float32)          # [Bt, Ib], stays register-resident
    i_base = i_idx * i_blk                          # global offset into dw/db (SMEM)

    # M is small (5) and static -> unroll; each i contributes a [Bt, Ot] chunk that
    # lives entirely in vregs (no [Bt, I, Ot] temporary is ever materialized).
    for m in range(n_branches):
        s_m = jnp.zeros((bt, ot), jnp.float32)
        for il in range(i_blk):
            xi = x_blk[:, il:il + 1]                              # [Bt, 1]
            w = wt_ref[m, il:il + 1, :].astype(jnp.float32)       # [1, Ot]
            qv = qt_ref[m, il:il + 1, :].astype(jnp.float32)      # [1, Ot]
            dwi = dw_ref[i_base + il]                             # scalar (SMEM)
            dbi = db_ref[i_base + il]                             # scalar (SMEM)
            z = xi * w - qv                                       # [Bt, Ot]  (VPU)
            t = 0.5 * jnp.tanh(0.5 * z) + 0.5                     # sigmoid via tanh (1 EUP)
            d = t * jnp.tanh(dwi * t + dbi)                       # 1 EUP + VPU
            s_m = s_m + d
        s_acc[m] = s_acc[m] + s_m

    @pl.when(i_idx == n_i - 1)
    def _finalize():
        acc = jnp.zeros((bt, ot), jnp.float32)
        for m in range(n_branches):
            # sigmoid(s) = 0.5*tanh(0.5*s) + 0.5 ; the +0.5*M is folded below.
            acc = acc + jnp.tanh(0.5 * s_acc[m])
        k = kq_ref[0]
        qs = kq_ref[1]
        y = 0.5 * acc + 0.5 * n_branches
        out_ref[...] = (k * (y - qs)).astype(out_ref.dtype)


# ---------------------------------------------------------------------------
# Host side: parameter layout is prepared once (hoisted out of the forward path).
def prepare_dnm_params(W, q, dw, db, k, qs, *, weight_dtype=jnp.bfloat16,
                       o_tile=None, i_block=None):
    """W, q: [O, M, I]; dw, db: [I]; k, qs: scalars / shape-(1,)."""
    O, M, I = W.shape
    cap = _vmem_capacity_bytes()

    # Per-generation defaults: bigger o tiles where 128 MiB VMEM is available.
    if o_tile is None:
        o_tile = 256 if cap >= 100 * (1 << 20) else 128
    o_tile = max(128, (int(o_tile) // 128) * 128)
    Op = _round_up(O, 128)
    o_tile = min(o_tile, Op)
    Op = _round_up(Op, o_tile)

    # I blocking: whole I when small, otherwise 128-lane blocks (block last dim
    # must be a multiple of 128 or the full dim).
    if i_block is None:
        i_block = I if I <= 128 else 128
    if i_block >= I:
        i_block = I
        Ip = I
    else:
        i_block = max(128, (int(i_block) // 128) * 128)
        if i_block >= I:
            i_block = I
            Ip = I
        else:
            Ip = _round_up(I, i_block)

    # O on lanes, I on sublanes; zero padding over i contributes exactly 0
    # (t = sigmoid(0) = 0.5, d = 0.5 * tanh(0) = 0).
    Wt = jnp.transpose(jnp.asarray(W, jnp.float32), (1, 2, 0)).astype(weight_dtype)
    Qt = jnp.transpose(jnp.asarray(q, jnp.float32), (1, 2, 0)).astype(weight_dtype)
    wt = jnp.zeros((M, Ip, Op), weight_dtype).at[:, :I, :O].set(Wt)
    qt = jnp.zeros((M, Ip, Op), weight_dtype).at[:, :I, :O].set(Qt)
    dwp = jnp.zeros((Ip,), jnp.float32).at[:I].set(jnp.asarray(dw, jnp.float32).reshape(-1))
    dbp = jnp.zeros((Ip,), jnp.float32).at[:I].set(jnp.asarray(db, jnp.float32).reshape(-1))
    kq = jnp.stack([jnp.asarray(k, jnp.float32).reshape(()),
                    jnp.asarray(qs, jnp.float32).reshape(())])

    return dict(wt=wt, qt=qt, dw=dwp, db=dbp, kq=kq,
                O=O, M=M, I=I, Op=Op, Ip=Ip,
                o_tile=o_tile, i_block=i_block,
                vmem_limit_bytes=int(min(3 * cap // 4, 64 * (1 << 20))))


def dnm_linear_m4(x, params, *, b_tile=None):
    """Pallas-backed DNM_Linear_M4 forward. x: [B, I] (or reshapeable to it)."""
    O, M, I = params["O"], params["M"], params["I"]
    Op, Ip = params["Op"], params["Ip"]
    o_tile, i_blk = params["o_tile"], params["i_block"]
    wt, qt = params["wt"], params["qt"]
    dwp, dbp, kq = params["dw"], params["db"], params["kq"]

    x = jnp.asarray(x, jnp.float32).reshape(-1, I)
    B = x.shape[0]

    # Keep the per-step compute tile ~8K f32 elements so the elementwise chain
    # stays register-resident (b_tile=64 at o_tile=128, 32 at o_tile=256).
    if b_tile is None:
        b_tile = max(8, (64 * 128) // o_tile)
    b_tile = _round_up(min(int(b_tile), _round_up(B, 8)), 8)
    Bp = _round_up(B, b_tile)

    xp = jnp.zeros((Bp, Ip), jnp.float32).at[:B, :I].set(x)

    grid = (Op // o_tile, Bp // b_tile, Ip // i_blk)

    wbytes = wt.dtype.itemsize
    cost = pl.CostEstimate(
        flops=8 * B * O * M * I,
        transcendentals=2 * B * O * M * I + B * O * M,
        bytes_accessed=2 * O * M * I * wbytes + 4 * (B * I + B * O + 2 * I + 2),
    )

    out = pl.pallas_call(
        _dnm_m4_kernel,
        out_shape=jax.ShapeDtypeStruct((Bp, Op), jnp.float32),
        grid=grid,
        in_specs=[
            pl.BlockSpec((b_tile, i_blk), lambda o, b, i: (b, i)),        # x (lane-dense)
            pl.BlockSpec((M, i_blk, o_tile), lambda o, b, i: (0, i, o)),  # Synapse_W^T
            pl.BlockSpec((M, i_blk, o_tile), lambda o, b, i: (0, i, o)),  # Synapse_q^T
            pl.BlockSpec(memory_space=pltpu.MemorySpace.SMEM),            # Dendritic_W
            pl.BlockSpec(memory_space=pltpu.MemorySpace.SMEM),            # Dendritic_B
            pl.BlockSpec(memory_space=pltpu.MemorySpace.SMEM),            # [k, qs]
        ],
        out_specs=pl.BlockSpec((b_tile, o_tile), lambda o, b, i: (b, o)),
        scratch_shapes=[pltpu.VMEM((M, b_tile, o_tile), jnp.float32)],
        compiler_params=pltpu.CompilerParams(
            # o leading + "parallel": v7x megacore splits over o so each weight
            # tile is streamed by exactly one core; b/i kept "arbitrary".
            dimension_semantics=("parallel", "arbitrary", "arbitrary"),
            vmem_limit_bytes=params["vmem_limit_bytes"],
        ),
        cost_estimate=cost,
    )(xp, wt, qt, dwp, dbp, kq)

    return out[:B, :O]


# ---------------------------------------------------------------------------
# pure-JAX reference of the torch forward, for the correctness self-check
def _ref_forward(x, W, q, dw, db, k, qs):
    t = jax.nn.sigmoid(x[:, None, None, :] * W[None] - q[None])
    t = t * jnp.tanh(dw * t + db)
    s = jnp.sum(t, axis=3)
    y = jnp.sum(jax.nn.sigmoid(s), axis=2)
    return k * (y - qs)


if __name__ == "__main__":
    input_size, out_size, M, batch = 16, 32, 5, 2

    key = jax.random.PRNGKey(0)
    kW, kDW, kDB, kk, kqs, kx = jax.random.split(key, 6)

    # matches the torch __init__: W ~ U[0,1), q = 0.1, DW/DB ~ U[0,1), k, qs ~ U[0,1)
    W = jax.random.uniform(kW, (out_size, M, input_size), dtype=jnp.float32)
    q = jnp.full((out_size, M, input_size), 0.1, dtype=jnp.float32)
    dw = jax.random.uniform(kDW, (input_size,), dtype=jnp.float32)
    db = jax.random.uniform(kDB, (input_size,), dtype=jnp.float32)
    k = jax.random.uniform(kk, (1,), dtype=jnp.float32)
    qs = jax.random.uniform(kqs, (1,), dtype=jnp.float32)

    x = jax.random.uniform(kx, (batch, input_size), dtype=jnp.float32)

    ref = _ref_forward(x, W, q, dw, db, k, qs)

    # Exact-math path (f32 weight stream): tight check.
    p_f32 = prepare_dnm_params(W, q, dw, db, k, qs, weight_dtype=jnp.float32)
    out_f32 = jax.block_until_ready(dnm_linear_m4(x, p_f32))
    assert out_f32.shape == (batch, out_size), out_f32.shape
    assert jnp.allclose(out_f32, ref, rtol=1e-4, atol=1e-4), (out_f32, ref)

    # Default fast path (bf16 weight stream, f32 compute): loose check.
    p_bf16 = prepare_dnm_params(W, q, dw, db, k, qs)
    out_bf16 = jax.block_until_ready(dnm_linear_m4(x, p_bf16))
    assert out_bf16.shape == (batch, out_size), out_bf16.shape
    assert jnp.allclose(out_bf16, ref, rtol=5e-2, atol=5e-2), (out_bf16, ref)

    print("KERNEL_OK")
</pallas_src>

<mosaic_0001>
module attributes {stable_mosaic.version = 11 : i64} {
  func.func @_dnm_m4_kernel(%arg0: i32, %arg1: i32, %arg2: i32, %arg3: memref<8x16xf32, #tpu.memory_space<vmem>>, %arg4: memref<5x16x128xf32, #tpu.memory_space<vmem>>, %arg5: memref<5x16x128xf32, #tpu.memory_space<vmem>>, %arg6: memref<16xf32, #tpu.memory_space<smem>>, %arg7: memref<16xf32, #tpu.memory_space<smem>>, %arg8: memref<2xf32, #tpu.memory_space<smem>>, %arg9: memref<8x128xf32, #tpu.memory_space<vmem>>, %arg10: memref<5x8x128xf32, #tpu.memory_space<vmem>>) attributes {dimension_semantics = [#tpu.dimension_semantics<parallel>, #tpu.dimension_semantics<arbitrary>, #tpu.dimension_semantics<arbitrary>], iteration_bounds = array<i64: 1, 1, 1>, scalar_prefetch = 0 : i64, scratch_operands = 1 : i64, tpu.core_type = #tpu.core_type<tc>, window_params = [{transform_indices = @transform_0, window_bounds = array<i64: 8, 16>}, {transform_indices = @transform_1, window_bounds = array<i64: 5, 16, 128>}, {transform_indices = @transform_2, window_bounds = array<i64: 5, 16, 128>}, {transform_indices = @transform_3, window_bounds = array<i64: 16>}, {transform_indices = @transform_4, window_bounds = array<i64: 16>}, {transform_indices = @transform_5, window_bounds = array<i64: 2>}, {transform_indices = @transform_6, window_bounds = array<i64: 8, 128>}]} {
    %c0_i32 = arith.constant 0 : i32
    %0 = arith.cmpi eq, %arg2, %c0_i32 : i32
    %1 = arith.extui %0 : i1 to i32
    %c0_i32_0 = arith.constant 0 : i32
    %2 = arith.cmpi ne, %1, %c0_i32_0 : i32
    scf.if %2 {
      %cst_888 = arith.constant 0.000000e+00 : f32
      %2443 = vector.broadcast %cst_888 : f32 to vector<5x8x128xf32>
      %c0_889 = arith.constant 0 : index
      %c0_890 = arith.constant 0 : index
      %c0_891 = arith.constant 0 : index
      %2444 = vector.load %arg10[%c0_889, %c0_890, %c0_891] : memref<5x8x128xf32, #tpu.memory_space<vmem>>, vector<5x8x128xf32>
      tpu.vector_store %arg10[%c0_889, %c0_890, %c0_891], %2443 {strides = array<i32>} : memref<5x8x128xf32, #tpu.memory_space<vmem>>, vector<5x8x128xf32>,
    } else {
    }
    %c0 = arith.constant 0 : index
    %c0_1 = arith.constant 0 : index
    %3 = vector.load %arg3[%c0, %c0_1] : memref<8x16xf32, #tpu.memory_space<vmem>>, vector<8x16xf32>
    %c16_i32 = arith.constant 16 : i32
    %4 = arith.muli %arg2, %c16_i32 : i32
    %cst = arith.constant 0.000000e+00 : f32
    %5 = vector.broadcast %cst : f32 to vector<8x128xf32>
    %6 = vector.extract_strided_slice %3 {offsets = [0, 0], sizes = [8, 1], strides = [1, 1]} : vector<8x16xf32> to vector<8x1xf32>
    %c0_2 = arith.constant 0 : index
    %c0_3 = arith.constant 0 : index
    %c0_4 = arith.constant 0 : index
    %7 = vector.load %arg4[%c0_2, %c0_3, %c0_4] : memref<5x16x128xf32, #tpu.memory_space<vmem>>, vector<1x1x128xf32>
    %8 = vector.shape_cast %7 : vector<1x1x128xf32> to vector<1x128xf32>
    %c0_5 = arith.constant 0 : index
    %c0_6 = arith.constant 0 : index
    %c0_7 = arith.constant 0 : index
    %9 = vector.load %arg5[%c0_5, %c0_6, %c0_7] : memref<5x16x128xf32, #tpu.memory_space<vmem>>, vector<1x1x128xf32>
    %10 = vector.shape_cast %9 : vector<1x1x128xf32> to vector<1x128xf32>
    %c0_i32_8 = arith.constant 0 : i32
    %11 = arith.addi %4, %c0_i32_8 : i32
    %12 = arith.index_cast %11 : i32 to index
    %13 = memref.load %arg6[%12] : memref<16xf32, #tpu.memory_space<smem>>
    %c0_i32_9 = arith.constant 0 : i32
    %14 = arith.addi %4, %c0_i32_9 : i32
    %15 = arith.index_cast %14 : i32 to index
    %16 = memref.load %arg7[%15] : memref<16xf32, #tpu.memory_space<smem>>
    %17 = vector.broadcast %6 : vector<8x1xf32> to vector<8x128xf32>
    %18 = vector.broadcast %8 : vector<1x128xf32> to vector<8x128xf32>
    %19 = arith.mulf %17, %18 : vector<8x128xf32>
    %20 = vector.broadcast %10 : vector<1x128xf32> to vector<8x128xf32>
    %21 = arith.subf %19, %20 : vector<8x128xf32>
    %cst_10 = arith.constant 5.000000e-01 : f32
    %22 = vector.broadcast %cst_10 : f32 to vector<8x128xf32>
    %23 = arith.mulf %22, %21 : vector<8x128xf32>
    %24 = math.tanh %23 : vector<8x128xf32>
    %cst_11 = arith.constant 5.000000e-01 : f32
    %25 = vector.broadcast %cst_11 : f32 to vector<8x128xf32>
    %26 = arith.mulf %25, %24 : vector<8x128xf32>
    %cst_12 = arith.constant 5.000000e-01 : f32
    %27 = vector.broadcast %cst_12 : f32 to vector<8x128xf32>
    %28 = arith.addf %26, %27 : vector<8x128xf32>
    %29 = vector.broadcast %13 : f32 to vector<8x128xf32>
    %30 = arith.mulf %29, %28 : vector<8x128xf32>
    %31 = vector.broadcast %16 : f32 to vector<8x128xf32>
    %32 = arith.addf %30, %31 : vector<8x128xf32>
    %33 = math.tanh %32 : vector<8x128xf32>
    %34 = arith.mulf %28, %33 : vector<8x128xf32>
    %35 = arith.addf %5, %34 : vector<8x128xf32>
    %36 = vector.extract_strided_slice %3 {offsets = [0, 1], sizes = [8, 1], strides = [1, 1]} : vector<8x16xf32> to vector<8x1xf32>
    %c0_13 = arith.constant 0 : index
    %c1 = arith.constant 1 : index
    %c0_14 = arith.constant 0 : index
    %37 = vector.load %arg4[%c0_13, %c1, %c0_14] : memref<5x16x128xf32, #tpu.memory_space<vmem>>, vector<1x1x128xf32>
    %38 = vector.shape_cast %37 : vector<1x1x128xf32> to vector<1x128xf32>
    %c0_15 = arith.constant 0 : index
    %c1_16 = arith.constant 1 : index
    %c0_17 = arith.constant 0 : index
    %39 = vector.load %arg5[%c0_15, %c1_16, %c0_17] : memref<5x16x128xf32, #tpu.memory_space<vmem>>, vector<1x1x128xf32>
    %40 = vector.shape_cast %39 : vector<1x1x128xf32> to vector<1x128xf32>
    %c1_i32 = arith.constant 1 : i32
    %41 = arith.addi %4, %c1_i32 : i32
    %42 = arith.index_cast %41 : i32 to index
    %43 = memref.load %arg6[%42] : memref<16xf32, #tpu.memory_space<smem>>
    %c1_i32_18 = arith.constant 1 : i32
    %44 = arith.addi %4, %c1_i32_18 : i32
    %45 = arith.index_cast %44 : i32 to index
    %46 = memref.load %arg7[%45] : memref<16xf32, #tpu.memory_space<smem>>
    %47 = vector.broadcast %36 : vector<8x1xf32> to vector<8x128xf32>
    %48 = vector.broadcast %38 : vector<1x128xf32> to vector<8x128xf32>
    %49 = arith.mulf %47, %48 : vector<8x128xf32>
    %50 = vector.broadcast %40 : vector<1x128xf32> to vector<8x128xf32>
    %51 = arith.subf %49, %50 : vector<8x128xf32>
    %cst_19 = arith.constant 5.000000e-01 : f32
    %52 = vector.broadcast %cst_19 : f32 to vector<8x128xf32>
    %53 = arith.mulf %52, %51 : vector<8x128xf32>
    %54 = math.tanh %53 : vector<8x128xf32>
    %cst_20 = arith.constant 5.000000e-01 : f32
    %55 = vector.broadcast %cst_20 : f32 to vector<8x128xf32>
    %56 = arith.mulf %55, %54 : vector<8x128xf32>
    %cst_21 = arith.constant 5.000000e-01 : f32
    %57 = vector.broadcast %cst_21 : f32 to vector<8x128xf32>
    %58 = arith.addf %56, %57 : vector<8x128xf32>
    %59 = vector.broadcast %43 : f32 to vector<8x128xf32>
    %60 = arith.mulf %59, %58 : vector<8x128xf32>
    %61 = vector.broadcast %46 : f32 to vector<8x128xf32>
    %62 = arith.addf %60, %61 : vector<8x128xf32>
    %63 = math.tanh %62 : vector<8x128xf32>
    %64 = arith.mulf %58, %63 : vector<8x128xf32>
    %65 = arith.addf %35, %64 : vector<8x128xf32>
    %66 = vector.extract_strided_slice %3 {offsets = [0, 2], sizes = [8, 1], strides = [1, 1]} : vector<8x16xf32> to vector<8x1xf32>
    %c0_22 = arith.constant 0 : index
    %c2 = arith.constant 2 : index
    %c0_23 = arith.constant 0 : index
    %67 = vector.load %arg4[%c0_22, %c2, %c0_23] : memref<5x16x128xf32, #tpu.memory_space<vmem>>, vector<1x1x128xf32>
    %68 = vector.shape_cast %67 : vector<1x1x128xf32> to vector<1x128xf32>
    %c0_24 = arith.constant 0 : index
    %c2_25 = arith.constant 2 : index
    %c0_26 = arith.constant 0 : index
    %69 = vector.load %arg5[%c0_24, %c2_25, %c0_26] : memref<5x16x128xf32, #tpu.memory_space<vmem>>, vector<1x1x128xf32>
    %70 = vector.shape_cast %69 : vector<1x1x128xf32> to vector<1x128xf32>
    %c2_i32 = arith.constant 2 : i32
    %71 = arith.addi %4, %c2_i32 : i32
    %72 = arith.index_cast %71 : i32 to index
    %73 = memref.load %arg6[%72] : memref<16xf32, #tpu.memory_space<smem>>
    %c2_i32_27 = arith.constant 2 : i32
    %74 = arith.addi %4, %c2_i32_27 : i32
    %75 = arith.index_cast %74 : i32 to index
    %76 = memref.load %arg7[%75] : memref<16xf32, #tpu.memory_space<smem>>
    %77 = vector.broadcast %66 : vector<8x1xf32> to vector<8x128xf32>
    %78 = vector.broadcast %68 : vector<1x128xf32> to vector<8x128xf32>
    %79 = arith.mulf %77, %78 : vector<8x128xf32>
    %80 = vector.broadcast %70 : vector<1x128xf32> to vector<8x128xf32>
    %81 = arith.subf %79, %80 : vector<8x128xf32>
    %cst_28 = arith.constant 5.000000e-01 : f32
    %82 = vector.broadcast %cst_28 : f32 to vector<8x128xf32>
    %83 = arith.mulf %82, %81 : vector<8x128xf32>
    %84 = math.tanh %83 : vector<8x128xf32>
    %cst_29 = arith.constant 5.000000e-01 : f32
    %85 = vector.broadcast %cst_29 : f32 to vector<8x128xf32>
    %86 = arith.mulf %85, %84 : vector<8x128xf32>
    %cst_30 = arith.constant 5.000000e-01 : f32
    %87 = vector.broadcast %cst_30 : f32 to vector<8x128xf32>
    %88 = arith.addf %86, %87 : vector<8x128xf32>
    %89 = vector.broadcast %73 : f32 to vector<8x128xf32>
    %90 = arith.mulf %89, %88 : vector<8x128xf32>
    %91 = vector.broadcast %76 : f32 to vector<8x128xf32>
    %92 = arith.addf %90, %91 : vector<8x128xf32>
    %93 = math.tanh %92 : vector<8x128xf32>
    %94 = arith.mulf %88, %93 : vector<8x128xf32>
    %95 = arith.addf %65, %94 : vector<8x128xf32>
    %96 = vector.extract_strided_slice %3 {offsets = [0, 3], sizes = [8, 1], strides = [1, 1]} : vector<8x16xf32> to vector<8x1xf32>
    %c0_31 = arith.constant 0 : index
    %c3 = arith.constant 3 : index
    %c0_32 = arith.constant 0 : index
    %97 = vector.load %arg4[%c0_31, %c3, %c0_32] : memref<5x16x128xf32, #tpu.memory_space<vmem>>, vector<1x1x128xf32>
    %98 = vector.shape_cast %97 : vector<1x1x128xf32> to vector<1x128xf32>
    %c0_33 = arith.constant 0 : index
    %c3_34 = arith.constant 3 : index
    %c0_35 = arith.constant 0 : index
    %99 = vector.load %arg5[%c0_33, %c3_34, %c0_35] : memref<5x16x128xf32, #tpu.memory_space<vmem>>, vector<1x1x128xf32>
    %100 = vector.shape_cast %99 : vector<1x1x128xf32> to vector<1x128xf32>
    %c3_i32 = arith.constant 3 : i32
    %101 = arith.addi %4, %c3_i32 : i32
    %102 = arith.index_cast %101 : i32 to index
    %103 = memref.load %arg6[%102] : memref<16xf32, #tpu.memory_space<smem>>
    %c3_i32_36 = arith.constant 3 : i32
    %104 = arith.addi %4, %c3_i32_36 : i32
    %105 = arith.index_cast %104 : i32 to index
    %106 = memref.load %arg7[%105] : memref<16xf32, #tpu.memory_space<smem>>
    %107 = vector.broadcast %96 : vector<8x1xf32> to vector<8x128xf32>
    %108 = vector.broadcast %98 : vector<1x128xf32> to vector<8x128xf32>
    %109 = arith.mulf %107, %108 : vector<8x128xf32>
    %110 = vector.broadcast %100 : vector<1x128xf32> to vector<8x128xf32>
    %111 = arith.subf %109, %110 : vector<8x128xf32>
    %cst_37 = arith.constant 5.000000e-01 : f32
    %112 = vector.broadcast %cst_37 : f32 to vector<8x128xf32>
    %113 = arith.mulf %112, %111 : vector<8x128xf32>
    %114 = math.tanh %113 : vector<8x128xf32>
    %cst_38 = arith.constant 5.000000e-01 : f32
    %115 = vector.broadcast %cst_38 : f32 to vector<8x128xf32>
    %116 = arith.mulf %115, %114 : vector<8x128xf32>
    %cst_39 = arith.constant 5.000000e-01 : f32
    %117 = vector.broadcast %cst_39 : f32 to vector<8x128xf32>
    %118 = arith.addf %116, %117 : vector<8x128xf32>
    %119 = vector.broadcast %103 : f32 to vector<8x128xf32>
    %120 = arith.mulf %119, %118 : vector<8x128xf32>
    %121 = vector.broadcast %106 : f32 to vector<8x128xf32>
    %122 = arith.addf %120, %121 : vector<8x128xf32>
    %123 = math.tanh %122 : vector<8x128xf32>
    %124 = arith.mulf %118, %123 : vector<8x128xf32>
    %125 = arith.addf %95, %124 : vector<8x128xf32>
    %126 = vector.extract_strided_slice %3 {offsets = [0, 4], sizes = [8, 1], strides = [1, 1]} : vector<8x16xf32> to vector<8x1xf32>
    %c0_40 = arith.constant 0 : index
    %c4 = arith.constant 4 : index
    %c0_41 = arith.constant 0 : index
    %127 = vector.load %arg4[%c0_40, %c4, %c0_41] : memref<5x16x128xf32, #tpu.memory_space<vmem>>, vector<1x1x128xf32>
    %128 = vector.shape_cast %127 : vector<1x1x128xf32> to vector<1x128xf32>
    %c0_42 = arith.constant 0 : index
    %c4_43 = arith.constant 4 : index
    %c0_44 = arith.constant 0 : index
    %129 = vector.load %arg5[%c0_42, %c4_43, %c0_44] : memref<5x16x128xf32, #tpu.memory_space<vmem>>, vector<1x1x128xf32>
    %130 = vector.shape_cast %129 : vector<1x1x128xf32> to vector<1x128xf32>
    %c4_i32 = arith.constant 4 : i32
    %131 = arith.addi %4, %c4_i32 : i32
    %132 = arith.index_cast %131 : i32 to index
    %133 = memref.load %arg6[%132] : memref<16xf32, #tpu.memory_space<smem>>
    %c4_i32_45 = arith.constant 4 : i32
    %134 = arith.addi %4, %c4_i32_45 : i32
    %135 = arith.index_cast %134 : i32 to index
    %136 = memref.load %arg7[%135] : memref<16xf32, #tpu.memory_space<smem>>
    %137 = vector.broadcast %126 : vector<8x1xf32> to vector<8x128xf32>
    %138 = vector.broadcast %128 : vector<1x128xf32> to vector<8x128xf32>
    %139 = arith.mulf %137, %138 : vector<8x128xf32>
    %140 = vector.broadcast %130 : vector<1x128xf32> to vector<8x128xf32>
    %141 = arith.subf %139, %140 : vector<8x128xf32>
    %cst_46 = arith.constant 5.000000e-01 : f32
    %142 = vector.broadcast %cst_46 : f32 to vector<8x128xf32>
    %143 = arith.mulf %142, %141 : vector<8x128xf32>
    %144 = math.tanh %143 : vector<8x128xf32>
    %cst_47 = arith.constant 5.000000e-01 : f32
    %145 = vector.broadcast %cst_47 : f32 to vector<8x128xf32>
    %146 = arith.mulf %145, %144 : vector<8x128xf32>
    %cst_48 = arith.constant 5.000000e-01 : f32
    %147 = vector.broadcast %cst_48 : f32 to vector<8x128xf32>
    %148 = arith.addf %146, %147 : vector<8x128xf32>
    %149 = vector.broadcast %133 : f32 to vector<8x128xf32>
    %150 = arith.mulf %149, %148 : vector<8x128xf32>
    %151 = vector.broadcast %136 : f32 to vector<8x128xf32>
    %152 = arith.addf %150, %151 : vector<8x128xf32>
    %153 = math.tanh %152 : vector<8x128xf32>
    %154 = arith.mulf %148, %153 : vector<8x128xf32>
    %155 = arith.addf %125, %154 : vector<8x128xf32>
    %156 = vector.extract_strided_slice %3 {offsets = [0, 5], sizes = [8, 1], strides = [1, 1]} : vector<8x16xf32> to vector<8x1xf32>
    %c0_49 = arith.constant 0 : index
    %c5 = arith.constant 5 : index
    %c0_50 = arith.constant 0 : index
    %157 = vector.load %arg4[%c0_49, %c5, %c0_50] : memref<5x16x128xf32, #tpu.memory_space<vmem>>, vector<1x1x128xf32>
    %158 = vector.shape_cast %157 : vector<1x1x128xf32> to vector<1x128xf32>
    %c0_51 = arith.constant 0 : index
    %c5_52 = arith.constant 5 : index
    %c0_53 = arith.constant 0 : index
    %159 = vector.load %arg5[%c0_51, %c5_52, %c0_53] : memref<5x16x128xf32, #tpu.memory_space<vmem>>, vector<1x1x128xf32>
    %160 = vector.shape_cast %159 : vector<1x1x128xf32> to vector<1x128xf32>
    %c5_i32 = arith.constant 5 : i32
    %161 = arith.addi %4, %c5_i32 : i32
    %162 = arith.index_cast %161 : i32 to index
    %163 = memref.load %arg6[%162] : memref<16xf32, #tpu.memory_space<smem>>
    %c5_i32_54 = arith.constant 5 : i32
    %164 = arith.addi %4, %c5_i32_54 : i32
    %165 = arith.index_cast %164 : i32 to index
    %166 = memref.load %arg7[%165] : memref<16xf32, #tpu.memory_space<smem>>
    %167 = vector.broadcast %156 : vector<8x1xf32> to vector<8x128xf32>
    %168 = vector.broadcast %158 : vector<1x128xf32> to vector<8x128xf32>
    %169 = arith.mulf %167, %168 : vector<8x128xf32>
    %170 = vector.broadcast %160 : vector<1x128xf32> to vector<8x128xf32>
    %171 = arith.subf %169, %170 : vector<8x128xf32>
    %cst_55 = arith.constant 5.000000e-01 : f32
    %172 = vector.broadcast %cst_55 : f32 to vector<8x128xf32>
    %173 = arith.mulf %172, %171 : vector<8x128xf32>
    %174 = math.tanh %173 : vector<8x128xf32>
    %cst_56 = arith.constant 5.000000e-01 : f32
    %175 = vector.broadcast %cst_56 : f32 to vector<8x128xf32>
    %176 = arith.mulf %175, %174 : vector<8x128xf32>
    %cst_57 = arith.constant 5.000000e-01 : f32
    %177 = vector.broadcast %cst_57 : f32 to vector<8x128xf32>
    %178 = arith.addf %176, %177 : vector<8x128xf32>
    %179 = vector.broadcast %163 : f32 to vector<8x128xf32>
    %180 = arith.mulf %179, %178 : vector<8x128xf32>
    %181 = vector.broadcast %166 : f32 to vector<8x128xf32>
    %182 = arith.addf %180, %181 : vector<8x128xf32>
    %183 = math.tanh %182 : vector<8x128xf32>
    %184 = arith.mulf %178, %183 : vector<8x128xf32>
    %185 = arith.addf %155, %184 : vector<8x128xf32>
    %186 = vector.extract_strided_slice %3 {offsets = [0, 6], sizes = [8, 1], strides = [1, 1]} : vector<8x16xf32> to vector<8x1xf32>
    %c0_58 = arith.constant 0 : index
    %c6 = arith.constant 6 : index
    %c0_59 = arith.constant 0 : index
    %187 = vector.load %arg4[%c0_58, %c6, %c0_59] : memref<5x16x128xf32, #tpu.memory_space<vmem>>, vector<1x1x128xf32>
    %188 = vector.shape_cast %187 : vector<1x1x128xf32> to vector<1x128xf32>
    %c0_60 = arith.constant 0 : index
    %c6_61 = arith.constant 6 : index
    %c0_62 = arith.constant 0 : index
    %189 = vector.load %arg5[%c0_60, %c6_61, %c0_62] : memref<5x16x128xf32, #tpu.memory_space<vmem>>, vector<1x1x128xf32>
    %190 = vector.shape_cast %189 : vector<1x1x128xf32> to vector<1x128xf32>
    %c6_i32 = arith.constant 6 : i32
    %191 = arith.addi %4, %c6_i32 : i32
    %192 = arith.index_cast %191 : i32 to index
    %193 = memref.load %arg6[%192] : memref<16xf32, #tpu.memory_space<smem>>
    %c6_i32_63 = arith.constant 6 : i32
    %194 = arith.addi %4, %c6_i32_63 : i32
    %195 = arith.index_cast %194 : i32 to index
    %196 = memref.load %arg7[%195] : memref<16xf32, #tpu.memory_space<smem>>
    %197 = vector.broadcast %186 : vector<8x1xf32> to vector<8x128xf32>
    %198 = vector.broadcast %188 : vector<1x128xf32> to vector<8x128xf32>
    %199 = arith.mulf %197, %198 : vector<8x128xf32>
    %200 = vector.broadcast %190 : vector<1x128xf32> to vector<8x128xf32>
    %201 = arith.subf %199, %200 : vector<8x128xf32>
    %cst_64 = arith.constant 5.000000e-01 : f32
    %202 = vector.broadcast %cst_64 : f32 to vector<8x128xf32>
    %203 = arith.mulf %202, %201 : vector<8x128xf32>
    %204 = math.tanh %203 : vector<8x128xf32>
    %cst_65 = arith.constant 5.000000e-01 : f32
    %205 = vector.broadcast %cst_65 : f32 to vector<8x128xf32>
    %206 = arith.mulf %205, %204 : vector<8x128xf32>
    %cst_66 = arith.constant 5.000000e-01 : f32
    %207 = vector.broadcast %cst_66 : f32 to vector<8x128xf32>
    %208 = arith.addf %206, %207 : vector<8x128xf32>
    %209 = vector.broadcast %193 : f32 to vector<8x128xf32>
    %210 = arith.mulf %209, %208 : vector<8x128xf32>
    %211 = vector.broadcast %196 : f32 to vector<8x128xf32>
    %212 = arith.addf %210, %211 : vector<8x128xf32>
    %213 = math.tanh %212 : vector<8x128xf32>
    %214 = arith.mulf %208, %213 : vector<8x128xf32>
    %215 = arith.addf %185, %214 : vector<8x128xf32>
    %216 = vector.extract_strided_slice %3 {offsets = [0, 7], sizes = [8, 1], strides = [1, 1]} : vector<8x16xf32> to vector<8x1xf32>
    %c0_67 = arith.constant 0 : index
    %c7 = arith.constant 7 : index
    %c0_68 = arith.constant 0 : index
    %217 = vector.load %arg4[%c0_67, %c7, %c0_68] : memref<5x16x128xf32, #tpu.memory_space<vmem>>, vector<1x1x128xf32>
    %218 = vector.shape_cast %217 : vector<1x1x128xf32> to vector<1x128xf32>
    %c0_69 = arith.constant 0 : index
    %c7_70 = arith.constant 7 : index
    %c0_71 = arith.constant 0 : index
    %219 = vector.load %arg5[%c0_69, %c7_70, %c0_71] : memref<5x16x128xf32, #tpu.memory_space<vmem>>, vector<1x1x128xf32>
    %220 = vector.shape_cast %219 : vector<1x1x128xf32> to vector<1x128xf32>
    %c7_i32 = arith.constant 7 : i32
    %221 = arith.addi %4, %c7_i32 : i32
    %222 = arith.index_cast %221 : i32 to index
    %223 = memref.load %arg6[%222] : memref<16xf32, #tpu.memory_space<smem>>
    %c7_i32_72 = arith.constant 7 : i32
    %224 = arith.addi %4, %c7_i32_72 : i32
    %225 = arith.index_cast %224 : i32 to index
    %226 = memref.load %arg7[%225] : memref<16xf32, #tpu.memory_space<smem>>
    %227 = vector.broadcast %216 : vector<8x1xf32> to vector<8x128xf32>
    %228 = vector.broadcast %218 : vector<1x128xf32> to vector<8x128xf32>
    %229 = arith.mulf %227, %228 : vector<8x128xf32>
    %230 = vector.broadcast %220 : vector<1x128xf32> to vector<8x128xf32>
    %231 = arith.subf %229, %230 : vector<8x128xf32>
    %cst_73 = arith.constant 5.000000e-01 : f32
    %232 = vector.broadcast %cst_73 : f32 to vector<8x128xf32>
    %233 = arith.mulf %232, %231 : vector<8x128xf32>
    %234 = math.tanh %233 : vector<8x128xf32>
    %cst_74 = arith.constant 5.000000e-01 : f32
    %235 = vector.broadcast %cst_74 : f32 to vector<8x128xf32>
    %236 = arith.mulf %235, %234 : vector<8x128xf32>
    %cst_75 = arith.constant 5.000000e-01 : f32
    %237 = vector.broadcast %cst_75 : f32 to vector<8x128xf32>
    %238 = arith.addf %236, %237 : vector<8x128xf32>
    %239 = vector.broadcast %223 : f32 to vector<8x128xf32>
    %240 = arith.mulf %239, %238 : vector<8x128xf32>
    %241 = vector.broadcast %226 : f32 to vector<8x128xf32>
    %242 = arith.addf %240, %241 : vector<8x128xf32>
    %243 = math.tanh %242 : vector<8x128xf32>
    %244 = arith.mulf %238, %243 : vector<8x128xf32>
    %245 = arith.addf %215, %244 : vector<8x128xf32>
    %246 = vector.extract_strided_slice %3 {offsets = [0, 8], sizes = [8, 1], strides = [1, 1]} : vector<8x16xf32> to vector<8x1xf32>
    %c0_76 = arith.constant 0 : index
    %c8 = arith.constant 8 : index
    %c0_77 = arith.constant 0 : index
    %247 = vector.load %arg4[%c0_76, %c8, %c0_77] : memref<5x16x128xf32, #tpu.memory_space<vmem>>, vector<1x1x128xf32>
    %248 = vector.shape_cast %247 : vector<1x1x128xf32> to vector<1x128xf32>
    %c0_78 = arith.constant 0 : index
    %c8_79 = arith.constant 8 : index
    %c0_80 = arith.constant 0 : index
    %249 = vector.load %arg5[%c0_78, %c8_79, %c0_80] : memref<5x16x128xf32, #tpu.memory_space<vmem>>, vector<1x1x128xf32>
    %250 = vector.shape_cast %249 : vector<1x1x128xf32> to vector<1x128xf32>
    %c8_i32 = arith.constant 8 : i32
    %251 = arith.addi %4, %c8_i32 : i32
    %252 = arith.index_cast %251 : i32 to index
    %253 = memref.load %arg6[%252] : memref<16xf32, #tpu.memory_space<smem>>
    %c8_i32_81 = arith.constant 8 : i32
    %254 = arith.addi %4, %c8_i32_81 : i32
    %255 = arith.index_cast %254 : i32 to index
    %256 = memref.load %arg7[%255] : memref<16xf32, #tpu.memory_space<smem>>
    %257 = vector.broadcast %246 : vector<8x1xf32> to vector<8x128xf32>
    %258 = vector.broadcast %248 : vector<1x128xf32> to vector<8x128xf32>
    %259 = arith.mulf %257, %258 : vector<8x128xf32>
    %260 = vector.broadcast %250 : vector<1x128xf32> to vector<8x128xf32>
    %261 = arith.subf %259, %260 : vector<8x128xf32>
    %cst_82 = arith.constant 5.000000e-01 : f32
    %262 = vector.broadcast %cst_82 : f32 to vector<8x128xf32>
    %263 = arith.mulf %262, %261 : vector<8x128xf32>
    %264 = math.tanh %263 : vector<8x128xf32>
    %cst_83 = arith.constant 5.000000e-01 : f32
    %265 = vector.broadcast %cst_83 : f32 to vector<8x128xf32>
    %266 = arith.mulf %265, %264 : vector<8x128xf32>
    %cst_84 = arith.constant 5.000000e-01 : f32
    %267 = vector.broadcast %cst_84 : f32 to vector<8x128xf32>
    %268 = arith.addf %266, %267 : vector<8x128xf32>
    %269 = vector.broadcast %253 : f32 to vector<8x128xf32>
    %270 = arith.mulf %269, %268 : vector<8x128xf32>
    %271 = vector.broadcast %256 : f32 to vector<8x128xf32>
    %272 = arith.addf %270, %271 : vector<8x128xf32>
    %273 = math.tanh %272 : vector<8x128xf32>
    %274 = arith.mulf %268, %273 : vector<8x128xf32>
    %275 = arith.addf %245, %274 : vector<8x128xf32>
    %276 = vector.extract_strided_slice %3 {offsets = [0, 9], sizes = [8, 1], strides = [1, 1]} : vector<8x16xf32> to vector<8x1xf32>
    %c0_85 = arith.constant 0 : index
    %c9 = arith.constant 9 : index
    %c0_86 = arith.constant 0 : index
    %277 = vector.load %arg4[%c0_85, %c9, %c0_86] : memref<5x16x128xf32, #tpu.memory_space<vmem>>, vector<1x1x128xf32>
    %278 = vector.shape_cast %277 : vector<1x1x128xf32> to vector<1x128xf32>
    %c0_87 = arith.constant 0 : index
    %c9_88 = arith.constant 9 : index
    %c0_89 = arith.constant 0 : index
    %279 = vector.load %arg5[%c0_87, %c9_88, %c0_89] : memref<5x16x128xf32, #tpu.memory_space<vmem>>, vector<1x1x128xf32>
    %280 = vector.shape_cast %279 : vector<1x1x128xf32> to vector<1x128xf32>
    %c9_i32 = arith.constant 9 : i32
    %281 = arith.addi %4, %c9_i32 : i32
    %282 = arith.index_cast %281 : i32 to index
    %283 = memref.load %arg6[%282] : memref<16xf32, #tpu.memory_space<smem>>
    %c9_i32_90 = arith.constant 9 : i32
    %284 = arith.addi %4, %c9_i32_90 : i32
    %285 = arith.index_cast %284 : i32 to index
    %286 = memref.load %arg7[%285] : memref<16xf32, #tpu.memory_space<smem>>
    %287 = vector.broadcast %276 : vector<8x1xf32> to vector<8x128xf32>
    %288 = vector.broadcast %278 : vector<1x128xf32> to vector<8x128xf32>
    %289 = arith.mulf %287, %288 : vector<8x128xf32>
    %290 = vector.broadcast %280 : vector<1x128xf32> to vector<8x128xf32>
    %291 = arith.subf %289, %290 : vector<8x128xf32>
    %cst_91 = arith.constant 5.000000e-01 : f32
    %292 = vector.broadcast %cst_91 : f32 to vector<8x128xf32>
    %293 = arith.mulf %292, %291 : vector<8x128xf32>
    %294 = math.tanh %293 : vector<8x128xf32>
    %cst_92 = arith.constant 5.000000e-01 : f32
    %295 = vector.broadcast %cst_92 : f32 to vector<8x128xf32>
    %296 = arith.mulf %295, %294 : vector<8x128xf32>
    %cst_93 = arith.constant 5.000000e-01 : f32
    %297 = vector.broadcast %cst_93 : f32 to vector<8x128xf32>
    %298 = arith.addf %296, %297 : vector<8x128xf32>
    %299 = vector.broadcast %283 : f32 to vector<8x128xf32>
    %300 = arith.mulf %299, %298 : vector<8x128xf32>
    %301 = vector.broadcast %286 : f32 to vector<8x128xf32>
    %302 = arith.addf %300, %301 : vector<8x128xf32>
    %303 = math.tanh %302 : vector<8x128xf32>
    %304 = arith.mulf %298, %303 : vector<8x128xf32>
    %305 = arith.addf %275, %304 : vector<8x128xf32>
    %306 = vector.extract_strided_slice %3 {offsets = [0, 10], sizes = [8, 1], strides = [1, 1]} : vector<8x16xf32> to vector<8x1xf32>
    %c0_94 = arith.constant 0 : index
    %c10 = arith.constant 10 : index
    %c0_95 = arith.constant 0 : index
    %307 = vector.load %arg4[%c0_94, %c10, %c0_95] : memref<5x16x128xf32, #tpu.memory_space<vmem>>, vector<1x1x128xf32>
    %308 = vector.shape_cast %307 : vector<1x1x128xf32> to vector<1x128xf32>
    %c0_96 = arith.constant 0 : index
    %c10_97 = arith.constant 10 : index
    %c0_98 = arith.constant 0 : index
    %309 = vector.load %arg5[%c0_96, %c10_97, %c0_98] : memref<5x16x128xf32, #tpu.memory_space<vmem>>, vector<1x1x128xf32>
    %310 = vector.shape_cast %309 : vector<1x1x128xf32> to vector<1x128xf32>
    %c10_i32 = arith.constant 10 : i32
    %311 = arith.addi %4, %c10_i32 : i32
    %312 = arith.index_cast %311 : i32 to index
    %313 = memref.load %arg6[%312] : memref<16xf32, #tpu.memory_space<smem>>
    %c10_i32_99 = arith.constant 10 : i32
    %314 = arith.addi %4, %c10_i32_99 : i32
    %315 = arith.index_cast %314 : i32 to index
    %316 = memref.load %arg7[%315] : memref<16xf32, #tpu.memory_space<smem>>
    %317 = vector.broadcast %306 : vector<8x1xf32> to vector<8x128xf32>
    %318 = vector.broadcast %308 : vector<1x128xf32> to vector<8x128xf32>
    %319 = arith.mulf %317, %318 : vector<8x128xf32>
    %320 = vector.broadcast %310 : vector<1x128xf32> to vector<8x128xf32>
    %321 = arith.subf %319, %320 : vector<8x128xf32>
    %cst_100 = arith.constant 5.000000e-01 : f32
    %322 = vector.broadcast %cst_100 : f32 to vector<8x128xf32>
    %323 = arith.mulf %322, %321 : vector<8x128xf32>
    %324 = math.tanh %323 : vector<8x128xf32>
    %cst_101 = arith.constant 5.000000e-01 : f32
    %325 = vector.broadcast %cst_101 : f32 to vector<8x128xf32>
    %326 = arith.mulf %325, %324 : vector<8x128xf32>
    %cst_102 = arith.constant 5.000000e-01 : f32
    %327 = vector.broadcast %cst_102 : f32 to vector<8x128xf32>
    %328 = arith.addf %326, %327 : vector<8x128xf32>
    %329 = vector.broadcast %313 : f32 to vector<8x128xf32>
    %330 = arith.mulf %329, %328 : vector<8x128xf32>
    %331 = vector.broadcast %316 : f32 to vector<8x128xf32>
    %332 = arith.addf %330, %331 : vector<8x128xf32>
    %333 = math.tanh %332 : vector<8x128xf32>
    %334 = arith.mulf %328, %333 : vector<8x128xf32>
    %335 = arith.addf %305, %334 : vector<8x128xf32>
    %336 = vector.extract_strided_slice %3 {offsets = [0, 11], sizes = [8, 1], strides = [1, 1]} : vector<8x16xf32> to vector<8x1xf32>
    %c0_103 = arith.constant 0 : index
    %c11 = arith.constant 11 : index
    %c0_104 = arith.constant 0 : index
    %337 = vector.load %arg4[%c0_103, %c11, %c0_104] : memref<5x16x128xf32, #tpu.memory_space<vmem>>, vector<1x1x128xf32>
    %338 = vector.shape_cast %337 : vector<1x1x128xf32> to vector<1x128xf32>
    %c0_105 = arith.constant 0 : index
    %c11_106 = arith.constant 11 : index
    %c0_107 = arith.constant 0 : index
    %339 = vector.load %arg5[%c0_105, %c11_106, %c0_107] : memref<5x16x128xf32, #tpu.memory_space<vmem>>, vector<1x1x128xf32>
    %340 = vector.shape_cast %339 : vector<1x1x128xf32> to vector<1x128xf32>
    %c11_i32 = arith.constant 11 : i32
    %341 = arith.addi %4, %c11_i32 : i32
    %342 = arith.index_cast %341 : i32 to index
    %343 = memref.load %arg6[%342] : memref<16xf32, #tpu.memory_space<smem>>
    %c11_i32_108 = arith.constant 11 : i32
    %344 = arith.addi %4, %c11_i32_108 : i32
    %345 = arith.index_cast %344 : i32 to index
    %346 = memref.load %arg7[%345] : memref<16xf32, #tpu.memory_space<smem>>
    %347 = vector.broadcast %336 : vector<8x1xf32> to vector<8x128xf32>
    %348 = vector.broadcast %338 : vector<1x128xf32> to vector<8x128xf32>
    %349 = arith.mulf %347, %348 : vector<8x128xf32>
    %350 = vector.broadcast %340 : vector<1x128xf32> to vector<8x128xf32>
    %351 = arith.subf %349, %350 : vector<8x128xf32>
    %cst_109 = arith.constant 5.000000e-01 : f32
    %352 = vector.broadcast %cst_109 : f32 to vector<8x128xf32>
    %353 = arith.mulf %352, %351 : vector<8x128xf32>
    %354 = math.tanh %353 : vector<8x128xf32>
    %cst_110 = arith.constant 5.000000e-01 : f32
    %355 = vector.broadcast %cst_110 : f32 to vector<8x128xf32>
    %356 = arith.mulf %355, %354 : vector<8x128xf32>
    %cst_111 = arith.constant 5.000000e-01 : f32
    %357 = vector.broadcast %cst_111 : f32 to vector<8x128xf32>
    %358 = arith.addf %356, %357 : vector<8x128xf32>
    %359 = vector.broadcast %343 : f32 to vector<8x128xf32>
    %360 = arith.mulf %359, %358 : vector<8x128xf32>
    %361 = vector.broadcast %346 : f32 to vector<8x128xf32>
    %362 = arith.addf %360, %361 : vector<8x128xf32>
    %363 = math.tanh %362 : vector<8x128xf32>
    %364 = arith.mulf %358, %363 : vector<8x128xf32>
    %365 = arith.addf %335, %364 : vector<8x128xf32>
    %366 = vector.extract_strided_slice %3 {offsets = [0, 12], sizes = [8, 1], strides = [1, 1]} : vector<8x16xf32> to vector<8x1xf32>
    %c0_112 = arith.constant 0 : index
    %c12 = arith.constant 12 : index
    %c0_113 = arith.constant 0 : index
    %367 = vector.load %arg4[%c0_112, %c12, %c0_113] : memref<5x16x128xf32, #tpu.memory_space<vmem>>, vector<1x1x128xf32>
    %368 = vector.shape_cast %367 : vector<1x1x128xf32> to vector<1x128xf32>
    %c0_114 = arith.constant 0 : index
    %c12_115 = arith.constant 12 : index
    %c0_116 = arith.constant 0 : index
    %369 = vector.load %arg5[%c0_114, %c12_115, %c0_116] : memref<5x16x128xf32, #tpu.memory_space<vmem>>, vector<1x1x128xf32>
    %370 = vector.shape_cast %369 : vector<1x1x128xf32> to vector<1x128xf32>
    %c12_i32 = arith.constant 12 : i32
    %371 = arith.addi %4, %c12_i32 : i32
    %372 = arith.index_cast %371 : i32 to index
    %373 = memref.load %arg6[%372] : memref<16xf32, #tpu.memory_space<smem>>
    %c12_i32_117 = arith.constant 12 : i32
    %374 = arith.addi %4, %c12_i32_117 : i32
    %375 = arith.index_cast %374 : i32 to index
    %376 = memref.load %arg7[%375] : memref<16xf32, #tpu.memory_space<smem>>
    %377 = vector.broadcast %366 : vector<8x1xf32> to vector<8x128xf32>
    %378 = vector.broadcast %368 : vector<1x128xf32> to vector<8x128xf32>
    %379 = arith.mulf %377, %378 : vector<8x128xf32>
    %380 = vector.broadcast %370 : vector<1x128xf32> to vector<8x128xf32>
    %381 = arith.subf %379, %380 : vector<8x128xf32>
    %cst_118 = arith.constant 5.000000e-01 : f32
    %382 = vector.broadcast %cst_118 : f32 to vector<8x128xf32>
    %383 = arith.mulf %382, %381 : vector<8x128xf32>
    %384 = math.tanh %383 : vector<8x128xf32>
    %cst_119 = arith.constant 5.000000e-01 : f32
    %385 = vector.broadcast %cst_119 : f32 to vector<8x128xf32>
    %386 = arith.mulf %385, %384 : vector<8x128xf32>
    %cst_120 = arith.constant 5.000000e-01 : f32
    %387 = vector.broadcast %cst_120 : f32 to vector<8x128xf32>
    %388 = arith.addf %386, %387 : vector<8x128xf32>
    %389 = vector.broadcast %373 : f32 to vector<8x128xf32>
    %390 = arith.mulf %389, %388 : vector<8x128xf32>
    %391 = vector.broadcast %376 : f32 to vector<8x128xf32>
    %392 = arith.addf %390, %391 : vector<8x128xf32>
    %393 = math.tanh %392 : vector<8x128xf32>
    %394 = arith.mulf %388, %393 : vector<8x128xf32>
    %395 = arith.addf %365, %394 : vector<8x128xf32>
    %396 = vector.extract_strided_slice %3 {offsets = [0, 13], sizes = [8, 1], strides = [1, 1]} : vector<8x16xf32> to vector<8x1xf32>
    %c0_121 = arith.constant 0 : index
    %c13 = arith.constant 13 : index
    %c0_122 = arith.constant 0 : index
    %397 = vector.load %arg4[%c0_121, %c13, %c0_122] : memref<5x16x128xf32, #tpu.memory_space<vmem>>, vector<1x1x128xf32>
    %398 = vector.shape_cast %397 : vector<1x1x128xf32> to vector<1x128xf32>
    %c0_123 = arith.constant 0 : index
    %c13_124 = arith.constant 13 : index
    %c0_125 = arith.constant 0 : index
    %399 = vector.load %arg5[%c0_123, %c13_124, %c0_125] : memref<5x16x128xf32, #tpu.memory_space<vmem>>, vector<1x1x128xf32>
    %400 = vector.shape_cast %399 : vector<1x1x128xf32> to vector<1x128xf32>
    %c13_i32 = arith.constant 13 : i32
    %401 = arith.addi %4, %c13_i32 : i32
    %402 = arith.index_cast %401 : i32 to index
    %403 = memref.load %arg6[%402] : memref<16xf32, #tpu.memory_space<smem>>
    %c13_i32_126 = arith.constant 13 : i32
    %404 = arith.addi %4, %c13_i32_126 : i32
    %405 = arith.index_cast %404 : i32 to index
    %406 = memref.load %arg7[%405] : memref<16xf32, #tpu.memory_space<smem>>
    %407 = vector.broadcast %396 : vector<8x1xf32> to vector<8x128xf32>
    %408 = vector.broadcast %398 : vector<1x128xf32> to vector<8x128xf32>
    %409 = arith.mulf %407, %408 : vector<8x128xf32>
    %410 = vector.broadcast %400 : vector<1x128xf32> to vector<8x128xf32>
    %411 = arith.subf %409, %410 : vector<8x128xf32>
    %cst_127 = arith.constant 5.000000e-01 : f32
    %412 = vector.broadcast %cst_127 : f32 to vector<8x128xf32>
    %413 = arith.mulf %412, %411 : vector<8x128xf32>
    %414 = math.tanh %413 : vector<8x128xf32>
    %cst_128 = arith.constant 5.000000e-01 : f32
    %415 = vector.broadcast %cst_128 : f32 to vector<8x128xf32>
    %416 = arith.mulf %415, %414 : vector<8x128xf32>
    %cst_129 = arith.constant 5.000000e-01 : f32
    %417 = vector.broadcast %cst_129 : f32 to vector<8x128xf32>
    %418 = arith.addf %416, %417 : vector<8x128xf32>
    %419 = vector.broadcast %403 : f32 to vector<8x128xf32>
    %420 = arith.mulf %419, %418 : vector<8x128xf32>
    %421 = vector.broadcast %406 : f32 to vector<8x128xf32>
    %422 = arith.addf %420, %421 : vector<8x128xf32>
    %423 = math.tanh %422 : vector<8x128xf32>
    %424 = arith.mulf %418, %423 : vector<8x128xf32>
    %425 = arith.addf %395, %424 : vector<8x128xf32>
    %426 = vector.extract_strided_slice %3 {offsets = [0, 14], sizes = [8, 1], strides = [1, 1]} : vector<8x16xf32> to vector<8x1xf32>
    %c0_130 = arith.constant 0 : index
    %c14 = arith.constant 14 : index
    %c0_131 = arith.constant 0 : index
    %427 = vector.load %arg4[%c0_130, %c14, %c0_131] : memref<5x16x128xf32, #tpu.memory_space<vmem>>, vector<1x1x128xf32>
    %428 = vector.shape_cast %427 : vector<1x1x128xf32> to vector<1x128xf32>
    %c0_132 = arith.constant 0 : index
    %c14_133 = arith.constant 14 : index
    %c0_134 = arith.constant 0 : index
    %429 = vector.load %arg5[%c0_132, %c14_133, %c0_134] : memref<5x16x128xf32, #tpu.memory_space<vmem>>, vector<1x1x128xf32>
    %430 = vector.shape_cast %429 : vector<1x1x128xf32> to vector<1x128xf32>
    %c14_i32 = arith.constant 14 : i32
    %431 = arith.addi %4, %c14_i32 : i32
    %432 = arith.index_cast %431 : i32 to index
    %433 = memref.load %arg6[%432] : memref<16xf32, #tpu.memory_space<smem>>
    %c14_i32_135 = arith.constant 14 : i32
    %434 = arith.addi %4, %c14_i32_135 : i32
    %435 = arith.index_cast %434 : i32 to index
    %436 = memref.load %arg7[%435] : memref<16xf32, #tpu.memory_space<smem>>
    %437 = vector.broadcast %426 : vector<8x1xf32> to vector<8x128xf32>
    %438 = vector.broadcast %428 : vector<1x128xf32> to vector<8x128xf32>
    %439 = arith.mulf %437, %438 : vector<8x128xf32>
    %440 = vector.broadcast %430 : vector<1x128xf32> to vector<8x128xf32>
    %441 = arith.subf %439, %440 : vector<8x128xf32>
    %cst_136 = arith.constant 5.000000e-01 : f32
    %442 = vector.broadcast %cst_136 : f32 to vector<8x128xf32>
    %443 = arith.mulf %442, %441 : vector<8x128xf32>
    %444 = math.tanh %443 : vector<8x128xf32>
    %cst_137 = arith.constant 5.000000e-01 : f32
    %445 = vector.broadcast %cst_137 : f32 to vector<8x128xf32>
    %446 = arith.mulf %445, %444 : vector<8x128xf32>
    %cst_138 = arith.constant 5.000000e-01 : f32
    %447 = vector.broadcast %cst_138 : f32 to vector<8x128xf32>
    %448 = arith.addf %446, %447 : vector<8x128xf32>
    %449 = vector.broadcast %433 : f32 to vector<8x128xf32>
    %450 = arith.mulf %449, %448 : vector<8x128xf32>
    %451 = vector.broadcast %436 : f32 to vector<8x128xf32>
    %452 = arith.addf %450, %451 : vector<8x128xf32>
    %453 = math.tanh %452 : vector<8x128xf32>
    %454 = arith.mulf %448, %453 : vector<8x128xf32>
    %455 = arith.addf %425, %454 : vector<8x128xf32>
    %456 = vector.extract_strided_slice %3 {offsets = [0, 15], sizes = [8, 1], strides = [1, 1]} : vector<8x16xf32> to vector<8x1xf32>
    %c0_139 = arith.constant 0 : index
    %c15 = arith.constant 15 : index
    %c0_140 = arith.constant 0 : index
    %457 = vector.load %arg4[%c0_139, %c15, %c0_140] : memref<5x16x128xf32, #tpu.memory_space<vmem>>, vector<1x1x128xf32>
    %458 = vector.shape_cast %457 : vector<1x1x128xf32> to vector<1x128xf32>
    %c0_141 = arith.constant 0 : index
    %c15_142 = arith.constant 15 : index
    %c0_143 = arith.constant 0 : index
    %459 = vector.load %arg5[%c0_141, %c15_142, %c0_143] : memref<5x16x128xf32, #tpu.memory_space<vmem>>, vector<1x1x128xf32>
    %460 = vector.shape_cast %459 : vector<1x1x128xf32> to vector<1x128xf32>
    %c15_i32 = arith.constant 15 : i32
    %461 = arith.addi %4, %c15_i32 : i32
    %462 = arith.index_cast %461 : i32 to index
    %463 = memref.load %arg6[%462] : memref<16xf32, #tpu.memory_space<smem>>
    %c15_i32_144 = arith.constant 15 : i32
    %464 = arith.addi %4, %c15_i32_144 : i32
    %465 = arith.index_cast %464 : i32 to index
    %466 = memref.load %arg7[%465] : memref<16xf32, #tpu.memory_space<smem>>
    %467 = vector.broadcast %456 : vector<8x1xf32> to vector<8x128xf32>
    %468 = vector.broadcast %458 : vector<1x128xf32> to vector<8x128xf32>
    %469 = arith.mulf %467, %468 : vector<8x128xf32>
    %470 = vector.broadcast %460 : vector<1x128xf32> to vector<8x128xf32>
    %471 = arith.subf %469, %470 : vector<8x128xf32>
    %cst_145 = arith.constant 5.000000e-01 : f32
    %472 = vector.broadcast %cst_145 : f32 to vector<8x128xf32>
    %473 = arith.mulf %472, %471 : vector<8x128xf32>
    %474 = math.tanh %473 : vector<8x128xf32>
    %cst_146 = arith.constant 5.000000e-01 : f32
    %475 = vector.broadcast %cst_146 : f32 to vector<8x128xf32>
    %476 = arith.mulf %475, %474 : vector<8x128xf32>
    %cst_147 = arith.constant 5.000000e-01 : f32
    %477 = vector.broadcast %cst_147 : f32 to vector<8x128xf32>
    %478 = arith.addf %476, %477 : vector<8x128xf32>
    %479 = vector.broadcast %463 : f32 to vector<8x128xf32>
    %480 = arith.mulf %479, %478 : vector<8x128xf32>
    %481 = vector.broadcast %466 : f32 to vector<8x128xf32>
    %482 = arith.addf %480, %481 : vector<8x128xf32>
    %483 = math.tanh %482 : vector<8x128xf32>
    %484 = arith.mulf %478, %483 : vector<8x128xf32>
    %485 = arith.addf %455, %484 : vector<8x128xf32>
    %c0_148 = arith.constant 0 : index
    %c0_149 = arith.constant 0 : index
    %c0_150 = arith.constant 0 : index
    %486 = vector.load %arg10[%c0_148, %c0_149, %c0_150] : memref<5x8x128xf32, #tpu.memory_space<vmem>>, vector<1x8x128xf32>
    %487 = vector.shape_cast %486 : vector<1x8x128xf32> to vector<8x128xf32>
    %488 = arith.addf %487, %485 : vector<8x128xf32>
    %c0_151 = arith.constant 0 : index
    %c0_152 = arith.constant 0 : index
    %c0_153 = arith.constant 0 : index
    %489 = vector.load %arg10[%c0_151, %c0_152, %c0_153] : memref<5x8x128xf32, #tpu.memory_space<vmem>>, vector<1x8x128xf32>
    %490 = vector.shape_cast %489 : vector<1x8x128xf32> to vector<8x128xf32>
    %491 = vector.shape_cast %488 : vector<8x128xf32> to vector<1x8x128xf32>
    tpu.vector_store %arg10[%c0_151, %c0_152, %c0_153], %491 {strides = array<i32>} : memref<5x8x128xf32, #tpu.memory_space<vmem>>, vector<1x8x128xf32>,
    %cst_154 = arith.constant 0.000000e+00 : f32
    %492 = vector.broadcast %cst_154 : f32 to vector<8x128xf32>
    %493 = vector.extract_strided_slice %3 {offsets = [0, 0], sizes = [8, 1], strides = [1, 1]} : vector<8x16xf32> to vector<8x1xf32>
    %c1_155 = arith.constant 1 : index
    %c0_156 = arith.constant 0 : index
    %c0_157 = arith.constant 0 : index
    %494 = vector.load %arg4[%c1_155, %c0_156, %c0_157] : memref<5x16x128xf32, #tpu.memory_space<vmem>>, vector<1x1x128xf32>
    %495 = vector.shape_cast %494 : vector<1x1x128xf32> to vector<1x128xf32>
    %c1_158 = arith.constant 1 : index
    %c0_159 = arith.constant 0 : index
    %c0_160 = arith.constant 0 : index
    %496 = vector.load %arg5[%c1_158, %c0_159, %c0_160] : memref<5x16x128xf32, #tpu.memory_space<vmem>>, vector<1x1x128xf32>
    %497 = vector.shape_cast %496 : vector<1x1x128xf32> to vector<1x128xf32>
    %c0_i32_161 = arith.constant 0 : i32
    %498 = arith.addi %4, %c0_i32_161 : i32
    %499 = arith.index_cast %498 : i32 to index
    %500 = memref.load %arg6[%499] : memref<16xf32, #tpu.memory_space<smem>>
    %c0_i32_162 = arith.constant 0 : i32
    %501 = arith.addi %4, %c0_i32_162 : i32
    %502 = arith.index_cast %501 : i32 to index
    %503 = memref.load %arg7[%502] : memref<16xf32, #tpu.memory_space<smem>>
    %504 = vector.broadcast %493 : vector<8x1xf32> to vector<8x128xf32>
    %505 = vector.broadcast %495 : vector<1x128xf32> to vector<8x128xf32>
    %506 = arith.mulf %504, %505 : vector<8x128xf32>
    %507 = vector.broadcast %497 : vector<1x128xf32> to vector<8x128xf32>
    %508 = arith.subf %506, %507 : vector<8x128xf32>
    %cst_163 = arith.constant 5.000000e-01 : f32
    %509 = vector.broadcast %cst_163 : f32 to vector<8x128xf32>
    %510 = arith.mulf %509, %508 : vector<8x128xf32>
    %511 = math.tanh %510 : vector<8x128xf32>
    %cst_164 = arith.constant 5.000000e-01 : f32
    %512 = vector.broadcast %cst_164 : f32 to vector<8x128xf32>
    %513 = arith.mulf %512, %511 : vector<8x128xf32>
    %cst_165 = arith.constant 5.000000e-01 : f32
    %514 = vector.broadcast %cst_165 : f32 to vector<8x128xf32>
    %515 = arith.addf %513, %514 : vector<8x128xf32>
    %516 = vector.broadcast %500 : f32 to vector<8x128xf32>
    %517 = arith.mulf %516, %515 : vector<8x128xf32>
    %518 = vector.broadcast %503 : f32 to vector<8x128xf32>
    %519 = arith.addf %517, %518 : vector<8x128xf32>
    %520 = math.tanh %519 : vector<8x128xf32>
    %521 = arith.mulf %515, %520 : vector<8x128xf32>
    %522 = arith.addf %492, %521 : vector<8x128xf32>
    %523 = vector.extract_strided_slice %3 {offsets = [0, 1], sizes = [8, 1], strides = [1, 1]} : vector<8x16xf32> to vector<8x1xf32>
    %c1_166 = arith.constant 1 : index
    %c1_167 = arith.constant 1 : index
    %c0_168 = arith.constant 0 : index
    %524 = vector.load %arg4[%c1_166, %c1_167, %c0_168] : memref<5x16x128xf32, #tpu.memory_space<vmem>>, vector<1x1x128xf32>
    %525 = vector.shape_cast %524 : vector<1x1x128xf32> to vector<1x128xf32>
    %c1_169 = arith.constant 1 : index
    %c1_170 = arith.constant 1 : index
    %c0_171 = arith.constant 0 : index
    %526 = vector.load %arg5[%c1_169, %c1_170, %c0_171] : memref<5x16x128xf32, #tpu.memory_space<vmem>>, vector<1x1x128xf32>
    %527 = vector.shape_cast %526 : vector<1x1x128xf32> to vector<1x128xf32>
    %c1_i32_172 = arith.constant 1 : i32
    %528 = arith.addi %4, %c1_i32_172 : i32
    %529 = arith.index_cast %528 : i32 to index
    %530 = memref.load %arg6[%529] : memref<16xf32, #tpu.memory_space<smem>>
    %c1_i32_173 = arith.constant 1 : i32
    %531 = arith.addi %4, %c1_i32_173 : i32
    %532 = arith.index_cast %531 : i32 to index
    %533 = memref.load %arg7[%532] : memref<16xf32, #tpu.memory_space<smem>>
    %534 = vector.broadcast %523 : vector<8x1xf32> to vector<8x128xf32>
    %535 = vector.broadcast %525 : vector<1x128xf32> to vector<8x128xf32>
    %536 = arith.mulf %534, %535 : vector<8x128xf32>
    %537 = vector.broadcast %527 : vector<1x128xf32> to vector<8x128xf32>
    %538 = arith.subf %536, %537 : vector<8x128xf32>
    %cst_174 = arith.constant 5.000000e-01 : f32
    %539 = vector.broadcast %cst_174 : f32 to vector<8x128xf32>
    %540 = arith.mulf %539, %538 : vector<8x128xf32>
    %541 = math.tanh %540 : vector<8x128xf32>
    %cst_175 = arith.constant 5.000000e-01 : f32
    %542 = vector.broadcast %cst_175 : f32 to vector<8x128xf32>
    %543 = arith.mulf %542, %541 : vector<8x128xf32>
    %cst_176 = arith.constant 5.000000e-01 : f32
    %544 = vector.broadcast %cst_176 : f32 to vector<8x128xf32>
    %545 = arith.addf %543, %544 : vector<8x128xf32>
    %546 = vector.broadcast %530 : f32 to vector<8x128xf32>
    %547 = arith.mulf %546, %545 : vector<8x128xf32>
    %548 = vector.broadcast %533 : f32 to vector<8x128xf32>
    %549 = arith.addf %547, %548 : vector<8x128xf32>
    %550 = math.tanh %549 : vector<8x128xf32>
    %551 = arith.mulf %545, %550 : vector<8x128xf32>
    %552 = arith.addf %522, %551 : vector<8x128xf32>
    %553 = vector.extract_strided_slice %3 {offsets = [0, 2], sizes = [8, 1], strides = [1, 1]} : vector<8x16xf32> to vector<8x1xf32>
    %c1_177 = arith.constant 1 : index
    %c2_178 = arith.constant 2 : index
    %c0_179 = arith.constant 0 : index
    %554 = vector.load %arg4[%c1_177, %c2_178, %c0_179] : memref<5x16x128xf32, #tpu.memory_space<vmem>>, vector<1x1x128xf32>
    %555 = vector.shape_cast %554 : vector<1x1x128xf32> to vector<1x128xf32>
    %c1_180 = arith.constant 1 : index
    %c2_181 = arith.constant 2 : index
    %c0_182 = arith.constant 0 : index
    %556 = vector.load %arg5[%c1_180, %c2_181, %c0_182] : memref<5x16x128xf32, #tpu.memory_space<vmem>>, vector<1x1x128xf32>
    %557 = vector.shape_cast %556 : vector<1x1x128xf32> to vector<1x128xf32>
    %c2_i32_183 = arith.constant 2 : i32
    %558 = arith.addi %4, %c2_i32_183 : i32
    %559 = arith.index_cast %558 : i32 to index
    %560 = memref.load %arg6[%559] : memref<16xf32, #tpu.memory_space<smem>>
    %c2_i32_184 = arith.constant 2 : i32
    %561 = arith.addi %4, %c2_i32_184 : i32
    %562 = arith.index_cast %561 : i32 to index
    %563 = memref.load %arg7[%562] : memref<16xf32, #tpu.memory_space<smem>>
    %564 = vector.broadcast %553 : vector<8x1xf32> to vector<8x128xf32>
    %565 = vector.broadcast %555 : vector<1x128xf32> to vector<8x128xf32>
    %566 = arith.mulf %564, %565 : vector<8x128xf32>
    %567 = vector.broadcast %557 : vector<1x128xf32> to vector<8x128xf32>
    %568 = arith.subf %566, %567 : vector<8x128xf32>
    %cst_185 = arith.constant 5.000000e-01 : f32
    %569 = vector.broadcast %cst_185 : f32 to vector<8x128xf32>
    %570 = arith.mulf %569, %568 : vector<8x128xf32>
    %571 = math.tanh %570 : vector<8x128xf32>
    %cst_186 = arith.constant 5.000000e-01 : f32
    %572 = vector.broadcast %cst_186 : f32 to vector<8x128xf32>
    %573 = arith.mulf %572, %571 : vector<8x128xf32>
    %cst_187 = arith.constant 5.000000e-01 : f32
    %574 = vector.broadcast %cst_187 : f32 to vector<8x128xf32>
    %575 = arith.addf %573, %574 : vector<8x128xf32>
    %576 = vector.broadcast %560 : f32 to vector<8x128xf32>
    %577 = arith.mulf %576, %575 : vector<8x128xf32>
    %578 = vector.broadcast %563 : f32 to vector<8x128xf32>
    %579 = arith.addf %577, %578 : vector<8x128xf32>
    %580 = math.tanh %579 : vector<8x128xf32>
    %581 = arith.mulf %575, %580 : vector<8x128xf32>
    %582 = arith.addf %552, %581 : vector<8x128xf32>
    %583 = vector.extract_strided_slice %3 {offsets = [0, 3], sizes = [8, 1], strides = [1, 1]} : vector<8x16xf32> to vector<8x1xf32>
    %c1_188 = arith.constant 1 : index
    %c3_189 = arith.constant 3 : index
    %c0_190 = arith.constant 0 : index
    %584 = vector.load %arg4[%c1_188, %c3_189, %c0_190] : memref<5x16x128xf32, #tpu.memory_space<vmem>>, vector<1x1x128xf32>
    %585 = vector.shape_cast %584 : vector<1x1x128xf32> to vector<1x128xf32>
    %c1_191 = arith.constant 1 : index
    %c3_192 = arith.constant 3 : index
    %c0_193 = arith.constant 0 : index
    %586 = vector.load %arg5[%c1_191, %c3_192, %c0_193] : memref<5x16x128xf32, #tpu.memory_space<vmem>>, vector<1x1x128xf32>
    %587 = vector.shape_cast %586 : vector<1x1x128xf32> to vector<1x128xf32>
    %c3_i32_194 = arith.constant 3 : i32
    %588 = arith.addi %4, %c3_i32_194 : i32
    %589 = arith.index_cast %588 : i32 to index
    %590 = memref.load %arg6[%589] : memref<16xf32, #tpu.memory_space<smem>>
    %c3_i32_195 = arith.constant 3 : i32
    %591 = arith.addi %4, %c3_i32_195 : i32
    %592 = arith.index_cast %591 : i32 to index
    %593 = memref.load %arg7[%592] : memref<16xf32, #tpu.memory_space<smem>>
    %594 = vector.broadcast %583 : vector<8x1xf32> to vector<8x128xf32>
    %595 = vector.broadcast %585 : vector<1x128xf32> to vector<8x128xf32>
    %596 = arith.mulf %594, %595 : vector<8x128xf32>
    %597 = vector.broadcast %587 : vector<1x128xf32> to vector<8x128xf32>
    %598 = arith.subf %596, %597 : vector<8x128xf32>
    %cst_196 = arith.constant 5.000000e-01 : f32
    %599 = vector.broadcast %cst_196 : f32 to vector<8x128xf32>
    %600 = arith.mulf %599, %598 : vector<8x128xf32>
    %601 = math.tanh %600 : vector<8x128xf32>
    %cst_197 = arith.constant 5.000000e-01 : f32
    %602 = vector.broadcast %cst_197 : f32 to vector<8x128xf32>
    %603 = arith.mulf %602, %601 : vector<8x128xf32>
    %cst_198 = arith.constant 5.000000e-01 : f32
    %604 = vector.broadcast %cst_198 : f32 to vector<8x128xf32>
    %605 = arith.addf %603, %604 : vector<8x128xf32>
    %606 = vector.broadcast %590 : f32 to vector<8x128xf32>
    %607 = arith.mulf %606, %605 : vector<8x128xf32>
    %608 = vector.broadcast %593 : f32 to vector<8x128xf32>
    %609 = arith.addf %607, %608 : vector<8x128xf32>
    %610 = math.tanh %609 : vector<8x128xf32>
    %611 = arith.mulf %605, %610 : vector<8x128xf32>
    %612 = arith.addf %582, %611 : vector<8x128xf32>
    %613 = vector.extract_strided_slice %3 {offsets = [0, 4], sizes = [8, 1], strides = [1, 1]} : vector<8x16xf32> to vector<8x1xf32>
    %c1_199 = arith.constant 1 : index
    %c4_200 = arith.constant 4 : index
    %c0_201 = arith.constant 0 : index
    %614 = vector.load %arg4[%c1_199, %c4_200, %c0_201] : memref<5x16x128xf32, #tpu.memory_space<vmem>>, vector<1x1x128xf32>
    %615 = vector.shape_cast %614 : vector<1x1x128xf32> to vector<1x128xf32>
    %c1_202 = arith.constant 1 : index
    %c4_203 = arith.constant 4 : index
    %c0_204 = arith.constant 0 : index
    %616 = vector.load %arg5[%c1_202, %c4_203, %c0_204] : memref<5x16x128xf32, #tpu.memory_space<vmem>>, vector<1x1x128xf32>
    %617 = vector.shape_cast %616 : vector<1x1x128xf32> to vector<1x128xf32>
    %c4_i32_205 = arith.constant 4 : i32
    %618 = arith.addi %4, %c4_i32_205 : i32
    %619 = arith.index_cast %618 : i32 to index
    %620 = memref.load %arg6[%619] : memref<16xf32, #tpu.memory_space<smem>>
    %c4_i32_206 = arith.constant 4 : i32
    %621 = arith.addi %4, %c4_i32_206 : i32
    %622 = arith.index_cast %621 : i32 to index
    %623 = memref.load %arg7[%622] : memref<16xf32, #tpu.memory_space<smem>>
    %624 = vector.broadcast %613 : vector<8x1xf32> to vector<8x128xf32>
    %625 = vector.broadcast %615 : vector<1x128xf32> to vector<8x128xf32>
    %626 = arith.mulf %624, %625 : vector<8x128xf32>
    %627 = vector.broadcast %617 : vector<1x128xf32> to vector<8x128xf32>
    %628 = arith.subf %626, %627 : vector<8x128xf32>
    %cst_207 = arith.constant 5.000000e-01 : f32
    %629 = vector.broadcast %cst_207 : f32 to vector<8x128xf32>
    %630 = arith.mulf %629, %628 : vector<8x128xf32>
    %631 = math.tanh %630 : vector<8x128xf32>
    %cst_208 = arith.constant 5.000000e-01 : f32
    %632 = vector.broadcast %cst_208 : f32 to vector<8x128xf32>
    %633 = arith.mulf %632, %631 : vector<8x128xf32>
    %cst_209 = arith.constant 5.000000e-01 : f32
    %634 = vector.broadcast %cst_209 : f32 to vector<8x128xf32>
    %635 = arith.addf %633, %634 : vector<8x128xf32>
    %636 = vector.broadcast %620 : f32 to vector<8x128xf32>
    %637 = arith.mulf %636, %635 : vector<8x128xf32>
    %638 = vector.broadcast %623 : f32 to vector<8x128xf32>
    %639 = arith.addf %637, %638 : vector<8x128xf32>
    %640 = math.tanh %639 : vector<8x128xf32>
    %641 = arith.mulf %635, %640 : vector<8x128xf32>
    %642 = arith.addf %612, %641 : vector<8x128xf32>
    %643 = vector.extract_strided_slice %3 {offsets = [0, 5], sizes = [8, 1], strides = [1, 1]} : vector<8x16xf32> to vector<8x1xf32>
    %c1_210 = arith.constant 1 : index
    %c5_211 = arith.constant 5 : index
    %c0_212 = arith.constant 0 : index
    %644 = vector.load %arg4[%c1_210, %c5_211, %c0_212] : memref<5x16x128xf32, #tpu.memory_space<vmem>>, vector<1x1x128xf32>
    %645 = vector.shape_cast %644 : vector<1x1x128xf32> to vector<1x128xf32>
    %c1_213 = arith.constant 1 : index
    %c5_214 = arith.constant 5 : index
    %c0_215 = arith.constant 0 : index
    %646 = vector.load %arg5[%c1_213, %c5_214, %c0_215] : memref<5x16x128xf32, #tpu.memory_space<vmem>>, vector<1x1x128xf32>
    %647 = vector.shape_cast %646 : vector<1x1x128xf32> to vector<1x128xf32>
    %c5_i32_216 = arith.constant 5 : i32
    %648 = arith.addi %4, %c5_i32_216 : i32
    %649 = arith.index_cast %648 : i32 to index
    %650 = memref.load %arg6[%649] : memref<16xf32, #tpu.memory_space<smem>>
    %c5_i32_217 = arith.constant 5 : i32
    %651 = arith.addi %4, %c5_i32_217 : i32
    %652 = arith.index_cast %651 : i32 to index
    %653 = memref.load %arg7[%652] : memref<16xf32, #tpu.memory_space<smem>>
    %654 = vector.broadcast %643 : vector<8x1xf32> to vector<8x128xf32>
    %655 = vector.broadcast %645 : vector<1x128xf32> to vector<8x128xf32>
    %656 = arith.mulf %654, %655 : vector<8x128xf32>
    %657 = vector.broadcast %647 : vector<1x128xf32> to vector<8x128xf32>
    %658 = arith.subf %656, %657 : vector<8x128xf32>
    %cst_218 = arith.constant 5.000000e-01 : f32
    %659 = vector.broadcast %cst_218 : f32 to vector<8x128xf32>
    %660 = arith.mulf %659, %658 : vector<8x128xf32>
    %661 = math.tanh %660 : vector<8x128xf32>
    %cst_219 = arith.constant 5.000000e-01 : f32
    %662 = vector.broadcast %cst_219 : f32 to vector<8x128xf32>
    %663 = arith.mulf %662, %661 : vector<8x128xf32>
    %cst_220 = arith.constant 5.000000e-01 : f32
    %664 = vector.broadcast %cst_220 : f32 to vector<8x128xf32>
    %665 = arith.addf %663, %664 : vector<8x128xf32>
    %666 = vector.broadcast %650 : f32 to vector<8x128xf32>
    %667 = arith.mulf %666, %665 : vector<8x128xf32>
    %668 = vector.broadcast %653 : f32 to vector<8x128xf32>
    %669 = arith.addf %667, %668 : vector<8x128xf32>
    %670 = math.tanh %669 : vector<8x128xf32>
    %671 = arith.mulf %665, %670 : vector<8x128xf32>
    %672 = arith.addf %642, %671 : vector<8x128xf32>
    %673 = vector.extract_strided_slice %3 {offsets = [0, 6], sizes = [8, 1], strides = [1, 1]} : vector<8x16xf32> to vector<8x1xf32>
    %c1_221 = arith.constant 1 : index
    %c6_222 = arith.constant 6 : index
    %c0_223 = arith.constant 0 : index
    %674 = vector.load %arg4[%c1_221, %c6_222, %c0_223] : memref<5x16x128xf32, #tpu.memory_space<vmem>>, vector<1x1x128xf32>
    %675 = vector.shape_cast %674 : vector<1x1x128xf32> to vector<1x128xf32>
    %c1_224 = arith.constant 1 : index
    %c6_225 = arith.constant 6 : index
    %c0_226 = arith.constant 0 : index
    %676 = vector.load %arg5[%c1_224, %c6_225, %c0_226] : memref<5x16x128xf32, #tpu.memory_space<vmem>>, vector<1x1x128xf32>
    %677 = vector.shape_cast %676 : vector<1x1x128xf32> to vector<1x128xf32>
    %c6_i32_227 = arith.constant 6 : i32
    %678 = arith.addi %4, %c6_i32_227 : i32
    %679 = arith.index_cast %678 : i32 to index
    %680 = memref.load %arg6[%679] : memref<16xf32, #tpu.memory_space<smem>>
    %c6_i32_228 = arith.constant 6 : i32
    %681 = arith.addi %4, %c6_i32_228 : i32
    %682 = arith.index_cast %681 : i32 to index
    %683 = memref.load %arg7[%682] : memref<16xf32, #tpu.memory_space<smem>>
    %684 = vector.broadcast %673 : vector<8x1xf32> to vector<8x128xf32>
    %685 = vector.broadcast %675 : vector<1x128xf32> to vector<8x128xf32>
    %686 = arith.mulf %684, %685 : vector<8x128xf32>
    %687 = vector.broadcast %677 : vector<1x128xf32> to vector<8x128xf32>
    %688 = arith.subf %686, %687 : vector<8x128xf32>
    %cst_229 = arith.constant 5.000000e-01 : f32
    %689 = vector.broadcast %cst_229 : f32 to vector<8x128xf32>
    %690 = arith.mulf %689, %688 : vector<8x128xf32>
    %691 = math.tanh %690 : vector<8x128xf32>
    %cst_230 = arith.constant 5.000000e-01 : f32
    %692 = vector.broadcast %cst_230 : f32 to vector<8x128xf32>
    %693 = arith.mulf %692, %691 : vector<8x128xf32>
    %cst_231 = arith.constant 5.000000e-01 : f32
    %694 = vector.broadcast %cst_231 : f32 to vector<8x128xf32>
    %695 = arith.addf %693, %694 : vector<8x128xf32>
    %696 = vector.broadcast %680 : f32 to vector<8x128xf32>
    %697 = arith.mulf %696, %695 : vector<8x128xf32>
    %698 = vector.broadcast %683 : f32 to vector<8x128xf32>
    %699 = arith.addf %697, %698 : vector<8x128xf32>
    %700 = math.tanh %699 : vector<8x128xf32>
    %701 = arith.mulf %695, %700 : vector<8x128xf32>
    %702 = arith.addf %672, %701 : vector<8x128xf32>
    %703 = vector.extract_strided_slice %3 {offsets = [0, 7], sizes = [8, 1], strides = [1, 1]} : vector<8x16xf32> to vector<8x1xf32>
    %c1_232 = arith.constant 1 : index
    %c7_233 = arith.constant 7 : index
    %c0_234 = arith.constant 0 : index
    %704 = vector.load %arg4[%c1_232, %c7_233, %c0_234] : memref<5x16x128xf32, #tpu.memory_space<vmem>>, vector<1x1x128xf32>
    %705 = vector.shape_cast %704 : vector<1x1x128xf32> to vector<1x128xf32>
    %c1_235 = arith.constant 1 : index
    %c7_236 = arith.constant 7 : index
    %c0_237 = arith.constant 0 : index
    %706 = vector.load %arg5[%c1_235, %c7_236, %c0_237] : memref<5x16x128xf32, #tpu.memory_space<vmem>>, vector<1x1x128xf32>
    %707 = vector.shape_cast %706 : vector<1x1x128xf32> to vector<1x128xf32>
    %c7_i32_238 = arith.constant 7 : i32
    %708 = arith.addi %4, %c7_i32_238 : i32
    %709 = arith.index_cast %708 : i32 to index
    %710 = memref.load %arg6[%709] : memref<16xf32, #tpu.memory_space<smem>>
    %c7_i32_239 = arith.constant 7 : i32
    %711 = arith.addi %4, %c7_i32_239 : i32
    %712 = arith.index_cast %711 : i32 to index
    %713 = memref.load %arg7[%712] : memref<16xf32, #tpu.memory_space<smem>>
    %714 = vector.broadcast %703 : vector<8x1xf32> to vector<8x128xf32>
    %715 = vector.broadcast %705 : vector<1x128xf32> to vector<8x128xf32>
    %716 = arith.mulf %714, %715 : vector<8x128xf32>
    %717 = vector.broadcast %707 : vector<1x128xf32> to vector<8x128xf32>
    %718 = arith.subf %716, %717 : vector<8x128xf32>
    %cst_240 = arith.constant 5.000000e-01 : f32
    %719 = vector.broadcast %cst_240 : f32 to vector<8x128xf32>
    %720 = arith.mulf %719, %718 : vector<8x128xf32>
    %721 = math.tanh %720 : vector<8x128xf32>
    %cst_241 = arith.constant 5.000000e-01 : f32
    %722 = vector.broadcast %cst_241 : f32 to vector<8x128xf32>
    %723 = arith.mulf %722, %721 : vector<8x128xf32>
    %cst_242 = arith.constant 5.000000e-01 : f32
    %724 = vector.broadcast %cst_242 : f32 to vector<8x128xf32>
    %725 = arith.addf %723, %724 : vector<8x128xf32>
    %726 = vector.broadcast %710 : f32 to vector<8x128xf32>
    %727 = arith.mulf %726, %725 : vector<8x128xf32>
    %728 = vector.broadcast %713 : f32 to vector<8x128xf32>
    %729 = arith.addf %727, %728 : vector<8x128xf32>
    %730 = math.tanh %729 : vector<8x128xf32>
    %731 = arith.mulf %725, %730 : vector<8x128xf32>
    %732 = arith.addf %702, %731 : vector<8x128xf32>
    %733 = vector.extract_strided_slice %3 {offsets = [0, 8], sizes = [8, 1], strides = [1, 1]} : vector<8x16xf32> to vector<8x1xf32>
    %c1_243 = arith.constant 1 : index
    %c8_244 = arith.constant 8 : index
    %c0_245 = arith.constant 0 : index
    %734 = vector.load %arg4[%c1_243, %c8_244, %c0_245] : memref<5x16x128xf32, #tpu.memory_space<vmem>>, vector<1x1x128xf32>
    %735 = vector.shape_cast %734 : vector<1x1x128xf32> to vector<1x128xf32>
    %c1_246 = arith.constant 1 : index
    %c8_247 = arith.constant 8 : index
    %c0_248 = arith.constant 0 : index
    %736 = vector.load %arg5[%c1_246, %c8_247, %c0_248] : memref<5x16x128xf32, #tpu.memory_space<vmem>>, vector<1x1x128xf32>
    %737 = vector.shape_cast %736 : vector<1x1x128xf32> to vector<1x128xf32>
    %c8_i32_249 = arith.constant 8 : i32
    %738 = arith.addi %4, %c8_i32_249 : i32
    %739 = arith.index_cast %738 : i32 to index
    %740 = memref.load %arg6[%739] : memref<16xf32, #tpu.memory_space<smem>>
    %c8_i32_250 = arith.constant 8 : i32
    %741 = arith.addi %4, %c8_i32_250 : i32
    %742 = arith.index_cast %741 : i32 to index
    %743 = memref.load %arg7[%742] : memref<16xf32, #tpu.memory_space<smem>>
    %744 = vector.broadcast %733 : vector<8x1xf32> to vector<8x128xf32>
    %745 = vector.broadcast %735 : vector<1x128xf32> to vector<8x128xf32>
    %746 = arith.mulf %744, %745 : vector<8x128xf32>
    %747 = vector.broadcast %737 : vector<1x128xf32> to vector<8x128xf32>
    %748 = arith.subf %746, %747 : vector<8x128xf32>
    %cst_251 = arith.constant 5.000000e-01 : f32
    %749 = vector.broadcast %cst_251 : f32 to vector<8x128xf32>
    %750 = arith.mulf %749, %748 : vector<8x128xf32>
    %751 = math.tanh %750 : vector<8x128xf32>
    %cst_252 = arith.constant 5.000000e-01 : f32
    %752 = vector.broadcast %cst_252 : f32 to vector<8x128xf32>
    %753 = arith.mulf %752, %751 : vector<8x128xf32>
    %cst_253 = arith.constant 5.000000e-01 : f32
    %754 = vector.broadcast %cst_253 : f32 to vector<8x128xf32>
    %755 = arith.addf %753, %754 : vector<8x128xf32>
    %756 = vector.broadcast %740 : f32 to vector<8x128xf32>
    %757 = arith.mulf %756, %755 : vector<8x128xf32>
    %758 = vector.broadcast %743 : f32 to vector<8x128xf32>
    %759 = arith.addf %757, %758 : vector<8x128xf32>
    %760 = math.tanh %759 : vector<8x128xf32>
    %761 = arith.mulf %755, %760 : vector<8x128xf32>
    %762 = arith.addf %732, %761 : vector<8x128xf32>
    %763 = vector.extract_strided_slice %3 {offsets = [0, 9], sizes = [8, 1], strides = [1, 1]} : vector<8x16xf32> to vector<8x1xf32>
    %c1_254 = arith.constant 1 : index
    %c9_255 = arith.constant 9 : index
    %c0_256 = arith.constant 0 : index
    %764 = vector.load %arg4[%c1_254, %c9_255, %c0_256] : memref<5x16x128xf32, #tpu.memory_space<vmem>>, vector<1x1x128xf32>
    %765 = vector.shape_cast %764 : vector<1x1x128xf32> to vector<1x128xf32>
    %c1_257 = arith.constant 1 : index
    %c9_258 = arith.constant 9 : index
    %c0_259 = arith.constant 0 : index
    %766 = vector.load %arg5[%c1_257, %c9_258, %c0_259] : memref<5x16x128xf32, #tpu.memory_space<vmem>>, vector<1x1x128xf32>
    %767 = vector.shape_cast %766 : vector<1x1x128xf32> to vector<1x128xf32>
    %c9_i32_260 = arith.constant 9 : i32
    %768 = arith.addi %4, %c9_i32_260 : i32
    %769 = arith.index_cast %768 : i32 to index
    %770 = memref.load %arg6[%769] : memref<16xf32, #tpu.memory_space<smem>>
    %c9_i32_261 = arith.constant 9 : i32
    %771 = arith.addi %4, %c9_i32_261 : i32
    %772 = arith.index_cast %771 : i32 to index
    %773 = memref.load %arg7[%772] : memref<16xf32, #tpu.memory_space<smem>>
    %774 = vector.broadcast %763 : vector<8x1xf32> to vector<8x128xf32>
    %775 = vector.broadcast %765 : vector<1x128xf32> to vector<8x128xf32>
    %776 = arith.mulf %774, %775 : vector<8x128xf32>
    %777 = vector.broadcast %767 : vector<1x128xf32> to vector<8x128xf32>
    %778 = arith.subf %776, %777 : vector<8x128xf32>
    %cst_262 = arith.constant 5.000000e-01 : f32
    %779 = vector.broadcast %cst_262 : f32 to vector<8x128xf32>
    %780 = arith.mulf %779, %778 : vector<8x128xf32>
    %781 = math.tanh %780 : vector<8x128xf32>
    %cst_263 = arith.constant 5.000000e-01 : f32
    %782 = vector.broadcast %cst_263 : f32 to vector<8x128xf32>
    %783 = arith.mulf %782, %781 : vector<8x128xf32>
    %cst_264 = arith.constant 5.000000e-01 : f32
    %784 = vector.broadcast %cst_264 : f32 to vector<8x128xf32>
    %785 = arith.addf %783, %784 : vector<8x128xf32>
    %786 = vector.broadcast %770 : f32 to vector<8x128xf32>
    %787 = arith.mulf %786, %785 : vector<8x128xf32>
    %788 = vector.broadcast %773 : f32 to vector<8x128xf32>
    %789 = arith.addf %787, %788 : vector<8x128xf32>
    %790 = math.tanh %789 : vector<8x128xf32>
    %791 = arith.mulf %785, %790 : vector<8x128xf32>
    %792 = arith.addf %762, %791 : vector<8x128xf32>
    %793 = vector.extract_strided_slice %3 {offsets = [0, 10], sizes = [8, 1], strides = [1, 1]} : vector<8x16xf32> to vector<8x1xf32>
    %c1_265 = arith.constant 1 : index
    %c10_266 = arith.constant 10 : index
    %c0_267 = arith.constant 0 : index
    %794 = vector.load %arg4[%c1_265, %c10_266, %c0_267] : memref<5x16x128xf32, #tpu.memory_space<vmem>>, vector<1x1x128xf32>
    %795 = vector.shape_cast %794 : vector<1x1x128xf32> to vector<1x128xf32>
    %c1_268 = arith.constant 1 : index
    %c10_269 = arith.constant 10 : index
    %c0_270 = arith.constant 0 : index
    %796 = vector.load %arg5[%c1_268, %c10_269, %c0_270] : memref<5x16x128xf32, #tpu.memory_space<vmem>>, vector<1x1x128xf32>
    %797 = vector.shape_cast %796 : vector<1x1x128xf32> to vector<1x128xf32>
    %c10_i32_271 = arith.constant 10 : i32
    %798 = arith.addi %4, %c10_i32_271 : i32
    %799 = arith.index_cast %798 : i32 to index
    %800 = memref.load %arg6[%799] : memref<16xf32, #tpu.memory_space<smem>>
    %c10_i32_272 = arith.constant 10 : i32
    %801 = arith.addi %4, %c10_i32_272 : i32
    %802 = arith.index_cast %801 : i32 to index
    %803 = memref.load %arg7[%802] : memref<16xf32, #tpu.memory_space<smem>>
    %804 = vector.broadcast %793 : vector<8x1xf32> to vector<8x128xf32>
    %805 = vector.broadcast %795 : vector<1x128xf32> to vector<8x128xf32>
    %806 = arith.mulf %804, %805 : vector<8x128xf32>
    %807 = vector.broadcast %797 : vector<1x128xf32> to vector<8x128xf32>
    %808 = arith.subf %806, %807 : vector<8x128xf32>
    %cst_273 = arith.constant 5.000000e-01 : f32
    %809 = vector.broadcast %cst_273 : f32 to vector<8x128xf32>
    %810 = arith.mulf %809, %808 : vector<8x128xf32>
    %811 = math.tanh %810 : vector<8x128xf32>
    %cst_274 = arith.constant 5.000000e-01 : f32
    %812 = vector.broadcast %cst_274 : f32 to vector<8x128xf32>
    %813 = arith.mulf %812, %811 : vector<8x128xf32>
    %cst_275 = arith.constant 5.000000e-01 : f32
    %814 = vector.broadcast %cst_275 : f32 to vector<8x128xf32>
    %815 = arith.addf %813, %814 : vector<8x128xf32>
    %816 = vector.broadcast %800 : f32 to vector<8x128xf32>
    %817 = arith.mulf %816, %815 : vector<8x128xf32>
    %818 = vector.broadcast %803 : f32 to vector<8x128xf32>
    %819 = arith.addf %817, %818 : vector<8x128xf32>
    %820 = math.tanh %819 : vector<8x128xf32>
    %821 = arith.mulf %815, %820 : vector<8x128xf32>
    %822 = arith.addf %792, %821 : vector<8x128xf32>
    %823 = vector.extract_strided_slice %3 {offsets = [0, 11], sizes = [8, 1], strides = [1, 1]} : vector<8x16xf32> to vector<8x1xf32>
    %c1_276 = arith.constant 1 : index
    %c11_277 = arith.constant 11 : index
    %c0_278 = arith.constant 0 : index
    %824 = vector.load %arg4[%c1_276, %c11_277, %c0_278] : memref<5x16x128xf32, #tpu.memory_space<vmem>>, vector<1x1x128xf32>
    %825 = vector.shape_cast %824 : vector<1x1x128xf32> to vector<1x128xf32>
    %c1_279 = arith.constant 1 : index
    %c11_280 = arith.constant 11 : index
    %c0_281 = arith.constant 0 : index
    %826 = vector.load %arg5[%c1_279, %c11_280, %c0_281] : memref<5x16x128xf32, #tpu.memory_space<vmem>>, vector<1x1x128xf32>
    %827 = vector.shape_cast %826 : vector<1x1x128xf32> to vector<1x128xf32>
    %c11_i32_282 = arith.constant 11 : i32
    %828 = arith.addi %4, %c11_i32_282 : i32
    %829 = arith.index_cast %828 : i32 to index
    %830 = memref.load %arg6[%829] : memref<16xf32, #tpu.memory_space<smem>>
    %c11_i32_283 = arith.constant 11 : i32
    %831 = arith.addi %4, %c11_i32_283 : i32
    %832 = arith.index_cast %831 : i32 to index
    %833 = memref.load %arg7[%832] : memref<16xf32, #tpu.memory_space<smem>>
    %834 = vector.broadcast %823 : vector<8x1xf32> to vector<8x128xf32>
    %835 = vector.broadcast %825 : vector<1x128xf32> to vector<8x128xf32>
    %836 = arith.mulf %834, %835 : vector<8x128xf32>
    %837 = vector.broadcast %827 : vector<1x128xf32> to vector<8x128xf32>
    %838 = arith.subf %836, %837 : vector<8x128xf32>
    %cst_284 = arith.constant 5.000000e-01 : f32
    %839 = vector.broadcast %cst_284 : f32 to vector<8x128xf32>
    %840 = arith.mulf %839, %838 : vector<8x128xf32>
    %841 = math.tanh %840 : vector<8x128xf32>
    %cst_285 = arith.constant 5.000000e-01 : f32
    %842 = vector.broadcast %cst_285 : f32 to vector<8x128xf32>
    %843 = arith.mulf %842, %841 : vector<8x128xf32>
    %cst_286 = arith.constant 5.000000e-01 : f32
    %844 = vector.broadcast %cst_286 : f32 to vector<8x128xf32>
    %845 = arith.addf %843, %844 : vector<8x128xf32>
    %846 = vector.broadcast %830 : f32 to vector<8x128xf32>
    %847 = arith.mulf %846, %845 : vector<8x128xf32>
    %848 = vector.broadcast %833 : f32 to vector<8x128xf32>
    %849 = arith.addf %847, %848 : vector<8x128xf32>
    %850 = math.tanh %849 : vector<8x128xf32>
    %851 = arith.mulf %845, %850 : vector<8x128xf32>
    %852 = arith.addf %822, %851 : vector<8x128xf32>
    %853 = vector.extract_strided_slice %3 {offsets = [0, 12], sizes = [8, 1], strides = [1, 1]} : vector<8x16xf32> to vector<8x1xf32>
    %c1_287 = arith.constant 1 : index
    %c12_288 = arith.constant 12 : index
    %c0_289 = arith.constant 0 : index
    %854 = vector.load %arg4[%c1_287, %c12_288, %c0_289] : memref<5x16x128xf32, #tpu.memory_space<vmem>>, vector<1x1x128xf32>
    %855 = vector.shape_cast %854 : vector<1x1x128xf32> to vector<1x128xf32>
    %c1_290 = arith.constant 1 : index
    %c12_291 = arith.constant 12 : index
    %c0_292 = arith.constant 0 : index
    %856 = vector.load %arg5[%c1_290, %c12_291, %c0_292] : memref<5x16x128xf32, #tpu.memory_space<vmem>>, vector<1x1x128xf32>
    %857 = vector.shape_cast %856 : vector<1x1x128xf32> to vector<1x128xf32>
    %c12_i32_293 = arith.constant 12 : i32
    %858 = arith.addi %4, %c12_i32_293 : i32
    %859 = arith.index_cast %858 : i32 to index
    %860 = memref.load %arg6[%859] : memref<16xf32, #tpu.memory_space<smem>>
    %c12_i32_294 = arith.constant 12 : i32
    %861 = arith.addi %4, %c12_i32_294 : i32
    %862 = arith.index_cast %861 : i32 to index
    %863 = memref.load %arg7[%862] : memref<16xf32, #tpu.memory_space<smem>>
    %864 = vector.broadcast %853 : vector<8x1xf32> to vector<8x128xf32>
    %865 = vector.broadcast %855 : vector<1x128xf32> to vector<8x128xf32>
    %866 = arith.mulf %864, %865 : vector<8x128xf32>
    %867 = vector.broadcast %857 : vector<1x128xf32> to vector<8x128xf32>
    %868 = arith.subf %866, %867 : vector<8x128xf32>
    %cst_295 = arith.constant 5.000000e-01 : f32
    %869 = vector.broadcast %cst_295 : f32 to vector<8x128xf32>
    %870 = arith.mulf %869, %868 : vector<8x128xf32>
    %871 = math.tanh %870 : vector<8x128xf32>
    %cst_296 = arith.constant 5.000000e-01 : f32
    %872 = vector.broadcast %cst_296 : f32 to vector<8x128xf32>
    %873 = arith.mulf %872, %871 : vector<8x128xf32>
    %cst_297 = arith.constant 5.000000e-01 : f32
    %874 = vector.broadcast %cst_297 : f32 to vector<8x128xf32>
    %875 = arith.addf %873, %874 : vector<8x128xf32>
    %876 = vector.broadcast %860 : f32 to vector<8x128xf32>
    %877 = arith.mulf %876, %875 : vector<8x128xf32>
    %878 = vector.broadcast %863 : f32 to vector<8x128xf32>
    %879 = arith.addf %877, %878 : vector<8x128xf32>
    %880 = math.tanh %879 : vector<8x128xf32>
    %881 = arith.mulf %875, %880 : vector<8x128xf32>
    %882 = arith.addf %852, %881 : vector<8x128xf32>
    %883 = vector.extract_strided_slice %3 {offsets = [0, 13], sizes = [8, 1], strides = [1, 1]} : vector<8x16xf32> to vector<8x1xf32>
    %c1_298 = arith.constant 1 : index
    %c13_299 = arith.constant 13 : index
    %c0_300 = arith.constant 0 : index
    %884 = vector.load %arg4[%c1_298, %c13_299, %c0_300] : memref<5x16x128xf32, #tpu.memory_space<vmem>>, vector<1x1x128xf32>
    %885 = vector.shape_cast %884 : vector<1x1x128xf32> to vector<1x128xf32>
    %c1_301 = arith.constant 1 : index
    %c13_302 = arith.constant 13 : index
    %c0_303 = arith.constant 0 : index
    %886 = vector.load %arg5[%c1_301, %c13_302, %c0_303] : memref<5x16x128xf32, #tpu.memory_space<vmem>>, vector<1x1x128xf32>
    %887 = vector.shape_cast %886 : vector<1x1x128xf32> to vector<1x128xf32>
    %c13_i32_304 = arith.constant 13 : i32
    %888 = arith.addi %4, %c13_i32_304 : i32
    %889 = arith.index_cast %888 : i32 to index
    %890 = memref.load %arg6[%889] : memref<16xf32, #tpu.memory_space<smem>>
    %c13_i32_305 = arith.constant 13 : i32
    %891 = arith.addi %4, %c13_i32_305 : i32
    %892 = arith.index_cast %891 : i32 to index
    %893 = memref.load %arg7[%892] : memref<16xf32, #tpu.memory_space<smem>>
    %894 = vector.broadcast %883 : vector<8x1xf32> to vector<8x128xf32>
    %895 = vector.broadcast %885 : vector<1x128xf32> to vector<8x128xf32>
    %896 = arith.mulf %894, %895 : vector<8x128xf32>
    %897 = vector.broadcast %887 : vector<1x128xf32> to vector<8x128xf32>
    %898 = arith.subf %896, %897 : vector<8x128xf32>
    %cst_306 = arith.constant 5.000000e-01 : f32
    %899 = vector.broadcast %cst_306 : f32 to vector<8x128xf32>
    %900 = arith.mulf %899, %898 : vector<8x128xf32>
    %901 = math.tanh %900 : vector<8x128xf32>
    %cst_307 = arith.constant 5.000000e-01 : f32
    %902 = vector.broadcast %cst_307 : f32 to vector<8x128xf32>
    %903 = arith.mulf %902, %901 : vector<8x128xf32>
    %cst_308 = arith.constant 5.000000e-01 : f32
    %904 = vector.broadcast %cst_308 : f32 to vector<8x128xf32>
    %905 = arith.addf %903, %904 : vector<8x128xf32>
    %906 = vector.broadcast %890 : f32 to vector<8x128xf32>
    %907 = arith.mulf %906, %905 : vector<8x128xf32>
    %908 = vector.broadcast %893 : f32 to vector<8x128xf32>
    %909 = arith.addf %907, %908 : vector<8x128xf32>
    %910 = math.tanh %909 : vector<8x128xf32>
    %911 = arith.mulf %905, %910 : vector<8x128xf32>
    %912 = arith.addf %882, %911 : vector<8x128xf32>
    %913 = vector.extract_strided_slice %3 {offsets = [0, 14], sizes = [8, 1], strides = [1, 1]} : vector<8x16xf32> to vector<8x1xf32>
    %c1_309 = arith.constant 1 : index
    %c14_310 = arith.constant 14 : index
    %c0_311 = arith.constant 0 : index
    %914 = vector.load %arg4[%c1_309, %c14_310, %c0_311] : memref<5x16x128xf32, #tpu.memory_space<vmem>>, vector<1x1x128xf32>
    %915 = vector.shape_cast %914 : vector<1x1x128xf32> to vector<1x128xf32>
    %c1_312 = arith.constant 1 : index
    %c14_313 = arith.constant 14 : index
    %c0_314 = arith.constant 0 : index
    %916 = vector.load %arg5[%c1_312, %c14_313, %c0_314] : memref<5x16x128xf32, #tpu.memory_space<vmem>>, vector<1x1x128xf32>
    %917 = vector.shape_cast %916 : vector<1x1x128xf32> to vector<1x128xf32>
    %c14_i32_315 = arith.constant 14 : i32
    %918 = arith.addi %4, %c14_i32_315 : i32
    %919 = arith.index_cast %918 : i32 to index
    %920 = memref.load %arg6[%919] : memref<16xf32, #tpu.memory_space<smem>>
    %c14_i32_316 = arith.constant 14 : i32
    %921 = arith.addi %4, %c14_i32_316 : i32
    %922 = arith.index_cast %921 : i32 to index
    %923 = memref.load %arg7[%922] : memref<16xf32, #tpu.memory_space<smem>>
    %924 = vector.broadcast %913 : vector<8x1xf32> to vector<8x128xf32>
    %925 = vector.broadcast %915 : vector<1x128xf32> to vector<8x128xf32>
    %926 = arith.mulf %924, %925 : vector<8x128xf32>
    %927 = vector.broadcast %917 : vector<1x128xf32> to vector<8x128xf32>
    %928 = arith.subf %926, %927 : vector<8x128xf32>
    %cst_317 = arith.constant 5.000000e-01 : f32
    %929 = vector.broadcast %cst_317 : f32 to vector<8x128xf32>
    %930 = arith.mulf %929, %928 : vector<8x128xf32>
    %931 = math.tanh %930 : vector<8x128xf32>
    %cst_318 = arith.constant 5.000000e-01 : f32
    %932 = vector.broadcast %cst_318 : f32 to vector<8x128xf32>
    %933 = arith.mulf %932, %931 : vector<8x128xf32>
    %cst_319 = arith.constant 5.000000e-01 : f32
    %934 = vector.broadcast %cst_319 : f32 to vector<8x128xf32>
    %935 = arith.addf %933, %934 : vector<8x128xf32>
    %936 = vector.broadcast %920 : f32 to vector<8x128xf32>
    %937 = arith.mulf %936, %935 : vector<8x128xf32>
    %938 = vector.broadcast %923 : f32 to vector<8x128xf32>
    %939 = arith.addf %937, %938 : vector<8x128xf32>
    %940 = math.tanh %939 : vector<8x128xf32>
    %941 = arith.mulf %935, %940 : vector<8x128xf32>
    %942 = arith.addf %912, %941 : vector<8x128xf32>
    %943 = vector.extract_strided_slice %3 {offsets = [0, 15], sizes = [8, 1], strides = [1, 1]} : vector<8x16xf32> to vector<8x1xf32>
    %c1_320 = arith.constant 1 : index
    %c15_321 = arith.constant 15 : index
    %c0_322 = arith.constant 0 : index
    %944 = vector.load %arg4[%c1_320, %c15_321, %c0_322] : memref<5x16x128xf32, #tpu.memory_space<vmem>>, vector<1x1x128xf32>
    %945 = vector.shape_cast %944 : vector<1x1x128xf32> to vector<1x128xf32>
    %c1_323 = arith.constant 1 : index
    %c15_324 = arith.constant 15 : index
    %c0_325 = arith.constant 0 : index
    %946 = vector.load %arg5[%c1_323, %c15_324, %c0_325] : memref<5x16x128xf32, #tpu.memory_space<vmem>>, vector<1x1x128xf32>
    %947 = vector.shape_cast %946 : vector<1x1x128xf32> to vector<1x128xf32>
    %c15_i32_326 = arith.constant 15 : i32
    %948 = arith.addi %4, %c15_i32_326 : i32
    %949 = arith.index_cast %948 : i32 to index
    %950 = memref.load %arg6[%949] : memref<16xf32, #tpu.memory_space<smem>>
    %c15_i32_327 = arith.constant 15 : i32
    %951 = arith.addi %4, %c15_i32_327 : i32
    %952 = arith.index_cast %951 : i32 to index
    %953 = memref.load %arg7[%952] : memref<16xf32, #tpu.memory_space<smem>>
    %954 = vector.broadcast %943 : vector<8x1xf32> to vector<8x128xf32>
    %955 = vector.broadcast %945 : vector<1x128xf32> to vector<8x128xf32>
    %956 = arith.mulf %954, %955 : vector<8x128xf32>
    %957 = vector.broadcast %947 : vector<1x128xf32> to vector<8x128xf32>
    %958 = arith.subf %956, %957 : vector<8x128xf32>
    %cst_328 = arith.constant 5.000000e-01 : f32
    %959 = vector.broadcast %cst_328 : f32 to vector<8x128xf32>
    %960 = arith.mulf %959, %958 : vector<8x128xf32>
    %961 = math.tanh %960 : vector<8x128xf32>
    %cst_329 = arith.constant 5.000000e-01 : f32
    %962 = vector.broadcast %cst_329 : f32 to vector<8x128xf32>
    %963 = arith.mulf %962, %961 : vector<8x128xf32>
    %cst_330 = arith.constant 5.000000e-01 : f32
    %964 = vector.broadcast %cst_330 : f32 to vector<8x128xf32>
    %965 = arith.addf %963, %964 : vector<8x128xf32>
    %966 = vector.broadcast %950 : f32 to vector<8x128xf32>
    %967 = arith.mulf %966, %965 : vector<8x128xf32>
    %968 = vector.broadcast %953 : f32 to vector<8x128xf32>
    %969 = arith.addf %967, %968 : vector<8x128xf32>
    %970 = math.tanh %969 : vector<8x128xf32>
    %971 = arith.mulf %965, %970 : vector<8x128xf32>
    %972 = arith.addf %942, %971 : vector<8x128xf32>
    %c1_331 = arith.constant 1 : index
    %c0_332 = arith.constant 0 : index
    %c0_333 = arith.constant 0 : index
    %973 = vector.load %arg10[%c1_331, %c0_332, %c0_333] : memref<5x8x128xf32, #tpu.memory_space<vmem>>, vector<1x8x128xf32>
    %974 = vector.shape_cast %973 : vector<1x8x128xf32> to vector<8x128xf32>
    %975 = arith.addf %974, %972 : vector<8x128xf32>
    %c1_334 = arith.constant 1 : index
    %c0_335 = arith.constant 0 : index
    %c0_336 = arith.constant 0 : index
    %976 = vector.load %arg10[%c1_334, %c0_335, %c0_336] : memref<5x8x128xf32, #tpu.memory_space<vmem>>, vector<1x8x128xf32>
    %977 = vector.shape_cast %976 : vector<1x8x128xf32> to vector<8x128xf32>
    %978 = vector.shape_cast %975 : vector<8x128xf32> to vector<1x8x128xf32>
    tpu.vector_store %arg10[%c1_334, %c0_335, %c0_336], %978 {strides = array<i32>} : memref<5x8x128xf32, #tpu.memory_space<vmem>>, vector<1x8x128xf32>,
    %cst_337 = arith.constant 0.000000e+00 : f32
    %979 = vector.broadcast %cst_337 : f32 to vector<8x128xf32>
    %980 = vector.extract_strided_slice %3 {offsets = [0, 0], sizes = [8, 1], strides = [1, 1]} : vector<8x16xf32> to vector<8x1xf32>
    %c2_338 = arith.constant 2 : index
    %c0_339 = arith.constant 0 : index
    %c0_340 = arith.constant 0 : index
    %981 = vector.load %arg4[%c2_338, %c0_339, %c0_340] : memref<5x16x128xf32, #tpu.memory_space<vmem>>, vector<1x1x128xf32>
    %982 = vector.shape_cast %981 : vector<1x1x128xf32> to vector<1x128xf32>
    %c2_341 = arith.constant 2 : index
    %c0_342 = arith.constant 0 : index
    %c0_343 = arith.constant 0 : index
    %983 = vector.load %arg5[%c2_341, %c0_342, %c0_343] : memref<5x16x128xf32, #tpu.memory_space<vmem>>, vector<1x1x128xf32>
    %984 = vector.shape_cast %983 : vector<1x1x128xf32> to vector<1x128xf32>
    %c0_i32_344 = arith.constant 0 : i32
    %985 = arith.addi %4, %c0_i32_344 : i32
    %986 = arith.index_cast %985 : i32 to index
    %987 = memref.load %arg6[%986] : memref<16xf32, #tpu.memory_space<smem>>
    %c0_i32_345 = arith.constant 0 : i32
    %988 = arith.addi %4, %c0_i32_345 : i32
    %989 = arith.index_cast %988 : i32 to index
    %990 = memref.load %arg7[%989] : memref<16xf32, #tpu.memory_space<smem>>
    %991 = vector.broadcast %980 : vector<8x1xf32> to vector<8x128xf32>
    %992 = vector.broadcast %982 : vector<1x128xf32> to vector<8x128xf32>
    %993 = arith.mulf %991, %992 : vector<8x128xf32>
    %994 = vector.broadcast %984 : vector<1x128xf32> to vector<8x128xf32>
    %995 = arith.subf %993, %994 : vector<8x128xf32>
    %cst_346 = arith.constant 5.000000e-01 : f32
    %996 = vector.broadcast %cst_346 : f32 to vector<8x128xf32>
    %997 = arith.mulf %996, %995 : vector<8x128xf32>
    %998 = math.tanh %997 : vector<8x128xf32>
    %cst_347 = arith.constant 5.000000e-01 : f32
    %999 = vector.broadcast %cst_347 : f32 to vector<8x128xf32>
    %1000 = arith.mulf %999, %998 : vector<8x128xf32>
    %cst_348 = arith.constant 5.000000e-01 : f32
    %1001 = vector.broadcast %cst_348 : f32 to vector<8x128xf32>
    %1002 = arith.addf %1000, %1001 : vector<8x128xf32>
    %1003 = vector.broadcast %987 : f32 to vector<8x128xf32>
    %1004 = arith.mulf %1003, %1002 : vector<8x128xf32>
    %1005 = vector.broadcast %990 : f32 to vector<8x128xf32>
    %1006 = arith.addf %1004, %1005 : vector<8x128xf32>
    %1007 = math.tanh %1006 : vector<8x128xf32>
    %1008 = arith.mulf %1002, %1007 : vector<8x128xf32>
    %1009 = arith.addf %979, %1008 : vector<8x128xf32>
    %1010 = vector.extract_strided_slice %3 {offsets = [0, 1], sizes = [8, 1], strides = [1, 1]} : vector<8x16xf32> to vector<8x1xf32>
    %c2_349 = arith.constant 2 : index
    %c1_350 = arith.constant 1 : index
    %c0_351 = arith.constant 0 : index
    %1011 = vector.load %arg4[%c2_349, %c1_350, %c0_351] : memref<5x16x128xf32, #tpu.memory_space<vmem>>, vector<1x1x128xf32>
    %1012 = vector.shape_cast %1011 : vector<1x1x128xf32> to vector<1x128xf32>
    %c2_352 = arith.constant 2 : index
    %c1_353 = arith.constant 1 : index
    %c0_354 = arith.constant 0 : index
    %1013 = vector.load %arg5[%c2_352, %c1_353, %c0_354] : memref<5x16x128xf32, #tpu.memory_space<vmem>>, vector<1x1x128xf32>
    %1014 = vector.shape_cast %1013 : vector<1x1x128xf32> to vector<1x128xf32>
    %c1_i32_355 = arith.constant 1 : i32
    %1015 = arith.addi %4, %c1_i32_355 : i32
    %1016 = arith.index_cast %1015 : i32 to index
    %1017 = memref.load %arg6[%1016] : memref<16xf32, #tpu.memory_space<smem>>
    %c1_i32_356 = arith.constant 1 : i32
    %1018 = arith.addi %4, %c1_i32_356 : i32
    %1019 = arith.index_cast %1018 : i32 to index
    %1020 = memref.load %arg7[%1019] : memref<16xf32, #tpu.memory_space<smem>>
    %1021 = vector.broadcast %1010 : vector<8x1xf32> to vector<8x128xf32>
    %1022 = vector.broadcast %1012 : vector<1x128xf32> to vector<8x128xf32>
    %1023 = arith.mulf %1021, %1022 : vector<8x128xf32>
    %1024 = vector.broadcast %1014 : vector<1x128xf32> to vector<8x128xf32>
    %1025 = arith.subf %1023, %1024 : vector<8x128xf32>
    %cst_357 = arith.constant 5.000000e-01 : f32
    %1026 = vector.broadcast %cst_357 : f32 to vector<8x128xf32>
    %1027 = arith.mulf %1026, %1025 : vector<8x128xf32>
    %1028 = math.tanh %1027 : vector<8x128xf32>
    %cst_358 = arith.constant 5.000000e-01 : f32
    %1029 = vector.broadcast %cst_358 : f32 to vector<8x128xf32>
    %1030 = arith.mulf %1029, %1028 : vector<8x128xf32>
    %cst_359 = arith.constant 5.000000e-01 : f32
    %1031 = vector.broadcast %cst_359 : f32 to vector<8x128xf32>
    %1032 = arith.addf %1030, %1031 : vector<8x128xf32>
    %1033 = vector.broadcast %1017 : f32 to vector<8x128xf32>
    %1034 = arith.mulf %1033, %1032 : vector<8x128xf32>
    %1035 = vector.broadcast %1020 : f32 to vector<8x128xf32>
    %1036 = arith.addf %1034, %1035 : vector<8x128xf32>
    %1037 = math.tanh %1036 : vector<8x128xf32>
    %1038 = arith.mulf %1032, %1037 : vector<8x128xf32>
    %1039 = arith.addf %1009, %1038 : vector<8x128xf32>
    %1040 = vector.extract_strided_slice %3 {offsets = [0, 2], sizes = [8, 1], strides = [1, 1]} : vector<8x16xf32> to vector<8x1xf32>
    %c2_360 = arith.constant 2 : index
    %c2_361 = arith.constant 2 : index
    %c0_362 = arith.constant 0 : index
    %1041 = vector.load %arg4[%c2_360, %c2_361, %c0_362] : memref<5x16x128xf32, #tpu.memory_space<vmem>>, vector<1x1x128xf32>
    %1042 = vector.shape_cast %1041 : vector<1x1x128xf32> to vector<1x128xf32>
    %c2_363 = arith.constant 2 : index
    %c2_364 = arith.constant 2 : index
    %c0_365 = arith.constant 0 : index
    %1043 = vector.load %arg5[%c2_363, %c2_364, %c0_365] : memref<5x16x128xf32, #tpu.memory_space<vmem>>, vector<1x1x128xf32>
    %1044 = vector.shape_cast %1043 : vector<1x1x128xf32> to vector<1x128xf32>
    %c2_i32_366 = arith.constant 2 : i32
    %1045 = arith.addi %4, %c2_i32_366 : i32
    %1046 = arith.index_cast %1045 : i32 to index
    %1047 = memref.load %arg6[%1046] : memref<16xf32, #tpu.memory_space<smem>>
    %c2_i32_367 = arith.constant 2 : i32
    %1048 = arith.addi %4, %c2_i32_367 : i32
    %1049 = arith.index_cast %1048 : i32 to index
    %1050 = memref.load %arg7[%1049] : memref<16xf32, #tpu.memory_space<smem>>
    %1051 = vector.broadcast %1040 : vector<8x1xf32> to vector<8x128xf32>
    %1052 = vector.broadcast %1042 : vector<1x128xf32> to vector<8x128xf32>
    %1053 = arith.mulf %1051, %1052 : vector<8x128xf32>
    %1054 = vector.broadcast %1044 : vector<1x128xf32> to vector<8x128xf32>
    %1055 = arith.subf %1053, %1054 : vector<8x128xf32>
    %cst_368 = arith.constant 5.000000e-01 : f32
    %1056 = vector.broadcast %cst_368 : f32 to vector<8x128xf32>
    %1057 = arith.mulf %1056, %1055 : vector<8x128xf32>
    %1058 = math.tanh %1057 : vector<8x128xf32>
    %cst_369 = arith.constant 5.000000e-01 : f32
    %1059 = vector.broadcast %cst_369 : f32 to vector<8x128xf32>
    %1060 = arith.mulf %1059, %1058 : vector<8x128xf32>
    %cst_370 = arith.constant 5.000000e-01 : f32
    %1061 = vector.broadcast %cst_370 : f32 to vector<8x128xf32>
    %1062 = arith.addf %1060, %1061 : vector<8x128xf32>
    %1063 = vector.broadcast %1047 : f32 to vector<8x128xf32>
    %1064 = arith.mulf %1063, %1062 : vector<8x128xf32>
    %1065 = vector.broadcast %1050 : f32 to vector<8x128xf32>
    %1066 = arith.addf %1064, %1065 : vector<8x128xf32>
    %1067 = math.tanh %1066 : vector<8x128xf32>
    %1068 = arith.mulf %1062, %1067 : vector<8x128xf32>
    %1069 = arith.addf %1039, %1068 : vector<8x128xf32>
    %1070 = vector.extract_strided_slice %3 {offsets = [0, 3], sizes = [8, 1], strides = [1, 1]} : vector<8x16xf32> to vector<8x1xf32>
    %c2_371 = arith.constant 2 : index
    %c3_372 = arith.constant 3 : index
    %c0_373 = arith.constant 0 : index
    %1071 = vector.load %arg4[%c2_371, %c3_372, %c0_373] : memref<5x16x128xf32, #tpu.memory_space<vmem>>, vector<1x1x128xf32>
    %1072 = vector.shape_cast %1071 : vector<1x1x128xf32> to vector<1x128xf32>
    %c2_374 = arith.constant 2 : index
    %c3_375 = arith.constant 3 : index
    %c0_376 = arith.constant 0 : index
    %1073 = vector.load %arg5[%c2_374, %c3_375, %c0_376] : memref<5x16x128xf32, #tpu.memory_space<vmem>>, vector<1x1x128xf32>
    %1074 = vector.shape_cast %1073 : vector<1x1x128xf32> to vector<1x128xf32>
    %c3_i32_377 = arith.constant 3 : i32
    %1075 = arith.addi %4, %c3_i32_377 : i32
    %1076 = arith.index_cast %1075 : i32 to index
    %1077 = memref.load %arg6[%1076] : memref<16xf32, #tpu.memory_space<smem>>
    %c3_i32_378 = arith.constant 3 : i32
    %1078 = arith.addi %4, %c3_i32_378 : i32
    %1079 = arith.index_cast %1078 : i32 to index
    %1080 = memref.load %arg7[%1079] : memref<16xf32, #tpu.memory_space<smem>>
    %1081 = vector.broadcast %1070 : vector<8x1xf32> to vector<8x128xf32>
    %1082 = vector.broadcast %1072 : vector<1x128xf32> to vector<8x128xf32>
    %1083 = arith.mulf %1081, %1082 : vector<8x128xf32>
    %1084 = vector.broadcast %1074 : vector<1x128xf32> to vector<8x128xf32>
    %1085 = arith.subf %1083, %1084 : vector<8x128xf32>
    %cst_379 = arith.constant 5.000000e-01 : f32
    %1086 = vector.broadcast %cst_379 : f32 to vector<8x128xf32>
    %1087 = arith.mulf %1086, %1085 : vector<8x128xf32>
    %1088 = math.tanh %1087 : vector<8x128xf32>
    %cst_380 = arith.constant 5.000000e-01 : f32
    %1089 = vector.broadcast %cst_380 : f32 to vector<8x128xf32>
    %1090 = arith.mulf %1089, %1088 : vector<8x128xf32>
    %cst_381 = arith.constant 5.000000e-01 : f32
    %1091 = vector.broadcast %cst_381 : f32 to vector<8x128xf32>
    %1092 = arith.addf %1090, %1091 : vector<8x128xf32>
    %1093 = vector.broadcast %1077 : f32 to vector<8x128xf32>
    %1094 = arith.mulf %1093, %1092 : vector<8x128xf32>
    %1095 = vector.broadcast %1080 : f32 to vector<8x128xf32>
    %1096 = arith.addf %1094, %1095 : vector<8x128xf32>
    %1097 = math.tanh %1096 : vector<8x128xf32>
    %1098 = arith.mulf %1092, %1097 : vector<8x128xf32>
    %1099 = arith.addf %1069, %1098 : vector<8x128xf32>
    %1100 = vector.extract_strided_slice %3 {offsets = [0, 4], sizes = [8, 1], strides = [1, 1]} : vector<8x16xf32> to vector<8x1xf32>
    %c2_382 = arith.constant 2 : index
    %c4_383 = arith.constant 4 : index
    %c0_384 = arith.constant 0 : index
    %1101 = vector.load %arg4[%c2_382, %c4_383, %c0_384] : memref<5x16x128xf32, #tpu.memory_space<vmem>>, vector<1x1x128xf32>
    %1102 = vector.shape_cast %1101 : vector<1x1x128xf32> to vector<1x128xf32>
    %c2_385 = arith.constant 2 : index
    %c4_386 = arith.constant 4 : index
    %c0_387 = arith.constant 0 : index
    %1103 = vector.load %arg5[%c2_385, %c4_386, %c0_387] : memref<5x16x128xf32, #tpu.memory_space<vmem>>, vector<1x1x128xf32>
    %1104 = vector.shape_cast %1103 : vector<1x1x128xf32> to vector<1x128xf32>
    %c4_i32_388 = arith.constant 4 : i32
    %1105 = arith.addi %4, %c4_i32_388 : i32
    %1106 = arith.index_cast %1105 : i32 to index
    %1107 = memref.load %arg6[%1106] : memref<16xf32, #tpu.memory_space<smem>>
    %c4_i32_389 = arith.constant 4 : i32
    %1108 = arith.addi %4, %c4_i32_389 : i32
    %1109 = arith.index_cast %1108 : i32 to index
    %1110 = memref.load %arg7[%1109] : memref<16xf32, #tpu.memory_space<smem>>
    %1111 = vector.broadcast %1100 : vector<8x1xf32> to vector<8x128xf32>
    %1112 = vector.broadcast %1102 : vector<1x128xf32> to vector<8x128xf32>
    %1113 = arith.mulf %1111, %1112 : vector<8x128xf32>
    %1114 = vector.broadcast %1104 : vector<1x128xf32> to vector<8x128xf32>
    %1115 = arith.subf %1113, %1114 : vector<8x128xf32>
    %cst_390 = arith.constant 5.000000e-01 : f32
    %1116 = vector.broadcast %cst_390 : f32 to vector<8x128xf32>
    %1117 = arith.mulf %1116, %1115 : vector<8x128xf32>
    %1118 = math.tanh %1117 : vector<8x128xf32>
    %cst_391 = arith.constant 5.000000e-01 : f32
    %1119 = vector.broadcast %cst_391 : f32 to vector<8x128xf32>
    %1120 = arith.mulf %1119, %1118 : vector<8x128xf32>
    %cst_392 = arith.constant 5.000000e-01 : f32
    %1121 = vector.broadcast %cst_392 : f32 to vector<8x128xf32>
    %1122 = arith.addf %1120, %1121 : vector<8x128xf32>
    %1123 = vector.broadcast %1107 : f32 to vector<8x128xf32>
    %1124 = arith.mulf %1123, %1122 : vector<8x128xf32>
    %1125 = vector.broadcast %1110 : f32 to vector<8x128xf32>
    %1126 = arith.addf %1124, %1125 : vector<8x128xf32>
    %1127 = math.tanh %1126 : vector<8x128xf32>
    %1128 = arith.mulf %1122, %1127 : vector<8x128xf32>
    %1129 = arith.addf %1099, %1128 : vector<8x128xf32>
    %1130 = vector.extract_strided_slice %3 {offsets = [0, 5], sizes = [8, 1], strides = [1, 1]} : vector<8x16xf32> to vector<8x1xf32>
    %c2_393 = arith.constant 2 : index
    %c5_394 = arith.constant 5 : index
    %c0_395 = arith.constant 0 : index
    %1131 = vector.load %arg4[%c2_393, %c5_394, %c0_395] : memref<5x16x128xf32, #tpu.memory_space<vmem>>, vector<1x1x128xf32>
    %1132 = vector.shape_cast %1131 : vector<1x1x128xf32> to vector<1x128xf32>
    %c2_396 = arith.constant 2 : index
    %c5_397 = arith.constant 5 : index
    %c0_398 = arith.constant 0 : index
    %1133 = vector.load %arg5[%c2_396, %c5_397, %c0_398] : memref<5x16x128xf32, #tpu.memory_space<vmem>>, vector<1x1x128xf32>
    %1134 = vector.shape_cast %1133 : vector<1x1x128xf32> to vector<1x128xf32>
    %c5_i32_399 = arith.constant 5 : i32
    %1135 = arith.addi %4, %c5_i32_399 : i32
    %1136 = arith.index_cast %1135 : i32 to index
    %1137 = memref.load %arg6[%1136] : memref<16xf32, #tpu.memory_space<smem>>
    %c5_i32_400 = arith.constant 5 : i32
    %1138 = arith.addi %4, %c5_i32_400 : i32
    %1139 = arith.index_cast %1138 : i32 to index
    %1140 = memref.load %arg7[%1139] : memref<16xf32, #tpu.memory_space<smem>>
    %1141 = vector.broadcast %1130 : vector<8x1xf32> to vector<8x128xf32>
    %1142 = vector.broadcast %1132 : vector<1x128xf32> to vector<8x128xf32>
    %1143 = arith.mulf %1141, %1142 : vector<8x128xf32>
    %1144 = vector.broadcast %1134 : vector<1x128xf32> to vector<8x128xf32>
    %1145 = arith.subf %1143, %1144 : vector<8x128xf32>
    %cst_401 = arith.constant 5.000000e-01 : f32
    %1146 = vector.broadcast %cst_401 : f32 to vector<8x128xf32>
    %1147 = arith.mulf %1146, %1145 : vector<8x128xf32>
    %1148 = math.tanh %1147 : vector<8x128xf32>
    %cst_402 = arith.constant 5.000000e-01 : f32
    %1149 = vector.broadcast %cst_402 : f32 to vector<8x128xf32>
    %1150 = arith.mulf %1149, %1148 : vector<8x128xf32>
    %cst_403 = arith.constant 5.000000e-01 : f32
    %1151 = vector.broadcast %cst_403 : f32 to vector<8x128xf32>
    %1152 = arith.addf %1150, %1151 : vector<8x128xf32>
    %1153 = vector.broadcast %1137 : f32 to vector<8x128xf32>
    %1154 = arith.mulf %1153, %1152 : vector<8x128xf32>
    %1155 = vector.broadcast %1140 : f32 to vector<8x128xf32>
    %1156 = arith.addf %1154, %1155 : vector<8x128xf32>
    %1157 = math.tanh %1156 : vector<8x128xf32>
    %1158 = arith.mulf %1152, %1157 : vector<8x128xf32>
    %1159 = arith.addf %1129, %1158 : vector<8x128xf32>
    %1160 = vector.extract_strided_slice %3 {offsets = [0, 6], sizes = [8, 1], strides = [1, 1]} : vector<8x16xf32> to vector<8x1xf32>
    %c2_404 = arith.constant 2 : index
    %c6_405 = arith.constant 6 : index
    %c0_406 = arith.constant 0 : index
    %1161 = vector.load %arg4[%c2_404, %c6_405, %c0_406] : memref<5x16x128xf32, #tpu.memory_space<vmem>>, vector<1x1x128xf32>
    %1162 = vector.shape_cast %1161 : vector<1x1x128xf32> to vector<1x128xf32>
    %c2_407 = arith.constant 2 : index
    %c6_408 = arith.constant 6 : index
    %c0_409 = arith.constant 0 : index
    %1163 = vector.load %arg5[%c2_407, %c6_408, %c0_409] : memref<5x16x128xf32, #tpu.memory_space<vmem>>, vector<1x1x128xf32>
    %1164 = vector.shape_cast %1163 : vector<1x1x128xf32> to vector<1x128xf32>
    %c6_i32_410 = arith.constant 6 : i32
    %1165 = arith.addi %4, %c6_i32_410 : i32
    %1166 = arith.index_cast %1165 : i32 to index
    %1167 = memref.load %arg6[%1166] : memref<16xf32, #tpu.memory_space<smem>>
    %c6_i32_411 = arith.constant 6 : i32
    %1168 = arith.addi %4, %c6_i32_411 : i32
    %1169 = arith.index_cast %1168 : i32 to index
    %1170 = memref.load %arg7[%1169] : memref<16xf32, #tpu.memory_space<smem>>
    %1171 = vector.broadcast %1160 : vector<8x1xf32> to vector<8x128xf32>
    %1172 = vector.broadcast %1162 : vector<1x128xf32> to vector<8x128xf32>
    %1173 = arith.mulf %1171, %1172 : vector<8x128xf32>
    %1174 = vector.broadcast %1164 : vector<1x128xf32> to vector<8x128xf32>
    %1175 = arith.subf %1173, %1174 : vector<8x128xf32>
    %cst_412 = arith.constant 5.000000e-01 : f32
    %1176 = vector.broadcast %cst_412 : f32 to vector<8x128xf32>
    %1177 = arith.mulf %1176, %1175 : vector<8x128xf32>
    %1178 = math.tanh %1177 : vector<8x128xf32>
    %cst_413 = arith.constant 5.000000e-01 : f32
    %1179 = vector.broadcast %cst_413 : f32 to vector<8x128xf32>
    %1180 = arith.mulf %1179, %1178 : vector<8x128xf32>
    %cst_414 = arith.constant 5.000000e-01 : f32
    %1181 = vector.broadcast %cst_414 : f32 to vector<8x128xf32>
    %1182 = arith.addf %1180, %1181 : vector<8x128xf32>
    %1183 = vector.broadcast %1167 : f32 to vector<8x128xf32>
    %1184 = arith.mulf %1183, %1182 : vector<8x128xf32>
    %1185 = vector.broadcast %1170 : f32 to vector<8x128xf32>
    %1186 = arith.addf %1184, %1185 : vector<8x128xf32>
    %1187 = math.tanh %1186 : vector<8x128xf32>
    %1188 = arith.mulf %1182, %1187 : vector<8x128xf32>
    %1189 = arith.addf %1159, %1188 : vector<8x128xf32>
    %1190 = vector.extract_strided_slice %3 {offsets = [0, 7], sizes = [8, 1], strides = [1, 1]} : vector<8x16xf32> to vector<8x1xf32>
    %c2_415 = arith.constant 2 : index
    %c7_416 = arith.constant 7 : index
    %c0_417 = arith.constant 0 : index
    %1191 = vector.load %arg4[%c2_415, %c7_416, %c0_417] : memref<5x16x128xf32, #tpu.memory_space<vmem>>, vector<1x1x128xf32>
    %1192 = vector.shape_cast %1191 : vector<1x1x128xf32> to vector<1x128xf32>
    %c2_418 = arith.constant 2 : index
    %c7_419 = arith.constant 7 : index
    %c0_420 = arith.constant 0 : index
    %1193 = vector.load %arg5[%c2_418, %c7_419, %c0_420] : memref<5x16x128xf32, #tpu.memory_space<vmem>>, vector<1x1x128xf32>
    %1194 = vector.shape_cast %1193 : vector<1x1x128xf32> to vector<1x128xf32>
    %c7_i32_421 = arith.constant 7 : i32
    %1195 = arith.addi %4, %c7_i32_421 : i32
    %1196 = arith.index_cast %1195 : i32 to index
    %1197 = memref.load %arg6[%1196] : memref<16xf32, #tpu.memory_space<smem>>
    %c7_i32_422 = arith.constant 7 : i32
    %1198 = arith.addi %4, %c7_i32_422 : i32
    %1199 = arith.index_cast %1198 : i32 to index
    %1200 = memref.load %arg7[%1199] : memref<16xf32, #tpu.memory_space<smem>>
    %1201 = vector.broadcast %1190 : vector<8x1xf32> to vector<8x128xf32>
    %1202 = vector.broadcast %1192 : vector<1x128xf32> to vector<8x128xf32>
    %1203 = arith.mulf %1201, %1202 : vector<8x128xf32>
    %1204 = vector.broadcast %1194 : vector<1x128xf32> to vector<8x128xf32>
    %1205 = arith.subf %1203, %1204 : vector<8x128xf32>
    %cst_423 = arith.constant 5.000000e-01 : f32
    %1206 = vector.broadcast %cst_423 : f32 to vector<8x128xf32>
    %1207 = arith.mulf %1206, %1205 : vector<8x128xf32>
    %1208 = math.tanh %1207 : vector<8x128xf32>
    %cst_424 = arith.constant 5.000000e-01 : f32
    %1209 = vector.broadcast %cst_424 : f32 to vector<8x128xf32>
    %1210 = arith.mulf %1209, %1208 : vector<8x128xf32>
    %cst_425 = arith.constant 5.000000e-01 : f32
    %1211 = vector.broadcast %cst_425 : f32 to vector<8x128xf32>
    %1212 = arith.addf %1210, %1211 : vector<8x128xf32>
    %1213 = vector.broadcast %1197 : f32 to vector<8x128xf32>
    %1214 = arith.mulf %1213, %1212 : vector<8x128xf32>
    %1215 = vector.broadcast %1200 : f32 to vector<8x128xf32>
    %1216 = arith.addf %1214, %1215 : vector<8x128xf32>
    %1217 = math.tanh %1216 : vector<8x128xf32>
    %1218 = arith.mulf %1212, %1217 : vector<8x128xf32>
    %1219 = arith.addf %1189, %1218 : vector<8x128xf32>
    %1220 = vector.extract_strided_slice %3 {offsets = [0, 8], sizes = [8, 1], strides = [1, 1]} : vector<8x16xf32> to vector<8x1xf32>
    %c2_426 = arith.constant 2 : index
    %c8_427 = arith.constant 8 : index
    %c0_428 = arith.constant 0 : index
    %1221 = vector.load %arg4[%c2_426, %c8_427, %c0_428] : memref<5x16x128xf32, #tpu.memory_space<vmem>>, vector<1x1x128xf32>
    %1222 = vector.shape_cast %1221 : vector<1x1x128xf32> to vector<1x128xf32>
    %c2_429 = arith.constant 2 : index
    %c8_430 = arith.constant 8 : index
    %c0_431 = arith.constant 0 : index
    %1223 = vector.load %arg5[%c2_429, %c8_430, %c0_431] : memref<5x16x128xf32, #tpu.memory_space<vmem>>, vector<1x1x128xf32>
    %1224 = vector.shape_cast %1223 : vector<1x1x128xf32> to vector<1x128xf32>
    %c8_i32_432 = arith.constant 8 : i32
    %1225 = arith.addi %4, %c8_i32_432 : i32
    %1226 = arith.index_cast %1225 : i32 to index
    %1227 = memref.load %arg6[%1226] : memref<16xf32, #tpu.memory_space<smem>>
    %c8_i32_433 = arith.constant 8 : i32
    %1228 = arith.addi %4, %c8_i32_433 : i32
    %1229 = arith.index_cast %1228 : i32 to index
    %1230 = memref.load %arg7[%1229] : memref<16xf32, #tpu.memory_space<smem>>
    %1231 = vector.broadcast %1220 : vector<8x1xf32> to vector<8x128xf32>
    %1232 = vector.broadcast %1222 : vector<1x128xf32> to vector<8x128xf32>
    %1233 = arith.mulf %1231, %1232 : vector<8x128xf32>
    %1234 = vector.broadcast %1224 : vector<1x128xf32> to vector<8x128xf32>
    %1235 = arith.subf %1233, %1234 : vector<8x128xf32>
    %cst_434 = arith.constant 5.000000e-01 : f32
    %1236 = vector.broadcast %cst_434 : f32 to vector<8x128xf32>
    %1237 = arith.mulf %1236, %1235 : vector<8x128xf32>
    %1238 = math.tanh %1237 : vector<8x128xf32>
    %cst_435 = arith.constant 5.000000e-01 : f32
    %1239 = vector.broadcast %cst_435 : f32 to vector<8x128xf32>
    %1240 = arith.mulf %1239, %1238 : vector<8x128xf32>
    %cst_436 = arith.constant 5.000000e-01 : f32
    %1241 = vector.broadcast %cst_436 : f32 to vector<8x128xf32>
    %1242 = arith.addf %1240, %1241 : vector<8x128xf32>
    %1243 = vector.broadcast %1227 : f32 to vector<8x128xf32>
    %1244 = arith.mulf %1243, %1242 : vector<8x128xf32>
    %1245 = vector.broadcast %1230 : f32 to vector<8x128xf32>
    %1246 = arith.addf %1244, %1245 : vector<8x128xf32>
    %1247 = math.tanh %1246 : vector<8x128xf32>
    %1248 = arith.mulf %1242, %1247 : vector<8x128xf32>
    %1249 = arith.addf %1219, %1248 : vector<8x128xf32>
    %1250 = vector.extract_strided_slice %3 {offsets = [0, 9], sizes = [8, 1], strides = [1, 1]} : vector<8x16xf32> to vector<8x1xf32>
    %c2_437 = arith.constant 2 : index
    %c9_438 = arith.constant 9 : index
    %c0_439 = arith.constant 0 : index
    %1251 = vector.load %arg4[%c2_437, %c9_438, %c0_439] : memref<5x16x128xf32, #tpu.memory_space<vmem>>, vector<1x1x128xf32>
    %1252 = vector.shape_cast %1251 : vector<1x1x128xf32> to vector<1x128xf32>
    %c2_440 = arith.constant 2 : index
    %c9_441 = arith.constant 9 : index
    %c0_442 = arith.constant 0 : index
    %1253 = vector.load %arg5[%c2_440, %c9_441, %c0_442] : memref<5x16x128xf32, #tpu.memory_space<vmem>>, vector<1x1x128xf32>
    %1254 = vector.shape_cast %1253 : vector<1x1x128xf32> to vector<1x128xf32>
    %c9_i32_443 = arith.constant 9 : i32
    %1255 = arith.addi %4, %c9_i32_443 : i32
    %1256 = arith.index_cast %1255 : i32 to index
    %1257 = memref.load %arg6[%1256] : memref<16xf32, #tpu.memory_space<smem>>
    %c9_i32_444 = arith.constant 9 : i32
    %1258 = arith.addi %4, %c9_i32_444 : i32
    %1259 = arith.index_cast %1258 : i32 to index
    %1260 = memref.load %arg7[%1259] : memref<16xf32, #tpu.memory_space<smem>>
    %1261 = vector.broadcast %1250 : vector<8x1xf32> to vector<8x128xf32>
    %1262 = vector.broadcast %1252 : vector<1x128xf32> to vector<8x128xf32>
    %1263 = arith.mulf %1261, %1262 : vector<8x128xf32>
    %1264 = vector.broadcast %1254 : vector<1x128xf32> to vector<8x128xf32>
    %1265 = arith.subf %1263, %1264 : vector<8x128xf32>
    %cst_445 = arith.constant 5.000000e-01 : f32
    %1266 = vector.broadcast %cst_445 : f32 to vector<8x128xf32>
    %1267 = arith.mulf %1266, %1265 : vector<8x128xf32>
    %1268 = math.tanh %1267 : vector<8x128xf32>
    %cst_446 = arith.constant 5.000000e-01 : f32
    %1269 = vector.broadcast %cst_446 : f32 to vector<8x128xf32>
    %1270 = arith.mulf %1269, %1268 : vector<8x128xf32>
    %cst_447 = arith.constant 5.000000e-01 : f32
    %1271 = vector.broadcast %cst_447 : f32 to vector<8x128xf32>
    %1272 = arith.addf %1270, %1271 : vector<8x128xf32>
    %1273 = vector.broadcast %1257 : f32 to vector<8x128xf32>
    %1274 = arith.mulf %1273, %1272 : vector<8x128xf32>
    %1275 = vector.broadcast %1260 : f32 to vector<8x128xf32>
    %1276 = arith.addf %1274, %1275 : vector<8x128xf32>
    %1277 = math.tanh %1276 : vector<8x128xf32>
    %1278 = arith.mulf %1272, %1277 : vector<8x128xf32>
    %1279 = arith.addf %1249, %1278 : vector<8x128xf32>
    %1280 = vector.extract_strided_slice %3 {offsets = [0, 10], sizes = [8, 1], strides = [1, 1]} : vector<8x16xf32> to vector<8x1xf32>
    %c2_448 = arith.constant 2 : index
    %c10_449 = arith.constant 10 : index
    %c0_450 = arith.constant 0 : index
    %1281 = vector.load %arg4[%c2_448, %c10_449, %c0_450] : memref<5x16x128xf32, #tpu.memory_space<vmem>>, vector<1x1x128xf32>
    %1282 = vector.shape_cast %1281 : vector<1x1x128xf32> to vector<1x128xf32>
    %c2_451 = arith.constant 2 : index
    %c10_452 = arith.constant 10 : index
    %c0_453 = arith.constant 0 : index
    %1283 = vector.load %arg5[%c2_451, %c10_452, %c0_453] : memref<5x16x128xf32, #tpu.memory_space<vmem>>, vector<1x1x128xf32>
    %1284 = vector.shape_cast %1283 : vector<1x1x128xf32> to vector<1x128xf32>
    %c10_i32_454 = arith.constant 10 : i32
    %1285 = arith.addi %4, %c10_i32_454 : i32
    %1286 = arith.index_cast %1285 : i32 to index
    %1287 = memref.load %arg6[%1286] : memref<16xf32, #tpu.memory_space<smem>>
    %c10_i32_455 = arith.constant 10 : i32
    %1288 = arith.addi %4, %c10_i32_455 : i32
    %1289 = arith.index_cast %1288 : i32 to index
    %1290 = memref.load %arg7[%1289] : memref<16xf32, #tpu.memory_space<smem>>
    %1291 = vector.broadcast %1280 : vector<8x1xf32> to vector<8x128xf32>
    %1292 = vector.broadcast %1282 : vector<1x128xf32> to vector<8x128xf32>
    %1293 = arith.mulf %1291, %1292 : vector<8x128xf32>
    %1294 = vector.broadcast %1284 : vector<1x128xf32> to vector<8x128xf32>
    %1295 = arith.subf %1293, %1294 : vector<8x128xf32>
    %cst_456 = arith.constant 5.000000e-01 : f32
    %1296 = vector.broadcast %cst_456 : f32 to vector<8x128xf32>
    %1297 = arith.mulf %1296, %1295 : vector<8x128xf32>
    %1298 = math.tanh %1297 : vector<8x128xf32>
    %cst_457 = arith.constant 5.000000e-01 : f32
    %1299 = vector.broadcast %cst_457 : f32 to vector<8x128xf32>
    %1300 = arith.mulf %1299, %1298 : vector<8x128xf32>
    %cst_458 = arith.constant 5.000000e-01 : f32
    %1301 = vector.broadcast %cst_458 : f32 to vector<8x128xf32>
    %1302 = arith.addf %1300, %1301 : vector<8x128xf32>
    %1303 = vector.broadcast %1287 : f32 to vector<8x128xf32>
    %1304 = arith.mulf %1303, %1302 : vector<8x128xf32>
    %1305 = vector.broadcast %1290 : f32 to vector<8x128xf32>
    %1306 = arith.addf %1304, %1305 : vector<8x128xf32>
    %1307 = math.tanh %1306 : vector<8x128xf32>
    %1308 = arith.mulf %1302, %1307 : vector<8x128xf32>
    %1309 = arith.addf %1279, %1308 : vector<8x128xf32>
    %1310 = vector.extract_strided_slice %3 {offsets = [0, 11], sizes = [8, 1], strides = [1, 1]} : vector<8x16xf32> to vector<8x1xf32>
    %c2_459 = arith.constant 2 : index
    %c11_460 = arith.constant 11 : index
    %c0_461 = arith.constant 0 : index
    %1311 = vector.load %arg4[%c2_459, %c11_460, %c0_461] : memref<5x16x128xf32, #tpu.memory_space<vmem>>, vector<1x1x128xf32>
    %1312 = vector.shape_cast %1311 : vector<1x1x128xf32> to vector<1x128xf32>
    %c2_462 = arith.constant 2 : index
    %c11_463 = arith.constant 11 : index
    %c0_464 = arith.constant 0 : index
    %1313 = vector.load %arg5[%c2_462, %c11_463, %c0_464] : memref<5x16x128xf32, #tpu.memory_space<vmem>>, vector<1x1x128xf32>
    %1314 = vector.shape_cast %1313 : vector<1x1x128xf32> to vector<1x128xf32>
    %c11_i32_465 = arith.constant 11 : i32
    %1315 = arith.addi %4, %c11_i32_465 : i32
    %1316 = arith.index_cast %1315 : i32 to index
    %1317 = memref.load %arg6[%1316] : memref<16xf32, #tpu.memory_space<smem>>
    %c11_i32_466 = arith.constant 11 : i32
    %1318 = arith.addi %4, %c11_i32_466 : i32
    %1319 = arith.index_cast %1318 : i32 to index
    %1320 = memref.load %arg7[%1319] : memref<16xf32, #tpu.memory_space<smem>>
    %1321 = vector.broadcast %1310 : vector<8x1xf32> to vector<8x128xf32>
    %1322 = vector.broadcast %1312 : vector<1x128xf32> to vector<8x128xf32>
    %1323 = arith.mulf %1321, %1322 : vector<8x128xf32>
    %1324 = vector.broadcast %1314 : vector<1x128xf32> to vector<8x128xf32>
    %1325 = arith.subf %1323, %1324 : vector<8x128xf32>
    %cst_467 = arith.constant 5.000000e-01 : f32
    %1326 = vector.broadcast %cst_467 : f32 to vector<8x128xf32>
    %1327 = arith.mulf %1326, %1325 : vector<8x128xf32>
    %1328 = math.tanh %1327 : vector<8x128xf32>
    %cst_468 = arith.constant 5.000000e-01 : f32
    %1329 = vector.broadcast %cst_468 : f32 to vector<8x128xf32>
    %1330 = arith.mulf %1329, %1328 : vector<8x128xf32>
    %cst_469 = arith.constant 5.000000e-01 : f32
    %1331 = vector.broadcast %cst_469 : f32 to vector<8x128xf32>
    %1332 = arith.addf %1330, %1331 : vector<8x128xf32>
    %1333 = vector.broadcast %1317 : f32 to vector<8x128xf32>
    %1334 = arith.mulf %1333, %1332 : vector<8x128xf32>
    %1335 = vector.broadcast %1320 : f32 to vector<8x128xf32>
    %1336 = arith.addf %1334, %1335 : vector<8x128xf32>
    %1337 = math.tanh %1336 : vector<8x128xf32>
    %1338 = arith.mulf %1332, %1337 : vector<8x128xf32>
    %1339 = arith.addf %1309, %1338 : vector<8x128xf32>
    %1340 = vector.extract_strided_slice %3 {offsets = [0, 12], sizes = [8, 1], strides = [1, 1]} : vector<8x16xf32> to vector<8x1xf32>
    %c2_470 = arith.constant 2 : index
    %c12_471 = arith.constant 12 : index
    %c0_472 = arith.constant 0 : index
    %1341 = vector.load %arg4[%c2_470, %c12_471, %c0_472] : memref<5x16x128xf32, #tpu.memory_space<vmem>>, vector<1x1x128xf32>
    %1342 = vector.shape_cast %1341 : vector<1x1x128xf32> to vector<1x128xf32>
    %c2_473 = arith.constant 2 : index
    %c12_474 = arith.constant 12 : index
    %c0_475 = arith.constant 0 : index
    %1343 = vector.load %arg5[%c2_473, %c12_474, %c0_475] : memref<5x16x128xf32, #tpu.memory_space<vmem>>, vector<1x1x128xf32>
    %1344 = vector.shape_cast %1343 : vector<1x1x128xf32> to vector<1x128xf32>
    %c12_i32_476 = arith.constant 12 : i32
    %1345 = arith.addi %4, %c12_i32_476 : i32
    %1346 = arith.index_cast %1345 : i32 to index
    %1347 = memref.load %arg6[%1346] : memref<16xf32, #tpu.memory_space<smem>>
    %c12_i32_477 = arith.constant 12 : i32
    %1348 = arith.addi %4, %c12_i32_477 : i32
    %1349 = arith.index_cast %1348 : i32 to index
    %1350 = memref.load %arg7[%1349] : memref<16xf32, #tpu.memory_space<smem>>
    %1351 = vector.broadcast %1340 : vector<8x1xf32> to vector<8x128xf32>
    %1352 = vector.broadcast %1342 : vector<1x128xf32> to vector<8x128xf32>
    %1353 = arith.mulf %1351, %1352 : vector<8x128xf32>
    %1354 = vector.broadcast %1344 : vector<1x128xf32> to vector<8x128xf32>
    %1355 = arith.subf %1353, %1354 : vector<8x128xf32>
    %cst_478 = arith.constant 5.000000e-01 : f32
    %1356 = vector.broadcast %cst_478 : f32 to vector<8x128xf32>
    %1357 = arith.mulf %1356, %1355 : vector<8x128xf32>
    %1358 = math.tanh %1357 : vector<8x128xf32>
    %cst_479 = arith.constant 5.000000e-01 : f32
    %1359 = vector.broadcast %cst_479 : f32 to vector<8x128xf32>
    %1360 = arith.mulf %1359, %1358 : vector<8x128xf32>
    %cst_480 = arith.constant 5.000000e-01 : f32
    %1361 = vector.broadcast %cst_480 : f32 to vector<8x128xf32>
    %1362 = arith.addf %1360, %1361 : vector<8x128xf32>
    %1363 = vector.broadcast %1347 : f32 to vector<8x128xf32>
    %1364 = arith.mulf %1363, %1362 : vector<8x128xf32>
    %1365 = vector.broadcast %1350 : f32 to vector<8x128xf32>
    %1366 = arith.addf %1364, %1365 : vector<8x128xf32>
    %1367 = math.tanh %1366 : vector<8x128xf32>
    %1368 = arith.mulf %1362, %1367 : vector<8x128xf32>
    %1369 = arith.addf %1339, %1368 : vector<8x128xf32>
    %1370 = vector.extract_strided_slice %3 {offsets = [0, 13], sizes = [8, 1], strides = [1, 1]} : vector<8x16xf32> to vector<8x1xf32>
    %c2_481 = arith.constant 2 : index
    %c13_482 = arith.constant 13 : index
    %c0_483 = arith.constant 0 : index
    %1371 = vector.load %arg4[%c2_481, %c13_482, %c0_483] : memref<5x16x128xf32, #tpu.memory_space<vmem>>, vector<1x1x128xf32>
    %1372 = vector.shape_cast %1371 : vector<1x1x128xf32> to vector<1x128xf32>
    %c2_484 = arith.constant 2 : index
    %c13_485 = arith.constant 13 : index
    %c0_486 = arith.constant 0 : index
    %1373 = vector.load %arg5[%c2_484, %c13_485, %c0_486] : memref<5x16x128xf32, #tpu.memory_space<vmem>>, vector<1x1x128xf32>
    %1374 = vector.shape_cast %1373 : vector<1x1x128xf32> to vector<1x128xf32>
    %c13_i32_487 = arith.constant 13 : i32
    %1375 = arith.addi %4, %c13_i32_487 : i32
    %1376 = arith.index_cast %1375 : i32 to index
    %1377 = memref.load %arg6[%1376] : memref<16xf32, #tpu.memory_space<smem>>
    %c13_i32_488 = arith.constant 13 : i32
    %1378 = arith.addi %4, %c13_i32_488 : i32
    %1379 = arith.index_cast %1378 : i32 to index
    %1380 = memref.load %arg7[%1379] : memref<16xf32, #tpu.memory_space<smem>>
    %1381 = vector.broadcast %1370 : vector<8x1xf32> to vector<8x128xf32>
    %1382 = vector.broadcast %1372 : vector<1x128xf32> to vector<8x128xf32>
    %1383 = arith.mulf %1381, %1382 : vector<8x128xf32>
    %1384 = vector.broadcast %1374 : vector<1x128xf32> to vector<8x128xf32>
    %1385 = arith.subf %1383, %1384 : vector<8x128xf32>
    %cst_489 = arith.constant 5.000000e-01 : f32
    %1386 = vector.broadcast %cst_489 : f32 to vector<8x128xf32>
    %1387 = arith.mulf %1386, %1385 : vector<8x128xf32>
    %1388 = math.tanh %1387 : vector<8x128xf32>
    %cst_490 = arith.constant 5.000000e-01 : f32
    %1389 = vector.broadcast %cst_490 : f32 to vector<8x128xf32>
    %1390 = arith.mulf %1389, %1388 : vector<8x128xf32>
    %cst_491 = arith.constant 5.000000e-01 : f32
    %1391 = vector.broadcast %cst_491 : f32 to vector<8x128xf32>
    %1392 = arith.addf %1390, %1391 : vector<8x128xf32>
    %1393 = vector.broadcast %1377 : f32 to vector<8x128xf32>
    %1394 = arith.mulf %1393, %1392 : vector<8x128xf32>
    %1395 = vector.broadcast %1380 : f32 to vector<8x128xf32>
    %1396 = arith.addf %1394, %1395 : vector<8x128xf32>
    %1397 = math.tanh %1396 : vector<8x128xf32>
    %1398 = arith.mulf %1392, %1397 : vector<8x128xf32>
    %1399 = arith.addf %1369, %1398 : vector<8x128xf32>
    %1400 = vector.extract_strided_slice %3 {offsets = [0, 14], sizes = [8, 1], strides = [1, 1]} : vector<8x16xf32> to vector<8x1xf32>
    %c2_492 = arith.constant 2 : index
    %c14_493 = arith.constant 14 : index
    %c0_494 = arith.constant 0 : index
    %1401 = vector.load %arg4[%c2_492, %c14_493, %c0_494] : memref<5x16x128xf32, #tpu.memory_space<vmem>>, vector<1x1x128xf32>
    %1402 = vector.shape_cast %1401 : vector<1x1x128xf32> to vector<1x128xf32>
    %c2_495 = arith.constant 2 : index
    %c14_496 = arith.constant 14 : index
    %c0_497 = arith.constant 0 : index
    %1403 = vector.load %arg5[%c2_495, %c14_496, %c0_497] : memref<5x16x128xf32, #tpu.memory_space<vmem>>, vector<1x1x128xf32>
    %1404 = vector.shape_cast %1403 : vector<1x1x128xf32> to vector<1x128xf32>
    %c14_i32_498 = arith.constant 14 : i32
    %1405 = arith.addi %4, %c14_i32_498 : i32
    %1406 = arith.index_cast %1405 : i32 to index
    %1407 = memref.load %arg6[%1406] : memref<16xf32, #tpu.memory_space<smem>>
    %c14_i32_499 = arith.constant 14 : i32
    %1408 = arith.addi %4, %c14_i32_499 : i32
    %1409 = arith.index_cast %1408 : i32 to index
    %1410 = memref.load %arg7[%1409] : memref<16xf32, #tpu.memory_space<smem>>
    %1411 = vector.broadcast %1400 : vector<8x1xf32> to vector<8x128xf32>
    %1412 = vector.broadcast %1402 : vector<1x128xf32> to vector<8x128xf32>
    %1413 = arith.mulf %1411, %1412 : vector<8x128xf32>
    %1414 = vector.broadcast %1404 : vector<1x128xf32> to vector<8x128xf32>
    %1415 = arith.subf %1413, %1414 : vector<8x128xf32>
    %cst_500 = arith.constant 5.000000e-01 : f32
    %1416 = vector.broadcast %cst_500 : f32 to vector<8x128xf32>
    %1417 = arith.mulf %1416, %1415 : vector<8x128xf32>
    %1418 = math.tanh %1417 : vector<8x128xf32>
    %cst_501 = arith.constant 5.000000e-01 : f32
    %1419 = vector.broadcast %cst_501 : f32 to vector<8x128xf32>
    %1420 = arith.mulf %1419, %1418 : vector<8x128xf32>
    %cst_502 = arith.constant 5.000000e-01 : f32
    %1421 = vector.broadcast %cst_502 : f32 to vector<8x128xf32>
    %1422 = arith.addf %1420, %1421 : vector<8x128xf32>
    %1423 = vector.broadcast %1407 : f32 to vector<8x128xf32>
    %1424 = arith.mulf %1423, %1422 : vector<8x128xf32>
    %1425 = vector.broadcast %1410 : f32 to vector<8x128xf32>
    %1426 = arith.addf %1424, %1425 : vector<8x128xf32>
    %1427 = math.tanh %1426 : vector<8x128xf32>
    %1428 = arith.mulf %1422, %1427 : vector<8x128xf32>
    %1429 = arith.addf %1399, %1428 : vector<8x128xf32>
    %1430 = vector.extract_strided_slice %3 {offsets = [0, 15], sizes = [8, 1], strides = [1, 1]} : vector<8x16xf32> to vector<8x1xf32>
    %c2_503 = arith.constant 2 : index
    %c15_504 = arith.constant 15 : index
    %c0_505 = arith.constant 0 : index
    %1431 = vector.load %arg4[%c2_503, %c15_504, %c0_505] : memref<5x16x128xf32, #tpu.memory_space<vmem>>, vector<1x1x128xf32>
    %1432 = vector.shape_cast %1431 : vector<1x1x128xf32> to vector<1x128xf32>
    %c2_506 = arith.constant 2 : index
    %c15_507 = arith.constant 15 : index
    %c0_508 = arith.constant 0 : index
    %1433 = vector.load %arg5[%c2_506, %c15_507, %c0_508] : memref<5x16x128xf32, #tpu.memory_space<vmem>>, vector<1x1x128xf32>
    %1434 = vector.shape_cast %1433 : vector<1x1x128xf32> to vector<1x128xf32>
    %c15_i32_509 = arith.constant 15 : i32
    %1435 = arith.addi %4, %c15_i32_509 : i32
    %1436 = arith.index_cast %1435 : i32 to index
    %1437 = memref.load %arg6[%1436] : memref<16xf32, #tpu.memory_space<smem>>
    %c15_i32_510 = arith.constant 15 : i32
    %1438 = arith.addi %4, %c15_i32_510 : i32
    %1439 = arith.index_cast %1438 : i32 to index
    %1440 = memref.load %arg7[%1439] : memref<16xf32, #tpu.memory_space<smem>>
    %1441 = vector.broadcast %1430 : vector<8x1xf32> to vector<8x128xf32>
    %1442 = vector.broadcast %1432 : vector<1x128xf32> to vector<8x128xf32>
    %1443 = arith.mulf %1441, %1442 : vector<8x128xf32>
    %1444 = vector.broadcast %1434 : vector<1x128xf32> to vector<8x128xf32>
    %1445 = arith.subf %1443, %1444 : vector<8x128xf32>
    %cst_511 = arith.constant 5.000000e-01 : f32
    %1446 = vector.broadcast %cst_511 : f32 to vector<8x128xf32>
    %1447 = arith.mulf %1446, %1445 : vector<8x128xf32>
    %1448 = math.tanh %1447 : vector<8x128xf32>
    %cst_512 = arith.constant 5.000000e-01 : f32
    %1449 = vector.broadcast %cst_512 : f32 to vector<8x128xf32>
    %1450 = arith.mulf %1449, %1448 : vector<8x128xf32>
    %cst_513 = arith.constant 5.000000e-01 : f32
    %1451 = vector.broadcast %cst_513 : f32 to vector<8x128xf32>
    %1452 = arith.addf %1450, %1451 : vector<8x128xf32>
    %1453 = vector.broadcast %1437 : f32 to vector<8x128xf32>
    %1454 = arith.mulf %1453, %1452 : vector<8x128xf32>
    %1455 = vector.broadcast %1440 : f32 to vector<8x128xf32>
    %1456 = arith.addf %1454, %1455 : vector<8x128xf32>
    %1457 = math.tanh %1456 : vector<8x128xf32>
    %1458 = arith.mulf %1452, %1457 : vector<8x128xf32>
    %1459 = arith.addf %1429, %1458 : vector<8x128xf32>
    %c2_514 = arith.constant 2 : index
    %c0_515 = arith.constant 0 : index
    %c0_516 = arith.constant 0 : index
    %1460 = vector.load %arg10[%c2_514, %c0_515, %c0_516] : memref<5x8x128xf32, #tpu.memory_space<vmem>>, vector<1x8x128xf32>
    %1461 = vector.shape_cast %1460 : vector<1x8x128xf32> to vector<8x128xf32>
    %1462 = arith.addf %1461, %1459 : vector<8x128xf32>
    %c2_517 = arith.constant 2 : index
    %c0_518 = arith.constant 0 : index
    %c0_519 = arith.constant 0 : index
    %1463 = vector.load %arg10[%c2_517, %c0_518, %c0_519] : memref<5x8x128xf32, #tpu.memory_space<vmem>>, vector<1x8x128xf32>
    %1464 = vector.shape_cast %1463 : vector<1x8x128xf32> to vector<8x128xf32>
    %1465 = vector.shape_cast %1462 : vector<8x128xf32> to vector<1x8x128xf32>
    tpu.vector_store %arg10[%c2_517, %c0_518, %c0_519], %1465 {strides = array<i32>} : memref<5x8x128xf32, #tpu.memory_space<vmem>>, vector<1x8x128xf32>,
    %cst_520 = arith.constant 0.000000e+00 : f32
    %1466 = vector.broadcast %cst_520 : f32 to vector<8x128xf32>
    %1467 = vector.extract_strided_slice %3 {offsets = [0, 0], sizes = [8, 1], strides = [1, 1]} : vector<8x16xf32> to vector<8x1xf32>
    %c3_521 = arith.constant 3 : index
    %c0_522 = arith.constant 0 : index
    %c0_523 = arith.constant 0 : index
    %1468 = vector.load %arg4[%c3_521, %c0_522, %c0_523] : memref<5x16x128xf32, #tpu.memory_space<vmem>>, vector<1x1x128xf32>
    %1469 = vector.shape_cast %1468 : vector<1x1x128xf32> to vector<1x128xf32>
    %c3_524 = arith.constant 3 : index
    %c0_525 = arith.constant 0 : index
    %c0_526 = arith.constant 0 : index
    %1470 = vector.load %arg5[%c3_524, %c0_525, %c0_526] : memref<5x16x128xf32, #tpu.memory_space<vmem>>, vector<1x1x128xf32>
    %1471 = vector.shape_cast %1470 : vector<1x1x128xf32> to vector<1x128xf32>
    %c0_i32_527 = arith.constant 0 : i32
    %1472 = arith.addi %4, %c0_i32_527 : i32
    %1473 = arith.index_cast %1472 : i32 to index
    %1474 = memref.load %arg6[%1473] : memref<16xf32, #tpu.memory_space<smem>>
    %c0_i32_528 = arith.constant 0 : i32
    %1475 = arith.addi %4, %c0_i32_528 : i32
    %1476 = arith.index_cast %1475 : i32 to index
    %1477 = memref.load %arg7[%1476] : memref<16xf32, #tpu.memory_space<smem>>
    %1478 = vector.broadcast %1467 : vector<8x1xf32> to vector<8x128xf32>
    %1479 = vector.broadcast %1469 : vector<1x128xf32> to vector<8x128xf32>
    %1480 = arith.mulf %1478, %1479 : vector<8x128xf32>
    %1481 = vector.broadcast %1471 : vector<1x128xf32> to vector<8x128xf32>
    %1482 = arith.subf %1480, %1481 : vector<8x128xf32>
    %cst_529 = arith.constant 5.000000e-01 : f32
    %1483 = vector.broadcast %cst_529 : f32 to vector<8x128xf32>
    %1484 = arith.mulf %1483, %1482 : vector<8x128xf32>
    %1485 = math.tanh %1484 : vector<8x128xf32>
    %cst_530 = arith.constant 5.000000e-01 : f32
    %1486 = vector.broadcast %cst_530 : f32 to vector<8x128xf32>
    %1487 = arith.mulf %1486, %1485 : vector<8x128xf32>
    %cst_531 = arith.constant 5.000000e-01 : f32
    %1488 = vector.broadcast %cst_531 : f32 to vector<8x128xf32>
    %1489 = arith.addf %1487, %1488 : vector<8x128xf32>
    %1490 = vector.broadcast %1474 : f32 to vector<8x128xf32>
    %1491 = arith.mulf %1490, %1489 : vector<8x128xf32>
    %1492 = vector.broadcast %1477 : f32 to vector<8x128xf32>
    %1493 = arith.addf %1491, %1492 : vector<8x128xf32>
    %1494 = math.tanh %1493 : vector<8x128xf32>
    %1495 = arith.mulf %1489, %1494 : vector<8x128xf32>
    %1496 = arith.addf %1466, %1495 : vector<8x128xf32>
    %1497 = vector.extract_strided_slice %3 {offsets = [0, 1], sizes = [8, 1], strides = [1, 1]} : vector<8x16xf32> to vector<8x1xf32>
    %c3_532 = arith.constant 3 : index
    %c1_533 = arith.constant 1 : index
    %c0_534 = arith.constant 0 : index
    %1498 = vector.load %arg4[%c3_532, %c1_533, %c0_534] : memref<5x16x128xf32, #tpu.memory_space<vmem>>, vector<1x1x128xf32>
    %1499 = vector.shape_cast %1498 : vector<1x1x128xf32> to vector<1x128xf32>
    %c3_535 = arith.constant 3 : index
    %c1_536 = arith.constant 1 : index
    %c0_537 = arith.constant 0 : index
    %1500 = vector.load %arg5[%c3_535, %c1_536, %c0_537] : memref<5x16x128xf32, #tpu.memory_space<vmem>>, vector<1x1x128xf32>
    %1501 = vector.shape_cast %1500 : vector<1x1x128xf32> to vector<1x128xf32>
    %c1_i32_538 = arith.constant 1 : i32
    %1502 = arith.addi %4, %c1_i32_538 : i32
    %1503 = arith.index_cast %1502 : i32 to index
    %1504 = memref.load %arg6[%1503] : memref<16xf32, #tpu.memory_space<smem>>
    %c1_i32_539 = arith.constant 1 : i32
    %1505 = arith.addi %4, %c1_i32_539 : i32
    %1506 = arith.index_cast %1505 : i32 to index
    %1507 = memref.load %arg7[%1506] : memref<16xf32, #tpu.memory_space<smem>>
    %1508 = vector.broadcast %1497 : vector<8x1xf32> to vector<8x128xf32>
    %1509 = vector.broadcast %1499 : vector<1x128xf32> to vector<8x128xf32>
    %1510 = arith.mulf %1508, %1509 : vector<8x128xf32>
    %1511 = vector.broadcast %1501 : vector<1x128xf32> to vector<8x128xf32>
    %1512 = arith.subf %1510, %1511 : vector<8x128xf32>
    %cst_540 = arith.constant 5.000000e-01 : f32
    %1513 = vector.broadcast %cst_540 : f32 to vector<8x128xf32>
    %1514 = arith.mulf %1513, %1512 : vector<8x128xf32>
    %1515 = math.tanh %1514 : vector<8x128xf32>
    %cst_541 = arith.constant 5.000000e-01 : f32
    %1516 = vector.broadcast %cst_541 : f32 to vector<8x128xf32>
    %1517 = arith.mulf %1516, %1515 : vector<8x128xf32>
    %cst_542 = arith.constant 5.000000e-01 : f32
    %1518 = vector.broadcast %cst_542 : f32 to vector<8x128xf32>
    %1519 = arith.addf %1517, %1518 : vector<8x128xf32>
    %1520 = vector.broadcast %1504 : f32 to vector<8x128xf32>
    %1521 = arith.mulf %1520, %1519 : vector<8x128xf32>
    %1522 = vector.broadcast %1507 : f32 to vector<8x128xf32>
    %1523 = arith.addf %1521, %1522 : vector<8x128xf32>
    %1524 = math.tanh %1523 : vector<8x128xf32>
    %1525 = arith.mulf %1519, %1524 : vector<8x128xf32>
    %1526 = arith.addf %1496, %1525 : vector<8x128xf32>
    %1527 = vector.extract_strided_slice %3 {offsets = [0, 2], sizes = [8, 1], strides = [1, 1]} : vector<8x16xf32> to vector<8x1xf32>
    %c3_543 = arith.constant 3 : index
    %c2_544 = arith.constant 2 : index
    %c0_545 = arith.constant 0 : index
    %1528 = vector.load %arg4[%c3_543, %c2_544, %c0_545] : memref<5x16x128xf32, #tpu.memory_space<vmem>>, vector<1x1x128xf32>
    %1529 = vector.shape_cast %1528 : vector<1x1x128xf32> to vector<1x128xf32>
    %c3_546 = arith.constant 3 : index
    %c2_547 = arith.constant 2 : index
    %c0_548 = arith.constant 0 : index
    %1530 = vector.load %arg5[%c3_546, %c2_547, %c0_548] : memref<5x16x128xf32, #tpu.memory_space<vmem>>, vector<1x1x128xf32>
    %1531 = vector.shape_cast %1530 : vector<1x1x128xf32> to vector<1x128xf32>
    %c2_i32_549 = arith.constant 2 : i32
    %1532 = arith.addi %4, %c2_i32_549 : i32
    %1533 = arith.index_cast %1532 : i32 to index
    %1534 = memref.load %arg6[%1533] : memref<16xf32, #tpu.memory_space<smem>>
    %c2_i32_550 = arith.constant 2 : i32
    %1535 = arith.addi %4, %c2_i32_550 : i32
    %1536 = arith.index_cast %1535 : i32 to index
    %1537 = memref.load %arg7[%1536] : memref<16xf32, #tpu.memory_space<smem>>
    %1538 = vector.broadcast %1527 : vector<8x1xf32> to vector<8x128xf32>
    %1539 = vector.broadcast %1529 : vector<1x128xf32> to vector<8x128xf32>
    %1540 = arith.mulf %1538, %1539 : vector<8x128xf32>
    %1541 = vector.broadcast %1531 : vector<1x128xf32> to vector<8x128xf32>
    %1542 = arith.subf %1540, %1541 : vector<8x128xf32>
    %cst_551 = arith.constant 5.000000e-01 : f32
    %1543 = vector.broadcast %cst_551 : f32 to vector<8x128xf32>
    %1544 = arith.mulf %1543, %1542 : vector<8x128xf32>
    %1545 = math.tanh %1544 : vector<8x128xf32>
    %cst_552 = arith.constant 5.000000e-01 : f32
    %1546 = vector.broadcast %cst_552 : f32 to vector<8x128xf32>
    %1547 = arith.mulf %1546, %1545 : vector<8x128xf32>
    %cst_553 = arith.constant 5.000000e-01 : f32
    %1548 = vector.broadcast %cst_553 : f32 to vector<8x128xf32>
    %1549 = arith.addf %1547, %1548 : vector<8x128xf32>
    %1550 = vector.broadcast %1534 : f32 to vector<8x128xf32>
    %1551 = arith.mulf %1550, %1549 : vector<8x128xf32>
    %1552 = vector.broadcast %1537 : f32 to vector<8x128xf32>
    %1553 = arith.addf %1551, %1552 : vector<8x128xf32>
    %1554 = math.tanh %1553 : vector<8x128xf32>
    %1555 = arith.mulf %1549, %1554 : vector<8x128xf32>
    %1556 = arith.addf %1526, %1555 : vector<8x128xf32>
    %1557 = vector.extract_strided_slice %3 {offsets = [0, 3], sizes = [8, 1], strides = [1, 1]} : vector<8x16xf32> to vector<8x1xf32>
    %c3_554 = arith.constant 3 : index
    %c3_555 = arith.constant 3 : index
    %c0_556 = arith.constant 0 : index
    %1558 = vector.load %arg4[%c3_554, %c3_555, %c0_556] : memref<5x16x128xf32, #tpu.memory_space<vmem>>, vector<1x1x128xf32>
    %1559 = vector.shape_cast %1558 : vector<1x1x128xf32> to vector<1x128xf32>
    %c3_557 = arith.constant 3 : index
    %c3_558 = arith.constant 3 : index
    %c0_559 = arith.constant 0 : index
    %1560 = vector.load %arg5[%c3_557, %c3_558, %c0_559] : memref<5x16x128xf32, #tpu.memory_space<vmem>>, vector<1x1x128xf32>
    %1561 = vector.shape_cast %1560 : vector<1x1x128xf32> to vector<1x128xf32>
    %c3_i32_560 = arith.constant 3 : i32
    %1562 = arith.addi %4, %c3_i32_560 : i32
    %1563 = arith.index_cast %1562 : i32 to index
    %1564 = memref.load %arg6[%1563] : memref<16xf32, #tpu.memory_space<smem>>
    %c3_i32_561 = arith.constant 3 : i32
    %1565 = arith.addi %4, %c3_i32_561 : i32
    %1566 = arith.index_cast %1565 : i32 to index
    %1567 = memref.load %arg7[%1566] : memref<16xf32, #tpu.memory_space<smem>>
    %1568 = vector.broadcast %1557 : vector<8x1xf32> to vector<8x128xf32>
    %1569 = vector.broadcast %1559 : vector<1x128xf32> to vector<8x128xf32>
    %1570 = arith.mulf %1568, %1569 : vector<8x128xf32>
    %1571 = vector.broadcast %1561 : vector<1x128xf32> to vector<8x128xf32>
    %1572 = arith.subf %1570, %1571 : vector<8x128xf32>
    %cst_562 = arith.constant 5.000000e-01 : f32
    %1573 = vector.broadcast %cst_562 : f32 to vector<8x128xf32>
    %1574 = arith.mulf %1573, %1572 : vector<8x128xf32>
    %1575 = math.tanh %1574 : vector<8x128xf32>
    %cst_563 = arith.constant 5.000000e-01 : f32
    %1576 = vector.broadcast %cst_563 : f32 to vector<8x128xf32>
    %1577 = arith.mulf %1576, %1575 : vector<8x128xf32>
    %cst_564 = arith.constant 5.000000e-01 : f32
    %1578 = vector.broadcast %cst_564 : f32 to vector<8x128xf32>
    %1579 = arith.addf %1577, %1578 : vector<8x128xf32>
    %1580 = vector.broadcast %1564 : f32 to vector<8x128xf32>
    %1581 = arith.mulf %1580, %1579 : vector<8x128xf32>
    %1582 = vector.broadcast %1567 : f32 to vector<8x128xf32>
    %1583 = arith.addf %1581, %1582 : vector<8x128xf32>
    %1584 = math.tanh %1583 : vector<8x128xf32>
    %1585 = arith.mulf %1579, %1584 : vector<8x128xf32>
    %1586 = arith.addf %1556, %1585 : vector<8x128xf32>
    %1587 = vector.extract_strided_slice %3 {offsets = [0, 4], sizes = [8, 1], strides = [1, 1]} : vector<8x16xf32> to vector<8x1xf32>
    %c3_565 = arith.constant 3 : index
    %c4_566 = arith.constant 4 : index
    %c0_567 = arith.constant 0 : index
    %1588 = vector.load %arg4[%c3_565, %c4_566, %c0_567] : memref<5x16x128xf32, #tpu.memory_space<vmem>>, vector<1x1x128xf32>
    %1589 = vector.shape_cast %1588 : vector<1x1x128xf32> to vector<1x128xf32>
    %c3_568 = arith.constant 3 : index
    %c4_569 = arith.constant 4 : index
    %c0_570 = arith.constant 0 : index
    %1590 = vector.load %arg5[%c3_568, %c4_569, %c0_570] : memref<5x16x128xf32, #tpu.memory_space<vmem>>, vector<1x1x128xf32>
    %1591 = vector.shape_cast %1590 : vector<1x1x128xf32> to vector<1x128xf32>
    %c4_i32_571 = arith.constant 4 : i32
    %1592 = arith.addi %4, %c4_i32_571 : i32
    %1593 = arith.index_cast %1592 : i32 to index
    %1594 = memref.load %arg6[%1593] : memref<16xf32, #tpu.memory_space<smem>>
    %c4_i32_572 = arith.constant 4 : i32
    %1595 = arith.addi %4, %c4_i32_572 : i32
    %1596 = arith.index_cast %1595 : i32 to index
    %1597 = memref.load %arg7[%1596] : memref<16xf32, #tpu.memory_space<smem>>
    %1598 = vector.broadcast %1587 : vector<8x1xf32> to vector<8x128xf32>
    %1599 = vector.broadcast %1589 : vector<1x128xf32> to vector<8x128xf32>
    %1600 = arith.mulf %1598, %1599 : vector<8x128xf32>
    %1601 = vector.broadcast %1591 : vector<1x128xf32> to vector<8x128xf32>
    %1602 = arith.subf %1600, %1601 : vector<8x128xf32>
    %cst_573 = arith.constant 5.000000e-01 : f32
    %1603 = vector.broadcast %cst_573 : f32 to vector<8x128xf32>
    %1604 = arith.mulf %1603, %1602 : vector<8x128xf32>
    %1605 = math.tanh %1604 : vector<8x128xf32>
    %cst_574 = arith.constant 5.000000e-01 : f32
    %1606 = vector.broadcast %cst_574 : f32 to vector<8x128xf32>
    %1607 = arith.mulf %1606, %1605 : vector<8x128xf32>
    %cst_575 = arith.constant 5.000000e-01 : f32
    %1608 = vector.broadcast %cst_575 : f32 to vector<8x128xf32>
    %1609 = arith.addf %1607, %1608 : vector<8x128xf32>
    %1610 = vector.broadcast %1594 : f32 to vector<8x128xf32>
    %1611 = arith.mulf %1610, %1609 : vector<8x128xf32>
    %1612 = vector.broadcast %1597 : f32 to vector<8x128xf32>
    %1613 = arith.addf %1611, %1612 : vector<8x128xf32>
    %1614 = math.tanh %1613 : vector<8x128xf32>
    %1615 = arith.mulf %1609, %1614 : vector<8x128xf32>
    %1616 = arith.addf %1586, %1615 : vector<8x128xf32>
    %1617 = vector.extract_strided_slice %3 {offsets = [0, 5], sizes = [8, 1], strides = [1, 1]} : vector<8x16xf32> to vector<8x1xf32>
    %c3_576 = arith.constant 3 : index
    %c5_577 = arith.constant 5 : index
    %c0_578 = arith.constant 0 : index
    %1618 = vector.load %arg4[%c3_576, %c5_577, %c0_578] : memref<5x16x128xf32, #tpu.memory_space<vmem>>, vector<1x1x128xf32>
    %1619 = vector.shape_cast %1618 : vector<1x1x128xf32> to vector<1x128xf32>
    %c3_579 = arith.constant 3 : index
    %c5_580 = arith.constant 5 : index
    %c0_581 = arith.constant 0 : index
    %1620 = vector.load %arg5[%c3_579, %c5_580, %c0_581] : memref<5x16x128xf32, #tpu.memory_space<vmem>>, vector<1x1x128xf32>
    %1621 = vector.shape_cast %1620 : vector<1x1x128xf32> to vector<1x128xf32>
    %c5_i32_582 = arith.constant 5 : i32
    %1622 = arith.addi %4, %c5_i32_582 : i32
    %1623 = arith.index_cast %1622 : i32 to index
    %1624 = memref.load %arg6[%1623] : memref<16xf32, #tpu.memory_space<smem>>
    %c5_i32_583 = arith.constant 5 : i32
    %1625 = arith.addi %4, %c5_i32_583 : i32
    %1626 = arith.index_cast %1625 : i32 to index
    %1627 = memref.load %arg7[%1626] : memref<16xf32, #tpu.memory_space<smem>>
    %1628 = vector.broadcast %1617 : vector<8x1xf32> to vector<8x128xf32>
    %1629 = vector.broadcast %1619 : vector<1x128xf32> to vector<8x128xf32>
    %1630 = arith.mulf %1628, %1629 : vector<8x128xf32>
    %1631 = vector.broadcast %1621 : vector<1x128xf32> to vector<8x128xf32>
    %1632 = arith.subf %1630, %1631 : vector<8x128xf32>
    %cst_584 = arith.constant 5.000000e-01 : f32
    %1633 = vector.broadcast %cst_584 : f32 to vector<8x128xf32>
    %1634 = arith.mulf %1633, %1632 : vector<8x128xf32>
    %1635 = math.tanh %1634 : vector<8x128xf32>
    %cst_585 = arith.constant 5.000000e-01 : f32
    %1636 = vector.broadcast %cst_585 : f32 to vector<8x128xf32>
    %1637 = arith.mulf %1636, %1635 : vector<8x128xf32>
    %cst_586 = arith.constant 5.000000e-01 : f32
    %1638 = vector.broadcast %cst_586 : f32 to vector<8x128xf32>
    %1639 = arith.addf %1637, %1638 : vector<8x128xf32>
    %1640 = vector.broadcast %1624 : f32 to vector<8x128xf32>
    %1641 = arith.mulf %1640, %1639 : vector<8x128xf32>
    %1642 = vector.broadcast %1627 : f32 to vector<8x128xf32>
    %1643 = arith.addf %1641, %1642 : vector<8x128xf32>
    %1644 = math.tanh %1643 : vector<8x128xf32>
    %1645 = arith.mulf %1639, %1644 : vector<8x128xf32>
    %1646 = arith.addf %1616, %1645 : vector<8x128xf32>
    %1647 = vector.extract_strided_slice %3 {offsets = [0, 6], sizes = [8, 1], strides = [1, 1]} : vector<8x16xf32> to vector<8x1xf32>
    %c3_587 = arith.constant 3 : index
    %c6_588 = arith.constant 6 : index
    %c0_589 = arith.constant 0 : index
    %1648 = vector.load %arg4[%c3_587, %c6_588, %c0_589] : memref<5x16x128xf32, #tpu.memory_space<vmem>>, vector<1x1x128xf32>
    %1649 = vector.shape_cast %1648 : vector<1x1x128xf32> to vector<1x128xf32>
    %c3_590 = arith.constant 3 : index
    %c6_591 = arith.constant 6 : index
    %c0_592 = arith.constant 0 : index
    %1650 = vector.load %arg5[%c3_590, %c6_591, %c0_592] : memref<5x16x128xf32, #tpu.memory_space<vmem>>, vector<1x1x128xf32>
    %1651 = vector.shape_cast %1650 : vector<1x1x128xf32> to vector<1x128xf32>
    %c6_i32_593 = arith.constant 6 : i32
    %1652 = arith.addi %4, %c6_i32_593 : i32
    %1653 = arith.index_cast %1652 : i32 to index
    %1654 = memref.load %arg6[%1653] : memref<16xf32, #tpu.memory_space<smem>>
    %c6_i32_594 = arith.constant 6 : i32
    %1655 = arith.addi %4, %c6_i32_594 : i32
    %1656 = arith.index_cast %1655 : i32 to index
    %1657 = memref.load %arg7[%1656] : memref<16xf32, #tpu.memory_space<smem>>
    %1658 = vector.broadcast %1647 : vector<8x1xf32> to vector<8x128xf32>
    %1659 = vector.broadcast %1649 : vector<1x128xf32> to vector<8x128xf32>
    %1660 = arith.mulf %1658, %1659 : vector<8x128xf32>
    %1661 = vector.broadcast %1651 : vector<1x128xf32> to vector<8x128xf32>
    %1662 = arith.subf %1660, %1661 : vector<8x128xf32>
    %cst_595 = arith.constant 5.000000e-01 : f32
    %1663 = vector.broadcast %cst_595 : f32 to vector<8x128xf32>
    %1664 = arith.mulf %1663, %1662 : vector<8x128xf32>
    %1665 = math.tanh %1664 : vector<8x128xf32>
    %cst_596 = arith.constant 5.000000e-01 : f32
    %1666 = vector.broadcast %cst_596 : f32 to vector<8x128xf32>
    %1667 = arith.mulf %1666, %1665 : vector<8x128xf32>
    %cst_597 = arith.constant 5.000000e-01 : f32
    %1668 = vector.broadcast %cst_597 : f32 to vector<8x128xf32>
    %1669 = arith.addf %1667, %1668 : vector<8x128xf32>
    %1670 = vector.broadcast %1654 : f32 to vector<8x128xf32>
    %1671 = arith.mulf %1670, %1669 : vector<8x128xf32>
    %1672 = vector.broadcast %1657 : f32 to vector<8x128xf32>
    %1673 = arith.addf %1671, %1672 : vector<8x128xf32>
    %1674 = math.tanh %1673 : vector<8x128xf32>
    %1675 = arith.mulf %1669, %1674 : vector<8x128xf32>
    %1676 = arith.addf %1646, %1675 : vector<8x128xf32>
    %1677 = vector.extract_strided_slice %3 {offsets = [0, 7], sizes = [8, 1], strides = [1, 1]} : vector<8x16xf32> to vector<8x1xf32>
    %c3_598 = arith.constant 3 : index
    %c7_599 = arith.constant 7 : index
    %c0_600 = arith.constant 0 : index
    %1678 = vector.load %arg4[%c3_598, %c7_599, %c0_600] : memref<5x16x128xf32, #tpu.memory_space<vmem>>, vector<1x1x128xf32>
    %1679 = vector.shape_cast %1678 : vector<1x1x128xf32> to vector<1x128xf32>
    %c3_601 = arith.constant 3 : index
    %c7_602 = arith.constant 7 : index
    %c0_603 = arith.constant 0 : index
    %1680 = vector.load %arg5[%c3_601, %c7_602, %c0_603] : memref<5x16x128xf32, #tpu.memory_space<vmem>>, vector<1x1x128xf32>
    %1681 = vector.shape_cast %1680 : vector<1x1x128xf32> to vector<1x128xf32>
    %c7_i32_604 = arith.constant 7 : i32
    %1682 = arith.addi %4, %c7_i32_604 : i32
    %1683 = arith.index_cast %1682 : i32 to index
    %1684 = memref.load %arg6[%1683] : memref<16xf32, #tpu.memory_space<smem>>
    %c7_i32_605 = arith.constant 7 : i32
    %1685 = arith.addi %4, %c7_i32_605 : i32
    %1686 = arith.index_cast %1685 : i32 to index
    %1687 = memref.load %arg7[%1686] : memref<16xf32, #tpu.memory_space<smem>>
    %1688 = vector.broadcast %1677 : vector<8x1xf32> to vector<8x128xf32>
    %1689 = vector.broadcast %1679 : vector<1x128xf32> to vector<8x128xf32>
    %1690 = arith.mulf %1688, %1689 : vector<8x128xf32>
    %1691 = vector.broadcast %1681 : vector<1x128xf32> to vector<8x128xf32>
    %1692 = arith.subf %1690, %1691 : vector<8x128xf32>
    %cst_606 = arith.constant 5.000000e-01 : f32
    %1693 = vector.broadcast %cst_606 : f32 to vector<8x128xf32>
    %1694 = arith.mulf %1693, %1692 : vector<8x128xf32>
    %1695 = math.tanh %1694 : vector<8x128xf32>
    %cst_607 = arith.constant 5.000000e-01 : f32
    %1696 = vector.broadcast %cst_607 : f32 to vector<8x128xf32>
    %1697 = arith.mulf %1696, %1695 : vector<8x128xf32>
    %cst_608 = arith.constant 5.000000e-01 : f32
    %1698 = vector.broadcast %cst_608 : f32 to vector<8x128xf32>
    %1699 = arith.addf %1697, %1698 : vector<8x128xf32>
    %1700 = vector.broadcast %1684 : f32 to vector<8x128xf32>
    %1701 = arith.mulf %1700, %1699 : vector<8x128xf32>
    %1702 = vector.broadcast %1687 : f32 to vector<8x128xf32>
    %1703 = arith.addf %1701, %1702 : vector<8x128xf32>
    %1704 = math.tanh %1703 : vector<8x128xf32>
    %1705 = arith.mulf %1699, %1704 : vector<8x128xf32>
    %1706 = arith.addf %1676, %1705 : vector<8x128xf32>
    %1707 = vector.extract_strided_slice %3 {offsets = [0, 8], sizes = [8, 1], strides = [1, 1]} : vector<8x16xf32> to vector<8x1xf32>
    %c3_609 = arith.constant 3 : index
    %c8_610 = arith.constant 8 : index
    %c0_611 = arith.constant 0 : index
    %1708 = vector.load %arg4[%c3_609, %c8_610, %c0_611] : memref<5x16x128xf32, #tpu.memory_space<vmem>>, vector<1x1x128xf32>
    %1709 = vector.shape_cast %1708 : vector<1x1x128xf32> to vector<1x128xf32>
    %c3_612 = arith.constant 3 : index
    %c8_613 = arith.constant 8 : index
    %c0_614 = arith.constant 0 : index
    %1710 = vector.load %arg5[%c3_612, %c8_613, %c0_614] : memref<5x16x128xf32, #tpu.memory_space<vmem>>, vector<1x1x128xf32>
    %1711 = vector.shape_cast %1710 : vector<1x1x128xf32> to vector<1x128xf32>
    %c8_i32_615 = arith.constant 8 : i32
    %1712 = arith.addi %4, %c8_i32_615 : i32
    %1713 = arith.index_cast %1712 : i32 to index
    %1714 = memref.load %arg6[%1713] : memref<16xf32, #tpu.memory_space<smem>>
    %c8_i32_616 = arith.constant 8 : i32
    %1715 = arith.addi %4, %c8_i32_616 : i32
    %1716 = arith.index_cast %1715 : i32 to index
    %1717 = memref.load %arg7[%1716] : memref<16xf32, #tpu.memory_space<smem>>
    %1718 = vector.broadcast %1707 : vector<8x1xf32> to vector<8x128xf32>
    %1719 = vector.broadcast %1709 : vector<1x128xf32> to vector<8x128xf32>
    %1720 = arith.mulf %1718, %1719 : vector<8x128xf32>
    %1721 = vector.broadcast %1711 : vector<1x128xf32> to vector<8x128xf32>
    %1722 = arith.subf %1720, %1721 : vector<8x128xf32>
    %cst_617 = arith.constant 5.000000e-01 : f32
    %1723 = vector.broadcast %cst_617 : f32 to vector<8x128xf32>
    %1724 = arith.mulf %1723, %1722 : vector<8x128xf32>
    %1725 = math.tanh %1724 : vector<8x128xf32>
    %cst_618 = arith.constant 5.000000e-01 : f32
    %1726 = vector.broadcast %cst_618 : f32 to vector<8x128xf32>
    %1727 = arith.mulf %1726, %1725 : vector<8x128xf32>
    %cst_619 = arith.constant 5.000000e-01 : f32
    %1728 = vector.broadcast %cst_619 : f32 to vector<8x128xf32>
    %1729 = arith.addf %1727, %1728 : vector<8x128xf32>
    %1730 = vector.broadcast %1714 : f32 to vector<8x128xf32>
    %1731 = arith.mulf %1730, %1729 : vector<8x128xf32>
    %1732 = vector.broadcast %1717 : f32 to vector<8x128xf32>
    %1733 = arith.addf %1731, %1732 : vector<8x128xf32>
    %1734 = math.tanh %1733 : vector<8x128xf32>
    %1735 = arith.mulf %1729, %1734 : vector<8x128xf32>
    %1736 = arith.addf %1706, %1735 : vector<8x128xf32>
    %1737 = vector.extract_strided_slice %3 {offsets = [0, 9], sizes = [8, 1], strides = [1, 1]} : vector<8x16xf32> to vector<8x1xf32>
    %c3_620 = arith.constant 3 : index
    %c9_621 = arith.constant 9 : index
    %c0_622 = arith.constant 0 : index
    %1738 = vector.load %arg4[%c3_620, %c9_621, %c0_622] : memref<5x16x128xf32, #tpu.memory_space<vmem>>, vector<1x1x128xf32>
    %1739 = vector.shape_cast %1738 : vector<1x1x128xf32> to vector<1x128xf32>
    %c3_623 = arith.constant 3 : index
    %c9_624 = arith.constant 9 : index
    %c0_625 = arith.constant 0 : index
    %1740 = vector.load %arg5[%c3_623, %c9_624, %c0_625] : memref<5x16x128xf32, #tpu.memory_space<vmem>>, vector<1x1x128xf32>
    %1741 = vector.shape_cast %1740 : vector<1x1x128xf32> to vector<1x128xf32>
    %c9_i32_626 = arith.constant 9 : i32
    %1742 = arith.addi %4, %c9_i32_626 : i32
    %1743 = arith.index_cast %1742 : i32 to index
    %1744 = memref.load %arg6[%1743] : memref<16xf32, #tpu.memory_space<smem>>
    %c9_i32_627 = arith.constant 9 : i32
    %1745 = arith.addi %4, %c9_i32_627 : i32
    %1746 = arith.index_cast %1745 : i32 to index
    %1747 = memref.load %arg7[%1746] : memref<16xf32, #tpu.memory_space<smem>>
    %1748 = vector.broadcast %1737 : vector<8x1xf32> to vector<8x128xf32>
    %1749 = vector.broadcast %1739 : vector<1x128xf32> to vector<8x128xf32>
    %1750 = arith.mulf %1748, %1749 : vector<8x128xf32>
    %1751 = vector.broadcast %1741 : vector<1x128xf32> to vector<8x128xf32>
    %1752 = arith.subf %1750, %1751 : vector<8x128xf32>
    %cst_628 = arith.constant 5.000000e-01 : f32
    %1753 = vector.broadcast %cst_628 : f32 to vector<8x128xf32>
    %1754 = arith.mulf %1753, %1752 : vector<8x128xf32>
    %1755 = math.tanh %1754 : vector<8x128xf32>
    %cst_629 = arith.constant 5.000000e-01 : f32
    %1756 = vector.broadcast %cst_629 : f32 to vector<8x128xf32>
    %1757 = arith.mulf %1756, %1755 : vector<8x128xf32>
    %cst_630 = arith.constant 5.000000e-01 : f32
    %1758 = vector.broadcast %cst_630 : f32 to vector<8x128xf32>
    %1759 = arith.addf %1757, %1758 : vector<8x128xf32>
    %1760 = vector.broadcast %1744 : f32 to vector<8x128xf32>
    %1761 = arith.mulf %1760, %1759 : vector<8x128xf32>
    %1762 = vector.broadcast %1747 : f32 to vector<8x128xf32>
    %1763 = arith.addf %1761, %1762 : vector<8x128xf32>
    %1764 = math.tanh %1763 : vector<8x128xf32>
    %1765 = arith.mulf %1759, %1764 : vector<8x128xf32>
    %1766 = arith.addf %1736, %1765 : vector<8x128xf32>
    %1767 = vector.extract_strided_slice %3 {offsets = [0, 10], sizes = [8, 1], strides = [1, 1]} : vector<8x16xf32> to vector<8x1xf32>
    %c3_631 = arith.constant 3 : index
    %c10_632 = arith.constant 10 : index
    %c0_633 = arith.constant 0 : index
    %1768 = vector.load %arg4[%c3_631, %c10_632, %c0_633] : memref<5x16x128xf32, #tpu.memory_space<vmem>>, vector<1x1x128xf32>
    %1769 = vector.shape_cast %1768 : vector<1x1x128xf32> to vector<1x128xf32>
    %c3_634 = arith.constant 3 : index
    %c10_635 = arith.constant 10 : index
    %c0_636 = arith.constant 0 : index
    %1770 = vector.load %arg5[%c3_634, %c10_635, %c0_636] : memref<5x16x128xf32, #tpu.memory_space<vmem>>, vector<1x1x128xf32>
    %1771 = vector.shape_cast %1770 : vector<1x1x128xf32> to vector<1x128xf32>
    %c10_i32_637 = arith.constant 10 : i32
    %1772 = arith.addi %4, %c10_i32_637 : i32
    %1773 = arith.index_cast %1772 : i32 to index
    %1774 = memref.load %arg6[%1773] : memref<16xf32, #tpu.memory_space<smem>>
    %c10_i32_638 = arith.constant 10 : i32
    %1775 = arith.addi %4, %c10_i32_638 : i32
    %1776 = arith.index_cast %1775 : i32 to index
    %1777 = memref.load %arg7[%1776] : memref<16xf32, #tpu.memory_space<smem>>
    %1778 = vector.broadcast %1767 : vector<8x1xf32> to vector<8x128xf32>
    %1779 = vector.broadcast %1769 : vector<1x128xf32> to vector<8x128xf32>
    %1780 = arith.mulf %1778, %1779 : vector<8x128xf32>
    %1781 = vector.broadcast %1771 : vector<1x128xf32> to vector<8x128xf32>
    %1782 = arith.subf %1780, %1781 : vector<8x128xf32>
    %cst_639 = arith.constant 5.000000e-01 : f32
    %1783 = vector.broadcast %cst_639 : f32 to vector<8x128xf32>
    %1784 = arith.mulf %1783, %1782 : vector<8x128xf32>
    %1785 = math.tanh %1784 : vector<8x128xf32>
    %cst_640 = arith.constant 5.000000e-01 : f32
    %1786 = vector.broadcast %cst_640 : f32 to vector<8x128xf32>
    %1787 = arith.mulf %1786, %1785 : vector<8x128xf32>
    %cst_641 = arith.constant 5.000000e-01 : f32
    %1788 = vector.broadcast %cst_641 : f32 to vector<8x128xf32>
    %1789 = arith.addf %1787, %1788 : vector<8x128xf32>
    %1790 = vector.broadcast %1774 : f32 to vector<8x128xf32>
    %1791 = arith.mulf %1790, %1789 : vector<8x128xf32>
    %1792 = vector.broadcast %1777 : f32 to vector<8x128xf32>
    %1793 = arith.addf %1791, %1792 : vector<8x128xf32>
    %1794 = math.tanh %1793 : vector<8x128xf32>
    %1795 = arith.mulf %1789, %1794 : vector<8x128xf32>
    %1796 = arith.addf %1766, %1795 : vector<8x128xf32>
    %1797 = vector.extract_strided_slice %3 {offsets = [0, 11], sizes = [8, 1], strides = [1, 1]} : vector<8x16xf32> to vector<8x1xf32>
    %c3_642 = arith.constant 3 : index
    %c11_643 = arith.constant 11 : index
    %c0_644 = arith.constant 0 : index
    %1798 = vector.load %arg4[%c3_642, %c11_643, %c0_644] : memref<5x16x128xf32, #tpu.memory_space<vmem>>, vector<1x1x128xf32>
    %1799 = vector.shape_cast %1798 : vector<1x1x128xf32> to vector<1x128xf32>
    %c3_645 = arith.constant 3 : index
    %c11_646 = arith.constant 11 : index
    %c0_647 = arith.constant 0 : index
    %1800 = vector.load %arg5[%c3_645, %c11_646, %c0_647] : memref<5x16x128xf32, #tpu.memory_space<vmem>>, vector<1x1x128xf32>
    %1801 = vector.shape_cast %1800 : vector<1x1x128xf32> to vector<1x128xf32>
    %c11_i32_648 = arith.constant 11 : i32
    %1802 = arith.addi %4, %c11_i32_648 : i32
    %1803 = arith.index_cast %1802 : i32 to index
    %1804 = memref.load %arg6[%1803] : memref<16xf32, #tpu.memory_space<smem>>
    %c11_i32_649 = arith.constant 11 : i32
    %1805 = arith.addi %4, %c11_i32_649 : i32
    %1806 = arith.index_cast %1805 : i32 to index
    %1807 = memref.load %arg7[%1806] : memref<16xf32, #tpu.memory_space<smem>>
    %1808 = vector.broadcast %1797 : vector<8x1xf32> to vector<8x128xf32>
    %1809 = vector.broadcast %1799 : vector<1x128xf32> to vector<8x128xf32>
    %1810 = arith.mulf %1808, %1809 : vector<8x128xf32>
    %1811 = vector.broadcast %1801 : vector<1x128xf32> to vector<8x128xf32>
    %1812 = arith.subf %1810, %1811 : vector<8x128xf32>
    %cst_650 = arith.constant 5.000000e-01 : f32
    %1813 = vector.broadcast %cst_650 : f32 to vector<8x128xf32>
    %1814 = arith.mulf %1813, %1812 : vector<8x128xf32>
    %1815 = math.tanh %1814 : vector<8x128xf32>
    %cst_651 = arith.constant 5.000000e-01 : f32
    %1816 = vector.broadcast %cst_651 : f32 to vector<8x128xf32>
    %1817 = arith.mulf %1816, %1815 : vector<8x128xf32>
    %cst_652 = arith.constant 5.000000e-01 : f32
    %1818 = vector.broadcast %cst_652 : f32 to vector<8x128xf32>
    %1819 = arith.addf %1817, %1818 : vector<8x128xf32>
    %1820 = vector.broadcast %1804 : f32 to vector<8x128xf32>
    %1821 = arith.mulf %1820, %1819 : vector<8x128xf32>
    %1822 = vector.broadcast %1807 : f32 to vector<8x128xf32>
    %1823 = arith.addf %1821, %1822 : vector<8x128xf32>
    %1824 = math.tanh %1823 : vector<8x128xf32>
    %1825 = arith.mulf %1819, %1824 : vector<8x128xf32>
    %1826 = arith.addf %1796, %1825 : vector<8x128xf32>
    %1827 = vector.extract_strided_slice %3 {offsets = [0, 12], sizes = [8, 1], strides = [1, 1]} : vector<8x16xf32> to vector<8x1xf32>
    %c3_653 = arith.constant 3 : index
    %c12_654 = arith.constant 12 : index
    %c0_655 = arith.constant 0 : index
    %1828 = vector.load %arg4[%c3_653, %c12_654, %c0_655] : memref<5x16x128xf32, #tpu.memory_space<vmem>>, vector<1x1x128xf32>
    %1829 = vector.shape_cast %1828 : vector<1x1x128xf32> to vector<1x128xf32>
    %c3_656 = arith.constant 3 : index
    %c12_657 = arith.constant 12 : index
    %c0_658 = arith.constant 0 : index
    %1830 = vector.load %arg5[%c3_656, %c12_657, %c0_658] : memref<5x16x128xf32, #tpu.memory_space<vmem>>, vector<1x1x128xf32>
    %1831 = vector.shape_cast %1830 : vector<1x1x128xf32> to vector<1x128xf32>
    %c12_i32_659 = arith.constant 12 : i32
    %1832 = arith.addi %4, %c12_i32_659 : i32
    %1833 = arith.index_cast %1832 : i32 to index
    %1834 = memref.load %arg6[%1833] : memref<16xf32, #tpu.memory_space<smem>>
    %c12_i32_660 = arith.constant 12 : i32
    %1835 = arith.addi %4, %c12_i32_660 : i32
    %1836 = arith.index_cast %1835 : i32 to index
    %1837 = memref.load %arg7[%1836] : memref<16xf32, #tpu.memory_space<smem>>
    %1838 = vector.broadcast %1827 : vector<8x1xf32> to vector<8x128xf32>
    %1839 = vector.broadcast %1829 : vector<1x128xf32> to vector<8x128xf32>
    %1840 = arith.mulf %1838, %1839 : vector<8x128xf32>
    %1841 = vector.broadcast %1831 : vector<1x128xf32> to vector<8x128xf32>
    %1842 = arith.subf %1840, %1841 : vector<8x128xf32>
    %cst_661 = arith.constant 5.000000e-01 : f32
    %1843 = vector.broadcast %cst_661 : f32 to vector<8x128xf32>
    %1844 = arith.mulf %1843, %1842 : vector<8x128xf32>
    %1845 = math.tanh %1844 : vector<8x128xf32>
    %cst_662 = arith.constant 5.000000e-01 : f32
    %1846 = vector.broadcast %cst_662 : f32 to vector<8x128xf32>
    %1847 = arith.mulf %1846, %1845 : vector<8x128xf32>
    %cst_663 = arith.constant 5.000000e-01 : f32
    %1848 = vector.broadcast %cst_663 : f32 to vector<8x128xf32>
    %1849 = arith.addf %1847, %1848 : vector<8x128xf32>
    %1850 = vector.broadcast %1834 : f32 to vector<8x128xf32>
    %1851 = arith.mulf %1850, %1849 : vector<8x128xf32>
    %1852 = vector.broadcast %1837 : f32 to vector<8x128xf32>
    %1853 = arith.addf %1851, %1852 : vector<8x128xf32>
    %1854 = math.tanh %1853 : vector<8x128xf32>
    %1855 = arith.mulf %1849, %1854 : vector<8x128xf32>
    %1856 = arith.addf %1826, %1855 : vector<8x128xf32>
    %1857 = vector.extract_strided_slice %3 {offsets = [0, 13], sizes = [8, 1], strides = [1, 1]} : vector<8x16xf32> to vector<8x1xf32>
    %c3_664 = arith.constant 3 : index
    %c13_665 = arith.constant 13 : index
    %c0_666 = arith.constant 0 : index
    %1858 = vector.load %arg4[%c3_664, %c13_665, %c0_666] : memref<5x16x128xf32, #tpu.memory_space<vmem>>, vector<1x1x128xf32>
    %1859 = vector.shape_cast %1858 : vector<1x1x128xf32> to vector<1x128xf32>
    %c3_667 = arith.constant 3 : index
    %c13_668 = arith.constant 13 : index
    %c0_669 = arith.constant 0 : index
    %1860 = vector.load %arg5[%c3_667, %c13_668, %c0_669] : memref<5x16x128xf32, #tpu.memory_space<vmem>>, vector<1x1x128xf32>
    %1861 = vector.shape_cast %1860 : vector<1x1x128xf32> to vector<1x128xf32>
    %c13_i32_670 = arith.constant 13 : i32
    %1862 = arith.addi %4, %c13_i32_670 : i32
    %1863 = arith.index_cast %1862 : i32 to index
    %1864 = memref.load %arg6[%1863] : memref<16xf32, #tpu.memory_space<smem>>
    %c13_i32_671 = arith.constant 13 : i32
    %1865 = arith.addi %4, %c13_i32_671 : i32
    %1866 = arith.index_cast %1865 : i32 to index
    %1867 = memref.load %arg7[%1866] : memref<16xf32, #tpu.memory_space<smem>>
    %1868 = vector.broadcast %1857 : vector<8x1xf32> to vector<8x128xf32>
    %1869 = vector.broadcast %1859 : vector<1x128xf32> to vector<8x128xf32>
    %1870 = arith.mulf %1868, %1869 : vector<8x128xf32>
    %1871 = vector.broadcast %1861 : vector<1x128xf32> to vector<8x128xf32>
    %1872 = arith.subf %1870, %1871 : vector<8x128xf32>
    %cst_672 = arith.constant 5.000000e-01 : f32
    %1873 = vector.broadcast %cst_672 : f32 to vector<8x128xf32>
    %1874 = arith.mulf %1873, %1872 : vector<8x128xf32>
    %1875 = math.tanh %1874 : vector<8x128xf32>
    %cst_673 = arith.constant 5.000000e-01 : f32
    %1876 = vector.broadcast %cst_673 : f32 to vector<8x128xf32>
    %1877 = arith.mulf %1876, %1875 : vector<8x128xf32>
    %cst_674 = arith.constant 5.000000e-01 : f32
    %1878 = vector.broadcast %cst_674 : f32 to vector<8x128xf32>
    %1879 = arith.addf %1877, %1878 : vector<8x128xf32>
    %1880 = vector.broadcast %1864 : f32 to vector<8x128xf32>
    %1881 = arith.mulf %1880, %1879 : vector<8x128xf32>
    %1882 = vector.broadcast %1867 : f32 to vector<8x128xf32>
    %1883 = arith.addf %1881, %1882 : vector<8x128xf32>
    %1884 = math.tanh %1883 : vector<8x128xf32>
    %1885 = arith.mulf %1879, %1884 : vector<8x128xf32>
    %1886 = arith.addf %1856, %1885 : vector<8x128xf32>
    %1887 = vector.extract_strided_slice %3 {offsets = [0, 14], sizes = [8, 1], strides = [1, 1]} : vector<8x16xf32> to vector<8x1xf32>
    %c3_675 = arith.constant 3 : index
    %c14_676 = arith.constant 14 : index
    %c0_677 = arith.constant 0 : index
    %1888 = vector.load %arg4[%c3_675, %c14_676, %c0_677] : memref<5x16x128xf32, #tpu.memory_space<vmem>>, vector<1x1x128xf32>
    %1889 = vector.shape_cast %1888 : vector<1x1x128xf32> to vector<1x128xf32>
    %c3_678 = arith.constant 3 : index
    %c14_679 = arith.constant 14 : index
    %c0_680 = arith.constant 0 : index
    %1890 = vector.load %arg5[%c3_678, %c14_679, %c0_680] : memref<5x16x128xf32, #tpu.memory_space<vmem>>, vector<1x1x128xf32>
    %1891 = vector.shape_cast %1890 : vector<1x1x128xf32> to vector<1x128xf32>
    %c14_i32_681 = arith.constant 14 : i32
    %1892 = arith.addi %4, %c14_i32_681 : i32
    %1893 = arith.index_cast %1892 : i32 to index
    %1894 = memref.load %arg6[%1893] : memref<16xf32, #tpu.memory_space<smem>>
    %c14_i32_682 = arith.constant 14 : i32
    %1895 = arith.addi %4, %c14_i32_682 : i32
    %1896 = arith.index_cast %1895 : i32 to index
    %1897 = memref.load %arg7[%1896] : memref<16xf32, #tpu.memory_space<smem>>
    %1898 = vector.broadcast %1887 : vector<8x1xf32> to vector<8x128xf32>
    %1899 = vector.broadcast %1889 : vector<1x128xf32> to vector<8x128xf32>
    %1900 = arith.mulf %1898, %1899 : vector<8x128xf32>
    %1901 = vector.broadcast %1891 : vector<1x128xf32> to vector<8x128xf32>
    %1902 = arith.subf %1900, %1901 : vector<8x128xf32>
    %cst_683 = arith.constant 5.000000e-01 : f32
    %1903 = vector.broadcast %cst_683 : f32 to vector<8x128xf32>
    %1904 = arith.mulf %1903, %1902 : vector<8x128xf32>
    %1905 = math.tanh %1904 : vector<8x128xf32>
    %cst_684 = arith.constant 5.000000e-01 : f32
    %1906 = vector.broadcast %cst_684 : f32 to vector<8x128xf32>
    %1907 = arith.mulf %1906, %1905 : vector<8x128xf32>
    %cst_685 = arith.constant 5.000000e-01 : f32
    %1908 = vector.broadcast %cst_685 : f32 to vector<8x128xf32>
    %1909 = arith.addf %1907, %1908 : vector<8x128xf32>
    %1910 = vector.broadcast %1894 : f32 to vector<8x128xf32>
    %1911 = arith.mulf %1910, %1909 : vector<8x128xf32>
    %1912 = vector.broadcast %1897 : f32 to vector<8x128xf32>
    %1913 = arith.addf %1911, %1912 : vector<8x128xf32>
    %1914 = math.tanh %1913 : vector<8x128xf32>
    %1915 = arith.mulf %1909, %1914 : vector<8x128xf32>
    %1916 = arith.addf %1886, %1915 : vector<8x128xf32>
    %1917 = vector.extract_strided_slice %3 {offsets = [0, 15], sizes = [8, 1], strides = [1, 1]} : vector<8x16xf32> to vector<8x1xf32>
    %c3_686 = arith.constant 3 : index
    %c15_687 = arith.constant 15 : index
    %c0_688 = arith.constant 0 : index
    %1918 = vector.load %arg4[%c3_686, %c15_687, %c0_688] : memref<5x16x128xf32, #tpu.memory_space<vmem>>, vector<1x1x128xf32>
    %1919 = vector.shape_cast %1918 : vector<1x1x128xf32> to vector<1x128xf32>
    %c3_689 = arith.constant 3 : index
    %c15_690 = arith.constant 15 : index
    %c0_691 = arith.constant 0 : index
    %1920 = vector.load %arg5[%c3_689, %c15_690, %c0_691] : memref<5x16x128xf32, #tpu.memory_space<vmem>>, vector<1x1x128xf32>
    %1921 = vector.shape_cast %1920 : vector<1x1x128xf32> to vector<1x128xf32>
    %c15_i32_692 = arith.constant 15 : i32
    %1922 = arith.addi %4, %c15_i32_692 : i32
    %1923 = arith.index_cast %1922 : i32 to index
    %1924 = memref.load %arg6[%1923] : memref<16xf32, #tpu.memory_space<smem>>
    %c15_i32_693 = arith.constant 15 : i32
    %1925 = arith.addi %4, %c15_i32_693 : i32
    %1926 = arith.index_cast %1925 : i32 to index
    %1927 = memref.load %arg7[%1926] : memref<16xf32, #tpu.memory_space<smem>>
    %1928 = vector.broadcast %1917 : vector<8x1xf32> to vector<8x128xf32>
    %1929 = vector.broadcast %1919 : vector<1x128xf32> to vector<8x128xf32>
    %1930 = arith.mulf %1928, %1929 : vector<8x128xf32>
    %1931 = vector.broadcast %1921 : vector<1x128xf32> to vector<8x128xf32>
    %1932 = arith.subf %1930, %1931 : vector<8x128xf32>
    %cst_694 = arith.constant 5.000000e-01 : f32
    %1933 = vector.broadcast %cst_694 : f32 to vector<8x128xf32>
    %1934 = arith.mulf %1933, %1932 : vector<8x128xf32>
    %1935 = math.tanh %1934 : vector<8x128xf32>
    %cst_695 = arith.constant 5.000000e-01 : f32
    %1936 = vector.broadcast %cst_695 : f32 to vector<8x128xf32>
    %1937 = arith.mulf %1936, %1935 : vector<8x128xf32>
    %cst_696 = arith.constant 5.000000e-01 : f32
    %1938 = vector.broadcast %cst_696 : f32 to vector<8x128xf32>
    %1939 = arith.addf %1937, %1938 : vector<8x128xf32>
    %1940 = vector.broadcast %1924 : f32 to vector<8x128xf32>
    %1941 = arith.mulf %1940, %1939 : vector<8x128xf32>
    %1942 = vector.broadcast %1927 : f32 to vector<8x128xf32>
    %1943 = arith.addf %1941, %1942 : vector<8x128xf32>
    %1944 = math.tanh %1943 : vector<8x128xf32>
    %1945 = arith.mulf %1939, %1944 : vector<8x128xf32>
    %1946 = arith.addf %1916, %1945 : vector<8x128xf32>
    %c3_697 = arith.constant 3 : index
    %c0_698 = arith.constant 0 : index
    %c0_699 = arith.constant 0 : index
    %1947 = vector.load %arg10[%c3_697, %c0_698, %c0_699] : memref<5x8x128xf32, #tpu.memory_space<vmem>>, vector<1x8x128xf32>
    %1948 = vector.shape_cast %1947 : vector<1x8x128xf32> to vector<8x128xf32>
    %1949 = arith.addf %1948, %1946 : vector<8x128xf32>
    %c3_700 = arith.constant 3 : index
    %c0_701 = arith.constant 0 : index
    %c0_702 = arith.constant 0 : index
    %1950 = vector.load %arg10[%c3_700, %c0_701, %c0_702] : memref<5x8x128xf32, #tpu.memory_space<vmem>>, vector<1x8x128xf32>
    %1951 = vector.shape_cast %1950 : vector<1x8x128xf32> to vector<8x128xf32>
    %1952 = vector.shape_cast %1949 : vector<8x128xf32> to vector<1x8x128xf32>
    tpu.vector_store %arg10[%c3_700, %c0_701, %c0_702], %1952 {strides = array<i32>} : memref<5x8x128xf32, #tpu.memory_space<vmem>>, vector<1x8x128xf32>,
    %cst_703 = arith.constant 0.000000e+00 : f32
    %1953 = vector.broadcast %cst_703 : f32 to vector<8x128xf32>
    %1954 = vector.extract_strided_slice %3 {offsets = [0, 0], sizes = [8, 1], strides = [1, 1]} : vector<8x16xf32> to vector<8x1xf32>
    %c4_704 = arith.constant 4 : index
    %c0_705 = arith.constant 0 : index
    %c0_706 = arith.constant 0 : index
    %1955 = vector.load %arg4[%c4_704, %c0_705, %c0_706] : memref<5x16x128xf32, #tpu.memory_space<vmem>>, vector<1x1x128xf32>
    %1956 = vector.shape_cast %1955 : vector<1x1x128xf32> to vector<1x128xf32>
    %c4_707 = arith.constant 4 : index
    %c0_708 = arith.constant 0 : index
    %c0_709 = arith.constant 0 : index
    %1957 = vector.load %arg5[%c4_707, %c0_708, %c0_709] : memref<5x16x128xf32, #tpu.memory_space<vmem>>, vector<1x1x128xf32>
    %1958 = vector.shape_cast %1957 : vector<1x1x128xf32> to vector<1x128xf32>
    %c0_i32_710 = arith.constant 0 : i32
    %1959 = arith.addi %4, %c0_i32_710 : i32
    %1960 = arith.index_cast %1959 : i32 to index
    %1961 = memref.load %arg6[%1960] : memref<16xf32, #tpu.memory_space<smem>>
    %c0_i32_711 = arith.constant 0 : i32
    %1962 = arith.addi %4, %c0_i32_711 : i32
    %1963 = arith.index_cast %1962 : i32 to index
    %1964 = memref.load %arg7[%1963] : memref<16xf32, #tpu.memory_space<smem>>
    %1965 = vector.broadcast %1954 : vector<8x1xf32> to vector<8x128xf32>
    %1966 = vector.broadcast %1956 : vector<1x128xf32> to vector<8x128xf32>
    %1967 = arith.mulf %1965, %1966 : vector<8x128xf32>
    %1968 = vector.broadcast %1958 : vector<1x128xf32> to vector<8x128xf32>
    %1969 = arith.subf %1967, %1968 : vector<8x128xf32>
    %cst_712 = arith.constant 5.000000e-01 : f32
    %1970 = vector.broadcast %cst_712 : f32 to vector<8x128xf32>
    %1971 = arith.mulf %1970, %1969 : vector<8x128xf32>
    %1972 = math.tanh %1971 : vector<8x128xf32>
    %cst_713 = arith.constant 5.000000e-01 : f32
    %1973 = vector.broadcast %cst_713 : f32 to vector<8x128xf32>
    %1974 = arith.mulf %1973, %1972 : vector<8x128xf32>
    %cst_714 = arith.constant 5.000000e-01 : f32
    %1975 = vector.broadcast %cst_714 : f32 to vector<8x128xf32>
    %1976 = arith.addf %1974, %1975 : vector<8x128xf32>
    %1977 = vector.broadcast %1961 : f32 to vector<8x128xf32>
    %1978 = arith.mulf %1977, %1976 : vector<8x128xf32>
    %1979 = vector.broadcast %1964 : f32 to vector<8x128xf32>
    %1980 = arith.addf %1978, %1979 : vector<8x128xf32>
    %1981 = math.tanh %1980 : vector<8x128xf32>
    %1982 = arith.mulf %1976, %1981 : vector<8x128xf32>
    %1983 = arith.addf %1953, %1982 : vector<8x128xf32>
    %1984 = vector.extract_strided_slice %3 {offsets = [0, 1], sizes = [8, 1], strides = [1, 1]} : vector<8x16xf32> to vector<8x1xf32>
    %c4_715 = arith.constant 4 : index
    %c1_716 = arith.constant 1 : index
    %c0_717 = arith.constant 0 : index
    %1985 = vector.load %arg4[%c4_715, %c1_716, %c0_717] : memref<5x16x128xf32, #tpu.memory_space<vmem>>, vector<1x1x128xf32>
    %1986 = vector.shape_cast %1985 : vector<1x1x128xf32> to vector<1x128xf32>
    %c4_718 = arith.constant 4 : index
    %c1_719 = arith.constant 1 : index
    %c0_720 = arith.constant 0 : index
    %1987 = vector.load %arg5[%c4_718, %c1_719, %c0_720] : memref<5x16x128xf32, #tpu.memory_space<vmem>>, vector<1x1x128xf32>
    %1988 = vector.shape_cast %1987 : vector<1x1x128xf32> to vector<1x128xf32>
    %c1_i32_721 = arith.constant 1 : i32
    %1989 = arith.addi %4, %c1_i32_721 : i32
    %1990 = arith.index_cast %1989 : i32 to index
    %1991 = memref.load %arg6[%1990] : memref<16xf32, #tpu.memory_space<smem>>
    %c1_i32_722 = arith.constant 1 : i32
    %1992 = arith.addi %4, %c1_i32_722 : i32
    %1993 = arith.index_cast %1992 : i32 to index
    %1994 = memref.load %arg7[%1993] : memref<16xf32, #tpu.memory_space<smem>>
    %1995 = vector.broadcast %1984 : vector<8x1xf32> to vector<8x128xf32>
    %1996 = vector.broadcast %1986 : vector<1x128xf32> to vector<8x128xf32>
    %1997 = arith.mulf %1995, %1996 : vector<8x128xf32>
    %1998 = vector.broadcast %1988 : vector<1x128xf32> to vector<8x128xf32>
    %1999 = arith.subf %1997, %1998 : vector<8x128xf32>
    %cst_723 = arith.constant 5.000000e-01 : f32
    %2000 = vector.broadcast %cst_723 : f32 to vector<8x128xf32>
    %2001 = arith.mulf %2000, %1999 : vector<8x128xf32>
    %2002 = math.tanh %2001 : vector<8x128xf32>
    %cst_724 = arith.constant 5.000000e-01 : f32
    %2003 = vector.broadcast %cst_724 : f32 to vector<8x128xf32>
    %2004 = arith.mulf %2003, %2002 : vector<8x128xf32>
    %cst_725 = arith.constant 5.000000e-01 : f32
    %2005 = vector.broadcast %cst_725 : f32 to vector<8x128xf32>
    %2006 = arith.addf %2004, %2005 : vector<8x128xf32>
    %2007 = vector.broadcast %1991 : f32 to vector<8x128xf32>
    %2008 = arith.mulf %2007, %2006 : vector<8x128xf32>
    %2009 = vector.broadcast %1994 : f32 to vector<8x128xf32>
    %2010 = arith.addf %2008, %2009 : vector<8x128xf32>
    %2011 = math.tanh %2010 : vector<8x128xf32>
    %2012 = arith.mulf %2006, %2011 : vector<8x128xf32>
    %2013 = arith.addf %1983, %2012 : vector<8x128xf32>
    %2014 = vector.extract_strided_slice %3 {offsets = [0, 2], sizes = [8, 1], strides = [1, 1]} : vector<8x16xf32> to vector<8x1xf32>
    %c4_726 = arith.constant 4 : index
    %c2_727 = arith.constant 2 : index
    %c0_728 = arith.constant 0 : index
    %2015 = vector.load %arg4[%c4_726, %c2_727, %c0_728] : memref<5x16x128xf32, #tpu.memory_space<vmem>>, vector<1x1x128xf32>
    %2016 = vector.shape_cast %2015 : vector<1x1x128xf32> to vector<1x128xf32>
    %c4_729 = arith.constant 4 : index
    %c2_730 = arith.constant 2 : index
    %c0_731 = arith.constant 0 : index
    %2017 = vector.load %arg5[%c4_729, %c2_730, %c0_731] : memref<5x16x128xf32, #tpu.memory_space<vmem>>, vector<1x1x128xf32>
    %2018 = vector.shape_cast %2017 : vector<1x1x128xf32> to vector<1x128xf32>
    %c2_i32_732 = arith.constant 2 : i32
    %2019 = arith.addi %4, %c2_i32_732 : i32
    %2020 = arith.index_cast %2019 : i32 to index
    %2021 = memref.load %arg6[%2020] : memref<16xf32, #tpu.memory_space<smem>>
    %c2_i32_733 = arith.constant 2 : i32
    %2022 = arith.addi %4, %c2_i32_733 : i32
    %2023 = arith.index_cast %2022 : i32 to index
    %2024 = memref.load %arg7[%2023] : memref<16xf32, #tpu.memory_space<smem>>
    %2025 = vector.broadcast %2014 : vector<8x1xf32> to vector<8x128xf32>
    %2026 = vector.broadcast %2016 : vector<1x128xf32> to vector<8x128xf32>
    %2027 = arith.mulf %2025, %2026 : vector<8x128xf32>
    %2028 = vector.broadcast %2018 : vector<1x128xf32> to vector<8x128xf32>
    %2029 = arith.subf %2027, %2028 : vector<8x128xf32>
    %cst_734 = arith.constant 5.000000e-01 : f32
    %2030 = vector.broadcast %cst_734 : f32 to vector<8x128xf32>
    %2031 = arith.mulf %2030, %2029 : vector<8x128xf32>
    %2032 = math.tanh %2031 : vector<8x128xf32>
    %cst_735 = arith.constant 5.000000e-01 : f32
    %2033 = vector.broadcast %cst_735 : f32 to vector<8x128xf32>
    %2034 = arith.mulf %2033, %2032 : vector<8x128xf32>
    %cst_736 = arith.constant 5.000000e-01 : f32
    %2035 = vector.broadcast %cst_736 : f32 to vector<8x128xf32>
    %2036 = arith.addf %2034, %2035 : vector<8x128xf32>
    %2037 = vector.broadcast %2021 : f32 to vector<8x128xf32>
    %2038 = arith.mulf %2037, %2036 : vector<8x128xf32>
    %2039 = vector.broadcast %2024 : f32 to vector<8x128xf32>
    %2040 = arith.addf %2038, %2039 : vector<8x128xf32>
    %2041 = math.tanh %2040 : vector<8x128xf32>
    %2042 = arith.mulf %2036, %2041 : vector<8x128xf32>
    %2043 = arith.addf %2013, %2042 : vector<8x128xf32>
    %2044 = vector.extract_strided_slice %3 {offsets = [0, 3], sizes = [8, 1], strides = [1, 1]} : vector<8x16xf32> to vector<8x1xf32>
    %c4_737 = arith.constant 4 : index
    %c3_738 = arith.constant 3 : index
    %c0_739 = arith.constant 0 : index
    %2045 = vector.load %arg4[%c4_737, %c3_738, %c0_739] : memref<5x16x128xf32, #tpu.memory_space<vmem>>, vector<1x1x128xf32>
    %2046 = vector.shape_cast %2045 : vector<1x1x128xf32> to vector<1x128xf32>
    %c4_740 = arith.constant 4 : index
    %c3_741 = arith.constant 3 : index
    %c0_742 = arith.constant 0 : index
    %2047 = vector.load %arg5[%c4_740, %c3_741, %c0_742] : memref<5x16x128xf32, #tpu.memory_space<vmem>>, vector<1x1x128xf32>
    %2048 = vector.shape_cast %2047 : vector<1x1x128xf32> to vector<1x128xf32>
    %c3_i32_743 = arith.constant 3 : i32
    %2049 = arith.addi %4, %c3_i32_743 : i32
    %2050 = arith.index_cast %2049 : i32 to index
    %2051 = memref.load %arg6[%2050] : memref<16xf32, #tpu.memory_space<smem>>
    %c3_i32_744 = arith.constant 3 : i32
    %2052 = arith.addi %4, %c3_i32_744 : i32
    %2053 = arith.index_cast %2052 : i32 to index
    %2054 = memref.load %arg7[%2053] : memref<16xf32, #tpu.memory_space<smem>>
    %2055 = vector.broadcast %2044 : vector<8x1xf32> to vector<8x128xf32>
    %2056 = vector.broadcast %2046 : vector<1x128xf32> to vector<8x128xf32>
    %2057 = arith.mulf %2055, %2056 : vector<8x128xf32>
    %2058 = vector.broadcast %2048 : vector<1x128xf32> to vector<8x128xf32>
    %2059 = arith.subf %2057, %2058 : vector<8x128xf32>
    %cst_745 = arith.constant 5.000000e-01 : f32
    %2060 = vector.broadcast %cst_745 : f32 to vector<8x128xf32>
    %2061 = arith.mulf %2060, %2059 : vector<8x128xf32>
    %2062 = math.tanh %2061 : vector<8x128xf32>
    %cst_746 = arith.constant 5.000000e-01 : f32
    %2063 = vector.broadcast %cst_746 : f32 to vector<8x128xf32>
    %2064 = arith.mulf %2063, %2062 : vector<8x128xf32>
    %cst_747 = arith.constant 5.000000e-01 : f32
    %2065 = vector.broadcast %cst_747 : f32 to vector<8x128xf32>
    %2066 = arith.addf %2064, %2065 : vector<8x128xf32>
    %2067 = vector.broadcast %2051 : f32 to vector<8x128xf32>
    %2068 = arith.mulf %2067, %2066 : vector<8x128xf32>
    %2069 = vector.broadcast %2054 : f32 to vector<8x128xf32>
    %2070 = arith.addf %2068, %2069 : vector<8x128xf32>
    %2071 = math.tanh %2070 : vector<8x128xf32>
    %2072 = arith.mulf %2066, %2071 : vector<8x128xf32>
    %2073 = arith.addf %2043, %2072 : vector<8x128xf32>
    %2074 = vector.extract_strided_slice %3 {offsets = [0, 4], sizes = [8, 1], strides = [1, 1]} : vector<8x16xf32> to vector<8x1xf32>
    %c4_748 = arith.constant 4 : index
    %c4_749 = arith.constant 4 : index
    %c0_750 = arith.constant 0 : index
    %2075 = vector.load %arg4[%c4_748, %c4_749, %c0_750] : memref<5x16x128xf32, #tpu.memory_space<vmem>>, vector<1x1x128xf32>
    %2076 = vector.shape_cast %2075 : vector<1x1x128xf32> to vector<1x128xf32>
    %c4_751 = arith.constant 4 : index
    %c4_752 = arith.constant 4 : index
    %c0_753 = arith.constant 0 : index
    %2077 = vector.load %arg5[%c4_751, %c4_752, %c0_753] : memref<5x16x128xf32, #tpu.memory_space<vmem>>, vector<1x1x128xf32>
    %2078 = vector.shape_cast %2077 : vector<1x1x128xf32> to vector<1x128xf32>
    %c4_i32_754 = arith.constant 4 : i32
    %2079 = arith.addi %4, %c4_i32_754 : i32
    %2080 = arith.index_cast %2079 : i32 to index
    %2081 = memref.load %arg6[%2080] : memref<16xf32, #tpu.memory_space<smem>>
    %c4_i32_755 = arith.constant 4 : i32
    %2082 = arith.addi %4, %c4_i32_755 : i32
    %2083 = arith.index_cast %2082 : i32 to index
    %2084 = memref.load %arg7[%2083] : memref<16xf32, #tpu.memory_space<smem>>
    %2085 = vector.broadcast %2074 : vector<8x1xf32> to vector<8x128xf32>
    %2086 = vector.broadcast %2076 : vector<1x128xf32> to vector<8x128xf32>
    %2087 = arith.mulf %2085, %2086 : vector<8x128xf32>
    %2088 = vector.broadcast %2078 : vector<1x128xf32> to vector<8x128xf32>
    %2089 = arith.subf %2087, %2088 : vector<8x128xf32>
    %cst_756 = arith.constant 5.000000e-01 : f32
    %2090 = vector.broadcast %cst_756 : f32 to vector<8x128xf32>
    %2091 = arith.mulf %2090, %2089 : vector<8x128xf32>
    %2092 = math.tanh %2091 : vector<8x128xf32>
    %cst_757 = arith.constant 5.000000e-01 : f32
    %2093 = vector.broadcast %cst_757 : f32 to vector<8x128xf32>
    %2094 = arith.mulf %2093, %2092 : vector<8x128xf32>
    %cst_758 = arith.constant 5.000000e-01 : f32
    %2095 = vector.broadcast %cst_758 : f32 to vector<8x128xf32>
    %2096 = arith.addf %2094, %2095 : vector<8x128xf32>
    %2097 = vector.broadcast %2081 : f32 to vector<8x128xf32>
    %2098 = arith.mulf %2097, %2096 : vector<8x128xf32>
    %2099 = vector.broadcast %2084 : f32 to vector<8x128xf32>
    %2100 = arith.addf %2098, %2099 : vector<8x128xf32>
    %2101 = math.tanh %2100 : vector<8x128xf32>
    %2102 = arith.mulf %2096, %2101 : vector<8x128xf32>
    %2103 = arith.addf %2073, %2102 : vector<8x128xf32>
    %2104 = vector.extract_strided_slice %3 {offsets = [0, 5], sizes = [8, 1], strides = [1, 1]} : vector<8x16xf32> to vector<8x1xf32>
    %c4_759 = arith.constant 4 : index
    %c5_760 = arith.constant 5 : index
    %c0_761 = arith.constant 0 : index
    %2105 = vector.load %arg4[%c4_759, %c5_760, %c0_761] : memref<5x16x128xf32, #tpu.memory_space<vmem>>, vector<1x1x128xf32>
    %2106 = vector.shape_cast %2105 : vector<1x1x128xf32> to vector<1x128xf32>
    %c4_762 = arith.constant 4 : index
    %c5_763 = arith.constant 5 : index
    %c0_764 = arith.constant 0 : index
    %2107 = vector.load %arg5[%c4_762, %c5_763, %c0_764] : memref<5x16x128xf32, #tpu.memory_space<vmem>>, vector<1x1x128xf32>
    %2108 = vector.shape_cast %2107 : vector<1x1x128xf32> to vector<1x128xf32>
    %c5_i32_765 = arith.constant 5 : i32
    %2109 = arith.addi %4, %c5_i32_765 : i32
    %2110 = arith.index_cast %2109 : i32 to index
    %2111 = memref.load %arg6[%2110] : memref<16xf32, #tpu.memory_space<smem>>
    %c5_i32_766 = arith.constant 5 : i32
    %2112 = arith.addi %4, %c5_i32_766 : i32
    %2113 = arith.index_cast %2112 : i32 to index
    %2114 = memref.load %arg7[%2113] : memref<16xf32, #tpu.memory_space<smem>>
    %2115 = vector.broadcast %2104 : vector<8x1xf32> to vector<8x128xf32>
    %2116 = vector.broadcast %2106 : vector<1x128xf32> to vector<8x128xf32>
    %2117 = arith.mulf %2115, %2116 : vector<8x128xf32>
    %2118 = vector.broadcast %2108 : vector<1x128xf32> to vector<8x128xf32>
    %2119 = arith.subf %2117, %2118 : vector<8x128xf32>
    %cst_767 = arith.constant 5.000000e-01 : f32
    %2120 = vector.broadcast %cst_767 : f32 to vector<8x128xf32>
    %2121 = arith.mulf %2120, %2119 : vector<8x128xf32>
    %2122 = math.tanh %2121 : vector<8x128xf32>
    %cst_768 = arith.constant 5.000000e-01 : f32
    %2123 = vector.broadcast %cst_768 : f32 to vector<8x128xf32>
    %2124 = arith.mulf %2123, %2122 : vector<8x128xf32>
    %cst_769 = arith.constant 5.000000e-01 : f32
    %2125 = vector.broadcast %cst_769 : f32 to vector<8x128xf32>
    %2126 = arith.addf %2124, %2125 : vector<8x128xf32>
    %2127 = vector.broadcast %2111 : f32 to vector<8x128xf32>
    %2128 = arith.mulf %2127, %2126 : vector<8x128xf32>
    %2129 = vector.broadcast %2114 : f32 to vector<8x128xf32>
    %2130 = arith.addf %2128, %2129 : vector<8x128xf32>
    %2131 = math.tanh %2130 : vector<8x128xf32>
    %2132 = arith.mulf %2126, %2131 : vector<8x128xf32>
    %2133 = arith.addf %2103, %2132 : vector<8x128xf32>
    %2134 = vector.extract_strided_slice %3 {offsets = [0, 6], sizes = [8, 1], strides = [1, 1]} : vector<8x16xf32> to vector<8x1xf32>
    %c4_770 = arith.constant 4 : index
    %c6_771 = arith.constant 6 : index
    %c0_772 = arith.constant 0 : index
    %2135 = vector.load %arg4[%c4_770, %c6_771, %c0_772] : memref<5x16x128xf32, #tpu.memory_space<vmem>>, vector<1x1x128xf32>
    %2136 = vector.shape_cast %2135 : vector<1x1x128xf32> to vector<1x128xf32>
    %c4_773 = arith.constant 4 : index
    %c6_774 = arith.constant 6 : index
    %c0_775 = arith.constant 0 : index
    %2137 = vector.load %arg5[%c4_773, %c6_774, %c0_775] : memref<5x16x128xf32, #tpu.memory_space<vmem>>, vector<1x1x128xf32>
    %2138 = vector.shape_cast %2137 : vector<1x1x128xf32> to vector<1x128xf32>
    %c6_i32_776 = arith.constant 6 : i32
    %2139 = arith.addi %4, %c6_i32_776 : i32
    %2140 = arith.index_cast %2139 : i32 to index
    %2141 = memref.load %arg6[%2140] : memref<16xf32, #tpu.memory_space<smem>>
    %c6_i32_777 = arith.constant 6 : i32
    %2142 = arith.addi %4, %c6_i32_777 : i32
    %2143 = arith.index_cast %2142 : i32 to index
    %2144 = memref.load %arg7[%2143] : memref<16xf32, #tpu.memory_space<smem>>
    %2145 = vector.broadcast %2134 : vector<8x1xf32> to vector<8x128xf32>
    %2146 = vector.broadcast %2136 : vector<1x128xf32> to vector<8x128xf32>
    %2147 = arith.mulf %2145, %2146 : vector<8x128xf32>
    %2148 = vector.broadcast %2138 : vector<1x128xf32> to vector<8x128xf32>
    %2149 = arith.subf %2147, %2148 : vector<8x128xf32>
    %cst_778 = arith.constant 5.000000e-01 : f32
    %2150 = vector.broadcast %cst_778 : f32 to vector<8x128xf32>
    %2151 = arith.mulf %2150, %2149 : vector<8x128xf32>
    %2152 = math.tanh %2151 : vector<8x128xf32>
    %cst_779 = arith.constant 5.000000e-01 : f32
    %2153 = vector.broadcast %cst_779 : f32 to vector<8x128xf32>
    %2154 = arith.mulf %2153, %2152 : vector<8x128xf32>
    %cst_780 = arith.constant 5.000000e-01 : f32
    %2155 = vector.broadcast %cst_780 : f32 to vector<8x128xf32>
    %2156 = arith.addf %2154, %2155 : vector<8x128xf32>
    %2157 = vector.broadcast %2141 : f32 to vector<8x128xf32>
    %2158 = arith.mulf %2157, %2156 : vector<8x128xf32>
    %2159 = vector.broadcast %2144 : f32 to vector<8x128xf32>
    %2160 = arith.addf %2158, %2159 : vector<8x128xf32>
    %2161 = math.tanh %2160 : vector<8x128xf32>
    %2162 = arith.mulf %2156, %2161 : vector<8x128xf32>
    %2163 = arith.addf %2133, %2162 : vector<8x128xf32>
    %2164 = vector.extract_strided_slice %3 {offsets = [0, 7], sizes = [8, 1], strides = [1, 1]} : vector<8x16xf32> to vector<8x1xf32>
    %c4_781 = arith.constant 4 : index
    %c7_782 = arith.constant 7 : index
    %c0_783 = arith.constant 0 : index
    %2165 = vector.load %arg4[%c4_781, %c7_782, %c0_783] : memref<5x16x128xf32, #tpu.memory_space<vmem>>, vector<1x1x128xf32>
    %2166 = vector.shape_cast %2165 : vector<1x1x128xf32> to vector<1x128xf32>
    %c4_784 = arith.constant 4 : index
    %c7_785 = arith.constant 7 : index
    %c0_786 = arith.constant 0 : index
    %2167 = vector.load %arg5[%c4_784, %c7_785, %c0_786] : memref<5x16x128xf32, #tpu.memory_space<vmem>>, vector<1x1x128xf32>
    %2168 = vector.shape_cast %2167 : vector<1x1x128xf32> to vector<1x128xf32>
    %c7_i32_787 = arith.constant 7 : i32
    %2169 = arith.addi %4, %c7_i32_787 : i32
    %2170 = arith.index_cast %2169 : i32 to index
    %2171 = memref.load %arg6[%2170] : memref<16xf32, #tpu.memory_space<smem>>
    %c7_i32_788 = arith.constant 7 : i32
    %2172 = arith.addi %4, %c7_i32_788 : i32
    %2173 = arith.index_cast %2172 : i32 to index
    %2174 = memref.load %arg7[%2173] : memref<16xf32, #tpu.memory_space<smem>>
    %2175 = vector.broadcast %2164 : vector<8x1xf32> to vector<8x128xf32>
    %2176 = vector.broadcast %2166 : vector<1x128xf32> to vector<8x128xf32>
    %2177 = arith.mulf %2175, %2176 : vector<8x128xf32>
    %2178 = vector.broadcast %2168 : vector<1x128xf32> to vector<8x128xf32>
    %2179 = arith.subf %2177, %2178 : vector<8x128xf32>
    %cst_789 = arith.constant 5.000000e-01 : f32
    %2180 = vector.broadcast %cst_789 : f32 to vector<8x128xf32>
    %2181 = arith.mulf %2180, %2179 : vector<8x128xf32>
    %2182 = math.tanh %2181 : vector<8x128xf32>
    %cst_790 = arith.constant 5.000000e-01 : f32
    %2183 = vector.broadcast %cst_790 : f32 to vector<8x128xf32>
    %2184 = arith.mulf %2183, %2182 : vector<8x128xf32>
    %cst_791 = arith.constant 5.000000e-01 : f32
    %2185 = vector.broadcast %cst_791 : f32 to vector<8x128xf32>
    %2186 = arith.addf %2184, %2185 : vector<8x128xf32>
    %2187 = vector.broadcast %2171 : f32 to vector<8x128xf32>
    %2188 = arith.mulf %2187, %2186 : vector<8x128xf32>
    %2189 = vector.broadcast %2174 : f32 to vector<8x128xf32>
    %2190 = arith.addf %2188, %2189 : vector<8x128xf32>
    %2191 = math.tanh %2190 : vector<8x128xf32>
    %2192 = arith.mulf %2186, %2191 : vector<8x128xf32>
    %2193 = arith.addf %2163, %2192 : vector<8x128xf32>
    %2194 = vector.extract_strided_slice %3 {offsets = [0, 8], sizes = [8, 1], strides = [1, 1]} : vector<8x16xf32> to vector<8x1xf32>
    %c4_792 = arith.constant 4 : index
    %c8_793 = arith.constant 8 : index
    %c0_794 = arith.constant 0 : index
    %2195 = vector.load %arg4[%c4_792, %c8_793, %c0_794] : memref<5x16x128xf32, #tpu.memory_space<vmem>>, vector<1x1x128xf32>
    %2196 = vector.shape_cast %2195 : vector<1x1x128xf32> to vector<1x128xf32>
    %c4_795 = arith.constant 4 : index
    %c8_796 = arith.constant 8 : index
    %c0_797 = arith.constant 0 : index
    %2197 = vector.load %arg5[%c4_795, %c8_796, %c0_797] : memref<5x16x128xf32, #tpu.memory_space<vmem>>, vector<1x1x128xf32>
    %2198 = vector.shape_cast %2197 : vector<1x1x128xf32> to vector<1x128xf32>
    %c8_i32_798 = arith.constant 8 : i32
    %2199 = arith.addi %4, %c8_i32_798 : i32
    %2200 = arith.index_cast %2199 : i32 to index
    %2201 = memref.load %arg6[%2200] : memref<16xf32, #tpu.memory_space<smem>>
    %c8_i32_799 = arith.constant 8 : i32
    %2202 = arith.addi %4, %c8_i32_799 : i32
    %2203 = arith.index_cast %2202 : i32 to index
    %2204 = memref.load %arg7[%2203] : memref<16xf32, #tpu.memory_space<smem>>
    %2205 = vector.broadcast %2194 : vector<8x1xf32> to vector<8x128xf32>
    %2206 = vector.broadcast %2196 : vector<1x128xf32> to vector<8x128xf32>
    %2207 = arith.mulf %2205, %2206 : vector<8x128xf32>
    %2208 = vector.broadcast %2198 : vector<1x128xf32> to vector<8x128xf32>
    %2209 = arith.subf %2207, %2208 : vector<8x128xf32>
    %cst_800 = arith.constant 5.000000e-01 : f32
    %2210 = vector.broadcast %cst_800 : f32 to vector<8x128xf32>
    %2211 = arith.mulf %2210, %2209 : vector<8x128xf32>
    %2212 = math.tanh %2211 : vector<8x128xf32>
    %cst_801 = arith.constant 5.000000e-01 : f32
    %2213 = vector.broadcast %cst_801 : f32 to vector<8x128xf32>
    %2214 = arith.mulf %2213, %2212 : vector<8x128xf32>
    %cst_802 = arith.constant 5.000000e-01 : f32
    %2215 = vector.broadcast %cst_802 : f32 to vector<8x128xf32>
    %2216 = arith.addf %2214, %2215 : vector<8x128xf32>
    %2217 = vector.broadcast %2201 : f32 to vector<8x128xf32>
    %2218 = arith.mulf %2217, %2216 : vector<8x128xf32>
    %2219 = vector.broadcast %2204 : f32 to vector<8x128xf32>
    %2220 = arith.addf %2218, %2219 : vector<8x128xf32>
    %2221 = math.tanh %2220 : vector<8x128xf32>
    %2222 = arith.mulf %2216, %2221 : vector<8x128xf32>
    %2223 = arith.addf %2193, %2222 : vector<8x128xf32>
    %2224 = vector.extract_strided_slice %3 {offsets = [0, 9], sizes = [8, 1], strides = [1, 1]} : vector<8x16xf32> to vector<8x1xf32>
    %c4_803 = arith.constant 4 : index
    %c9_804 = arith.constant 9 : index
    %c0_805 = arith.constant 0 : index
    %2225 = vector.load %arg4[%c4_803, %c9_804, %c0_805] : memref<5x16x128xf32, #tpu.memory_space<vmem>>, vector<1x1x128xf32>
    %2226 = vector.shape_cast %2225 : vector<1x1x128xf32> to vector<1x128xf32>
    %c4_806 = arith.constant 4 : index
    %c9_807 = arith.constant 9 : index
    %c0_808 = arith.constant 0 : index
    %2227 = vector.load %arg5[%c4_806, %c9_807, %c0_808] : memref<5x16x128xf32, #tpu.memory_space<vmem>>, vector<1x1x128xf32>
    %2228 = vector.shape_cast %2227 : vector<1x1x128xf32> to vector<1x128xf32>
    %c9_i32_809 = arith.constant 9 : i32
    %2229 = arith.addi %4, %c9_i32_809 : i32
    %2230 = arith.index_cast %2229 : i32 to index
    %2231 = memref.load %arg6[%2230] : memref<16xf32, #tpu.memory_space<smem>>
    %c9_i32_810 = arith.constant 9 : i32
    %2232 = arith.addi %4, %c9_i32_810 : i32
    %2233 = arith.index_cast %2232 : i32 to index
    %2234 = memref.load %arg7[%2233] : memref<16xf32, #tpu.memory_space<smem>>
    %2235 = vector.broadcast %2224 : vector<8x1xf32> to vector<8x128xf32>
    %2236 = vector.broadcast %2226 : vector<1x128xf32> to vector<8x128xf32>
    %2237 = arith.mulf %2235, %2236 : vector<8x128xf32>
    %2238 = vector.broadcast %2228 : vector<1x128xf32> to vector<8x128xf32>
    %2239 = arith.subf %2237, %2238 : vector<8x128xf32>
    %cst_811 = arith.constant 5.000000e-01 : f32
    %2240 = vector.broadcast %cst_811 : f32 to vector<8x128xf32>
    %2241 = arith.mulf %2240, %2239 : vector<8x128xf32>
    %2242 = math.tanh %2241 : vector<8x128xf32>
    %cst_812 = arith.constant 5.000000e-01 : f32
    %2243 = vector.broadcast %cst_812 : f32 to vector<8x128xf32>
    %2244 = arith.mulf %2243, %2242 : vector<8x128xf32>
    %cst_813 = arith.constant 5.000000e-01 : f32
    %2245 = vector.broadcast %cst_813 : f32 to vector<8x128xf32>
    %2246 = arith.addf %2244, %2245 : vector<8x128xf32>
    %2247 = vector.broadcast %2231 : f32 to vector<8x128xf32>
    %2248 = arith.mulf %2247, %2246 : vector<8x128xf32>
    %2249 = vector.broadcast %2234 : f32 to vector<8x128xf32>
    %2250 = arith.addf %2248, %2249 : vector<8x128xf32>
    %2251 = math.tanh %2250 : vector<8x128xf32>
    %2252 = arith.mulf %2246, %2251 : vector<8x128xf32>
    %2253 = arith.addf %2223, %2252 : vector<8x128xf32>
    %2254 = vector.extract_strided_slice %3 {offsets = [0, 10], sizes = [8, 1], strides = [1, 1]} : vector<8x16xf32> to vector<8x1xf32>
    %c4_814 = arith.constant 4 : index
    %c10_815 = arith.constant 10 : index
    %c0_816 = arith.constant 0 : index
    %2255 = vector.load %arg4[%c4_814, %c10_815, %c0_816] : memref<5x16x128xf32, #tpu.memory_space<vmem>>, vector<1x1x128xf32>
    %2256 = vector.shape_cast %2255 : vector<1x1x128xf32> to vector<1x128xf32>
    %c4_817 = arith.constant 4 : index
    %c10_818 = arith.constant 10 : index
    %c0_819 = arith.constant 0 : index
    %2257 = vector.load %arg5[%c4_817, %c10_818, %c0_819] : memref<5x16x128xf32, #tpu.memory_space<vmem>>, vector<1x1x128xf32>
    %2258 = vector.shape_cast %2257 : vector<1x1x128xf32> to vector<1x128xf32>
    %c10_i32_820 = arith.constant 10 : i32
    %2259 = arith.addi %4, %c10_i32_820 : i32
    %2260 = arith.index_cast %2259 : i32 to index
    %2261 = memref.load %arg6[%2260] : memref<16xf32, #tpu.memory_space<smem>>
    %c10_i32_821 = arith.constant 10 : i32
    %2262 = arith.addi %4, %c10_i32_821 : i32
    %2263 = arith.index_cast %2262 : i32 to index
    %2264 = memref.load %arg7[%2263] : memref<16xf32, #tpu.memory_space<smem>>
    %2265 = vector.broadcast %2254 : vector<8x1xf32> to vector<8x128xf32>
    %2266 = vector.broadcast %2256 : vector<1x128xf32> to vector<8x128xf32>
    %2267 = arith.mulf %2265, %2266 : vector<8x128xf32>
    %2268 = vector.broadcast %2258 : vector<1x128xf32> to vector<8x128xf32>
    %2269 = arith.subf %2267, %2268 : vector<8x128xf32>
    %cst_822 = arith.constant 5.000000e-01 : f32
    %2270 = vector.broadcast %cst_822 : f32 to vector<8x128xf32>
    %2271 = arith.mulf %2270, %2269 : vector<8x128xf32>
    %2272 = math.tanh %2271 : vector<8x128xf32>
    %cst_823 = arith.constant 5.000000e-01 : f32
    %2273 = vector.broadcast %cst_823 : f32 to vector<8x128xf32>
    %2274 = arith.mulf %2273, %2272 : vector<8x128xf32>
    %cst_824 = arith.constant 5.000000e-01 : f32
    %2275 = vector.broadcast %cst_824 : f32 to vector<8x128xf32>
    %2276 = arith.addf %2274, %2275 : vector<8x128xf32>
    %2277 = vector.broadcast %2261 : f32 to vector<8x128xf32>
    %2278 = arith.mulf %2277, %2276 : vector<8x128xf32>
    %2279 = vector.broadcast %2264 : f32 to vector<8x128xf32>
    %2280 = arith.addf %2278, %2279 : vector<8x128xf32>
    %2281 = math.tanh %2280 : vector<8x128xf32>
    %2282 = arith.mulf %2276, %2281 : vector<8x128xf32>
    %2283 = arith.addf %2253, %2282 : vector<8x128xf32>
    %2284 = vector.extract_strided_slice %3 {offsets = [0, 11], sizes = [8, 1], strides = [1, 1]} : vector<8x16xf32> to vector<8x1xf32>
    %c4_825 = arith.constant 4 : index
    %c11_826 = arith.constant 11 : index
    %c0_827 = arith.constant 0 : index
    %2285 = vector.load %arg4[%c4_825, %c11_826, %c0_827] : memref<5x16x128xf32, #tpu.memory_space<vmem>>, vector<1x1x128xf32>
    %2286 = vector.shape_cast %2285 : vector<1x1x128xf32> to vector<1x128xf32>
    %c4_828 = arith.constant 4 : index
    %c11_829 = arith.constant 11 : index
    %c0_830 = arith.constant 0 : index
    %2287 = vector.load %arg5[%c4_828, %c11_829, %c0_830] : memref<5x16x128xf32, #tpu.memory_space<vmem>>, vector<1x1x128xf32>
    %2288 = vector.shape_cast %2287 : vector<1x1x128xf32> to vector<1x128xf32>
    %c11_i32_831 = arith.constant 11 : i32
    %2289 = arith.addi %4, %c11_i32_831 : i32
    %2290 = arith.index_cast %2289 : i32 to index
    %2291 = memref.load %arg6[%2290] : memref<16xf32, #tpu.memory_space<smem>>
    %c11_i32_832 = arith.constant 11 : i32
    %2292 = arith.addi %4, %c11_i32_832 : i32
    %2293 = arith.index_cast %2292 : i32 to index
    %2294 = memref.load %arg7[%2293] : memref<16xf32, #tpu.memory_space<smem>>
    %2295 = vector.broadcast %2284 : vector<8x1xf32> to vector<8x128xf32>
    %2296 = vector.broadcast %2286 : vector<1x128xf32> to vector<8x128xf32>
    %2297 = arith.mulf %2295, %2296 : vector<8x128xf32>
    %2298 = vector.broadcast %2288 : vector<1x128xf32> to vector<8x128xf32>
    %2299 = arith.subf %2297, %2298 : vector<8x128xf32>
    %cst_833 = arith.constant 5.000000e-01 : f32
    %2300 = vector.broadcast %cst_833 : f32 to vector<8x128xf32>
    %2301 = arith.mulf %2300, %2299 : vector<8x128xf32>
    %2302 = math.tanh %2301 : vector<8x128xf32>
    %cst_834 = arith.constant 5.000000e-01 : f32
    %2303 = vector.broadcast %cst_834 : f32 to vector<8x128xf32>
    %2304 = arith.mulf %2303, %2302 : vector<8x128xf32>
    %cst_835 = arith.constant 5.000000e-01 : f32
    %2305 = vector.broadcast %cst_835 : f32 to vector<8x128xf32>
    %2306 = arith.addf %2304, %2305 : vector<8x128xf32>
    %2307 = vector.broadcast %2291 : f32 to vector<8x128xf32>
    %2308 = arith.mulf %2307, %2306 : vector<8x128xf32>
    %2309 = vector.broadcast %2294 : f32 to vector<8x128xf32>
    %2310 = arith.addf %2308, %2309 : vector<8x128xf32>
    %2311 = math.tanh %2310 : vector<8x128xf32>
    %2312 = arith.mulf %2306, %2311 : vector<8x128xf32>
    %2313 = arith.addf %2283, %2312 : vector<8x128xf32>
    %2314 = vector.extract_strided_slice %3 {offsets = [0, 12], sizes = [8, 1], strides = [1, 1]} : vector<8x16xf32> to vector<8x1xf32>
    %c4_836 = arith.constant 4 : index
    %c12_837 = arith.constant 12 : index
    %c0_838 = arith.constant 0 : index
    %2315 = vector.load %arg4[%c4_836, %c12_837, %c0_838] : memref<5x16x128xf32, #tpu.memory_space<vmem>>, vector<1x1x128xf32>
    %2316 = vector.shape_cast %2315 : vector<1x1x128xf32> to vector<1x128xf32>
    %c4_839 = arith.constant 4 : index
    %c12_840 = arith.constant 12 : index
    %c0_841 = arith.constant 0 : index
    %2317 = vector.load %arg5[%c4_839, %c12_840, %c0_841] : memref<5x16x128xf32, #tpu.memory_space<vmem>>, vector<1x1x128xf32>
    %2318 = vector.shape_cast %2317 : vector<1x1x128xf32> to vector<1x128xf32>
    %c12_i32_842 = arith.constant 12 : i32
    %2319 = arith.addi %4, %c12_i32_842 : i32
    %2320 = arith.index_cast %2319 : i32 to index
    %2321 = memref.load %arg6[%2320] : memref<16xf32, #tpu.memory_space<smem>>
    %c12_i32_843 = arith.constant 12 : i32
    %2322 = arith.addi %4, %c12_i32_843 : i32
    %2323 = arith.index_cast %2322 : i32 to index
    %2324 = memref.load %arg7[%2323] : memref<16xf32, #tpu.memory_space<smem>>
    %2325 = vector.broadcast %2314 : vector<8x1xf32> to vector<8x128xf32>
    %2326 = vector.broadcast %2316 : vector<1x128xf32> to vector<8x128xf32>
    %2327 = arith.mulf %2325, %2326 : vector<8x128xf32>
    %2328 = vector.broadcast %2318 : vector<1x128xf32> to vector<8x128xf32>
    %2329 = arith.subf %2327, %2328 : vector<8x128xf32>
    %cst_844 = arith.constant 5.000000e-01 : f32
    %2330 = vector.broadcast %cst_844 : f32 to vector<8x128xf32>
    %2331 = arith.mulf %2330, %2329 : vector<8x128xf32>
    %2332 = math.tanh %2331 : vector<8x128xf32>
    %cst_845 = arith.constant 5.000000e-01 : f32
    %2333 = vector.broadcast %cst_845 : f32 to vector<8x128xf32>
    %2334 = arith.mulf %2333, %2332 : vector<8x128xf32>
    %cst_846 = arith.constant 5.000000e-01 : f32
    %2335 = vector.broadcast %cst_846 : f32 to vector<8x128xf32>
    %2336 = arith.addf %2334, %2335 : vector<8x128xf32>
    %2337 = vector.broadcast %2321 : f32 to vector<8x128xf32>
    %2338 = arith.mulf %2337, %2336 : vector<8x128xf32>
    %2339 = vector.broadcast %2324 : f32 to vector<8x128xf32>
    %2340 = arith.addf %2338, %2339 : vector<8x128xf32>
    %2341 = math.tanh %2340 : vector<8x128xf32>
    %2342 = arith.mulf %2336, %2341 : vector<8x128xf32>
    %2343 = arith.addf %2313, %2342 : vector<8x128xf32>
    %2344 = vector.extract_strided_slice %3 {offsets = [0, 13], sizes = [8, 1], strides = [1, 1]} : vector<8x16xf32> to vector<8x1xf32>
    %c4_847 = arith.constant 4 : index
    %c13_848 = arith.constant 13 : index
    %c0_849 = arith.constant 0 : index
    %2345 = vector.load %arg4[%c4_847, %c13_848, %c0_849] : memref<5x16x128xf32, #tpu.memory_space<vmem>>, vector<1x1x128xf32>
    %2346 = vector.shape_cast %2345 : vector<1x1x128xf32> to vector<1x128xf32>
    %c4_850 = arith.constant 4 : index
    %c13_851 = arith.constant 13 : index
    %c0_852 = arith.constant 0 : index
    %2347 = vector.load %arg5[%c4_850, %c13_851, %c0_852] : memref<5x16x128xf32, #tpu.memory_space<vmem>>, vector<1x1x128xf32>
    %2348 = vector.shape_cast %2347 : vector<1x1x128xf32> to vector<1x128xf32>
    %c13_i32_853 = arith.constant 13 : i32
    %2349 = arith.addi %4, %c13_i32_853 : i32
    %2350 = arith.index_cast %2349 : i32 to index
    %2351 = memref.load %arg6[%2350] : memref<16xf32, #tpu.memory_space<smem>>
    %c13_i32_854 = arith.constant 13 : i32
    %2352 = arith.addi %4, %c13_i32_854 : i32
    %2353 = arith.index_cast %2352 : i32 to index
    %2354 = memref.load %arg7[%2353] : memref<16xf32, #tpu.memory_space<smem>>
    %2355 = vector.broadcast %2344 : vector<8x1xf32> to vector<8x128xf32>
    %2356 = vector.broadcast %2346 : vector<1x128xf32> to vector<8x128xf32>
    %2357 = arith.mulf %2355, %2356 : vector<8x128xf32>
    %2358 = vector.broadcast %2348 : vector<1x128xf32> to vector<8x128xf32>
    %2359 = arith.subf %2357, %2358 : vector<8x128xf32>
    %cst_855 = arith.constant 5.000000e-01 : f32
    %2360 = vector.broadcast %cst_855 : f32 to vector<8x128xf32>
    %2361 = arith.mulf %2360, %2359 : vector<8x128xf32>
    %2362 = math.tanh %2361 : vector<8x128xf32>
    %cst_856 = arith.constant 5.000000e-01 : f32
    %2363 = vector.broadcast %cst_856 : f32 to vector<8x128xf32>
    %2364 = arith.mulf %2363, %2362 : vector<8x128xf32>
    %cst_857 = arith.constant 5.000000e-01 : f32
    %2365 = vector.broadcast %cst_857 : f32 to vector<8x128xf32>
    %2366 = arith.addf %2364, %2365 : vector<8x128xf32>
    %2367 = vector.broadcast %2351 : f32 to vector<8x128xf32>
    %2368 = arith.mulf %2367, %2366 : vector<8x128xf32>
    %2369 = vector.broadcast %2354 : f32 to vector<8x128xf32>
    %2370 = arith.addf %2368, %2369 : vector<8x128xf32>
    %2371 = math.tanh %2370 : vector<8x128xf32>
    %2372 = arith.mulf %2366, %2371 : vector<8x128xf32>
    %2373 = arith.addf %2343, %2372 : vector<8x128xf32>
    %2374 = vector.extract_strided_slice %3 {offsets = [0, 14], sizes = [8, 1], strides = [1, 1]} : vector<8x16xf32> to vector<8x1xf32>
    %c4_858 = arith.constant 4 : index
    %c14_859 = arith.constant 14 : index
    %c0_860 = arith.constant 0 : index
    %2375 = vector.load %arg4[%c4_858, %c14_859, %c0_860] : memref<5x16x128xf32, #tpu.memory_space<vmem>>, vector<1x1x128xf32>
    %2376 = vector.shape_cast %2375 : vector<1x1x128xf32> to vector<1x128xf32>
    %c4_861 = arith.constant 4 : index
    %c14_862 = arith.constant 14 : index
    %c0_863 = arith.constant 0 : index
    %2377 = vector.load %arg5[%c4_861, %c14_862, %c0_863] : memref<5x16x128xf32, #tpu.memory_space<vmem>>, vector<1x1x128xf32>
    %2378 = vector.shape_cast %2377 : vector<1x1x128xf32> to vector<1x128xf32>
    %c14_i32_864 = arith.constant 14 : i32
    %2379 = arith.addi %4, %c14_i32_864 : i32
    %2380 = arith.index_cast %2379 : i32 to index
    %2381 = memref.load %arg6[%2380] : memref<16xf32, #tpu.memory_space<smem>>
    %c14_i32_865 = arith.constant 14 : i32
    %2382 = arith.addi %4, %c14_i32_865 : i32
    %2383 = arith.index_cast %2382 : i32 to index
    %2384 = memref.load %arg7[%2383] : memref<16xf32, #tpu.memory_space<smem>>
    %2385 = vector.broadcast %2374 : vector<8x1xf32> to vector<8x128xf32>
    %2386 = vector.broadcast %2376 : vector<1x128xf32> to vector<8x128xf32>
    %2387 = arith.mulf %2385, %2386 : vector<8x128xf32>
    %2388 = vector.broadcast %2378 : vector<1x128xf32> to vector<8x128xf32>
    %2389 = arith.subf %2387, %2388 : vector<8x128xf32>
    %cst_866 = arith.constant 5.000000e-01 : f32
    %2390 = vector.broadcast %cst_866 : f32 to vector<8x128xf32>
    %2391 = arith.mulf %2390, %2389 : vector<8x128xf32>
    %2392 = math.tanh %2391 : vector<8x128xf32>
    %cst_867 = arith.constant 5.000000e-01 : f32
    %2393 = vector.broadcast %cst_867 : f32 to vector<8x128xf32>
    %2394 = arith.mulf %2393, %2392 : vector<8x128xf32>
    %cst_868 = arith.constant 5.000000e-01 : f32
    %2395 = vector.broadcast %cst_868 : f32 to vector<8x128xf32>
    %2396 = arith.addf %2394, %2395 : vector<8x128xf32>
    %2397 = vector.broadcast %2381 : f32 to vector<8x128xf32>
    %2398 = arith.mulf %2397, %2396 : vector<8x128xf32>
    %2399 = vector.broadcast %2384 : f32 to vector<8x128xf32>
    %2400 = arith.addf %2398, %2399 : vector<8x128xf32>
    %2401 = math.tanh %2400 : vector<8x128xf32>
    %2402 = arith.mulf %2396, %2401 : vector<8x128xf32>
    %2403 = arith.addf %2373, %2402 : vector<8x128xf32>
    %2404 = vector.extract_strided_slice %3 {offsets = [0, 15], sizes = [8, 1], strides = [1, 1]} : vector<8x16xf32> to vector<8x1xf32>
    %c4_869 = arith.constant 4 : index
    %c15_870 = arith.constant 15 : index
    %c0_871 = arith.constant 0 : index
    %2405 = vector.load %arg4[%c4_869, %c15_870, %c0_871] : memref<5x16x128xf32, #tpu.memory_space<vmem>>, vector<1x1x128xf32>
    %2406 = vector.shape_cast %2405 : vector<1x1x128xf32> to vector<1x128xf32>
    %c4_872 = arith.constant 4 : index
    %c15_873 = arith.constant 15 : index
    %c0_874 = arith.constant 0 : index
    %2407 = vector.load %arg5[%c4_872, %c15_873, %c0_874] : memref<5x16x128xf32, #tpu.memory_space<vmem>>, vector<1x1x128xf32>
    %2408 = vector.shape_cast %2407 : vector<1x1x128xf32> to vector<1x128xf32>
    %c15_i32_875 = arith.constant 15 : i32
    %2409 = arith.addi %4, %c15_i32_875 : i32
    %2410 = arith.index_cast %2409 : i32 to index
    %2411 = memref.load %arg6[%2410] : memref<16xf32, #tpu.memory_space<smem>>
    %c15_i32_876 = arith.constant 15 : i32
    %2412 = arith.addi %4, %c15_i32_876 : i32
    %2413 = arith.index_cast %2412 : i32 to index
    %2414 = memref.load %arg7[%2413] : memref<16xf32, #tpu.memory_space<smem>>
    %2415 = vector.broadcast %2404 : vector<8x1xf32> to vector<8x128xf32>
    %2416 = vector.broadcast %2406 : vector<1x128xf32> to vector<8x128xf32>
    %2417 = arith.mulf %2415, %2416 : vector<8x128xf32>
    %2418 = vector.broadcast %2408 : vector<1x128xf32> to vector<8x128xf32>
    %2419 = arith.subf %2417, %2418 : vector<8x128xf32>
    %cst_877 = arith.constant 5.000000e-01 : f32
    %2420 = vector.broadcast %cst_877 : f32 to vector<8x128xf32>
    %2421 = arith.mulf %2420, %2419 : vector<8x128xf32>
    %2422 = math.tanh %2421 : vector<8x128xf32>
    %cst_878 = arith.constant 5.000000e-01 : f32
    %2423 = vector.broadcast %cst_878 : f32 to vector<8x128xf32>
    %2424 = arith.mulf %2423, %2422 : vector<8x128xf32>
    %cst_879 = arith.constant 5.000000e-01 : f32
    %2425 = vector.broadcast %cst_879 : f32 to vector<8x128xf32>
    %2426 = arith.addf %2424, %2425 : vector<8x128xf32>
    %2427 = vector.broadcast %2411 : f32 to vector<8x128xf32>
    %2428 = arith.mulf %2427, %2426 : vector<8x128xf32>
    %2429 = vector.broadcast %2414 : f32 to vector<8x128xf32>
    %2430 = arith.addf %2428, %2429 : vector<8x128xf32>
    %2431 = math.tanh %2430 : vector<8x128xf32>
    %2432 = arith.mulf %2426, %2431 : vector<8x128xf32>
    %2433 = arith.addf %2403, %2432 : vector<8x128xf32>
    %c4_880 = arith.constant 4 : index
    %c0_881 = arith.constant 0 : index
    %c0_882 = arith.constant 0 : index
    %2434 = vector.load %arg10[%c4_880, %c0_881, %c0_882] : memref<5x8x128xf32, #tpu.memory_space<vmem>>, vector<1x8x128xf32>
    %2435 = vector.shape_cast %2434 : vector<1x8x128xf32> to vector<8x128xf32>
    %2436 = arith.addf %2435, %2433 : vector<8x128xf32>
    %c4_883 = arith.constant 4 : index
    %c0_884 = arith.constant 0 : index
    %c0_885 = arith.constant 0 : index
    %2437 = vector.load %arg10[%c4_883, %c0_884, %c0_885] : memref<5x8x128xf32, #tpu.memory_space<vmem>>, vector<1x8x128xf32>
    %2438 = vector.shape_cast %2437 : vector<1x8x128xf32> to vector<8x128xf32>
    %2439 = vector.shape_cast %2436 : vector<8x128xf32> to vector<1x8x128xf32>
    tpu.vector_store %arg10[%c4_883, %c0_884, %c0_885], %2439 {strides = array<i32>} : memref<5x8x128xf32, #tpu.memory_space<vmem>>, vector<1x8x128xf32>,
    %c0_i32_886 = arith.constant 0 : i32
    %2440 = arith.cmpi eq, %arg2, %c0_i32_886 : i32
    %2441 = arith.extui %2440 : i1 to i32
    %c0_i32_887 = arith.constant 0 : i32
    %2442 = arith.cmpi ne, %2441, %c0_i32_887 : i32
    scf.if %2442 {
      %cst_888 = arith.constant 0.000000e+00 : f32
      %2443 = vector.broadcast %cst_888 : f32 to vector<8x128xf32>
      %c0_889 = arith.constant 0 : index
      %c0_890 = arith.constant 0 : index
      %c0_891 = arith.constant 0 : index
      %2444 = vector.load %arg10[%c0_889, %c0_890, %c0_891] : memref<5x8x128xf32, #tpu.memory_space<vmem>>, vector<1x8x128xf32>
      %2445 = vector.shape_cast %2444 : vector<1x8x128xf32> to vector<8x128xf32>
      %cst_892 = arith.constant 5.000000e-01 : f32
      %2446 = vector.broadcast %cst_892 : f32 to vector<8x128xf32>
      %2447 = arith.mulf %2446, %2445 : vector<8x128xf32>
      %2448 = math.tanh %2447 : vector<8x128xf32>
      %2449 = arith.addf %2443, %2448 : vector<8x128xf32>
      %c1_893 = arith.constant 1 : index
      %c0_894 = arith.constant 0 : index
      %c0_895 = arith.constant 0 : index
      %2450 = vector.load %arg10[%c1_893, %c0_894, %c0_895] : memref<5x8x128xf32, #tpu.memory_space<vmem>>, vector<1x8x128xf32>
      %2451 = vector.shape_cast %2450 : vector<1x8x128xf32> to vector<8x128xf32>
      %cst_896 = arith.constant 5.000000e-01 : f32
      %2452 = vector.broadcast %cst_896 : f32 to vector<8x128xf32>
      %2453 = arith.mulf %2452, %2451 : vector<8x128xf32>
      %2454 = math.tanh %2453 : vector<8x128xf32>
      %2455 = arith.addf %2449, %2454 : vector<8x128xf32>
      %c2_897 = arith.constant 2 : index
      %c0_898 = arith.constant 0 : index
      %c0_899 = arith.constant 0 : index
      %2456 = vector.load %arg10[%c2_897, %c0_898, %c0_899] : memref<5x8x128xf32, #tpu.memory_space<vmem>>, vector<1x8x128xf32>
      %2457 = vector.shape_cast %2456 : vector<1x8x128xf32> to vector<8x128xf32>
      %cst_900 = arith.constant 5.000000e-01 : f32
      %2458 = vector.broadcast %cst_900 : f32 to vector<8x128xf32>
      %2459 = arith.mulf %2458, %2457 : vector<8x128xf32>
      %2460 = math.tanh %2459 : vector<8x128xf32>
      %2461 = arith.addf %2455, %2460 : vector<8x128xf32>
      %c3_901 = arith.constant 3 : index
      %c0_902 = arith.constant 0 : index
      %c0_903 = arith.constant 0 : index
      %2462 = vector.load %arg10[%c3_901, %c0_902, %c0_903] : memref<5x8x128xf32, #tpu.memory_space<vmem>>, vector<1x8x128xf32>
      %2463 = vector.shape_cast %2462 : vector<1x8x128xf32> to vector<8x128xf32>
      %cst_904 = arith.constant 5.000000e-01 : f32
      %2464 = vector.broadcast %cst_904 : f32 to vector<8x128xf32>
      %2465 = arith.mulf %2464, %2463 : vector<8x128xf32>
      %2466 = math.tanh %2465 : vector<8x128xf32>
      %2467 = arith.addf %2461, %2466 : vector<8x128xf32>
      %c4_905 = arith.constant 4 : index
      %c0_906 = arith.constant 0 : index
      %c0_907 = arith.constant 0 : index
      %2468 = vector.load %arg10[%c4_905, %c0_906, %c0_907] : memref<5x8x128xf32, #tpu.memory_space<vmem>>, vector<1x8x128xf32>
      %2469 = vector.shape_cast %2468 : vector<1x8x128xf32> to vector<8x128xf32>
      %cst_908 = arith.constant 5.000000e-01 : f32
      %2470 = vector.broadcast %cst_908 : f32 to vector<8x128xf32>
      %2471 = arith.mulf %2470, %2469 : vector<8x128xf32>
      %2472 = math.tanh %2471 : vector<8x128xf32>
      %2473 = arith.addf %2467, %2472 : vector<8x128xf32>
      %c0_909 = arith.constant 0 : index
      %2474 = memref.load %arg8[%c0_909] : memref<2xf32, #tpu.memory_space<smem>>
      %c1_910 = arith.constant 1 : index
      %2475 = memref.load %arg8[%c1_910] : memref<2xf32, #tpu.memory_space<smem>>
      %cst_911 = arith.constant 5.000000e-01 : f32
      %2476 = vector.broadcast %cst_911 : f32 to vector<8x128xf32>
      %2477 = arith.mulf %2476, %2473 : vector<8x128xf32>
      %cst_912 = arith.constant 2.500000e+00 : f32
      %2478 = vector.broadcast %cst_912 : f32 to vector<8x128xf32>
      %2479 = arith.addf %2477, %2478 : vector<8x128xf32>
      %2480 = vector.broadcast %2475 : f32 to vector<8x128xf32>
      %2481 = arith.subf %2479, %2480 : vector<8x128xf32>
      %2482 = vector.broadcast %2474 : f32 to vector<8x128xf32>
      %2483 = arith.mulf %2482, %2481 : vector<8x128xf32>
      %c0_913 = arith.constant 0 : index
      %c0_914 = arith.constant 0 : index
      %2484 = vector.load %arg9[%c0_913, %c0_914] : memref<8x128xf32, #tpu.memory_space<vmem>>, vector<8x128xf32>
      tpu.vector_store %arg9[%c0_913, %c0_914], %2483 {strides = array<i32>} : memref<8x128xf32, #tpu.memory_space<vmem>>, vector<8x128xf32>,
    } else {
    }
    return
  }
  func.func @transform_0(%arg0: i32, %arg1: i32, %arg2: i32) -> (i32, i32) {
    %c0_i32 = arith.constant 0 : i32
    return %arg1, %arg2 : i32, i32
  }
  func.func @transform_1(%arg0: i32, %arg1: i32, %arg2: i32) -> (i32, i32, i32) {
    %c0_i32 = arith.constant 0 : i32
    %c0_i32_0 = arith.constant 0 : i32
    return %c0_i32, %arg2, %arg0 : i32, i32, i32
  }
  func.func @transform_2(%arg0: i32, %arg1: i32, %arg2: i32) -> (i32, i32, i32) {
    %c0_i32 = arith.constant 0 : i32
    %c0_i32_0 = arith.constant 0 : i32
    return %c0_i32, %arg2, %arg0 : i32, i32, i32
  }
  func.func @transform_3(%arg0: i32, %arg1: i32, %arg2: i32) -> i32 {
    %c0_i32 = arith.constant 0 : i32
    %c0_i32_0 = arith.constant 0 : i32
    return %c0_i32 : i32
  }
  func.func @transform_4(%arg0: i32, %arg1: i32, %arg2: i32) -> i32 {
    %c0_i32 = arith.constant 0 : i32
    %c0_i32_0 = arith.constant 0 : i32
    return %c0_i32 : i32
  }
  func.func @transform_5(%arg0: i32, %arg1: i32, %arg2: i32) -> i32 {
    %c0_i32 = arith.constant 0 : i32
    %c0_i32_0 = arith.constant 0 : i32
    return %c0_i32 : i32
  }
  func.func @transform_6(%arg0: i32, %arg1: i32, %arg2: i32) -> (i32, i32) {
    %c0_i32 = arith.constant 0 : i32
    return %arg1, %arg0 : i32, i32
  }
}

</mosaic_0001>

<llo_original>
// kernel: tpu_custom_call.1
$region0: #{tpu_custom_call.1}
  #allocation0 [shape = 'u32[]', space=smem, size = 0x4, offset = 0x4, fixed_abs, tag = 'smem constant byte address 0x4 - core index']
  #allocation1 [shape = 'u32[144,128]{1,0:T(1,128)}', space=vmem, size = 0x12000, scoped, tag = 'internal scratch']
  #allocation2 [shape = 'f32[5,8,128]{2,1,0:T(8,128)}', space=vmem, size = 0x5000, scoped, tag = 'scratch operand']
  %s0 = inlined_call_operand.hbm [shape: f32[8,16], index: 0, kind: input, shape index: {}]
  %s1 = inlined_call_operand.hbm [shape: f32[5,16,128], index: 1, kind: input, shape index: {}]
  %s2 = inlined_call_operand.hbm [shape: f32[5,16,128], index: 2, kind: input, shape index: {}]
  %s3 = inlined_call_operand.vmem [shape: f32[16], index: 3, kind: input, shape index: {}]
  %s4 = inlined_call_operand.vmem [shape: f32[16], index: 4, kind: input, shape index: {}]
  %s5 = inlined_call_operand.vmem [shape: f32[2], index: 5, kind: input, shape index: {}]
  %s6 = inlined_call_operand.hbm [shape: f32[8,128], index: 6, kind: output, shape index: {}]
  %s7 = sld [smem:[#allocation0]]
  $region66: #{tpu_custom_call.1} parent=0
    _
  %s9 = ssub.s32 1, %s7
  %s10 = scalar_select 0, %s9, %s7
  $region1: #{tpu_custom_call.1} parent=0
    #allocation3 [shape = 'u8[4096]{0}', space=vmem, size = 0x1000, scoped, tag = 'input window, operand 0, single buffered']
    #allocation4 [shape = 's32[1]{0}', space=sflag, size = 0x4, scoped, tag = 'scoped memory for tpu_custom_call.1']
    #allocation5 [shape = 's32[1]{0}', space=sflag, size = 0x4, scoped, tag = 'scoped memory for tpu_custom_call.1']
    #allocation6 [shape = 's32[1]{0}', space=sflag, size = 0x4, scoped, tag = 'scoped memory for tpu_custom_call.1']
    #allocation7 [shape = 'u8[40960]{0}', space=vmem, size = 0xa000, scoped, tag = 'input window, operand 1, single buffered']
    #allocation8 [shape = 's32[1]{0}', space=sflag, size = 0x4, scoped, tag = 'scoped memory for tpu_custom_call.1']
    #allocation9 [shape = 'u8[40960]{0}', space=vmem, size = 0xa000, scoped, tag = 'input window, operand 2, single buffered']
    #allocation10 [shape = 'u8[512]{0}', space=smem, size = 0x200, scoped, tag = 'input window, operand 3, single buffered']
    #allocation11 [shape = 'u8[512]{0}', space=smem, size = 0x200, scoped, tag = 'input window, operand 4, single buffered']
    #allocation12 [shape = 's32[1]{0}', space=sflag, size = 0x4, scoped, tag = 'scoped memory for tpu_custom_call.1']
    #allocation13 [shape = 'u8[512]{0}', space=smem, size = 0x200, scoped, tag = 'input window, operand 5, single buffered']
    #allocation14 [shape = 'u8[4096]{0}', space=vmem, size = 0x1000, scoped, tag = 'output window, operand 0, single buffered']
    %11 = vsyncpa [#allocation4], 0
    %12 = vsyncpa [#allocation8], 0
    %13 = vsyncpa [#allocation6], 0
    %14 = vsyncpa [#allocation12], 0
    %15 = vsyncpa [#allocation5], 0
    // Predicated region
    $region2: #{tpu_custom_call.1} parent=1 // pred_check
      _
    $region3: #{tpu_custom_call.1} parent=1 // pred_check_branch
      %17 = sbr.rel (0) target = $region5
    $region4: #{tpu_custom_call.1} parent=1 // pred_region
      %s19 = ssub.s32 128, 128
      %20 = vsyncadd [#allocation4], %s19
      %s22 = sshll.u32 [#allocation3], 4
      %s23 = int_to_ptr.vmem [resolvable:$true] %s22
      %25 = dma.hbm_to_vmem [thread:$0]  %s0, 128, %s23, [#allocation4]
    $region5: #{tpu_custom_call.1} parent=1 // pred_fallthru
      _
    // Predicated region
    $region6: #{tpu_custom_call.1} parent=1 // pred_check
      _
    $region7: #{tpu_custom_call.1} parent=1 // pred_check_branch
      %27 = sbr.rel (0) target = $region9
    $region8: #{tpu_custom_call.1} parent=1 // pred_region
      %s29 = ssub.s32 1280, 1280
      %30 = vsyncadd [#allocation8], %s29
      %s31 = sshll.u32 [#allocation7], 4
      %s32 = int_to_ptr.vmem [resolvable:$true] %s31
      %37 = dma.hbm_to_vmem [thread:$0]  %s1, 1280, %s32, [#allocation8], 128, 128, 8
    $region9: #{tpu_custom_call.1} parent=1 // pred_fallthru
      _
    // Predicated region
    $region10: #{tpu_custom_call.1} parent=1 // pred_check
      _
    $region11: #{tpu_custom_call.1} parent=1 // pred_check_branch
      %39 = sbr.rel (0) target = $region13
    $region12: #{tpu_custom_call.1} parent=1 // pred_region
      %s41 = ssub.s32 1280, 1280
      %42 = vsyncadd [#allocation8], %s41
      %s43 = sshll.u32 [#allocation9], 4
      %s44 = int_to_ptr.vmem [resolvable:$true] %s43
      %49 = dma.hbm_to_vmem [thread:$0]  %s2, 1280, %s44, [#allocation8], 128, 128, 8
    $region13: #{tpu_custom_call.1} parent=1 // pred_fallthru
      _
    // Predicated region
    $region14: #{tpu_custom_call.1} parent=1 // pred_check
      _
    $region15: #{tpu_custom_call.1} parent=1 // pred_check_branch
      %51 = sbr.rel (0) target = $region17
    $region16: #{tpu_custom_call.1} parent=1 // pred_region
      %s53 = ssub.s32 16, 16
      %54 = vsyncadd [#allocation6], %s53
      %s56 = sshll.u32 %s3, 4
      %s57 = int_to_ptr.vmem [resolvable:$true] %s56
      %59 = dma.vmem_to_smem %s57, 16, [#allocation10], [#allocation6]
    $region17: #{tpu_custom_call.1} parent=1 // pred_fallthru
      _
    // Predicated region
    $region18: #{tpu_custom_call.1} parent=1 // pred_check
      _
    $region19: #{tpu_custom_call.1} parent=1 // pred_check_branch
      %61 = sbr.rel (0) target = $region21
    $region20: #{tpu_custom_call.1} parent=1 // pred_region
      %s63 = ssub.s32 16, 16
      %64 = vsyncadd [#allocation12], %s63
      %s66 = sshll.u32 %s4, 4
      %s67 = int_to_ptr.vmem [resolvable:$true] %s66
      %69 = dma.vmem_to_smem %s67, 16, [#allocation11], [#allocation12]
    $region21: #{tpu_custom_call.1} parent=1 // pred_fallthru
      _
    // Predicated region
    $region22: #{tpu_custom_call.1} parent=1 // pred_check
      _
    $region23: #{tpu_custom_call.1} parent=1 // pred_check_branch
      %71 = sbr.rel (0) target = $region25
    $region24: #{tpu_custom_call.1} parent=1 // pred_region
      %s73 = ssub.s32 16, 16
      %74 = vsyncadd [#allocation12], %s73
      %s76 = sshll.u32 %s5, 4
      %s77 = int_to_ptr.vmem [resolvable:$true] %s76
      %79 = dma.vmem_to_smem %s77, 16, [#allocation13], [#allocation12]
    $region25: #{tpu_custom_call.1} parent=1 // pred_fallthru
      _
    // Predicated region
    $region26: #{tpu_custom_call.1} parent=1 // pred_check
      _
    $region27: #{tpu_custom_call.1} parent=1 // pred_check_branch
      %81 = sbr.rel (0) target = $region29
    $region28: #{tpu_custom_call.1} parent=1 // pred_region
      %82 = dma.done [#allocation4], 128
    $region29: #{tpu_custom_call.1} parent=1 // pred_fallthru
      _
    // Predicated region
    $region30: #{tpu_custom_call.1} parent=1 // pred_check
      _
    $region31: #{tpu_custom_call.1} parent=1 // pred_check_branch
      %84 = sbr.rel (0) target = $region33
    $region32: #{tpu_custom_call.1} parent=1 // pred_region
      %85 = dma.done [#allocation8], 1280
    $region33: #{tpu_custom_call.1} parent=1 // pred_fallthru
      _
    // Predicated region
    $region34: #{tpu_custom_call.1} parent=1 // pred_check
      _
    $region35: #{tpu_custom_call.1} parent=1 // pred_check_branch
      %87 = sbr.rel (0) target = $region37
    $region36: #{tpu_custom_call.1} parent=1 // pred_region
      %88 = dma.done [#allocation8], 1280
    $region37: #{tpu_custom_call.1} parent=1 // pred_fallthru
      _
    // Predicated region
    $region38: #{tpu_custom_call.1} parent=1 // pred_check
      _
    $region39: #{tpu_custom_call.1} parent=1 // pred_check_branch
      %90 = sbr.rel (0) target = $region41
    $region40: #{tpu_custom_call.1} parent=1 // pred_region
      %91 = dma.done [#allocation6], 16
    $region41: #{tpu_custom_call.1} parent=1 // pred_fallthru
      _
    // Predicated region
    $region42: #{tpu_custom_call.1} parent=1 // pred_check
      _
    $region43: #{tpu_custom_call.1} parent=1 // pred_check_branch
      %93 = sbr.rel (0) target = $region45
    $region44: #{tpu_custom_call.1} parent=1 // pred_region
      %94 = dma.done [#allocation12], 16
    $region45: #{tpu_custom_call.1} parent=1 // pred_fallthru
      _
    // Predicated region
    $region46: #{tpu_custom_call.1} parent=1 // pred_check
      _
    $region47: #{tpu_custom_call.1} parent=1 // pred_check_branch
      %96 = sbr.rel (0) target = $region49
    $region48: #{tpu_custom_call.1} parent=1 // pred_region
      %97 = dma.done [#allocation12], 16
    $region49: #{tpu_custom_call.1} parent=1 // pred_fallthru
      _
    %98 = sfence
    %p99 = scmp.eq.s32.totalorder 0, 0
    // Predicated region
    $region50: #{tpu_custom_call.1} parent=1 // pred_check
      %p100 = pneg %p99
    $region51: #{tpu_custom_call.1} parent=1 // pred_check_branch
      %102 = sbr.rel (%p100) target = $region53
    $region52: #{tpu_custom_call.1} parent=1 // pred_region
      %103 = vst [vmem:[#allocation2] sm:$0xff] 0.0
      %104 = vst [vmem:[#allocation2 + $0x8] sm:$0xff] 0.0
      %105 = vst [vmem:[#allocation2 + $0x10] sm:$0xff] 0.0
      %106 = vst [vmem:[#allocation2 + $0x18] sm:$0xff] 0.0
      %107 = vst [vmem:[#allocation2 + $0x20] sm:$0xff] 0.0
    $region53: #{tpu_custom_call.1} parent=1 // pred_fallthru
      _
    %v108 = vld [vmem:[#allocation3] sm:$0xff]
    %s109 = smul.u32 0, 16
    %v110 = vld [vmem:[#allocation7] sm:$0x1]
    %v111 = vld [vmem:[#allocation9] sm:$0x1]
    %s112 = sld [smem:[#allocation10 + %s109]]
    %s113 = sld [smem:[#allocation11 + %s109]]
    %115 = vset.pattern.permute.xlu0 0
    %116 = vperm.xlu0 %115, %v108
    %v117 = vpop.permute.xlu0 %116
    %v119 = vlaneseq
    %v120 = vshrl.u32 %v119, 7
    %v121 = vsub.s32 0, %v120
    %v122 = vrot.slane %v110, %v121
    %v123 = vmul.f32 %v117, %v122
    %v124 = vlaneseq
    %v125 = vshrl.u32 %v124, 7
    %v126 = vsub.s32 0, %v125
    %v127 = vrot.slane %v111, %v126
    %v128 = vsub.f32 %v123, %v127
    %v129 = vmul.f32 %v128, 0.5
    %v130 = vtanh.pop %v129
    %v131 = vmul.f32 %v130, 0.5
    %v132 = vadd.f32 %v131, 0.5
    %v133 = vstv %s112
    %v134 = vmul.f32 %v133, %v132
    %v135 = vstv %s113
    %v136 = vadd.f32 %v134, %v135
    %v137 = vtanh.pop %v136
    %v138 = vmul.f32 %v132, %v137
    %v139 = vadd.f32 %v138, 0.0
    %v140 = vld [vmem:[#allocation7 + $0x1] sm:$0x1]
    %v141 = vld [vmem:[#allocation9 + $0x1] sm:$0x1]
    %s142 = sadd.s32 %s109, 1
    %s143 = sld [smem:[#allocation10 + %s142]]
    %s144 = sld [smem:[#allocation11 + %s142]]
    %145 = vset.pattern.permute.xlu0 1
    %146 = vperm.xlu0 %145, %v108
    %v147 = vpop.permute.xlu0 %146
    %v149 = vlaneseq
    %v150 = vshrl.u32 %v149, 7
    %v151 = vsub.s32 0, %v150
    %v152 = vrot.slane %v140, %v151
    %v153 = vmul.f32 %v147, %v152
    %v154 = vlaneseq
    %v155 = vshrl.u32 %v154, 7
    %v156 = vsub.s32 0, %v155
    %v157 = vrot.slane %v141, %v156
    %v158 = vsub.f32 %v153, %v157
    %v159 = vmul.f32 %v158, 0.5
    %v160 = vtanh.pop %v159
    %v161 = vmul.f32 %v160, 0.5
    %v162 = vadd.f32 %v161, 0.5
    %v163 = vstv %s143
    %v164 = vmul.f32 %v163, %v162
    %v165 = vstv %s144
    %v166 = vadd.f32 %v164, %v165
    %v167 = vtanh.pop %v166
    %v168 = vmul.f32 %v162, %v167
    %v169 = vadd.f32 %v139, %v168
    %v170 = vld [vmem:[#allocation7 + $0x2] sm:$0x1]
    %v171 = vld [vmem:[#allocation9 + $0x2] sm:$0x1]
    %s172 = sadd.s32 %s109, 2
    %s173 = sld [smem:[#allocation10 + %s172]]
    %s174 = sld [smem:[#allocation11 + %s172]]
    %175 = vset.pattern.permute.xlu0 2
    %176 = vperm.xlu0 %175, %v108
    %v177 = vpop.permute.xlu0 %176
    %v179 = vlaneseq
    %v180 = vshrl.u32 %v179, 7
    %v181 = vsub.s32 0, %v180
    %v182 = vrot.slane %v170, %v181
    %v183 = vmul.f32 %v177, %v182
    %v184 = vlaneseq
    %v185 = vshrl.u32 %v184, 7
    %v186 = vsub.s32 0, %v185
    %v187 = vrot.slane %v171, %v186
    %v188 = vsub.f32 %v183, %v187
    %v189 = vmul.f32 %v188, 0.5
    %v190 = vtanh.pop %v189
    %v191 = vmul.f32 %v190, 0.5
    %v192 = vadd.f32 %v191, 0.5
    %v193 = vstv %s173
    %v194 = vmul.f32 %v193, %v192
    %v195 = vstv %s174
    %v196 = vadd.f32 %v194, %v195
    %v197 = vtanh.pop %v196
    %v198 = vmul.f32 %v192, %v197
    %v199 = vadd.f32 %v169, %v198
    %v200 = vld [vmem:[#allocation7 + $0x3] sm:$0x1]
    %v201 = vld [vmem:[#allocation9 + $0x3] sm:$0x1]
    %s202 = sadd.s32 %s109, 3
    %s203 = sld [smem:[#allocation10 + %s202]]
    %s204 = sld [smem:[#allocation11 + %s202]]
    %205 = vset.pattern.permute.xlu0 3
    %206 = vperm.xlu0 %205, %v108
    %v207 = vpop.permute.xlu0 %206
    %v209 = vlaneseq
    %v210 = vshrl.u32 %v209, 7
    %v211 = vsub.s32 0, %v210
    %v212 = vrot.slane %v200, %v211
    %v213 = vmul.f32 %v207, %v212
    %v214 = vlaneseq
    %v215 = vshrl.u32 %v214, 7
    %v216 = vsub.s32 0, %v215
    %v217 = vrot.slane %v201, %v216
    %v218 = vsub.f32 %v213, %v217
    %v219 = vmul.f32 %v218, 0.5
    %v220 = vtanh.pop %v219
    %v221 = vmul.f32 %v220, 0.5
    %v222 = vadd.f32 %v221, 0.5
    %v223 = vstv %s203
    %v224 = vmul.f32 %v223, %v222
    %v225 = vstv %s204
    %v226 = vadd.f32 %v224, %v225
    %v227 = vtanh.pop %v226
    %v228 = vmul.f32 %v222, %v227
    %v229 = vadd.f32 %v199, %v228
    %v230 = vld [vmem:[#allocation7 + $0x4] sm:$0x1]
    %v231 = vld [vmem:[#allocation9 + $0x4] sm:$0x1]
    %s232 = sadd.s32 %s109, 4
    %s233 = sld [smem:[#allocation10 + %s232]]
    %s234 = sld [smem:[#allocation11 + %s232]]
    %235 = vset.pattern.permute.xlu0 4
    %236 = vperm.xlu0 %235, %v108
    %v237 = vpop.permute.xlu0 %236
    %v239 = vlaneseq
    %v240 = vshrl.u32 %v239, 7
    %v241 = vsub.s32 0, %v240
    %v242 = vrot.slane %v230, %v241
    %v243 = vmul.f32 %v237, %v242
    %v244 = vlaneseq
    %v245 = vshrl.u32 %v244, 7
    %v246 = vsub.s32 0, %v245
    %v247 = vrot.slane %v231, %v246
    %v248 = vsub.f32 %v243, %v247
    %v249 = vmul.f32 %v248, 0.5
    %v250 = vtanh.pop %v249
    %v251 = vmul.f32 %v250, 0.5
    %v252 = vadd.f32 %v251, 0.5
    %v253 = vstv %s233
    %v254 = vmul.f32 %v253, %v252
    %v255 = vstv %s234
    %v256 = vadd.f32 %v254, %v255
    %v257 = vtanh.pop %v256
    %v258 = vmul.f32 %v252, %v257
    %v259 = vadd.f32 %v229, %v258
    %v260 = vld [vmem:[#allocation7 + $0x5] sm:$0x1]
    %v261 = vld [vmem:[#allocation9 + $0x5] sm:$0x1]
    %s262 = sadd.s32 %s109, 5
    %s263 = sld [smem:[#allocation10 + %s262]]
    %s264 = sld [smem:[#allocation11 + %s262]]
    %265 = vset.pattern.permute.xlu0 5
    %266 = vperm.xlu0 %265, %v108
    %v267 = vpop.permute.xlu0 %266
    %v269 = vlaneseq
    %v270 = vshrl.u32 %v269, 7
    %v271 = vsub.s32 0, %v270
    %v272 = vrot.slane %v260, %v271
    %v273 = vmul.f32 %v267, %v272
    %v274 = vlaneseq
    %v275 = vshrl.u32 %v274, 7
    %v276 = vsub.s32 0, %v275
    %v277 = vrot.slane %v261, %v276
    %v278 = vsub.f32 %v273, %v277
    %v279 = vmul.f32 %v278, 0.5
    %v280 = vtanh.pop %v279
    %v281 = vmul.f32 %v280, 0.5
    %v282 = vadd.f32 %v281, 0.5
    %v283 = vstv %s263
    %v284 = vmul.f32 %v283, %v282
    %v285 = vstv %s264
    %v286 = vadd.f32 %v284, %v285
    %v287 = vtanh.pop %v286
    %v288 = vmul.f32 %v282, %v287
    %v289 = vadd.f32 %v259, %v288
    %v290 = vld [vmem:[#allocation7 + $0x6] sm:$0x1]
    %v291 = vld [vmem:[#allocation9 + $0x6] sm:$0x1]
    %s292 = sadd.s32 %s109, 6
    %s293 = sld [smem:[#allocation10 + %s292]]
    %s294 = sld [smem:[#allocation11 + %s292]]
    %295 = vset.pattern.permute.xlu0 6
    %296 = vperm.xlu0 %295, %v108
    %v297 = vpop.permute.xlu0 %296
    %v299 = vlaneseq
    %v300 = vshrl.u32 %v299, 7
    %v301 = vsub.s32 0, %v300
    %v302 = vrot.slane %v290, %v301
    %v303 = vmul.f32 %v297, %v302
    %v304 = vlaneseq
    %v305 = vshrl.u32 %v304, 7
    %v306 = vsub.s32 0, %v305
    %v307 = vrot.slane %v291, %v306
    %v308 = vsub.f32 %v303, %v307
    %v309 = vmul.f32 %v308, 0.5
    %v310 = vtanh.pop %v309
    %v311 = vmul.f32 %v310, 0.5
    %v312 = vadd.f32 %v311, 0.5
    %v313 = vstv %s293
    %v314 = vmul.f32 %v313, %v312
    %v315 = vstv %s294
    %v316 = vadd.f32 %v314, %v315
    %v317 = vtanh.pop %v316
    %v318 = vmul.f32 %v312, %v317
    %v319 = vadd.f32 %v289, %v318
    %v320 = vld [vmem:[#allocation7 + $0x7] sm:$0x1]
    %v321 = vld [vmem:[#allocation9 + $0x7] sm:$0x1]
    %s322 = sadd.s32 %s109, 7
    %s323 = sld [smem:[#allocation10 + %s322]]
    %s324 = sld [smem:[#allocation11 + %s322]]
    %325 = vset.pattern.permute.xlu0 7
    %326 = vperm.xlu0 %325, %v108
    %v327 = vpop.permute.xlu0 %326
    %v329 = vlaneseq
    %v330 = vshrl.u32 %v329, 7
    %v331 = vsub.s32 0, %v330
    %v332 = vrot.slane %v320, %v331
    %v333 = vmul.f32 %v327, %v332
    %v334 = vlaneseq
    %v335 = vshrl.u32 %v334, 7
    %v336 = vsub.s32 0, %v335
    %v337 = vrot.slane %v321, %v336
    %v338 = vsub.f32 %v333, %v337
    %v339 = vmul.f32 %v338, 0.5
    %v340 = vtanh.pop %v339
    %v341 = vmul.f32 %v340, 0.5
    %v342 = vadd.f32 %v341, 0.5
    %v343 = vstv %s323
    %v344 = vmul.f32 %v343, %v342
    %v345 = vstv %s324
    %v346 = vadd.f32 %v344, %v345
    %v347 = vtanh.pop %v346
    %v348 = vmul.f32 %v342, %v347
    %v349 = vadd.f32 %v319, %v348
    %v350 = vld [vmem:[#allocation7 + $0x8] sm:$0x1]
    %v351 = vld [vmem:[#allocation9 + $0x8] sm:$0x1]
    %s352 = sadd.s32 %s109, 8
    %s353 = sld [smem:[#allocation10 + %s352]]
    %s354 = sld [smem:[#allocation11 + %s352]]
    %355 = vset.pattern.permute.xlu0 8
    %356 = vperm.xlu0 %355, %v108
    %v357 = vpop.permute.xlu0 %356
    %v359 = vlaneseq
    %v360 = vshrl.u32 %v359, 7
    %v361 = vsub.s32 0, %v360
    %v362 = vrot.slane %v350, %v361
    %v363 = vmul.f32 %v357, %v362
    %v364 = vlaneseq
    %v365 = vshrl.u32 %v364, 7
    %v366 = vsub.s32 0, %v365
    %v367 = vrot.slane %v351, %v366
    %v368 = vsub.f32 %v363, %v367
    %v369 = vmul.f32 %v368, 0.5
    %v370 = vtanh.pop %v369
    %v371 = vmul.f32 %v370, 0.5
    %v372 = vadd.f32 %v371, 0.5
    %v373 = vstv %s353
    %v374 = vmul.f32 %v373, %v372
    %v375 = vstv %s354
    %v376 = vadd.f32 %v374, %v375
    %v377 = vtanh.pop %v376
    %v378 = vmul.f32 %v372, %v377
    %v379 = vadd.f32 %v349, %v378
    %v380 = vld [vmem:[#allocation7 + $0x9] sm:$0x1]
    %v381 = vld [vmem:[#allocation9 + $0x9] sm:$0x1]
    %s382 = sadd.s32 %s109, 9
    %s383 = sld [smem:[#allocation10 + %s382]]
    %s384 = sld [smem:[#allocation11 + %s382]]
    %385 = vset.pattern.permute.xlu0 9
    %386 = vperm.xlu0 %385, %v108
    %v387 = vpop.permute.xlu0 %386
    %v389 = vlaneseq
    %v390 = vshrl.u32 %v389, 7
    %v391 = vsub.s32 0, %v390
    %v392 = vrot.slane %v380, %v391
    %v393 = vmul.f32 %v387, %v392
    %v394 = vlaneseq
    %v395 = vshrl.u32 %v394, 7
    %v396 = vsub.s32 0, %v395
    %v397 = vrot.slane %v381, %v396
    %v398 = vsub.f32 %v393, %v397
    %v399 = vmul.f32 %v398, 0.5
    %v400 = vtanh.pop %v399
    %v401 = vmul.f32 %v400, 0.5
    %v402 = vadd.f32 %v401, 0.5
    %v403 = vstv %s383
    %v404 = vmul.f32 %v403, %v402
    %v405 = vstv %s384
    %v406 = vadd.f32 %v404, %v405
    %v407 = vtanh.pop %v406
    %v408 = vmul.f32 %v402, %v407
    %v409 = vadd.f32 %v379, %v408
    %v410 = vld [vmem:[#allocation7 + $0xa] sm:$0x1]
    %v411 = vld [vmem:[#allocation9 + $0xa] sm:$0x1]
    %s412 = sadd.s32 %s109, 10
    %s413 = sld [smem:[#allocation10 + %s412]]
    %s414 = sld [smem:[#allocation11 + %s412]]
    %415 = vset.pattern.permute.xlu0 10
    %416 = vperm.xlu0 %415, %v108
    %v417 = vpop.permute.xlu0 %416
    %v419 = vlaneseq
    %v420 = vshrl.u32 %v419, 7
    %v421 = vsub.s32 0, %v420
    %v422 = vrot.slane %v410, %v421
    %v423 = vmul.f32 %v417, %v422
    %v424 = vlaneseq
    %v425 = vshrl.u32 %v424, 7
    %v426 = vsub.s32 0, %v425
    %v427 = vrot.slane %v411, %v426
    %v428 = vsub.f32 %v423, %v427
    %v429 = vmul.f32 %v428, 0.5
    %v430 = vtanh.pop %v429
    %v431 = vmul.f32 %v430, 0.5
    %v432 = vadd.f32 %v431, 0.5
    %v433 = vstv %s413
    %v434 = vmul.f32 %v433, %v432
    %v435 = vstv %s414
    %v436 = vadd.f32 %v434, %v435
    %v437 = vtanh.pop %v436
    %v438 = vmul.f32 %v432, %v437
    %v439 = vadd.f32 %v409, %v438
    %v440 = vld [vmem:[#allocation7 + $0xb] sm:$0x1]
    %v441 = vld [vmem:[#allocation9 + $0xb] sm:$0x1]
    %s442 = sadd.s32 %s109, 11
    %s443 = sld [smem:[#allocation10 + %s442]]
    %s444 = sld [smem:[#allocation11 + %s442]]
    %445 = vset.pattern.permute.xlu0 11
    %446 = vperm.xlu0 %445, %v108
    %v447 = vpop.permute.xlu0 %446
    %v449 = vlaneseq
    %v450 = vshrl.u32 %v449, 7
    %v451 = vsub.s32 0, %v450
    %v452 = vrot.slane %v440, %v451
    %v453 = vmul.f32 %v447, %v452
    %v454 = vlaneseq
    %v455 = vshrl.u32 %v454, 7
    %v456 = vsub.s32 0, %v455
    %v457 = vrot.slane %v441, %v456
    %v458 = vsub.f32 %v453, %v457
    %v459 = vmul.f32 %v458, 0.5
    %v460 = vtanh.pop %v459
    %v461 = vmul.f32 %v460, 0.5
    %v462 = vadd.f32 %v461, 0.5
    %v463 = vstv %s443
    %v464 = vmul.f32 %v463, %v462
    %v465 = vstv %s444
    %v466 = vadd.f32 %v464, %v465
    %v467 = vtanh.pop %v466
    %v468 = vmul.f32 %v462, %v467
    %v469 = vadd.f32 %v439, %v468
    %v470 = vld [vmem:[#allocation7 + $0xc] sm:$0x1]
    %v471 = vld [vmem:[#allocation9 + $0xc] sm:$0x1]
    %s472 = sadd.s32 %s109, 12
    %s473 = sld [smem:[#allocation10 + %s472]]
    %s474 = sld [smem:[#allocation11 + %s472]]
    %475 = vset.pattern.permute.xlu0 12
    %476 = vperm.xlu0 %475, %v108
    %v477 = vpop.permute.xlu0 %476
    %v479 = vlaneseq
    %v480 = vshrl.u32 %v479, 7
    %v481 = vsub.s32 0, %v480
    %v482 = vrot.slane %v470, %v481
    %v483 = vmul.f32 %v477, %v482
    %v484 = vlaneseq
    %v485 = vshrl.u32 %v484, 7
    %v486 = vsub.s32 0, %v485
    %v487 = vrot.slane %v471, %v486
    %v488 = vsub.f32 %v483, %v487
    %v489 = vmul.f32 %v488, 0.5
    %v490 = vtanh.pop %v489
    %v491 = vmul.f32 %v490, 0.5
    %v492 = vadd.f32 %v491, 0.5
    %v493 = vstv %s473
    %v494 = vmul.f32 %v493, %v492
    %v495 = vstv %s474
    %v496 = vadd.f32 %v494, %v495
    %v497 = vtanh.pop %v496
    %v498 = vmul.f32 %v492, %v497
    %v499 = vadd.f32 %v469, %v498
    %v500 = vld [vmem:[#allocation7 + $0xd] sm:$0x1]
    %v501 = vld [vmem:[#allocation9 + $0xd] sm:$0x1]
    %s502 = sadd.s32 %s109, 13
    %s503 = sld [smem:[#allocation10 + %s502]]
    %s504 = sld [smem:[#allocation11 + %s502]]
    %505 = vset.pattern.permute.xlu0 13
    %506 = vperm.xlu0 %505, %v108
    %v507 = vpop.permute.xlu0 %506
    %v509 = vlaneseq
    %v510 = vshrl.u32 %v509, 7
    %v511 = vsub.s32 0, %v510
    %v512 = vrot.slane %v500, %v511
    %v513 = vmul.f32 %v507, %v512
    %v514 = vlaneseq
    %v515 = vshrl.u32 %v514, 7
    %v516 = vsub.s32 0, %v515
    %v517 = vrot.slane %v501, %v516
    %v518 = vsub.f32 %v513, %v517
    %v519 = vmul.f32 %v518, 0.5
    %v520 = vtanh.pop %v519
    %v521 = vmul.f32 %v520, 0.5
    %v522 = vadd.f32 %v521, 0.5
    %v523 = vstv %s503
    %v524 = vmul.f32 %v523, %v522
    %v525 = vstv %s504
    %v526 = vadd.f32 %v524, %v525
    %v527 = vtanh.pop %v526
    %v528 = vmul.f32 %v522, %v527
    %v529 = vadd.f32 %v499, %v528
    %v530 = vld [vmem:[#allocation7 + $0xe] sm:$0x1]
    %v531 = vld [vmem:[#allocation9 + $0xe] sm:$0x1]
    %s532 = sadd.s32 %s109, 14
    %s533 = sld [smem:[#allocation10 + %s532]]
    %s534 = sld [smem:[#allocation11 + %s532]]
    %535 = vset.pattern.permute.xlu0 14
    %536 = vperm.xlu0 %535, %v108
    %v537 = vpop.permute.xlu0 %536
    %v539 = vlaneseq
    %v540 = vshrl.u32 %v539, 7
    %v541 = vsub.s32 0, %v540
    %v542 = vrot.slane %v530, %v541
    %v543 = vmul.f32 %v537, %v542
    %v544 = vlaneseq
    %v545 = vshrl.u32 %v544, 7
    %v546 = vsub.s32 0, %v545
    %v547 = vrot.slane %v531, %v546
    %v548 = vsub.f32 %v543, %v547
    %v549 = vmul.f32 %v548, 0.5
    %v550 = vtanh.pop %v549
    %v551 = vmul.f32 %v550, 0.5
    %v552 = vadd.f32 %v551, 0.5
    %v553 = vstv %s533
    %v554 = vmul.f32 %v553, %v552
    %v555 = vstv %s534
    %v556 = vadd.f32 %v554, %v555
    %v557 = vtanh.pop %v556
    %v558 = vmul.f32 %v552, %v557
    %v559 = vadd.f32 %v529, %v558
    %v560 = vld [vmem:[#allocation7 + $0xf] sm:$0x1]
    %v561 = vld [vmem:[#allocation9 + $0xf] sm:$0x1]
    %s562 = sadd.s32 %s109, 15
    %s563 = sld [smem:[#allocation10 + %s562]]
    %s564 = sld [smem:[#allocation11 + %s562]]
    %565 = vset.pattern.permute.xlu0 15
    %566 = vperm.xlu0 %565, %v108
    %v567 = vpop.permute.xlu0 %566
    %v569 = vlaneseq
    %v570 = vshrl.u32 %v569, 7
    %v571 = vsub.s32 0, %v570
    %v572 = vrot.slane %v560, %v571
    %v573 = vmul.f32 %v567, %v572
    %v574 = vlaneseq
    %v575 = vshrl.u32 %v574, 7
    %v576 = vsub.s32 0, %v575
    %v577 = vrot.slane %v561, %v576
    %v578 = vsub.f32 %v573, %v577
    %v579 = vmul.f32 %v578, 0.5
    %v580 = vtanh.pop %v579
    %v581 = vmul.f32 %v580, 0.5
    %v582 = vadd.f32 %v581, 0.5
    %v583 = vstv %s563
    %v584 = vmul.f32 %v583, %v582
    %v585 = vstv %s564
    %v586 = vadd.f32 %v584, %v585
    %v587 = vtanh.pop %v586
    %v588 = vmul.f32 %v582, %v587
    %v589 = vadd.f32 %v559, %v588
    %v590 = vld [vmem:[#allocation2] sm:$0xff]
    %v591 = vadd.f32 %v590, %v589
    %592 = vst [vmem:[#allocation2] sm:$0xff] %v591
    %s593 = scalar_lea.vmem [#allocation7], 16
    %v594 = vld [vmem:[%s593] sm:$0x1]
    %s595 = scalar_lea.vmem [#allocation9], 16
    %v596 = vld [vmem:[%s595] sm:$0x1]
    %s597 = sld [smem:[#allocation10 + %s109]]
    %s598 = sld [smem:[#allocation11 + %s109]]
    %v599 = vlaneseq
    %v600 = vshrl.u32 %v599, 7
    %v601 = vsub.s32 0, %v600
    %v602 = vrot.slane %v594, %v601
    %v603 = vmul.f32 %v117, %v602
    %v604 = vlaneseq
    %v605 = vshrl.u32 %v604, 7
    %v606 = vsub.s32 0, %v605
    %v607 = vrot.slane %v596, %v606
    %v608 = vsub.f32 %v603, %v607
    %v609 = vmul.f32 %v608, 0.5
    %v610 = vtanh.pop %v609
    %v611 = vmul.f32 %v610, 0.5
    %v612 = vadd.f32 %v611, 0.5
    %v613 = vstv %s597
    %v614 = vmul.f32 %v613, %v612
    %v615 = vstv %s598
    %v616 = vadd.f32 %v614, %v615
    %v617 = vtanh.pop %v616
    %v618 = vmul.f32 %v612, %v617
    %v619 = vadd.f32 %v618, 0.0
    %v620 = vld [vmem:[%s593 + $0x1] sm:$0x1]
    %v621 = vld [vmem:[%s595 + $0x1] sm:$0x1]
    %s622 = sld [smem:[#allocation10 + %s142]]
    %s623 = sld [smem:[#allocation11 + %s142]]
    %v624 = vlaneseq
    %v625 = vshrl.u32 %v624, 7
    %v626 = vsub.s32 0, %v625
    %v627 = vrot.slane %v620, %v626
    %v628 = vmul.f32 %v147, %v627
    %v629 = vlaneseq
    %v630 = vshrl.u32 %v629, 7
    %v631 = vsub.s32 0, %v630
    %v632 = vrot.slane %v621, %v631
    %v633 = vsub.f32 %v628, %v632
    %v634 = vmul.f32 %v633, 0.5
    %v635 = vtanh.pop %v634
    %v636 = vmul.f32 %v635, 0.5
    %v637 = vadd.f32 %v636, 0.5
    %v638 = vstv %s622
    %v639 = vmul.f32 %v638, %v637
    %v640 = vstv %s623
    %v641 = vadd.f32 %v639, %v640
    %v642 = vtanh.pop %v641
    %v643 = vmul.f32 %v637, %v642
    %v644 = vadd.f32 %v619, %v643
    %v645 = vld [vmem:[%s593 + $0x2] sm:$0x1]
    %v646 = vld [vmem:[%s595 + $0x2] sm:$0x1]
    %s647 = sld [smem:[#allocation10 + %s172]]
    %s648 = sld [smem:[#allocation11 + %s172]]
    %v649 = vlaneseq
    %v650 = vshrl.u32 %v649, 7
    %v651 = vsub.s32 0, %v650
    %v652 = vrot.slane %v645, %v651
    %v653 = vmul.f32 %v177, %v652
    %v654 = vlaneseq
    %v655 = vshrl.u32 %v654, 7
    %v656 = vsub.s32 0, %v655
    %v657 = vrot.slane %v646, %v656
    %v658 = vsub.f32 %v653, %v657
    %v659 = vmul.f32 %v658, 0.5
    %v660 = vtanh.pop %v659
    %v661 = vmul.f32 %v660, 0.5
    %v662 = vadd.f32 %v661, 0.5
    %v663 = vstv %s647
    %v664 = vmul.f32 %v663, %v662
    %v665 = vstv %s648
    %v666 = vadd.f32 %v664, %v665
    %v667 = vtanh.pop %v666
    %v668 = vmul.f32 %v662, %v667
    %v669 = vadd.f32 %v644, %v668
    %v670 = vld [vmem:[%s593 + $0x3] sm:$0x1]
    %v671 = vld [vmem:[%s595 + $0x3] sm:$0x1]
    %s672 = sld [smem:[#allocation10 + %s202]]
    %s673 = sld [smem:[#allocation11 + %s202]]
    %v674 = vlaneseq
    %v675 = vshrl.u32 %v674, 7
    %v676 = vsub.s32 0, %v675
    %v677 = vrot.slane %v670, %v676
    %v678 = vmul.f32 %v207, %v677
    %v679 = vlaneseq
    %v680 = vshrl.u32 %v679, 7
    %v681 = vsub.s32 0, %v680
    %v682 = vrot.slane %v671, %v681
    %v683 = vsub.f32 %v678, %v682
    %v684 = vmul.f32 %v683, 0.5
    %v685 = vtanh.pop %v684
    %v686 = vmul.f32 %v685, 0.5
    %v687 = vadd.f32 %v686, 0.5
    %v688 = vstv %s672
    %v689 = vmul.f32 %v688, %v687
    %v690 = vstv %s673
    %v691 = vadd.f32 %v689, %v690
    %v692 = vtanh.pop %v691
    %v693 = vmul.f32 %v687, %v692
    %v694 = vadd.f32 %v669, %v693
    %v695 = vld [vmem:[%s593 + $0x4] sm:$0x1]
    %v696 = vld [vmem:[%s595 + $0x4] sm:$0x1]
    %s697 = sld [smem:[#allocation10 + %s232]]
    %s698 = sld [smem:[#allocation11 + %s232]]
    %v699 = vlaneseq
    %v700 = vshrl.u32 %v699, 7
    %v701 = vsub.s32 0, %v700
    %v702 = vrot.slane %v695, %v701
    %v703 = vmul.f32 %v237, %v702
    %v704 = vlaneseq
    %v705 = vshrl.u32 %v704, 7
    %v706 = vsub.s32 0, %v705
    %v707 = vrot.slane %v696, %v706
    %v708 = vsub.f32 %v703, %v707
    %v709 = vmul.f32 %v708, 0.5
    %v710 = vtanh.pop %v709
    %v711 = vmul.f32 %v710, 0.5
    %v712 = vadd.f32 %v711, 0.5
    %v713 = vstv %s697
    %v714 = vmul.f32 %v713, %v712
    %v715 = vstv %s698
    %v716 = vadd.f32 %v714, %v715
    %v717 = vtanh.pop %v716
    %v718 = vmul.f32 %v712, %v717
    %v719 = vadd.f32 %v694, %v718
    %v720 = vld [vmem:[%s593 + $0x5] sm:$0x1]
    %v721 = vld [vmem:[%s595 + $0x5] sm:$0x1]
    %s722 = sld [smem:[#allocation10 + %s262]]
    %s723 = sld [smem:[#allocation11 + %s262]]
    %v724 = vlaneseq
    %v725 = vshrl.u32 %v724, 7
    %v726 = vsub.s32 0, %v725
    %v727 = vrot.slane %v720, %v726
    %v728 = vmul.f32 %v267, %v727
    %v729 = vlaneseq
    %v730 = vshrl.u32 %v729, 7
    %v731 = vsub.s32 0, %v730
    %v732 = vrot.slane %v721, %v731
    %v733 = vsub.f32 %v728, %v732
    %v734 = vmul.f32 %v733, 0.5
    %v735 = vtanh.pop %v734
    %v736 = vmul.f32 %v735, 0.5
    %v737 = vadd.f32 %v736, 0.5
    %v738 = vstv %s722
    %v739 = vmul.f32 %v738, %v737
    %v740 = vstv %s723
    %v741 = vadd.f32 %v739, %v740
    %v742 = vtanh.pop %v741
    %v743 = vmul.f32 %v737, %v742
    %v744 = vadd.f32 %v719, %v743
    %v745 = vld [vmem:[%s593 + $0x6] sm:$0x1]
    %v746 = vld [vmem:[%s595 + $0x6] sm:$0x1]
    %s747 = sld [smem:[#allocation10 + %s292]]
    %s748 = sld [smem:[#allocation11 + %s292]]
    %v749 = vlaneseq
    %v750 = vshrl.u32 %v749, 7
    %v751 = vsub.s32 0, %v750
    %v752 = vrot.slane %v745, %v751
    %v753 = vmul.f32 %v297, %v752
    %v754 = vlaneseq
    %v755 = vshrl.u32 %v754, 7
    %v756 = vsub.s32 0, %v755
    %v757 = vrot.slane %v746, %v756
    %v758 = vsub.f32 %v753, %v757
    %v759 = vmul.f32 %v758, 0.5
    %v760 = vtanh.pop %v759
    %v761 = vmul.f32 %v760, 0.5
    %v762 = vadd.f32 %v761, 0.5
    %v763 = vstv %s747
    %v764 = vmul.f32 %v763, %v762
    %v765 = vstv %s748
    %v766 = vadd.f32 %v764, %v765
    %v767 = vtanh.pop %v766
    %v768 = vmul.f32 %v762, %v767
    %v769 = vadd.f32 %v744, %v768
    %v770 = vld [vmem:[%s593 + $0x7] sm:$0x1]
    %v771 = vld [vmem:[%s595 + $0x7] sm:$0x1]
    %s772 = sld [smem:[#allocation10 + %s322]]
    %s773 = sld [smem:[#allocation11 + %s322]]
    %v774 = vlaneseq
    %v775 = vshrl.u32 %v774, 7
    %v776 = vsub.s32 0, %v775
    %v777 = vrot.slane %v770, %v776
    %v778 = vmul.f32 %v327, %v777
    %v779 = vlaneseq
    %v780 = vshrl.u32 %v779, 7
    %v781 = vsub.s32 0, %v780
    %v782 = vrot.slane %v771, %v781
    %v783 = vsub.f32 %v778, %v782
    %v784 = vmul.f32 %v783, 0.5
    %v785 = vtanh.pop %v784
    %v786 = vmul.f32 %v785, 0.5
    %v787 = vadd.f32 %v786, 0.5
    %v788 = vstv %s772
    %v789 = vmul.f32 %v788, %v787
    %v790 = vstv %s773
    %v791 = vadd.f32 %v789, %v790
    %v792 = vtanh.pop %v791
    %v793 = vmul.f32 %v787, %v792
    %v794 = vadd.f32 %v769, %v793
    %v795 = vld [vmem:[%s593 + $0x8] sm:$0x1]
    %v796 = vld [vmem:[%s595 + $0x8] sm:$0x1]
    %s797 = sld [smem:[#allocation10 + %s352]]
    %s798 = sld [smem:[#allocation11 + %s352]]
    %v799 = vlaneseq
    %v800 = vshrl.u32 %v799, 7
    %v801 = vsub.s32 0, %v800
    %v802 = vrot.slane %v795, %v801
    %v803 = vmul.f32 %v357, %v802
    %v804 = vlaneseq
    %v805 = vshrl.u32 %v804, 7
    %v806 = vsub.s32 0, %v805
    %v807 = vrot.slane %v796, %v806
    %v808 = vsub.f32 %v803, %v807
    %v809 = vmul.f32 %v808, 0.5
    %v810 = vtanh.pop %v809
    %v811 = vmul.f32 %v810, 0.5
    %v812 = vadd.f32 %v811, 0.5
    %v813 = vstv %s797
    %v814 = vmul.f32 %v813, %v812
    %v815 = vstv %s798
    %v816 = vadd.f32 %v814, %v815
    %v817 = vtanh.pop %v816
    %v818 = vmul.f32 %v812, %v817
    %v819 = vadd.f32 %v794, %v818
    %v820 = vld [vmem:[%s593 + $0x9] sm:$0x1]
    %v821 = vld [vmem:[%s595 + $0x9] sm:$0x1]
    %s822 = sld [smem:[#allocation10 + %s382]]
    %s823 = sld [smem:[#allocation11 + %s382]]
    %v824 = vlaneseq
    %v825 = vshrl.u32 %v824, 7
    %v826 = vsub.s32 0, %v825
    %v827 = vrot.slane %v820, %v826
    %v828 = vmul.f32 %v387, %v827
    %v829 = vlaneseq
    %v830 = vshrl.u32 %v829, 7
    %v831 = vsub.s32 0, %v830
    %v832 = vrot.slane %v821, %v831
    %v833 = vsub.f32 %v828, %v832
    %v834 = vmul.f32 %v833, 0.5
    %v835 = vtanh.pop %v834
    %v836 = vmul.f32 %v835, 0.5
    %v837 = vadd.f32 %v836, 0.5
    %v838 = vstv %s822
    %v839 = vmul.f32 %v838, %v837
    %v840 = vstv %s823
    %v841 = vadd.f32 %v839, %v840
    %v842 = vtanh.pop %v841
    %v843 = vmul.f32 %v837, %v842
    %v844 = vadd.f32 %v819, %v843
    %v845 = vld [vmem:[%s593 + $0xa] sm:$0x1]
    %v846 = vld [vmem:[%s595 + $0xa] sm:$0x1]
    %s847 = sld [smem:[#allocation10 + %s412]]
    %s848 = sld [smem:[#allocation11 + %s412]]
    %v849 = vlaneseq
    %v850 = vshrl.u32 %v849, 7
    %v851 = vsub.s32 0, %v850
    %v852 = vrot.slane %v845, %v851
    %v853 = vmul.f32 %v417, %v852
    %v854 = vlaneseq
    %v855 = vshrl.u32 %v854, 7
    %v856 = vsub.s32 0, %v855
    %v857 = vrot.slane %v846, %v856
    %v858 = vsub.f32 %v853, %v857
    %v859 = vmul.f32 %v858, 0.5
    %v860 = vtanh.pop %v859
    %v861 = vmul.f32 %v860, 0.5
    %v862 = vadd.f32 %v861, 0.5
    %v863 = vstv %s847
    %v864 = vmul.f32 %v863, %v862
    %v865 = vstv %s848
    %v866 = vadd.f32 %v864, %v865
    %v867 = vtanh.pop %v866
    %v868 = vmul.f32 %v862, %v867
    %v869 = vadd.f32 %v844, %v868
    %v870 = vld [vmem:[%s593 + $0xb] sm:$0x1]
    %v871 = vld [vmem:[%s595 + $0xb] sm:$0x1]
    %s872 = sld [smem:[#allocation10 + %s442]]
    %s873 = sld [smem:[#allocation11 + %s442]]
    %v874 = vlaneseq
    %v875 = vshrl.u32 %v874, 7
    %v876 = vsub.s32 0, %v875
    %v877 = vrot.slane %v870, %v876
    %v878 = vmul.f32 %v447, %v877
    %v879 = vlaneseq
    %v880 = vshrl.u32 %v879, 7
    %v881 = vsub.s32 0, %v880
    %v882 = vrot.slane %v871, %v881
    %v883 = vsub.f32 %v878, %v882
    %v884 = vmul.f32 %v883, 0.5
    %v885 = vtanh.pop %v884
    %v886 = vmul.f32 %v885, 0.5
    %v887 = vadd.f32 %v886, 0.5
    %v888 = vstv %s872
    %v889 = vmul.f32 %v888, %v887
    %v890 = vstv %s873
    %v891 = vadd.f32 %v889, %v890
    %v892 = vtanh.pop %v891
    %v893 = vmul.f32 %v887, %v892
    %v894 = vadd.f32 %v869, %v893
    %v895 = vld [vmem:[%s593 + $0xc] sm:$0x1]
    %v896 = vld [vmem:[%s595 + $0xc] sm:$0x1]
    %s897 = sld [smem:[#allocation10 + %s472]]
    %s898 = sld [smem:[#allocation11 + %s472]]
    %v899 = vlaneseq
    %v900 = vshrl.u32 %v899, 7
    %v901 = vsub.s32 0, %v900
    %v902 = vrot.slane %v895, %v901
    %v903 = vmul.f32 %v477, %v902
    %v904 = vlaneseq
    %v905 = vshrl.u32 %v904, 7
    %v906 = vsub.s32 0, %v905
    %v907 = vrot.slane %v896, %v906
    %v908 = vsub.f32 %v903, %v907
    %v909 = vmul.f32 %v908, 0.5
    %v910 = vtanh.pop %v909
    %v911 = vmul.f32 %v910, 0.5
    %v912 = vadd.f32 %v911, 0.5
    %v913 = vstv %s897
    %v914 = vmul.f32 %v913, %v912
    %v915 = vstv %s898
    %v916 = vadd.f32 %v914, %v915
    %v917 = vtanh.pop %v916
    %v918 = vmul.f32 %v912, %v917
    %v919 = vadd.f32 %v894, %v918
    %v920 = vld [vmem:[%s593 + $0xd] sm:$0x1]
    %v921 = vld [vmem:[%s595 + $0xd] sm:$0x1]
    %s922 = sld [smem:[#allocation10 + %s502]]
    %s923 = sld [smem:[#allocation11 + %s502]]
    %v924 = vlaneseq
    %v925 = vshrl.u32 %v924, 7
    %v926 = vsub.s32 0, %v925
    %v927 = vrot.slane %v920, %v926
    %v928 = vmul.f32 %v507, %v927
    %v929 = vlaneseq
    %v930 = vshrl.u32 %v929, 7
    %v931 = vsub.s32 0, %v930
    %v932 = vrot.slane %v921, %v931
    %v933 = vsub.f32 %v928, %v932
    %v934 = vmul.f32 %v933, 0.5
    %v935 = vtanh.pop %v934
    %v936 = vmul.f32 %v935, 0.5
    %v937 = vadd.f32 %v936, 0.5
    %v938 = vstv %s922
    %v939 = vmul.f32 %v938, %v937
    %v940 = vstv %s923
    %v941 = vadd.f32 %v939, %v940
    %v942 = vtanh.pop %v941
    %v943 = vmul.f32 %v937, %v942
    %v944 = vadd.f32 %v919, %v943
    %v945 = vld [vmem:[%s593 + $0xe] sm:$0x1]
    %v946 = vld [vmem:[%s595 + $0xe] sm:$0x1]
    %s947 = sld [smem:[#allocation10 + %s532]]
    %s948 = sld [smem:[#allocation11 + %s532]]
    %v949 = vlaneseq
    %v950 = vshrl.u32 %v949, 7
    %v951 = vsub.s32 0, %v950
    %v952 = vrot.slane %v945, %v951
    %v953 = vmul.f32 %v537, %v952
    %v954 = vlaneseq
    %v955 = vshrl.u32 %v954, 7
    %v956 = vsub.s32 0, %v955
    %v957 = vrot.slane %v946, %v956
    %v958 = vsub.f32 %v953, %v957
    %v959 = vmul.f32 %v958, 0.5
    %v960 = vtanh.pop %v959
    %v961 = vmul.f32 %v960, 0.5
    %v962 = vadd.f32 %v961, 0.5
    %v963 = vstv %s947
    %v964 = vmul.f32 %v963, %v962
    %v965 = vstv %s948
    %v966 = vadd.f32 %v964, %v965
    %v967 = vtanh.pop %v966
    %v968 = vmul.f32 %v962, %v967
    %v969 = vadd.f32 %v944, %v968
    %v970 = vld [vmem:[%s593 + $0xf] sm:$0x1]
    %v971 = vld [vmem:[%s595 + $0xf] sm:$0x1]
    %s972 = sld [smem:[#allocation10 + %s562]]
    %s973 = sld [smem:[#allocation11 + %s562]]
    %v974 = vlaneseq
    %v975 = vshrl.u32 %v974, 7
    %v976 = vsub.s32 0, %v975
    %v977 = vrot.slane %v970, %v976
    %v978 = vmul.f32 %v567, %v977
    %v979 = vlaneseq
    %v980 = vshrl.u32 %v979, 7
    %v981 = vsub.s32 0, %v980
    %v982 = vrot.slane %v971, %v981
    %v983 = vsub.f32 %v978, %v982
    %v984 = vmul.f32 %v983, 0.5
    %v985 = vtanh.pop %v984
    %v986 = vmul.f32 %v985, 0.5
    %v987 = vadd.f32 %v986, 0.5
    %v988 = vstv %s972
    %v989 = vmul.f32 %v988, %v987
    %v990 = vstv %s973
    %v991 = vadd.f32 %v989, %v990
    %v992 = vtanh.pop %v991
    %v993 = vmul.f32 %v987, %v992
    %v994 = vadd.f32 %v969, %v993
    %s995 = scalar_lea.vmem [#allocation2], 8
    %v996 = vld [vmem:[%s995] sm:$0xff]
    %v997 = vadd.f32 %v996, %v994
    %998 = vst [vmem:[%s995] sm:$0xff] %v997
    %s999 = scalar_lea.vmem [#allocation7], 32
    %v1000 = vld [vmem:[%s999] sm:$0x1]
    %s1001 = scalar_lea.vmem [#allocation9], 32
    %v1002 = vld [vmem:[%s1001] sm:$0x1]
    %s1003 = sld [smem:[#allocation10 + %s109]]
    %s1004 = sld [smem:[#allocation11 + %s109]]
    %v1005 = vlaneseq
    %v1006 = vshrl.u32 %v1005, 7
    %v1007 = vsub.s32 0, %v1006
    %v1008 = vrot.slane %v1000, %v1007
    %v1009 = vmul.f32 %v117, %v1008
    %v1010 = vlaneseq
    %v1011 = vshrl.u32 %v1010, 7
    %v1012 = vsub.s32 0, %v1011
    %v1013 = vrot.slane %v1002, %v1012
    %v1014 = vsub.f32 %v1009, %v1013
    %v1015 = vmul.f32 %v1014, 0.5
    %v1016 = vtanh.pop %v1015
    %v1017 = vmul.f32 %v1016, 0.5
    %v1018 = vadd.f32 %v1017, 0.5
    %v1019 = vstv %s1003
    %v1020 = vmul.f32 %v1019, %v1018
    %v1021 = vstv %s1004
    %v1022 = vadd.f32 %v1020, %v1021
    %v1023 = vtanh.pop %v1022
    %v1024 = vmul.f32 %v1018, %v1023
    %v1025 = vadd.f32 %v1024, 0.0
    %v1026 = vld [vmem:[%s999 + $0x1] sm:$0x1]
    %v1027 = vld [vmem:[%s1001 + $0x1] sm:$0x1]
    %s1028 = sld [smem:[#allocation10 + %s142]]
    %s1029 = sld [smem:[#allocation11 + %s142]]
    %v1030 = vlaneseq
    %v1031 = vshrl.u32 %v1030, 7
    %v1032 = vsub.s32 0, %v1031
    %v1033 = vrot.slane %v1026, %v1032
    %v1034 = vmul.f32 %v147, %v1033
    %v1035 = vlaneseq
    %v1036 = vshrl.u32 %v1035, 7
    %v1037 = vsub.s32 0, %v1036
    %v1038 = vrot.slane %v1027, %v1037
    %v1039 = vsub.f32 %v1034, %v1038
    %v1040 = vmul.f32 %v1039, 0.5
    %v1041 = vtanh.pop %v1040
    %v1042 = vmul.f32 %v1041, 0.5
    %v1043 = vadd.f32 %v1042, 0.5
    %v1044 = vstv %s1028
    %v1045 = vmul.f32 %v1044, %v1043
    %v1046 = vstv %s1029
    %v1047 = vadd.f32 %v1045, %v1046
    %v1048 = vtanh.pop %v1047
    %v1049 = vmul.f32 %v1043, %v1048
    %v1050 = vadd.f32 %v1025, %v1049
    %v1051 = vld [vmem:[%s999 + $0x2] sm:$0x1]
    %v1052 = vld [vmem:[%s1001 + $0x2] sm:$0x1]
    %s1053 = sld [smem:[#allocation10 + %s172]]
    %s1054 = sld [smem:[#allocation11 + %s172]]
    %v1055 = vlaneseq
    %v1056 = vshrl.u32 %v1055, 7
    %v1057 = vsub.s32 0, %v1056
    %v1058 = vrot.slane %v1051, %v1057
    %v1059 = vmul.f32 %v177, %v1058
    %v1060 = vlaneseq
    %v1061 = vshrl.u32 %v1060, 7
    %v1062 = vsub.s32 0, %v1061
    %v1063 = vrot.slane %v1052, %v1062
    %v1064 = vsub.f32 %v1059, %v1063
    %v1065 = vmul.f32 %v1064, 0.5
    %v1066 = vtanh.pop %v1065
    %v1067 = vmul.f32 %v1066, 0.5
    %v1068 = vadd.f32 %v1067, 0.5
    %v1069 = vstv %s1053
    %v1070 = vmul.f32 %v1069, %v1068
    %v1071 = vstv %s1054
    %v1072 = vadd.f32 %v1070, %v1071
    %v1073 = vtanh.pop %v1072
    %v1074 = vmul.f32 %v1068, %v1073
    %v1075 = vadd.f32 %v1050, %v1074
    %v1076 = vld [vmem:[%s999 + $0x3] sm:$0x1]
    %v1077 = vld [vmem:[%s1001 + $0x3] sm:$0x1]
    %s1078 = sld [smem:[#allocation10 + %s202]]
    %s1079 = sld [smem:[#allocation11 + %s202]]
    %v1080 = vlaneseq
    %v1081 = vshrl.u32 %v1080, 7
    %v1082 = vsub.s32 0, %v1081
    %v1083 = vrot.slane %v1076, %v1082
    %v1084 = vmul.f32 %v207, %v1083
    %v1085 = vlaneseq
    %v1086 = vshrl.u32 %v1085, 7
    %v1087 = vsub.s32 0, %v1086
    %v1088 = vrot.slane %v1077, %v1087
    %v1089 = vsub.f32 %v1084, %v1088
    %v1090 = vmul.f32 %v1089, 0.5
    %v1091 = vtanh.pop %v1090
    %v1092 = vmul.f32 %v1091, 0.5
    %v1093 = vadd.f32 %v1092, 0.5
    %v1094 = vstv %s1078
    %v1095 = vmul.f32 %v1094, %v1093
    %v1096 = vstv %s1079
    %v1097 = vadd.f32 %v1095, %v1096
    %v1098 = vtanh.pop %v1097
    %v1099 = vmul.f32 %v1093, %v1098
    %v1100 = vadd.f32 %v1075, %v1099
    %v1101 = vld [vmem:[%s999 + $0x4] sm:$0x1]
    %v1102 = vld [vmem:[%s1001 + $0x4] sm:$0x1]
    %s1103 = sld [smem:[#allocation10 + %s232]]
    %s1104 = sld [smem:[#allocation11 + %s232]]
    %v1105 = vlaneseq
    %v1106 = vshrl.u32 %v1105, 7
    %v1107 = vsub.s32 0, %v1106
    %v1108 = vrot.slane %v1101, %v1107
    %v1109 = vmul.f32 %v237, %v1108
    %v1110 = vlaneseq
    %v1111 = vshrl.u32 %v1110, 7
    %v1112 = vsub.s32 0, %v1111
    %v1113 = vrot.slane %v1102, %v1112
    %v1114 = vsub.f32 %v1109, %v1113
    %v1115 = vmul.f32 %v1114, 0.5
    %v1116 = vtanh.pop %v1115
    %v1117 = vmul.f32 %v1116, 0.5
    %v1118 = vadd.f32 %v1117, 0.5
    %v1119 = vstv %s1103
    %v1120 = vmul.f32 %v1119, %v1118
    %v1121 = vstv %s1104
    %v1122 = vadd.f32 %v1120, %v1121
    %v1123 = vtanh.pop %v1122
    %v1124 = vmul.f32 %v1118, %v1123
    %v1125 = vadd.f32 %v1100, %v1124
    %v1126 = vld [vmem:[%s999 + $0x5] sm:$0x1]
    %v1127 = vld [vmem:[%s1001 + $0x5] sm:$0x1]
    %s1128 = sld [smem:[#allocation10 + %s262]]
    %s1129 = sld [smem:[#allocation11 + %s262]]
    %v1130 = vlaneseq
    %v1131 = vshrl.u32 %v1130, 7
    %v1132 = vsub.s32 0, %v1131
    %v1133 = vrot.slane %v1126, %v1132
    %v1134 = vmul.f32 %v267, %v1133
    %v1135 = vlaneseq
    %v1136 = vshrl.u32 %v1135, 7
    %v1137 = vsub.s32 0, %v1136
    %v1138 = vrot.slane %v1127, %v1137
    %v1139 = vsub.f32 %v1134, %v1138
    %v1140 = vmul.f32 %v1139, 0.5
    %v1141 = vtanh.pop %v1140
    %v1142 = vmul.f32 %v1141, 0.5
    %v1143 = vadd.f32 %v1142, 0.5
    %v1144 = vstv %s1128
    %v1145 = vmul.f32 %v1144, %v1143
    %v1146 = vstv %s1129
    %v1147 = vadd.f32 %v1145, %v1146
    %v1148 = vtanh.pop %v1147
    %v1149 = vmul.f32 %v1143, %v1148
    %v1150 = vadd.f32 %v1125, %v1149
    %v1151 = vld [vmem:[%s999 + $0x6] sm:$0x1]
    %v1152 = vld [vmem:[%s1001 + $0x6] sm:$0x1]
    %s1153 = sld [smem:[#allocation10 + %s292]]
    %s1154 = sld [smem:[#allocation11 + %s292]]
    %v1155 = vlaneseq
    %v1156 = vshrl.u32 %v1155, 7
    %v1157 = vsub.s32 0, %v1156
    %v1158 = vrot.slane %v1151, %v1157
    %v1159 = vmul.f32 %v297, %v1158
    %v1160 = vlaneseq
    %v1161 = vshrl.u32 %v1160, 7
    %v1162 = vsub.s32 0, %v1161
    %v1163 = vrot.slane %v1152, %v1162
    %v1164 = vsub.f32 %v1159, %v1163
    %v1165 = vmul.f32 %v1164, 0.5
    %v1166 = vtanh.pop %v1165
    %v1167 = vmul.f32 %v1166, 0.5
    %v1168 = vadd.f32 %v1167, 0.5
    %v1169 = vstv %s1153
    %v1170 = vmul.f32 %v1169, %v1168
    %v1171 = vstv %s1154
    %v1172 = vadd.f32 %v1170, %v1171
    %v1173 = vtanh.pop %v1172
    %v1174 = vmul.f32 %v1168, %v1173
    %v1175 = vadd.f32 %v1150, %v1174
    %v1176 = vld [vmem:[%s999 + $0x7] sm:$0x1]
    %v1177 = vld [vmem:[%s1001 + $0x7] sm:$0x1]
    %s1178 = sld [smem:[#allocation10 + %s322]]
    %s1179 = sld [smem:[#allocation11 + %s322]]
    %v1180 = vlaneseq
    %v1181 = vshrl.u32 %v1180, 7
    %v1182 = vsub.s32 0, %v1181
    %v1183 = vrot.slane %v1176, %v1182
    %v1184 = vmul.f32 %v327, %v1183
    %v1185 = vlaneseq
    %v1186 = vshrl.u32 %v1185, 7
    %v1187 = vsub.s32 0, %v1186
    %v1188 = vrot.slane %v1177, %v1187
    %v1189 = vsub.f32 %v1184, %v1188
    %v1190 = vmul.f32 %v1189, 0.5
    %v1191 = vtanh.pop %v1190
    %v1192 = vmul.f32 %v1191, 0.5
    %v1193 = vadd.f32 %v1192, 0.5
    %v1194 = vstv %s1178
    %v1195 = vmul.f32 %v1194, %v1193
    %v1196 = vstv %s1179
    %v1197 = vadd.f32 %v1195, %v1196
    %v1198 = vtanh.pop %v1197
    %v1199 = vmul.f32 %v1193, %v1198
    %v1200 = vadd.f32 %v1175, %v1199
    %v1201 = vld [vmem:[%s999 + $0x8] sm:$0x1]
    %v1202 = vld [vmem:[%s1001 + $0x8] sm:$0x1]
    %s1203 = sld [smem:[#allocation10 + %s352]]
    %s1204 = sld [smem:[#allocation11 + %s352]]
    %v1205 = vlaneseq
    %v1206 = vshrl.u32 %v1205, 7
    %v1207 = vsub.s32 0, %v1206
    %v1208 = vrot.slane %v1201, %v1207
    %v1209 = vmul.f32 %v357, %v1208
    %v1210 = vlaneseq
    %v1211 = vshrl.u32 %v1210, 7
    %v1212 = vsub.s32 0, %v1211
    %v1213 = vrot.slane %v1202, %v1212
    %v1214 = vsub.f32 %v1209, %v1213
    %v1215 = vmul.f32 %v1214, 0.5
    %v1216 = vtanh.pop %v1215
    %v1217 = vmul.f32 %v1216, 0.5
    %v1218 = vadd.f32 %v1217, 0.5
    %v1219 = vstv %s1203
    %v1220 = vmul.f32 %v1219, %v1218
    %v1221 = vstv %s1204
    %v1222 = vadd.f32 %v1220, %v1221
    %v1223 = vtanh.pop %v1222
    %v1224 = vmul.f32 %v1218, %v1223
    %v1225 = vadd.f32 %v1200, %v1224
    %v1226 = vld [vmem:[%s999 + $0x9] sm:$0x1]
    %v1227 = vld [vmem:[%s1001 + $0x9] sm:$0x1]
    %s1228 = sld [smem:[#allocation10 + %s382]]
    %s1229 = sld [smem:[#allocation11 + %s382]]
    %v1230 = vlaneseq
    %v1231 = vshrl.u32 %v1230, 7
    %v1232 = vsub.s32 0, %v1231
    %v1233 = vrot.slane %v1226, %v1232
    %v1234 = vmul.f32 %v387, %v1233
    %v1235 = vlaneseq
    %v1236 = vshrl.u32 %v1235, 7
    %v1237 = vsub.s32 0, %v1236
    %v1238 = vrot.slane %v1227, %v1237
    %v1239 = vsub.f32 %v1234, %v1238
    %v1240 = vmul.f32 %v1239, 0.5
    %v1241 = vtanh.pop %v1240
    %v1242 = vmul.f32 %v1241, 0.5
    %v1243 = vadd.f32 %v1242, 0.5
    %v1244 = vstv %s1228
    %v1245 = vmul.f32 %v1244, %v1243
    %v1246 = vstv %s1229
    %v1247 = vadd.f32 %v1245, %v1246
    %v1248 = vtanh.pop %v1247
    %v1249 = vmul.f32 %v1243, %v1248
    %v1250 = vadd.f32 %v1225, %v1249
    %v1251 = vld [vmem:[%s999 + $0xa] sm:$0x1]
    %v1252 = vld [vmem:[%s1001 + $0xa] sm:$0x1]
    %s1253 = sld [smem:[#allocation10 + %s412]]
    %s1254 = sld [smem:[#allocation11 + %s412]]
    %v1255 = vlaneseq
    %v1256 = vshrl.u32 %v1255, 7
    %v1257 = vsub.s32 0, %v1256
    %v1258 = vrot.slane %v1251, %v1257
    %v1259 = vmul.f32 %v417, %v1258
    %v1260 = vlaneseq
    %v1261 = vshrl.u32 %v1260, 7
    %v1262 = vsub.s32 0, %v1261
    %v1263 = vrot.slane %v1252, %v1262
    %v1264 = vsub.f32 %v1259, %v1263
    %v1265 = vmul.f32 %v1264, 0.5
    %v1266 = vtanh.pop %v1265
    %v1267 = vmul.f32 %v1266, 0.5
    %v1268 = vadd.f32 %v1267, 0.5
    %v1269 = vstv %s1253
    %v1270 = vmul.f32 %v1269, %v1268
    %v1271 = vstv %s1254
    %v1272 = vadd.f32 %v1270, %v1271
    %v1273 = vtanh.pop %v1272
    %v1274 = vmul.f32 %v1268, %v1273
    %v1275 = vadd.f32 %v1250, %v1274
    %v1276 = vld [vmem:[%s999 + $0xb] sm:$0x1]
    %v1277 = vld [vmem:[%s1001 + $0xb] sm:$0x1]
    %s1278 = sld [smem:[#allocation10 + %s442]]
    %s1279 = sld [smem:[#allocation11 + %s442]]
    %v1280 = vlaneseq
    %v1281 = vshrl.u32 %v1280, 7
    %v1282 = vsub.s32 0, %v1281
    %v1283 = vrot.slane %v1276, %v1282
    %v1284 = vmul.f32 %v447, %v1283
    %v1285 = vlaneseq
    %v1286 = vshrl.u32 %v1285, 7
    %v1287 = vsub.s32 0, %v1286
    %v1288 = vrot.slane %v1277, %v1287
    %v1289 = vsub.f32 %v1284, %v1288
    %v1290 = vmul.f32 %v1289, 0.5
    %v1291 = vtanh.pop %v1290
    %v1292 = vmul.f32 %v1291, 0.5
    %v1293 = vadd.f32 %v1292, 0.5
    %v1294 = vstv %s1278
    %v1295 = vmul.f32 %v1294, %v1293
    %v1296 = vstv %s1279
    %v1297 = vadd.f32 %v1295, %v1296
    %v1298 = vtanh.pop %v1297
    %v1299 = vmul.f32 %v1293, %v1298
    %v1300 = vadd.f32 %v1275, %v1299
    %v1301 = vld [vmem:[%s999 + $0xc] sm:$0x1]
    %v1302 = vld [vmem:[%s1001 + $0xc] sm:$0x1]
    %s1303 = sld [smem:[#allocation10 + %s472]]
    %s1304 = sld [smem:[#allocation11 + %s472]]
    %v1305 = vlaneseq
    %v1306 = vshrl.u32 %v1305, 7
    %v1307 = vsub.s32 0, %v1306
    %v1308 = vrot.slane %v1301, %v1307
    %v1309 = vmul.f32 %v477, %v1308
    %v1310 = vlaneseq
    %v1311 = vshrl.u32 %v1310, 7
    %v1312 = vsub.s32 0, %v1311
    %v1313 = vrot.slane %v1302, %v1312
    %v1314 = vsub.f32 %v1309, %v1313
    %v1315 = vmul.f32 %v1314, 0.5
    %v1316 = vtanh.pop %v1315
    %v1317 = vmul.f32 %v1316, 0.5
    %v1318 = vadd.f32 %v1317, 0.5
    %v1319 = vstv %s1303
    %v1320 = vmul.f32 %v1319, %v1318
    %v1321 = vstv %s1304
    %v1322 = vadd.f32 %v1320, %v1321
    %v1323 = vtanh.pop %v1322
    %v1324 = vmul.f32 %v1318, %v1323
    %v1325 = vadd.f32 %v1300, %v1324
    %v1326 = vld [vmem:[%s999 + $0xd] sm:$0x1]
    %v1327 = vld [vmem:[%s1001 + $0xd] sm:$0x1]
    %s1328 = sld [smem:[#allocation10 + %s502]]
    %s1329 = sld [smem:[#allocation11 + %s502]]
    %v1330 = vlaneseq
    %v1331 = vshrl.u32 %v1330, 7
    %v1332 = vsub.s32 0, %v1331
    %v1333 = vrot.slane %v1326, %v1332
    %v1334 = vmul.f32 %v507, %v1333
    %v1335 = vlaneseq
    %v1336 = vshrl.u32 %v1335, 7
    %v1337 = vsub.s32 0, %v1336
    %v1338 = vrot.slane %v1327, %v1337
    %v1339 = vsub.f32 %v1334, %v1338
    %v1340 = vmul.f32 %v1339, 0.5
    %v1341 = vtanh.pop %v1340
    %v1342 = vmul.f32 %v1341, 0.5
    %v1343 = vadd.f32 %v1342, 0.5
    %v1344 = vstv %s1328
    %v1345 = vmul.f32 %v1344, %v1343
    %v1346 = vstv %s1329
    %v1347 = vadd.f32 %v1345, %v1346
    %v1348 = vtanh.pop %v1347
    %v1349 = vmul.f32 %v1343, %v1348
    %v1350 = vadd.f32 %v1325, %v1349
    %v1351 = vld [vmem:[%s999 + $0xe] sm:$0x1]
    %v1352 = vld [vmem:[%s1001 + $0xe] sm:$0x1]
    %s1353 = sld [smem:[#allocation10 + %s532]]
    %s1354 = sld [smem:[#allocation11 + %s532]]
    %v1355 = vlaneseq
    %v1356 = vshrl.u32 %v1355, 7
    %v1357 = vsub.s32 0, %v1356
    %v1358 = vrot.slane %v1351, %v1357
    %v1359 = vmul.f32 %v537, %v1358
    %v1360 = vlaneseq
    %v1361 = vshrl.u32 %v1360, 7
    %v1362 = vsub.s32 0, %v1361
    %v1363 = vrot.slane %v1352, %v1362
    %v1364 = vsub.f32 %v1359, %v1363
    %v1365 = vmul.f32 %v1364, 0.5
    %v1366 = vtanh.pop %v1365
    %v1367 = vmul.f32 %v1366, 0.5
    %v1368 = vadd.f32 %v1367, 0.5
    %v1369 = vstv %s1353
    %v1370 = vmul.f32 %v1369, %v1368
    %v1371 = vstv %s1354
    %v1372 = vadd.f32 %v1370, %v1371
    %v1373 = vtanh.pop %v1372
    %v1374 = vmul.f32 %v1368, %v1373
    %v1375 = vadd.f32 %v1350, %v1374
    %v1376 = vld [vmem:[%s999 + $0xf] sm:$0x1]
    %v1377 = vld [vmem:[%s1001 + $0xf] sm:$0x1]
    %s1378 = sld [smem:[#allocation10 + %s562]]
    %s1379 = sld [smem:[#allocation11 + %s562]]
    %v1380 = vlaneseq
    %v1381 = vshrl.u32 %v1380, 7
    %v1382 = vsub.s32 0, %v1381
    %v1383 = vrot.slane %v1376, %v1382
    %v1384 = vmul.f32 %v567, %v1383
    %v1385 = vlaneseq
    %v1386 = vshrl.u32 %v1385, 7
    %v1387 = vsub.s32 0, %v1386
    %v1388 = vrot.slane %v1377, %v1387
    %v1389 = vsub.f32 %v1384, %v1388
    %v1390 = vmul.f32 %v1389, 0.5
    %v1391 = vtanh.pop %v1390
    %v1392 = vmul.f32 %v1391, 0.5
    %v1393 = vadd.f32 %v1392, 0.5
    %v1394 = vstv %s1378
    %v1395 = vmul.f32 %v1394, %v1393
    %v1396 = vstv %s1379
    %v1397 = vadd.f32 %v1395, %v1396
    %v1398 = vtanh.pop %v1397
    %v1399 = vmul.f32 %v1393, %v1398
    %v1400 = vadd.f32 %v1375, %v1399
    %s1401 = scalar_lea.vmem [#allocation2], 16
    %v1402 = vld [vmem:[%s1401] sm:$0xff]
    %v1403 = vadd.f32 %v1402, %v1400
    %1404 = vst [vmem:[%s1401] sm:$0xff] %v1403
    %s1405 = scalar_lea.vmem [#allocation7], 48
    %v1406 = vld [vmem:[%s1405] sm:$0x1]
    %s1407 = scalar_lea.vmem [#allocation9], 48
    %v1408 = vld [vmem:[%s1407] sm:$0x1]
    %s1409 = sld [smem:[#allocation10 + %s109]]
    %s1410 = sld [smem:[#allocation11 + %s109]]
    %v1411 = vlaneseq
    %v1412 = vshrl.u32 %v1411, 7
    %v1413 = vsub.s32 0, %v1412
    %v1414 = vrot.slane %v1406, %v1413
    %v1415 = vmul.f32 %v117, %v1414
    %v1416 = vlaneseq
    %v1417 = vshrl.u32 %v1416, 7
    %v1418 = vsub.s32 0, %v1417
    %v1419 = vrot.slane %v1408, %v1418
    %v1420 = vsub.f32 %v1415, %v1419
    %v1421 = vmul.f32 %v1420, 0.5
    %v1422 = vtanh.pop %v1421
    %v1423 = vmul.f32 %v1422, 0.5
    %v1424 = vadd.f32 %v1423, 0.5
    %v1425 = vstv %s1409
    %v1426 = vmul.f32 %v1425, %v1424
    %v1427 = vstv %s1410
    %v1428 = vadd.f32 %v1426, %v1427
    %v1429 = vtanh.pop %v1428
    %v1430 = vmul.f32 %v1424, %v1429
    %v1431 = vadd.f32 %v1430, 0.0
    %v1432 = vld [vmem:[%s1405 + $0x1] sm:$0x1]
    %v1433 = vld [vmem:[%s1407 + $0x1] sm:$0x1]
    %s1434 = sld [smem:[#allocation10 + %s142]]
    %s1435 = sld [smem:[#allocation11 + %s142]]
    %v1436 = vlaneseq
    %v1437 = vshrl.u32 %v1436, 7
    %v1438 = vsub.s32 0, %v1437
    %v1439 = vrot.slane %v1432, %v1438
    %v1440 = vmul.f32 %v147, %v1439
    %v1441 = vlaneseq
    %v1442 = vshrl.u32 %v1441, 7
    %v1443 = vsub.s32 0, %v1442
    %v1444 = vrot.slane %v1433, %v1443
    %v1445 = vsub.f32 %v1440, %v1444
    %v1446 = vmul.f32 %v1445, 0.5
    %v1447 = vtanh.pop %v1446
    %v1448 = vmul.f32 %v1447, 0.5
    %v1449 = vadd.f32 %v1448, 0.5
    %v1450 = vstv %s1434
    %v1451 = vmul.f32 %v1450, %v1449
    %v1452 = vstv %s1435
    %v1453 = vadd.f32 %v1451, %v1452
    %v1454 = vtanh.pop %v1453
    %v1455 = vmul.f32 %v1449, %v1454
    %v1456 = vadd.f32 %v1431, %v1455
    %v1457 = vld [vmem:[%s1405 + $0x2] sm:$0x1]
    %v1458 = vld [vmem:[%s1407 + $0x2] sm:$0x1]
    %s1459 = sld [smem:[#allocation10 + %s172]]
    %s1460 = sld [smem:[#allocation11 + %s172]]
    %v1461 = vlaneseq
    %v1462 = vshrl.u32 %v1461, 7
    %v1463 = vsub.s32 0, %v1462
    %v1464 = vrot.slane %v1457, %v1463
    %v1465 = vmul.f32 %v177, %v1464
    %v1466 = vlaneseq
    %v1467 = vshrl.u32 %v1466, 7
    %v1468 = vsub.s32 0, %v1467
    %v1469 = vrot.slane %v1458, %v1468
    %v1470 = vsub.f32 %v1465, %v1469
    %v1471 = vmul.f32 %v1470, 0.5
    %v1472 = vtanh.pop %v1471
    %v1473 = vmul.f32 %v1472, 0.5
    %v1474 = vadd.f32 %v1473, 0.5
    %v1475 = vstv %s1459
    %v1476 = vmul.f32 %v1475, %v1474
    %v1477 = vstv %s1460
    %v1478 = vadd.f32 %v1476, %v1477
    %v1479 = vtanh.pop %v1478
    %v1480 = vmul.f32 %v1474, %v1479
    %v1481 = vadd.f32 %v1456, %v1480
    %v1482 = vld [vmem:[%s1405 + $0x3] sm:$0x1]
    %v1483 = vld [vmem:[%s1407 + $0x3] sm:$0x1]
    %s1484 = sld [smem:[#allocation10 + %s202]]
    %s1485 = sld [smem:[#allocation11 + %s202]]
    %v1486 = vlaneseq
    %v1487 = vshrl.u32 %v1486, 7
    %v1488 = vsub.s32 0, %v1487
    %v1489 = vrot.slane %v1482, %v1488
    %v1490 = vmul.f32 %v207, %v1489
    %v1491 = vlaneseq
    %v1492 = vshrl.u32 %v1491, 7
    %v1493 = vsub.s32 0, %v1492
    %v1494 = vrot.slane %v1483, %v1493
    %v1495 = vsub.f32 %v1490, %v1494
    %v1496 = vmul.f32 %v1495, 0.5
    %v1497 = vtanh.pop %v1496
    %v1498 = vmul.f32 %v1497, 0.5
    %v1499 = vadd.f32 %v1498, 0.5
    %v1500 = vstv %s1484
    %v1501 = vmul.f32 %v1500, %v1499
    %v1502 = vstv %s1485
    %v1503 = vadd.f32 %v1501, %v1502
    %v1504 = vtanh.pop %v1503
    %v1505 = vmul.f32 %v1499, %v1504
    %v1506 = vadd.f32 %v1481, %v1505
    %v1507 = vld [vmem:[%s1405 + $0x4] sm:$0x1]
    %v1508 = vld [vmem:[%s1407 + $0x4] sm:$0x1]
    %s1509 = sld [smem:[#allocation10 + %s232]]
    %s1510 = sld [smem:[#allocation11 + %s232]]
    %v1511 = vlaneseq
    %v1512 = vshrl.u32 %v1511, 7
    %v1513 = vsub.s32 0, %v1512
    %v1514 = vrot.slane %v1507, %v1513
    %v1515 = vmul.f32 %v237, %v1514
    %v1516 = vlaneseq
    %v1517 = vshrl.u32 %v1516, 7
    %v1518 = vsub.s32 0, %v1517
    %v1519 = vrot.slane %v1508, %v1518
    %v1520 = vsub.f32 %v1515, %v1519
    %v1521 = vmul.f32 %v1520, 0.5
    %v1522 = vtanh.pop %v1521
    %v1523 = vmul.f32 %v1522, 0.5
    %v1524 = vadd.f32 %v1523, 0.5
    %v1525 = vstv %s1509
    %v1526 = vmul.f32 %v1525, %v1524
    %v1527 = vstv %s1510
    %v1528 = vadd.f32 %v1526, %v1527
    %v1529 = vtanh.pop %v1528
    %v1530 = vmul.f32 %v1524, %v1529
    %v1531 = vadd.f32 %v1506, %v1530
    %v1532 = vld [vmem:[%s1405 + $0x5] sm:$0x1]
    %v1533 = vld [vmem:[%s1407 + $0x5] sm:$0x1]
    %s1534 = sld [smem:[#allocation10 + %s262]]
    %s1535 = sld [smem:[#allocation11 + %s262]]
    %v1536 = vlaneseq
    %v1537 = vshrl.u32 %v1536, 7
    %v1538 = vsub.s32 0, %v1537
    %v1539 = vrot.slane %v1532, %v1538
    %v1540 = vmul.f32 %v267, %v1539
    %v1541 = vlaneseq
    %v1542 = vshrl.u32 %v1541, 7
    %v1543 = vsub.s32 0, %v1542
    %v1544 = vrot.slane %v1533, %v1543
    %v1545 = vsub.f32 %v1540, %v1544
    %v1546 = vmul.f32 %v1545, 0.5
    %v1547 = vtanh.pop %v1546
    %v1548 = vmul.f32 %v1547, 0.5
    %v1549 = vadd.f32 %v1548, 0.5
    %v1550 = vstv %s1534
    %v1551 = vmul.f32 %v1550, %v1549
    %v1552 = vstv %s1535
    %v1553 = vadd.f32 %v1551, %v1552
    %v1554 = vtanh.pop %v1553
    %v1555 = vmul.f32 %v1549, %v1554
    %v1556 = vadd.f32 %v1531, %v1555
    %v1557 = vld [vmem:[%s1405 + $0x6] sm:$0x1]
    %v1558 = vld [vmem:[%s1407 + $0x6] sm:$0x1]
    %s1559 = sld [smem:[#allocation10 + %s292]]
    %s1560 = sld [smem:[#allocation11 + %s292]]
    %v1561 = vlaneseq
    %v1562 = vshrl.u32 %v1561, 7
    %v1563 = vsub.s32 0, %v1562
    %v1564 = vrot.slane %v1557, %v1563
    %v1565 = vmul.f32 %v297, %v1564
    %v1566 = vlaneseq
    %v1567 = vshrl.u32 %v1566, 7
    %v1568 = vsub.s32 0, %v1567
    %v1569 = vrot.slane %v1558, %v1568
    %v1570 = vsub.f32 %v1565, %v1569
    %v1571 = vmul.f32 %v1570, 0.5
    %v1572 = vtanh.pop %v1571
    %v1573 = vmul.f32 %v1572, 0.5
    %v1574 = vadd.f32 %v1573, 0.5
    %v1575 = vstv %s1559
    %v1576 = vmul.f32 %v1575, %v1574
    %v1577 = vstv %s1560
    %v1578 = vadd.f32 %v1576, %v1577
    %v1579 = vtanh.pop %v1578
    %v1580 = vmul.f32 %v1574, %v1579
    %v1581 = vadd.f32 %v1556, %v1580
    %v1582 = vld [vmem:[%s1405 + $0x7] sm:$0x1]
    %v1583 = vld [vmem:[%s1407 + $0x7] sm:$0x1]
    %s1584 = sld [smem:[#allocation10 + %s322]]
    %s1585 = sld [smem:[#allocation11 + %s322]]
    %v1586 = vlaneseq
    %v1587 = vshrl.u32 %v1586, 7
    %v1588 = vsub.s32 0, %v1587
    %v1589 = vrot.slane %v1582, %v1588
    %v1590 = vmul.f32 %v327, %v1589
    %v1591 = vlaneseq
    %v1592 = vshrl.u32 %v1591, 7
    %v1593 = vsub.s32 0, %v1592
    %v1594 = vrot.slane %v1583, %v1593
    %v1595 = vsub.f32 %v1590, %v1594
    %v1596 = vmul.f32 %v1595, 0.5
    %v1597 = vtanh.pop %v1596
    %v1598 = vmul.f32 %v1597, 0.5
    %v1599 = vadd.f32 %v1598, 0.5
    %v1600 = vstv %s1584
    %v1601 = vmul.f32 %v1600, %v1599
    %v1602 = vstv %s1585
    %v1603 = vadd.f32 %v1601, %v1602
    %v1604 = vtanh.pop %v1603
    %v1605 = vmul.f32 %v1599, %v1604
    %v1606 = vadd.f32 %v1581, %v1605
    %v1607 = vld [vmem:[%s1405 + $0x8] sm:$0x1]
    %v1608 = vld [vmem:[%s1407 + $0x8] sm:$0x1]
    %s1609 = sld [smem:[#allocation10 + %s352]]
    %s1610 = sld [smem:[#allocation11 + %s352]]
    %v1611 = vlaneseq
    %v1612 = vshrl.u32 %v1611, 7
    %v1613 = vsub.s32 0, %v1612
    %v1614 = vrot.slane %v1607, %v1613
    %v1615 = vmul.f32 %v357, %v1614
    %v1616 = vlaneseq
    %v1617 = vshrl.u32 %v1616, 7
    %v1618 = vsub.s32 0, %v1617
    %v1619 = vrot.slane %v1608, %v1618
    %v1620 = vsub.f32 %v1615, %v1619
    %v1621 = vmul.f32 %v1620, 0.5
    %v1622 = vtanh.pop %v1621
    %v1623 = vmul.f32 %v1622, 0.5
    %v1624 = vadd.f32 %v1623, 0.5
    %v1625 = vstv %s1609
    %v1626 = vmul.f32 %v1625, %v1624
    %v1627 = vstv %s1610
    %v1628 = vadd.f32 %v1626, %v1627
    %v1629 = vtanh.pop %v1628
    %v1630 = vmul.f32 %v1624, %v1629
    %v1631 = vadd.f32 %v1606, %v1630
    %v1632 = vld [vmem:[%s1405 + $0x9] sm:$0x1]
    %v1633 = vld [vmem:[%s1407 + $0x9] sm:$0x1]
    %s1634 = sld [smem:[#allocation10 + %s382]]
    %s1635 = sld [smem:[#allocation11 + %s382]]
    %v1636 = vlaneseq
    %v1637 = vshrl.u32 %v1636, 7
    %v1638 = vsub.s32 0, %v1637
    %v1639 = vrot.slane %v1632, %v1638
    %v1640 = vmul.f32 %v387, %v1639
    %v1641 = vlaneseq
    %v1642 = vshrl.u32 %v1641, 7
    %v1643 = vsub.s32 0, %v1642
    %v1644 = vrot.slane %v1633, %v1643
    %v1645 = vsub.f32 %v1640, %v1644
    %v1646 = vmul.f32 %v1645, 0.5
    %v1647 = vtanh.pop %v1646
    %v1648 = vmul.f32 %v1647, 0.5
    %v1649 = vadd.f32 %v1648, 0.5
    %v1650 = vstv %s1634
    %v1651 = vmul.f32 %v1650, %v1649
    %v1652 = vstv %s1635
    %v1653 = vadd.f32 %v1651, %v1652
    %v1654 = vtanh.pop %v1653
    %v1655 = vmul.f32 %v1649, %v1654
    %v1656 = vadd.f32 %v1631, %v1655
    %v1657 = vld [vmem:[%s1405 + $0xa] sm:$0x1]
    %v1658 = vld [vmem:[%s1407 + $0xa] sm:$0x1]
    %s1659 = sld [smem:[#allocation10 + %s412]]
    %s1660 = sld [smem:[#allocation11 + %s412]]
    %v1661 = vlaneseq
    %v1662 = vshrl.u32 %v1661, 7
    %v1663 = vsub.s32 0, %v1662
    %v1664 = vrot.slane %v1657, %v1663
    %v1665 = vmul.f32 %v417, %v1664
    %v1666 = vlaneseq
    %v1667 = vshrl.u32 %v1666, 7
    %v1668 = vsub.s32 0, %v1667
    %v1669 = vrot.slane %v1658, %v1668
    %v1670 = vsub.f32 %v1665, %v1669
    %v1671 = vmul.f32 %v1670, 0.5
    %v1672 = vtanh.pop %v1671
    %v1673 = vmul.f32 %v1672, 0.5
    %v1674 = vadd.f32 %v1673, 0.5
    %v1675 = vstv %s1659
    %v1676 = vmul.f32 %v1675, %v1674
    %v1677 = vstv %s1660
    %v1678 = vadd.f32 %v1676, %v1677
    %v1679 = vtanh.pop %v1678
    %v1680 = vmul.f32 %v1674, %v1679
    %v1681 = vadd.f32 %v1656, %v1680
    %v1682 = vld [vmem:[%s1405 + $0xb] sm:$0x1]
    %v1683 = vld [vmem:[%s1407 + $0xb] sm:$0x1]
    %s1684 = sld [smem:[#allocation10 + %s442]]
    %s1685 = sld [smem:[#allocation11 + %s442]]
    %v1686 = vlaneseq
    %v1687 = vshrl.u32 %v1686, 7
    %v1688 = vsub.s32 0, %v1687
    %v1689 = vrot.slane %v1682, %v1688
    %v1690 = vmul.f32 %v447, %v1689
    %v1691 = vlaneseq
    %v1692 = vshrl.u32 %v1691, 7
    %v1693 = vsub.s32 0, %v1692
    %v1694 = vrot.slane %v1683, %v1693
    %v1695 = vsub.f32 %v1690, %v1694
    %v1696 = vmul.f32 %v1695, 0.5
    %v1697 = vtanh.pop %v1696
    %v1698 = vmul.f32 %v1697, 0.5
    %v1699 = vadd.f32 %v1698, 0.5
    %v1700 = vstv %s1684
    %v1701 = vmul.f32 %v1700, %v1699
    %v1702 = vstv %s1685
    %v1703 = vadd.f32 %v1701, %v1702
    %v1704 = vtanh.pop %v1703
    %v1705 = vmul.f32 %v1699, %v1704
    %v1706 = vadd.f32 %v1681, %v1705
    %v1707 = vld [vmem:[%s1405 + $0xc] sm:$0x1]
    %v1708 = vld [vmem:[%s1407 + $0xc] sm:$0x1]
    %s1709 = sld [smem:[#allocation10 + %s472]]
    %s1710 = sld [smem:[#allocation11 + %s472]]
    %v1711 = vlaneseq
    %v1712 = vshrl.u32 %v1711, 7
    %v1713 = vsub.s32 0, %v1712
    %v1714 = vrot.slane %v1707, %v1713
    %v1715 = vmul.f32 %v477, %v1714
    %v1716 = vlaneseq
    %v1717 = vshrl.u32 %v1716, 7
    %v1718 = vsub.s32 0, %v1717
    %v1719 = vrot.slane %v1708, %v1718
    %v1720 = vsub.f32 %v1715, %v1719
    %v1721 = vmul.f32 %v1720, 0.5
    %v1722 = vtanh.pop %v1721
    %v1723 = vmul.f32 %v1722, 0.5
    %v1724 = vadd.f32 %v1723, 0.5
    %v1725 = vstv %s1709
    %v1726 = vmul.f32 %v1725, %v1724
    %v1727 = vstv %s1710
    %v1728 = vadd.f32 %v1726, %v1727
    %v1729 = vtanh.pop %v1728
    %v1730 = vmul.f32 %v1724, %v1729
    %v1731 = vadd.f32 %v1706, %v1730
    %v1732 = vld [vmem:[%s1405 + $0xd] sm:$0x1]
    %v1733 = vld [vmem:[%s1407 + $0xd] sm:$0x1]
    %s1734 = sld [smem:[#allocation10 + %s502]]
    %s1735 = sld [smem:[#allocation11 + %s502]]
    %v1736 = vlaneseq
    %v1737 = vshrl.u32 %v1736, 7
    %v1738 = vsub.s32 0, %v1737
    %v1739 = vrot.slane %v1732, %v1738
    %v1740 = vmul.f32 %v507, %v1739
    %v1741 = vlaneseq
    %v1742 = vshrl.u32 %v1741, 7
    %v1743 = vsub.s32 0, %v1742
    %v1744 = vrot.slane %v1733, %v1743
    %v1745 = vsub.f32 %v1740, %v1744
    %v1746 = vmul.f32 %v1745, 0.5
    %v1747 = vtanh.pop %v1746
    %v1748 = vmul.f32 %v1747, 0.5
    %v1749 = vadd.f32 %v1748, 0.5
    %v1750 = vstv %s1734
    %v1751 = vmul.f32 %v1750, %v1749
    %v1752 = vstv %s1735
    %v1753 = vadd.f32 %v1751, %v1752
    %v1754 = vtanh.pop %v1753
    %v1755 = vmul.f32 %v1749, %v1754
    %v1756 = vadd.f32 %v1731, %v1755
    %v1757 = vld [vmem:[%s1405 + $0xe] sm:$0x1]
    %v1758 = vld [vmem:[%s1407 + $0xe] sm:$0x1]
    %s1759 = sld [smem:[#allocation10 + %s532]]
    %s1760 = sld [smem:[#allocation11 + %s532]]
    %v1761 = vlaneseq
    %v1762 = vshrl.u32 %v1761, 7
    %v1763 = vsub.s32 0, %v1762
    %v1764 = vrot.slane %v1757, %v1763
    %v1765 = vmul.f32 %v537, %v1764
    %v1766 = vlaneseq
    %v1767 = vshrl.u32 %v1766, 7
    %v1768 = vsub.s32 0, %v1767
    %v1769 = vrot.slane %v1758, %v1768
    %v1770 = vsub.f32 %v1765, %v1769
    %v1771 = vmul.f32 %v1770, 0.5
    %v1772 = vtanh.pop %v1771
    %v1773 = vmul.f32 %v1772, 0.5
    %v1774 = vadd.f32 %v1773, 0.5
    %v1775 = vstv %s1759
    %v1776 = vmul.f32 %v1775, %v1774
    %v1777 = vstv %s1760
    %v1778 = vadd.f32 %v1776, %v1777
    %v1779 = vtanh.pop %v1778
    %v1780 = vmul.f32 %v1774, %v1779
    %v1781 = vadd.f32 %v1756, %v1780
    %v1782 = vld [vmem:[%s1405 + $0xf] sm:$0x1]
    %v1783 = vld [vmem:[%s1407 + $0xf] sm:$0x1]
    %s1784 = sld [smem:[#allocation10 + %s562]]
    %s1785 = sld [smem:[#allocation11 + %s562]]
    %v1786 = vlaneseq
    %v1787 = vshrl.u32 %v1786, 7
    %v1788 = vsub.s32 0, %v1787
    %v1789 = vrot.slane %v1782, %v1788
    %v1790 = vmul.f32 %v567, %v1789
    %v1791 = vlaneseq
    %v1792 = vshrl.u32 %v1791, 7
    %v1793 = vsub.s32 0, %v1792
    %v1794 = vrot.slane %v1783, %v1793
    %v1795 = vsub.f32 %v1790, %v1794
    %v1796 = vmul.f32 %v1795, 0.5
    %v1797 = vtanh.pop %v1796
    %v1798 = vmul.f32 %v1797, 0.5
    %v1799 = vadd.f32 %v1798, 0.5
    %v1800 = vstv %s1784
    %v1801 = vmul.f32 %v1800, %v1799
    %v1802 = vstv %s1785
    %v1803 = vadd.f32 %v1801, %v1802
    %v1804 = vtanh.pop %v1803
    %v1805 = vmul.f32 %v1799, %v1804
    %v1806 = vadd.f32 %v1781, %v1805
    %s1807 = scalar_lea.vmem [#allocation2], 24
    %v1808 = vld [vmem:[%s1807] sm:$0xff]
    %v1809 = vadd.f32 %v1808, %v1806
    %1810 = vst [vmem:[%s1807] sm:$0xff] %v1809
    %s1811 = scalar_lea.vmem [#allocation7], 64
    %v1812 = vld [vmem:[%s1811] sm:$0x1]
    %s1813 = scalar_lea.vmem [#allocation9], 64
    %v1814 = vld [vmem:[%s1813] sm:$0x1]
    %s1815 = sld [smem:[#allocation10 + %s109]]
    %s1816 = sld [smem:[#allocation11 + %s109]]
    %v1817 = vlaneseq
    %v1818 = vshrl.u32 %v1817, 7
    %v1819 = vsub.s32 0, %v1818
    %v1820 = vrot.slane %v1812, %v1819
    %v1821 = vmul.f32 %v117, %v1820
    %v1822 = vlaneseq
    %v1823 = vshrl.u32 %v1822, 7
    %v1824 = vsub.s32 0, %v1823
    %v1825 = vrot.slane %v1814, %v1824
    %v1826 = vsub.f32 %v1821, %v1825
    %v1827 = vmul.f32 %v1826, 0.5
    %v1828 = vtanh.pop %v1827
    %v1829 = vmul.f32 %v1828, 0.5
    %v1830 = vadd.f32 %v1829, 0.5
    %v1831 = vstv %s1815
    %v1832 = vmul.f32 %v1831, %v1830
    %v1833 = vstv %s1816
    %v1834 = vadd.f32 %v1832, %v1833
    %v1835 = vtanh.pop %v1834
    %v1836 = vmul.f32 %v1830, %v1835
    %v1837 = vadd.f32 %v1836, 0.0
    %v1838 = vld [vmem:[%s1811 + $0x1] sm:$0x1]
    %v1839 = vld [vmem:[%s1813 + $0x1] sm:$0x1]
    %s1840 = sld [smem:[#allocation10 + %s142]]
    %s1841 = sld [smem:[#allocation11 + %s142]]
    %v1842 = vlaneseq
    %v1843 = vshrl.u32 %v1842, 7
    %v1844 = vsub.s32 0, %v1843
    %v1845 = vrot.slane %v1838, %v1844
    %v1846 = vmul.f32 %v147, %v1845
    %v1847 = vlaneseq
    %v1848 = vshrl.u32 %v1847, 7
    %v1849 = vsub.s32 0, %v1848
    %v1850 = vrot.slane %v1839, %v1849
    %v1851 = vsub.f32 %v1846, %v1850
    %v1852 = vmul.f32 %v1851, 0.5
    %v1853 = vtanh.pop %v1852
    %v1854 = vmul.f32 %v1853, 0.5
    %v1855 = vadd.f32 %v1854, 0.5
    %v1856 = vstv %s1840
    %v1857 = vmul.f32 %v1856, %v1855
    %v1858 = vstv %s1841
    %v1859 = vadd.f32 %v1857, %v1858
    %v1860 = vtanh.pop %v1859
    %v1861 = vmul.f32 %v1855, %v1860
    %v1862 = vadd.f32 %v1837, %v1861
    %v1863 = vld [vmem:[%s1811 + $0x2] sm:$0x1]
    %v1864 = vld [vmem:[%s1813 + $0x2] sm:$0x1]
    %s1865 = sld [smem:[#allocation10 + %s172]]
    %s1866 = sld [smem:[#allocation11 + %s172]]
    %v1867 = vlaneseq
    %v1868 = vshrl.u32 %v1867, 7
    %v1869 = vsub.s32 0, %v1868
    %v1870 = vrot.slane %v1863, %v1869
    %v1871 = vmul.f32 %v177, %v1870
    %v1872 = vlaneseq
    %v1873 = vshrl.u32 %v1872, 7
    %v1874 = vsub.s32 0, %v1873
    %v1875 = vrot.slane %v1864, %v1874
    %v1876 = vsub.f32 %v1871, %v1875
    %v1877 = vmul.f32 %v1876, 0.5
    %v1878 = vtanh.pop %v1877
    %v1879 = vmul.f32 %v1878, 0.5
    %v1880 = vadd.f32 %v1879, 0.5
    %v1881 = vstv %s1865
    %v1882 = vmul.f32 %v1881, %v1880
    %v1883 = vstv %s1866
    %v1884 = vadd.f32 %v1882, %v1883
    %v1885 = vtanh.pop %v1884
    %v1886 = vmul.f32 %v1880, %v1885
    %v1887 = vadd.f32 %v1862, %v1886
    %v1888 = vld [vmem:[%s1811 + $0x3] sm:$0x1]
    %v1889 = vld [vmem:[%s1813 + $0x3] sm:$0x1]
    %s1890 = sld [smem:[#allocation10 + %s202]]
    %s1891 = sld [smem:[#allocation11 + %s202]]
    %v1892 = vlaneseq
    %v1893 = vshrl.u32 %v1892, 7
    %v1894 = vsub.s32 0, %v1893
    %v1895 = vrot.slane %v1888, %v1894
    %v1896 = vmul.f32 %v207, %v1895
    %v1897 = vlaneseq
    %v1898 = vshrl.u32 %v1897, 7
    %v1899 = vsub.s32 0, %v1898
    %v1900 = vrot.slane %v1889, %v1899
    %v1901 = vsub.f32 %v1896, %v1900
    %v1902 = vmul.f32 %v1901, 0.5
    %v1903 = vtanh.pop %v1902
    %v1904 = vmul.f32 %v1903, 0.5
    %v1905 = vadd.f32 %v1904, 0.5
    %v1906 = vstv %s1890
    %v1907 = vmul.f32 %v1906, %v1905
    %v1908 = vstv %s1891
    %v1909 = vadd.f32 %v1907, %v1908
    %v1910 = vtanh.pop %v1909
    %v1911 = vmul.f32 %v1905, %v1910
    %v1912 = vadd.f32 %v1887, %v1911
    %v1913 = vld [vmem:[%s1811 + $0x4] sm:$0x1]
    %v1914 = vld [vmem:[%s1813 + $0x4] sm:$0x1]
    %s1915 = sld [smem:[#allocation10 + %s232]]
    %s1916 = sld [smem:[#allocation11 + %s232]]
    %v1917 = vlaneseq
    %v1918 = vshrl.u32 %v1917, 7
    %v1919 = vsub.s32 0, %v1918
    %v1920 = vrot.slane %v1913, %v1919
    %v1921 = vmul.f32 %v237, %v1920
    %v1922 = vlaneseq
    %v1923 = vshrl.u32 %v1922, 7
    %v1924 = vsub.s32 0, %v1923
    %v1925 = vrot.slane %v1914, %v1924
    %v1926 = vsub.f32 %v1921, %v1925
    %v1927 = vmul.f32 %v1926, 0.5
    %v1928 = vtanh.pop %v1927
    %v1929 = vmul.f32 %v1928, 0.5
    %v1930 = vadd.f32 %v1929, 0.5
    %v1931 = vstv %s1915
    %v1932 = vmul.f32 %v1931, %v1930
    %v1933 = vstv %s1916
    %v1934 = vadd.f32 %v1932, %v1933
    %v1935 = vtanh.pop %v1934
    %v1936 = vmul.f32 %v1930, %v1935
    %v1937 = vadd.f32 %v1912, %v1936
    %v1938 = vld [vmem:[%s1811 + $0x5] sm:$0x1]
    %v1939 = vld [vmem:[%s1813 + $0x5] sm:$0x1]
    %s1940 = sld [smem:[#allocation10 + %s262]]
    %s1941 = sld [smem:[#allocation11 + %s262]]
    %v1942 = vlaneseq
    %v1943 = vshrl.u32 %v1942, 7
    %v1944 = vsub.s32 0, %v1943
    %v1945 = vrot.slane %v1938, %v1944
    %v1946 = vmul.f32 %v267, %v1945
    %v1947 = vlaneseq
    %v1948 = vshrl.u32 %v1947, 7
    %v1949 = vsub.s32 0, %v1948
    %v1950 = vrot.slane %v1939, %v1949
    %v1951 = vsub.f32 %v1946, %v1950
    %v1952 = vmul.f32 %v1951, 0.5
    %v1953 = vtanh.pop %v1952
    %v1954 = vmul.f32 %v1953, 0.5
    %v1955 = vadd.f32 %v1954, 0.5
    %v1956 = vstv %s1940
    %v1957 = vmul.f32 %v1956, %v1955
    %v1958 = vstv %s1941
    %v1959 = vadd.f32 %v1957, %v1958
    %v1960 = vtanh.pop %v1959
    %v1961 = vmul.f32 %v1955, %v1960
    %v1962 = vadd.f32 %v1937, %v1961
    %v1963 = vld [vmem:[%s1811 + $0x6] sm:$0x1]
    %v1964 = vld [vmem:[%s1813 + $0x6] sm:$0x1]
    %s1965 = sld [smem:[#allocation10 + %s292]]
    %s1966 = sld [smem:[#allocation11 + %s292]]
    %v1967 = vlaneseq
    %v1968 = vshrl.u32 %v1967, 7
    %v1969 = vsub.s32 0, %v1968
    %v1970 = vrot.slane %v1963, %v1969
    %v1971 = vmul.f32 %v297, %v1970
    %v1972 = vlaneseq
    %v1973 = vshrl.u32 %v1972, 7
    %v1974 = vsub.s32 0, %v1973
    %v1975 = vrot.slane %v1964, %v1974
    %v1976 = vsub.f32 %v1971, %v1975
    %v1977 = vmul.f32 %v1976, 0.5
    %v1978 = vtanh.pop %v1977
    %v1979 = vmul.f32 %v1978, 0.5
    %v1980 = vadd.f32 %v1979, 0.5
    %v1981 = vstv %s1965
    %v1982 = vmul.f32 %v1981, %v1980
    %v1983 = vstv %s1966
    %v1984 = vadd.f32 %v1982, %v1983
    %v1985 = vtanh.pop %v1984
    %v1986 = vmul.f32 %v1980, %v1985
    %v1987 = vadd.f32 %v1962, %v1986
    %v1988 = vld [vmem:[%s1811 + $0x7] sm:$0x1]
    %v1989 = vld [vmem:[%s1813 + $0x7] sm:$0x1]
    %s1990 = sld [smem:[#allocation10 + %s322]]
    %s1991 = sld [smem:[#allocation11 + %s322]]
    %v1992 = vlaneseq
    %v1993 = vshrl.u32 %v1992, 7
    %v1994 = vsub.s32 0, %v1993
    %v1995 = vrot.slane %v1988, %v1994
    %v1996 = vmul.f32 %v327, %v1995
    %v1997 = vlaneseq
    %v1998 = vshrl.u32 %v1997, 7
    %v1999 = vsub.s32 0, %v1998
    %v2000 = vrot.slane %v1989, %v1999
    %v2001 = vsub.f32 %v1996, %v2000
    %v2002 = vmul.f32 %v2001, 0.5
    %v2003 = vtanh.pop %v2002
    %v2004 = vmul.f32 %v2003, 0.5
    %v2005 = vadd.f32 %v2004, 0.5
    %v2006 = vstv %s1990
    %v2007 = vmul.f32 %v2006, %v2005
    %v2008 = vstv %s1991
    %v2009 = vadd.f32 %v2007, %v2008
    %v2010 = vtanh.pop %v2009
    %v2011 = vmul.f32 %v2005, %v2010
    %v2012 = vadd.f32 %v1987, %v2011
    %v2013 = vld [vmem:[%s1811 + $0x8] sm:$0x1]
    %v2014 = vld [vmem:[%s1813 + $0x8] sm:$0x1]
    %s2015 = sld [smem:[#allocation10 + %s352]]
    %s2016 = sld [smem:[#allocation11 + %s352]]
    %v2017 = vlaneseq
    %v2018 = vshrl.u32 %v2017, 7
    %v2019 = vsub.s32 0, %v2018
    %v2020 = vrot.slane %v2013, %v2019
    %v2021 = vmul.f32 %v357, %v2020
    %v2022 = vlaneseq
    %v2023 = vshrl.u32 %v2022, 7
    %v2024 = vsub.s32 0, %v2023
    %v2025 = vrot.slane %v2014, %v2024
    %v2026 = vsub.f32 %v2021, %v2025
    %v2027 = vmul.f32 %v2026, 0.5
    %v2028 = vtanh.pop %v2027
    %v2029 = vmul.f32 %v2028, 0.5
    %v2030 = vadd.f32 %v2029, 0.5
    %v2031 = vstv %s2015
    %v2032 = vmul.f32 %v2031, %v2030
    %v2033 = vstv %s2016
    %v2034 = vadd.f32 %v2032, %v2033
    %v2035 = vtanh.pop %v2034
    %v2036 = vmul.f32 %v2030, %v2035
    %v2037 = vadd.f32 %v2012, %v2036
    %v2038 = vld [vmem:[%s1811 + $0x9] sm:$0x1]
    %v2039 = vld [vmem:[%s1813 + $0x9] sm:$0x1]
    %s2040 = sld [smem:[#allocation10 + %s382]]
    %s2041 = sld [smem:[#allocation11 + %s382]]
    %v2042 = vlaneseq
    %v2043 = vshrl.u32 %v2042, 7
    %v2044 = vsub.s32 0, %v2043
    %v2045 = vrot.slane %v2038, %v2044
    %v2046 = vmul.f32 %v387, %v2045
    %v2047 = vlaneseq
    %v2048 = vshrl.u32 %v2047, 7
    %v2049 = vsub.s32 0, %v2048
    %v2050 = vrot.slane %v2039, %v2049
    %v2051 = vsub.f32 %v2046, %v2050
    %v2052 = vmul.f32 %v2051, 0.5
    %v2053 = vtanh.pop %v2052
    %v2054 = vmul.f32 %v2053, 0.5
    %v2055 = vadd.f32 %v2054, 0.5
    %v2056 = vstv %s2040
    %v2057 = vmul.f32 %v2056, %v2055
    %v2058 = vstv %s2041
    %v2059 = vadd.f32 %v2057, %v2058
    %v2060 = vtanh.pop %v2059
    %v2061 = vmul.f32 %v2055, %v2060
    %v2062 = vadd.f32 %v2037, %v2061
    %v2063 = vld [vmem:[%s1811 + $0xa] sm:$0x1]
    %v2064 = vld [vmem:[%s1813 + $0xa] sm:$0x1]
    %s2065 = sld [smem:[#allocation10 + %s412]]
    %s2066 = sld [smem:[#allocation11 + %s412]]
    %v2067 = vlaneseq
    %v2068 = vshrl.u32 %v2067, 7
    %v2069 = vsub.s32 0, %v2068
    %v2070 = vrot.slane %v2063, %v2069
    %v2071 = vmul.f32 %v417, %v2070
    %v2072 = vlaneseq
    %v2073 = vshrl.u32 %v2072, 7
    %v2074 = vsub.s32 0, %v2073
    %v2075 = vrot.slane %v2064, %v2074
    %v2076 = vsub.f32 %v2071, %v2075
    %v2077 = vmul.f32 %v2076, 0.5
    %v2078 = vtanh.pop %v2077
    %v2079 = vmul.f32 %v2078, 0.5
    %v2080 = vadd.f32 %v2079, 0.5
    %v2081 = vstv %s2065
    %v2082 = vmul.f32 %v2081, %v2080
    %v2083 = vstv %s2066
    %v2084 = vadd.f32 %v2082, %v2083
    %v2085 = vtanh.pop %v2084
    %v2086 = vmul.f32 %v2080, %v2085
    %v2087 = vadd.f32 %v2062, %v2086
    %v2088 = vld [vmem:[%s1811 + $0xb] sm:$0x1]
    %v2089 = vld [vmem:[%s1813 + $0xb] sm:$0x1]
    %s2090 = sld [smem:[#allocation10 + %s442]]
    %s2091 = sld [smem:[#allocation11 + %s442]]
    %v2092 = vlaneseq
    %v2093 = vshrl.u32 %v2092, 7
    %v2094 = vsub.s32 0, %v2093
    %v2095 = vrot.slane %v2088, %v2094
    %v2096 = vmul.f32 %v447, %v2095
    %v2097 = vlaneseq
    %v2098 = vshrl.u32 %v2097, 7
    %v2099 = vsub.s32 0, %v2098
    %v2100 = vrot.slane %v2089, %v2099
    %v2101 = vsub.f32 %v2096, %v2100
    %v2102 = vmul.f32 %v2101, 0.5
    %v2103 = vtanh.pop %v2102
    %v2104 = vmul.f32 %v2103, 0.5
    %v2105 = vadd.f32 %v2104, 0.5
    %v2106 = vstv %s2090
    %v2107 = vmul.f32 %v2106, %v2105
    %v2108 = vstv %s2091
    %v2109 = vadd.f32 %v2107, %v2108
    %v2110 = vtanh.pop %v2109
    %v2111 = vmul.f32 %v2105, %v2110
    %v2112 = vadd.f32 %v2087, %v2111
    %v2113 = vld [vmem:[%s1811 + $0xc] sm:$0x1]
    %v2114 = vld [vmem:[%s1813 + $0xc] sm:$0x1]
    %s2115 = sld [smem:[#allocation10 + %s472]]
    %s2116 = sld [smem:[#allocation11 + %s472]]
    %v2117 = vlaneseq
    %v2118 = vshrl.u32 %v2117, 7
    %v2119 = vsub.s32 0, %v2118
    %v2120 = vrot.slane %v2113, %v2119
    %v2121 = vmul.f32 %v477, %v2120
    %v2122 = vlaneseq
    %v2123 = vshrl.u32 %v2122, 7
    %v2124 = vsub.s32 0, %v2123
    %v2125 = vrot.slane %v2114, %v2124
    %v2126 = vsub.f32 %v2121, %v2125
    %v2127 = vmul.f32 %v2126, 0.5
    %v2128 = vtanh.pop %v2127
    %v2129 = vmul.f32 %v2128, 0.5
    %v2130 = vadd.f32 %v2129, 0.5
    %v2131 = vstv %s2115
    %v2132 = vmul.f32 %v2131, %v2130
    %v2133 = vstv %s2116
    %v2134 = vadd.f32 %v2132, %v2133
    %v2135 = vtanh.pop %v2134
    %v2136 = vmul.f32 %v2130, %v2135
    %v2137 = vadd.f32 %v2112, %v2136
    %v2138 = vld [vmem:[%s1811 + $0xd] sm:$0x1]
    %v2139 = vld [vmem:[%s1813 + $0xd] sm:$0x1]
    %s2140 = sld [smem:[#allocation10 + %s502]]
    %s2141 = sld [smem:[#allocation11 + %s502]]
    %v2142 = vlaneseq
    %v2143 = vshrl.u32 %v2142, 7
    %v2144 = vsub.s32 0, %v2143
    %v2145 = vrot.slane %v2138, %v2144
    %v2146 = vmul.f32 %v507, %v2145
    %v2147 = vlaneseq
    %v2148 = vshrl.u32 %v2147, 7
    %v2149 = vsub.s32 0, %v2148
    %v2150 = vrot.slane %v2139, %v2149
    %v2151 = vsub.f32 %v2146, %v2150
    %v2152 = vmul.f32 %v2151, 0.5
    %v2153 = vtanh.pop %v2152
    %v2154 = vmul.f32 %v2153, 0.5
    %v2155 = vadd.f32 %v2154, 0.5
    %v2156 = vstv %s2140
    %v2157 = vmul.f32 %v2156, %v2155
    %v2158 = vstv %s2141
    %v2159 = vadd.f32 %v2157, %v2158
    %v2160 = vtanh.pop %v2159
    %v2161 = vmul.f32 %v2155, %v2160
    %v2162 = vadd.f32 %v2137, %v2161
    %v2163 = vld [vmem:[%s1811 + $0xe] sm:$0x1]
    %v2164 = vld [vmem:[%s1813 + $0xe] sm:$0x1]
    %s2165 = sld [smem:[#allocation10 + %s532]]
    %s2166 = sld [smem:[#allocation11 + %s532]]
    %v2167 = vlaneseq
    %v2168 = vshrl.u32 %v2167, 7
    %v2169 = vsub.s32 0, %v2168
    %v2170 = vrot.slane %v2163, %v2169
    %v2171 = vmul.f32 %v537, %v2170
    %v2172 = vlaneseq
    %v2173 = vshrl.u32 %v2172, 7
    %v2174 = vsub.s32 0, %v2173
    %v2175 = vrot.slane %v2164, %v2174
    %v2176 = vsub.f32 %v2171, %v2175
    %v2177 = vmul.f32 %v2176, 0.5
    %v2178 = vtanh.pop %v2177
    %v2179 = vmul.f32 %v2178, 0.5
    %v2180 = vadd.f32 %v2179, 0.5
    %v2181 = vstv %s2165
    %v2182 = vmul.f32 %v2181, %v2180
    %v2183 = vstv %s2166
    %v2184 = vadd.f32 %v2182, %v2183
    %v2185 = vtanh.pop %v2184
    %v2186 = vmul.f32 %v2180, %v2185
    %v2187 = vadd.f32 %v2162, %v2186
    %v2188 = vld [vmem:[%s1811 + $0xf] sm:$0x1]
    %v2189 = vld [vmem:[%s1813 + $0xf] sm:$0x1]
    %s2190 = sld [smem:[#allocation10 + %s562]]
    %s2191 = sld [smem:[#allocation11 + %s562]]
    %v2192 = vlaneseq
    %v2193 = vshrl.u32 %v2192, 7
    %v2194 = vsub.s32 0, %v2193
    %v2195 = vrot.slane %v2188, %v2194
    %v2196 = vmul.f32 %v567, %v2195
    %v2197 = vlaneseq
    %v2198 = vshrl.u32 %v2197, 7
    %v2199 = vsub.s32 0, %v2198
    %v2200 = vrot.slane %v2189, %v2199
    %v2201 = vsub.f32 %v2196, %v2200
    %v2202 = vmul.f32 %v2201, 0.5
    %v2203 = vtanh.pop %v2202
    %v2204 = vmul.f32 %v2203, 0.5
    %v2205 = vadd.f32 %v2204, 0.5
    %v2206 = vstv %s2190
    %v2207 = vmul.f32 %v2206, %v2205
    %v2208 = vstv %s2191
    %v2209 = vadd.f32 %v2207, %v2208
    %v2210 = vtanh.pop %v2209
    %v2211 = vmul.f32 %v2205, %v2210
    %v2212 = vadd.f32 %v2187, %v2211
    %s2213 = scalar_lea.vmem [#allocation2], 32
    %v2214 = vld [vmem:[%s2213] sm:$0xff]
    %v2215 = vadd.f32 %v2214, %v2212
    %2216 = vst [vmem:[%s2213] sm:$0xff] %v2215
    // Predicated region
    $region54: #{tpu_custom_call.1} parent=1 // pred_check
      %p2217 = pneg %p99
    $region55: #{tpu_custom_call.1} parent=1 // pred_check_branch
      %2219 = sbr.rel (%p2217) target = $region57
    $region56: #{tpu_custom_call.1} parent=1 // pred_region
      %v2220 = vld [vmem:[#allocation2] sm:$0xff]
      %v2221 = vmul.f32 %v2220, 0.5
      %v2222 = vtanh.pop %v2221
      %v2223 = vadd.f32 %v2222, 0.0
      %v2224 = vld [vmem:[%s995] sm:$0xff]
      %v2225 = vmul.f32 %v2224, 0.5
      %v2226 = vtanh.pop %v2225
      %v2227 = vadd.f32 %v2223, %v2226
      %v2228 = vld [vmem:[%s1401] sm:$0xff]
      %v2229 = vmul.f32 %v2228, 0.5
      %v2230 = vtanh.pop %v2229
      %v2231 = vadd.f32 %v2227, %v2230
      %v2232 = vld [vmem:[%s1807] sm:$0xff]
      %v2233 = vmul.f32 %v2232, 0.5
      %v2234 = vtanh.pop %v2233
      %v2235 = vadd.f32 %v2231, %v2234
      %v2236 = vld [vmem:[%s2213] sm:$0xff]
      %v2237 = vmul.f32 %v2236, 0.5
      %v2238 = vtanh.pop %v2237
      %v2239 = vadd.f32 %v2235, %v2238
      %s2240 = sld [smem:[#allocation13]]
      %s2241 = sld [smem:[#allocation13 + $0x1]]
      %v2242 = vmul.f32 %v2239, 0.5
      %v2243 = vadd.f32 %v2242, 2.5
      %v2244 = vstv %s2241
      %v2245 = vsub.f32 %v2243, %v2244
      %v2246 = vstv %s2240
      %v2247 = vmul.f32 %v2246, %v2245
      %2248 = vst [vmem:[#allocation14] sm:$0xff] %v2247
    $region57: #{tpu_custom_call.1} parent=1 // pred_fallthru
      _
    // Predicated region
    $region58: #{tpu_custom_call.1} parent=1 // pred_check
      _
    $region59: #{tpu_custom_call.1} parent=1 // pred_check_branch
      %2250 = sbr.rel (0) target = $region61
    $region60: #{tpu_custom_call.1} parent=1 // pred_region
      %s2252 = ssub.s32 128, 128
      %2253 = vsyncadd [#allocation5], %s2252
      %s2255 = sshll.u32 [#allocation14], 4
      %s2256 = int_to_ptr.vmem [resolvable:$true] %s2255
      %2258 = dma.vmem_to_hbm [thread:$0]  %s2256, 128, %s6, [#allocation5]
    $region61: #{tpu_custom_call.1} parent=1 // pred_fallthru
      _
    // Predicated region
    $region62: #{tpu_custom_call.1} parent=1 // pred_check
      _
    $region63: #{tpu_custom_call.1} parent=1 // pred_check_branch
      %2260 = sbr.rel (0) target = $region65
    $region64: #{tpu_custom_call.1} parent=1 // pred_region
      %2261 = dma.done [#allocation5], 128
    $region65: #{tpu_custom_call.1} parent=1 // pred_fallthru
      _
    %2262 = vsyncpa [#allocation4], 1
    %2263 = vsyncpa [#allocation8], 1
    %2264 = vsyncpa [#allocation5], 1
    %2265 = vsyncpa [#allocation6], 1
    %2266 = vsyncpa [#allocation12], 1

</llo_original>
